<compile_context>
chip_gen: v7x
topology: tpu7x:2x2x1
jax: 0.10.0
libtpu: 0.0.40
codegen_flags: <defaults>
</compile_context>

<pallas_src>
import math
from functools import partial

import numpy as np
import jax
import jax.numpy as jnp
from jax import lax
from jax.experimental import pallas as pl
from jax.experimental.pallas import tpu as pltpu

# ------------------------- model hyper-parameters (small) -------------------------
D_MODEL = 32
HEADS = 4
D_K = D_MODEL // HEADS          # 8
N_LAYERS = 2
VOCAB = 20
N_FEAT = 15                     # src last dim
NF_PAD = 16                     # src last dim padded for the int32 DMA
D_EMB = D_MODEL // 2            # 16
F_IN = N_FEAT * D_EMB           # 240
D_FF = 2048                     # FeedForward default d_ff
EPS = 1e-6
MAX_SEQ = 80

OH_W = N_FEAT * VOCAB           # 300: per-feature one-hot width
OH_PAD = 384                    # padded to a lane-friendly multiple of 128
N_VEC_ROWS = 3 + 6 * N_LAYERS + 2   # stacked (row, D_MODEL) small params
NEG_BIG = -1e9                  # same value the reference masked_fill uses


# ------------------------------ shared in-kernel math ------------------------------
def _norm(x, alpha, bias):
    # PyTorch Norm: alpha * (x - mean) / (std + eps) + bias, std unbiased (n-1).
    mean = jnp.mean(x, axis=-1, keepdims=True)
    xc = x - mean
    var = jnp.sum(xc * xc, axis=-1, keepdims=True) * (1.0 / (D_MODEL - 1))
    std = jnp.sqrt(var)
    return alpha * (xc * pl.reciprocal(std + EPS)) + bias   # exact reciprocal


def _softmax(x):
    m = jnp.max(x, axis=-1, keepdims=True)
    e = jnp.exp(x - m)
    return e * pl.reciprocal(jnp.sum(e, axis=-1, keepdims=True), approx=True)


# ------------------------------------ fused kernel ------------------------------------
def encoder_kernel(src_ref, w_pre_ref, vec_ref, pe_ref, mask_ref,
                   w_qkv_ref, b_qkv_ref, w_o_ref,
                   w_ff1_ref, b_ff1_ref, w_ff2_ref, o_ref, *, s_len):
    ids = src_ref[...]                     # (R, NF_PAD) int32; per-feature offsets pre-added
    R = ids.shape[0]                       # BT * s_len rows (batch folded into rows)
    vec = vec_ref[...]                     # (N_VEC_ROWS, D_MODEL) stacked small params
    # vec rows: 0 lat_b | 1 norm_a*sqrtD | 2 norm_b*sqrtD |
    #           per layer l @ 3+6l: n1_a, n1_b, bo, n2_a, n2_b, b2 | last two: final norm a, b

    # ---- Embedding + flatten + features_to_latent_turns fused into one matmul ----
    # bool-accumulated one-hot (offsets already folded into ids host-side), cast once.
    col = lax.broadcasted_iota(jnp.int32, (R, OH_PAD), 1)
    hit = col == ids[:, 0:1]
    for f in range(1, N_FEAT):             # static, tiny; pad column 15 never read
        hit = hit | (col == ids[:, f:f + 1])
    oh = hit.astype(jnp.float32)
    x = jnp.dot(oh, w_pre_ref[...], preferred_element_type=jnp.float32) + vec[0:1, :]

    # ---- shared Norm (sqrt(d_model) folded into alpha/bias) + positional encoding ----
    x = _norm(x, vec[1:2, :], vec[2:3, :]) + pe_ref[...]

    use_mask = R > s_len                   # trace-time: only needed when batch is folded

    # ---- encoder layers (static unroll) ----
    for l in range(N_LAYERS):
        r = 3 + 6 * l
        n1_a, n1_b = vec[r:r + 1, :], vec[r + 1:r + 2, :]
        bo = vec[r + 2:r + 3, :]
        n2_a, n2_b = vec[r + 3:r + 4, :], vec[r + 4:r + 5, :]
        b2 = vec[r + 5:r + 6, :]

        # --- self-attention: fused QKV matmul on all rows; 1/sqrt(d_k) folded into Wq/bq ---
        x2 = _norm(x, n1_a, n1_b)
        qkv = jnp.dot(x2, w_qkv_ref[l],
                      preferred_element_type=jnp.float32) + b_qkv_ref[l]
        wo = w_o_ref[l]                                        # (D, D)

        attn = jnp.zeros((R, D_MODEL), jnp.float32)
        for h in range(HEADS):             # per-head accumulate through Wo (no concat)
            lo, hi = h * D_K, (h + 1) * D_K
            q_h = qkv[:, lo:hi]
            k_h = qkv[:, D_MODEL + lo:D_MODEL + hi]
            v_h = qkv[:, 2 * D_MODEL + lo:2 * D_MODEL + hi]
            s = lax.dot_general(q_h, k_h, (((1,), (1,)), ((), ())),
                                preferred_element_type=jnp.float32)   # (R, R)
            if use_mask:                   # block-diagonal bias keeps batches independent
                s = s + mask_ref[...]
            p = _softmax(s)
            pv = jnp.dot(p, v_h, preferred_element_type=jnp.float32)  # (R, D_K)
            attn = attn + jnp.dot(pv, wo[lo:hi, :],
                                  preferred_element_type=jnp.float32)
        x = x + attn + bo

        # --- feed-forward (bf16 weights + activations, f32 accumulate) ---
        x2 = _norm(x, n2_a, n2_b)
        h1 = jnp.dot(x2.astype(jnp.bfloat16), w_ff1_ref[l],
                     preferred_element_type=jnp.float32) + b_ff1_ref[l]
        h1 = jnp.maximum(h1, 0.0)
        x = x + jnp.dot(h1.astype(jnp.bfloat16), w_ff2_ref[l],
                        preferred_element_type=jnp.float32) + b2

    # ---- final (shared) Norm ----
    rf = 3 + 6 * N_LAYERS
    o_ref[...] = _norm(x, vec[rf:rf + 1, :], vec[rf + 1:rf + 2, :])


# ------------------------------------ wrappers ---------------------------------------
def _rep(shape):
    # full-array block, constant index map -> fetched once for the whole grid
    n = len(shape)
    return pl.BlockSpec(shape, lambda g, _n=n: (0,) * _n)


def _pick_bt(B, S, target_rows=128):
    # Largest divisor of B with BT*S <= target_rows; keep the grid >=2 when B >= 2
    # so v7x megacore ("parallel") still uses both TensorCores.
    cap = max(1, target_rows // S)
    if B >= 2:
        cap = min(cap, max(1, B // 2))
    best = 1
    for bt in range(1, min(B, cap) + 1):
        if B % bt == 0:
            best = bt
    return best


def encoder_forward(src, packed, target_rows=128):
    B, S, F = src.shape
    assert F == N_FEAT
    BT = _pick_bt(B, S, target_rows)        # cap rows ~128: (rows, 2048) f32 FF temp stays ~1 MiB
    G = B // BT
    R = BT * S

    # host-side: per-feature vocab offsets + pad 15 -> 16 (pad points at a zero w_pre row)
    off = (jnp.arange(N_FEAT, dtype=jnp.int32) * VOCAB)[None, None, :]
    src_off = src.astype(jnp.int32) + off
    pad = jnp.full((B, S, NF_PAD - N_FEAT), OH_PAD - 1, jnp.int32)
    src_flat = jnp.concatenate([src_off, pad], axis=-1).reshape(B * S, NF_PAD)

    # positional encoding tiled per block (rows are (batch, seq) with seq fastest)
    pe_block = jnp.tile(packed["pe"][:S], (BT, 1))                      # (R, D_MODEL)

    # additive block-diagonal attention bias across the folded batch
    bid = np.repeat(np.arange(BT), S)
    mask_bias = jnp.asarray(
        np.where(bid[:, None] == bid[None, :], 0.0, NEG_BIG), dtype=jnp.float32)  # (R, R)

    out = pl.pallas_call(
        partial(encoder_kernel, s_len=S),
        out_shape=jax.ShapeDtypeStruct((B * S, D_MODEL), jnp.float32),
        grid=(G,),
        in_specs=[
            pl.BlockSpec((R, NF_PAD), lambda g: (g, 0)),        # src ids (+offsets), int32
            _rep((OH_PAD, D_MODEL)),                            # emb ∘ latent weight (f32)
            _rep((N_VEC_ROWS, D_MODEL)),                        # stacked small vectors
            _rep((R, D_MODEL)),                                 # positional encoding (tiled)
            _rep((R, R)),                                       # block-diag attention bias
            _rep((N_LAYERS, D_MODEL, 3 * D_MODEL)),             # fused Wq|Wk|Wv
            _rep((N_LAYERS, 1, 3 * D_MODEL)),                   # fused bq|bk|bv
            _rep((N_LAYERS, D_MODEL, D_MODEL)),                 # Wo
            _rep((N_LAYERS, D_MODEL, D_FF)),                    # FF linear_1 W (bf16)
            _rep((N_LAYERS, 1, D_FF)),                          # FF linear_1 b
            _rep((N_LAYERS, D_FF, D_MODEL)),                    # FF linear_2 W (bf16)
        ],
        out_specs=pl.BlockSpec((R, D_MODEL), lambda g: (g, 0)),
        compiler_params=pltpu.CompilerParams(
            dimension_semantics=("parallel",)),                 # 2 TCs on v7x when G >= 2
    )(src_flat, packed["w_pre"], packed["vec"], pe_block, mask_bias,
      packed["w_qkv"], packed["b_qkv"], packed["w_o"],
      packed["w_ff1"], packed["b_ff1"], packed["w_ff2"])
    return out.reshape(B, S, D_MODEL)


# ------------------------- host-side parameter packing / folding -------------------------
def pack_params(params):
    sqrt_d = math.sqrt(D_MODEL)
    inv_sqrt_dk = 1.0 / math.sqrt(D_K)

    # Fold embedding table into features_to_latent_turns:
    #   y[s] = sum_f emb[src[s,f]] @ lat_w[f*D_EMB:(f+1)*D_EMB]  ->  one-hot @ w_pre
    lat_w3 = params["lat_w"].reshape(N_FEAT, D_EMB, D_MODEL)
    w_pre = jnp.einsum("ve,fed->fvd", params["emb"], lat_w3).reshape(OH_W, D_MODEL)
    w_pre = jnp.zeros((OH_PAD, D_MODEL), jnp.float32).at[:OH_W].set(w_pre)

    # Encoder reuses ONE Norm module before pe() and at the very end (shared params);
    # sqrt(d_model) (applied after that Norm, inside PositionalEncoder) folded into copy #1.
    rows = [params["lat_b"],
            params["norm_a"] * sqrt_d,
            params["norm_b"] * sqrt_d]
    w_qkv, b_qkv, w_o, w_ff1, b_ff1, w_ff2 = [], [], [], [], [], []
    for lp in params["layers"]:
        rows += [lp["n1_a"], lp["n1_b"], lp["bo"], lp["n2_a"], lp["n2_b"], lp["b2"]]
        w_qkv.append(jnp.concatenate(
            [lp["wq"] * inv_sqrt_dk, lp["wk"], lp["wv"]], axis=1))   # 1/sqrt(d_k) folded
        b_qkv.append(jnp.concatenate(
            [lp["bq"] * inv_sqrt_dk, lp["bk"], lp["bv"]], axis=1))
        w_o.append(lp["wo"])
        w_ff1.append(lp["w1"])
        b_ff1.append(lp["b1"])
        w_ff2.append(lp["w2"])
    rows += [params["norm_a"], params["norm_b"]]

    return {
        "w_pre": w_pre,
        "vec": jnp.concatenate(rows, axis=0),                        # (N_VEC_ROWS, D_MODEL)
        "pe": params["pe"],
        "w_qkv": jnp.stack(w_qkv),                                   # (L, D, 3D) f32
        "b_qkv": jnp.stack(b_qkv),                                   # (L, 1, 3D) f32
        "w_o": jnp.stack(w_o),                                       # (L, D, D)  f32
        "w_ff1": jnp.stack(w_ff1).astype(jnp.bfloat16),              # (L, D, D_FF)  bf16
        "b_ff1": jnp.stack(b_ff1),                                   # (L, 1, D_FF)  f32
        "w_ff2": jnp.stack(w_ff2).astype(jnp.bfloat16),              # (L, D_FF, D)  bf16
    }


# ------------------------------ deterministic parameters ------------------------------
def _positional_encoding(max_seq_len, d_model):
    # exact replica of the (idiosyncratic) PyTorch loop (cos uses 2*(i+1))
    pe = np.zeros((max_seq_len, d_model), dtype=np.float32)
    for pos in range(max_seq_len):
        for i in range(0, d_model, 2):
            pe[pos, i] = math.sin(pos / 10000 ** (2 * i / d_model))
            pe[pos, i + 1] = math.cos(pos / 10000 ** (2 * (i + 1) / d_model))
    return jnp.asarray(pe)


def make_params(key):
    ks = iter(jax.random.split(key, 64))

    def w(shape, scale=0.02):
        return (scale * jax.random.normal(next(ks), shape)).astype(jnp.float32)

    params = {
        "emb": w((VOCAB, D_EMB), 1.0),
        "lat_w": w((F_IN, D_MODEL)),
        "lat_b": jnp.zeros((1, D_MODEL), jnp.float32),
        "norm_a": jnp.ones((1, D_MODEL), jnp.float32),   # shared Encoder.norm
        "norm_b": jnp.zeros((1, D_MODEL), jnp.float32),
        "pe": _positional_encoding(MAX_SEQ, D_MODEL),
        "layers": [],
    }
    for _ in range(N_LAYERS):
        params["layers"].append({
            "n1_a": jnp.ones((1, D_MODEL), jnp.float32),
            "n1_b": jnp.zeros((1, D_MODEL), jnp.float32),
            "wq": w((D_MODEL, D_MODEL)), "bq": jnp.zeros((1, D_MODEL), jnp.float32),
            "wk": w((D_MODEL, D_MODEL)), "bk": jnp.zeros((1, D_MODEL), jnp.float32),
            "wv": w((D_MODEL, D_MODEL)), "bv": jnp.zeros((1, D_MODEL), jnp.float32),
            "wo": w((D_MODEL, D_MODEL)), "bo": jnp.zeros((1, D_MODEL), jnp.float32),
            "n2_a": jnp.ones((1, D_MODEL), jnp.float32),
            "n2_b": jnp.zeros((1, D_MODEL), jnp.float32),
            "w1": w((D_MODEL, D_FF)), "b1": jnp.zeros((1, D_FF), jnp.float32),
            "w2": w((D_FF, D_MODEL)), "b2": jnp.zeros((1, D_MODEL), jnp.float32),
        })
    return params


if __name__ == "__main__":
    key = jax.random.PRNGKey(0)
    pkey, skey = jax.random.split(key)
    params = make_params(pkey)
    packed = pack_params(params)

    B, S = 2, 8
    src = jax.random.randint(skey, (B, S, N_FEAT), 0, VOCAB, dtype=jnp.int32)

    out = encoder_forward(src, packed)
    jax.block_until_ready(out)
    assert out.shape == (B, S, D_MODEL)
    assert bool(jnp.all(jnp.isfinite(out)))
    print("KERNEL_OK")
</pallas_src>

<mosaic_0001>
module attributes {stable_mosaic.version = 11 : i64} {
  func.func @encoder_kernel(%arg0: i32, %arg1: memref<8x16xi32, #tpu.memory_space<vmem>>, %arg2: memref<384x32xf32, #tpu.memory_space<vmem>>, %arg3: memref<17x32xf32, #tpu.memory_space<vmem>>, %arg4: memref<8x32xf32, #tpu.memory_space<vmem>>, %arg5: memref<8x8xf32, #tpu.memory_space<vmem>>, %arg6: memref<2x32x96xf32, #tpu.memory_space<vmem>>, %arg7: memref<2x1x96xf32, #tpu.memory_space<vmem>>, %arg8: memref<2x32x32xf32, #tpu.memory_space<vmem>>, %arg9: memref<2x32x2048xbf16, #tpu.memory_space<vmem>>, %arg10: memref<2x1x2048xf32, #tpu.memory_space<vmem>>, %arg11: memref<2x2048x32xbf16, #tpu.memory_space<vmem>>, %arg12: memref<8x32xf32, #tpu.memory_space<vmem>>) attributes {dimension_semantics = [#tpu.dimension_semantics<parallel>], iteration_bounds = array<i64: 2>, scalar_prefetch = 0 : i64, scratch_operands = 0 : i64, tpu.core_type = #tpu.core_type<tc>, window_params = [{transform_indices = @transform_0, window_bounds = array<i64: 8, 16>}, {pipeline_mode = #tpu.pipeline_mode<synchronous>, transform_indices = @transform_1, window_bounds = array<i64: 384, 32>}, {pipeline_mode = #tpu.pipeline_mode<synchronous>, transform_indices = @transform_2, window_bounds = array<i64: 17, 32>}, {pipeline_mode = #tpu.pipeline_mode<synchronous>, transform_indices = @transform_3, window_bounds = array<i64: 8, 32>}, {pipeline_mode = #tpu.pipeline_mode<synchronous>, transform_indices = @transform_4, window_bounds = array<i64: 8, 8>}, {pipeline_mode = #tpu.pipeline_mode<synchronous>, transform_indices = @transform_5, window_bounds = array<i64: 2, 32, 96>}, {pipeline_mode = #tpu.pipeline_mode<synchronous>, transform_indices = @transform_6, window_bounds = array<i64: 2, 1, 96>}, {pipeline_mode = #tpu.pipeline_mode<synchronous>, transform_indices = @transform_7, window_bounds = array<i64: 2, 32, 32>}, {pipeline_mode = #tpu.pipeline_mode<synchronous>, transform_indices = @transform_8, window_bounds = array<i64: 2, 32, 2048>}, {pipeline_mode = #tpu.pipeline_mode<synchronous>, transform_indices = @transform_9, window_bounds = array<i64: 2, 1, 2048>}, {pipeline_mode = #tpu.pipeline_mode<synchronous>, transform_indices = @transform_10, window_bounds = array<i64: 2, 2048, 32>}, {transform_indices = @transform_11, window_bounds = array<i64: 8, 32>}]} {
    %c0 = arith.constant 0 : index
    %c0_0 = arith.constant 0 : index
    %0 = vector.load %arg1[%c0, %c0_0] : memref<8x16xi32, #tpu.memory_space<vmem>>, vector<8x16xi32>
    %c0_1 = arith.constant 0 : index
    %c0_2 = arith.constant 0 : index
    %1 = vector.load %arg3[%c0_1, %c0_2] : memref<17x32xf32, #tpu.memory_space<vmem>>, vector<17x32xf32>
    %2 = tpu.iota {dimensions = array<i32: 1>} : vector<8x384xi32>
    %3 = vector.extract_strided_slice %0 {offsets = [0, 0], sizes = [8, 1], strides = [1, 1]} : vector<8x16xi32> to vector<8x1xi32>
    %4 = vector.broadcast %3 : vector<8x1xi32> to vector<8x384xi32>
    %5 = arith.cmpi eq, %2, %4 : vector<8x384xi32>
    %6 = vector.extract_strided_slice %0 {offsets = [0, 1], sizes = [8, 1], strides = [1, 1]} : vector<8x16xi32> to vector<8x1xi32>
    %7 = vector.broadcast %6 : vector<8x1xi32> to vector<8x384xi32>
    %8 = arith.cmpi eq, %2, %7 : vector<8x384xi32>
    %9 = arith.ori %5, %8 : vector<8x384xi1>
    %10 = vector.extract_strided_slice %0 {offsets = [0, 2], sizes = [8, 1], strides = [1, 1]} : vector<8x16xi32> to vector<8x1xi32>
    %11 = vector.broadcast %10 : vector<8x1xi32> to vector<8x384xi32>
    %12 = arith.cmpi eq, %2, %11 : vector<8x384xi32>
    %13 = arith.ori %9, %12 : vector<8x384xi1>
    %14 = vector.extract_strided_slice %0 {offsets = [0, 3], sizes = [8, 1], strides = [1, 1]} : vector<8x16xi32> to vector<8x1xi32>
    %15 = vector.broadcast %14 : vector<8x1xi32> to vector<8x384xi32>
    %16 = arith.cmpi eq, %2, %15 : vector<8x384xi32>
    %17 = arith.ori %13, %16 : vector<8x384xi1>
    %18 = vector.extract_strided_slice %0 {offsets = [0, 4], sizes = [8, 1], strides = [1, 1]} : vector<8x16xi32> to vector<8x1xi32>
    %19 = vector.broadcast %18 : vector<8x1xi32> to vector<8x384xi32>
    %20 = arith.cmpi eq, %2, %19 : vector<8x384xi32>
    %21 = arith.ori %17, %20 : vector<8x384xi1>
    %22 = vector.extract_strided_slice %0 {offsets = [0, 5], sizes = [8, 1], strides = [1, 1]} : vector<8x16xi32> to vector<8x1xi32>
    %23 = vector.broadcast %22 : vector<8x1xi32> to vector<8x384xi32>
    %24 = arith.cmpi eq, %2, %23 : vector<8x384xi32>
    %25 = arith.ori %21, %24 : vector<8x384xi1>
    %26 = vector.extract_strided_slice %0 {offsets = [0, 6], sizes = [8, 1], strides = [1, 1]} : vector<8x16xi32> to vector<8x1xi32>
    %27 = vector.broadcast %26 : vector<8x1xi32> to vector<8x384xi32>
    %28 = arith.cmpi eq, %2, %27 : vector<8x384xi32>
    %29 = arith.ori %25, %28 : vector<8x384xi1>
    %30 = vector.extract_strided_slice %0 {offsets = [0, 7], sizes = [8, 1], strides = [1, 1]} : vector<8x16xi32> to vector<8x1xi32>
    %31 = vector.broadcast %30 : vector<8x1xi32> to vector<8x384xi32>
    %32 = arith.cmpi eq, %2, %31 : vector<8x384xi32>
    %33 = arith.ori %29, %32 : vector<8x384xi1>
    %34 = vector.extract_strided_slice %0 {offsets = [0, 8], sizes = [8, 1], strides = [1, 1]} : vector<8x16xi32> to vector<8x1xi32>
    %35 = vector.broadcast %34 : vector<8x1xi32> to vector<8x384xi32>
    %36 = arith.cmpi eq, %2, %35 : vector<8x384xi32>
    %37 = arith.ori %33, %36 : vector<8x384xi1>
    %38 = vector.extract_strided_slice %0 {offsets = [0, 9], sizes = [8, 1], strides = [1, 1]} : vector<8x16xi32> to vector<8x1xi32>
    %39 = vector.broadcast %38 : vector<8x1xi32> to vector<8x384xi32>
    %40 = arith.cmpi eq, %2, %39 : vector<8x384xi32>
    %41 = arith.ori %37, %40 : vector<8x384xi1>
    %42 = vector.extract_strided_slice %0 {offsets = [0, 10], sizes = [8, 1], strides = [1, 1]} : vector<8x16xi32> to vector<8x1xi32>
    %43 = vector.broadcast %42 : vector<8x1xi32> to vector<8x384xi32>
    %44 = arith.cmpi eq, %2, %43 : vector<8x384xi32>
    %45 = arith.ori %41, %44 : vector<8x384xi1>
    %46 = vector.extract_strided_slice %0 {offsets = [0, 11], sizes = [8, 1], strides = [1, 1]} : vector<8x16xi32> to vector<8x1xi32>
    %47 = vector.broadcast %46 : vector<8x1xi32> to vector<8x384xi32>
    %48 = arith.cmpi eq, %2, %47 : vector<8x384xi32>
    %49 = arith.ori %45, %48 : vector<8x384xi1>
    %50 = vector.extract_strided_slice %0 {offsets = [0, 12], sizes = [8, 1], strides = [1, 1]} : vector<8x16xi32> to vector<8x1xi32>
    %51 = vector.broadcast %50 : vector<8x1xi32> to vector<8x384xi32>
    %52 = arith.cmpi eq, %2, %51 : vector<8x384xi32>
    %53 = arith.ori %49, %52 : vector<8x384xi1>
    %54 = vector.extract_strided_slice %0 {offsets = [0, 13], sizes = [8, 1], strides = [1, 1]} : vector<8x16xi32> to vector<8x1xi32>
    %55 = vector.broadcast %54 : vector<8x1xi32> to vector<8x384xi32>
    %56 = arith.cmpi eq, %2, %55 : vector<8x384xi32>
    %57 = arith.ori %53, %56 : vector<8x384xi1>
    %58 = vector.extract_strided_slice %0 {offsets = [0, 14], sizes = [8, 1], strides = [1, 1]} : vector<8x16xi32> to vector<8x1xi32>
    %59 = vector.broadcast %58 : vector<8x1xi32> to vector<8x384xi32>
    %60 = arith.cmpi eq, %2, %59 : vector<8x384xi32>
    %61 = arith.ori %57, %60 : vector<8x384xi1>
    %62 = arith.extui %61 : vector<8x384xi1> to vector<8x384xi32>
    %63 = arith.sitofp %62 : vector<8x384xi32> to vector<8x384xf32>
    %c0_3 = arith.constant 0 : index
    %c0_4 = arith.constant 0 : index
    %64 = vector.load %arg2[%c0_3, %c0_4] : memref<384x32xf32, #tpu.memory_space<vmem>>, vector<384x32xf32>
    %cst = arith.constant dense<0.000000e+00> : vector<8x32xf32>
    %65 = tpu.matmul %63, %64, %cst {dimension_numbers = #tpu.dot_dimension_numbers<[1], [0], [0], [1], [0, 0, 1, 1], [], []>} : vector<8x384xf32>, vector<384x32xf32>, vector<8x32xf32> -> vector<8x32xf32>
    %66 = vector.extract_strided_slice %1 {offsets = [0, 0], sizes = [1, 32], strides = [1, 1]} : vector<17x32xf32> to vector<1x32xf32>
    %67 = vector.broadcast %66 : vector<1x32xf32> to vector<8x32xf32>
    %68 = arith.addf %65, %67 : vector<8x32xf32>
    %69 = vector.extract_strided_slice %1 {offsets = [1, 0], sizes = [1, 32], strides = [1, 1]} : vector<17x32xf32> to vector<1x32xf32>
    %70 = vector.extract_strided_slice %1 {offsets = [2, 0], sizes = [1, 32], strides = [1, 1]} : vector<17x32xf32> to vector<1x32xf32>
    %cst_5 = arith.constant dense<0.000000e+00> : vector<8xf32>
    %71 = vector.multi_reduction <add>, %68, %cst_5 [1] : vector<8x32xf32> to vector<8xf32>
    %72 = vector.shape_cast %71 : vector<8xf32> to vector<8x1xf32>
    %cst_6 = arith.constant 3.200000e+01 : f32
    %73 = vector.broadcast %cst_6 : f32 to vector<8x1xf32>
    %74 = arith.divf %72, %73 : vector<8x1xf32>
    %75 = vector.broadcast %74 : vector<8x1xf32> to vector<8x32xf32>
    %76 = arith.subf %68, %75 : vector<8x32xf32>
    %77 = arith.mulf %76, %76 : vector<8x32xf32>
    %cst_7 = arith.constant dense<0.000000e+00> : vector<8xf32>
    %78 = vector.multi_reduction <add>, %77, %cst_7 [1] : vector<8x32xf32> to vector<8xf32>
    %79 = vector.shape_cast %78 : vector<8xf32> to vector<8x1xf32>
    %cst_8 = arith.constant 0.0322580636 : f32
    %80 = vector.broadcast %cst_8 : f32 to vector<8x1xf32>
    %81 = arith.mulf %79, %80 : vector<8x1xf32>
    %82 = math.sqrt %81 : vector<8x1xf32>
    %cst_9 = arith.constant 9.99999997E-7 : f32
    %83 = vector.broadcast %cst_9 : f32 to vector<8x1xf32>
    %84 = arith.addf %82, %83 : vector<8x1xf32>
    %85 = tpu.reciprocal %84 : vector<8x1xf32> -> vector<8x1xf32>
    %86 = vector.broadcast %85 : vector<8x1xf32> to vector<8x32xf32>
    %87 = arith.mulf %76, %86 : vector<8x32xf32>
    %88 = vector.broadcast %69 : vector<1x32xf32> to vector<8x32xf32>
    %89 = arith.mulf %88, %87 : vector<8x32xf32>
    %90 = vector.broadcast %70 : vector<1x32xf32> to vector<8x32xf32>
    %91 = arith.addf %89, %90 : vector<8x32xf32>
    %c0_10 = arith.constant 0 : index
    %c0_11 = arith.constant 0 : index
    %92 = vector.load %arg4[%c0_10, %c0_11] : memref<8x32xf32, #tpu.memory_space<vmem>>, vector<8x32xf32>
    %93 = arith.addf %91, %92 : vector<8x32xf32>
    %94 = vector.extract_strided_slice %1 {offsets = [3, 0], sizes = [1, 32], strides = [1, 1]} : vector<17x32xf32> to vector<1x32xf32>
    %95 = vector.extract_strided_slice %1 {offsets = [4, 0], sizes = [1, 32], strides = [1, 1]} : vector<17x32xf32> to vector<1x32xf32>
    %96 = vector.extract_strided_slice %1 {offsets = [5, 0], sizes = [1, 32], strides = [1, 1]} : vector<17x32xf32> to vector<1x32xf32>
    %97 = vector.extract_strided_slice %1 {offsets = [6, 0], sizes = [1, 32], strides = [1, 1]} : vector<17x32xf32> to vector<1x32xf32>
    %98 = vector.extract_strided_slice %1 {offsets = [7, 0], sizes = [1, 32], strides = [1, 1]} : vector<17x32xf32> to vector<1x32xf32>
    %99 = vector.extract_strided_slice %1 {offsets = [8, 0], sizes = [1, 32], strides = [1, 1]} : vector<17x32xf32> to vector<1x32xf32>
    %cst_12 = arith.constant dense<0.000000e+00> : vector<8xf32>
    %100 = vector.multi_reduction <add>, %93, %cst_12 [1] : vector<8x32xf32> to vector<8xf32>
    %101 = vector.shape_cast %100 : vector<8xf32> to vector<8x1xf32>
    %cst_13 = arith.constant 3.200000e+01 : f32
    %102 = vector.broadcast %cst_13 : f32 to vector<8x1xf32>
    %103 = arith.divf %101, %102 : vector<8x1xf32>
    %104 = vector.broadcast %103 : vector<8x1xf32> to vector<8x32xf32>
    %105 = arith.subf %93, %104 : vector<8x32xf32>
    %106 = arith.mulf %105, %105 : vector<8x32xf32>
    %cst_14 = arith.constant dense<0.000000e+00> : vector<8xf32>
    %107 = vector.multi_reduction <add>, %106, %cst_14 [1] : vector<8x32xf32> to vector<8xf32>
    %108 = vector.shape_cast %107 : vector<8xf32> to vector<8x1xf32>
    %cst_15 = arith.constant 0.0322580636 : f32
    %109 = vector.broadcast %cst_15 : f32 to vector<8x1xf32>
    %110 = arith.mulf %108, %109 : vector<8x1xf32>
    %111 = math.sqrt %110 : vector<8x1xf32>
    %cst_16 = arith.constant 9.99999997E-7 : f32
    %112 = vector.broadcast %cst_16 : f32 to vector<8x1xf32>
    %113 = arith.addf %111, %112 : vector<8x1xf32>
    %114 = tpu.reciprocal %113 : vector<8x1xf32> -> vector<8x1xf32>
    %115 = vector.broadcast %114 : vector<8x1xf32> to vector<8x32xf32>
    %116 = arith.mulf %105, %115 : vector<8x32xf32>
    %117 = vector.broadcast %94 : vector<1x32xf32> to vector<8x32xf32>
    %118 = arith.mulf %117, %116 : vector<8x32xf32>
    %119 = vector.broadcast %95 : vector<1x32xf32> to vector<8x32xf32>
    %120 = arith.addf %118, %119 : vector<8x32xf32>
    %c0_17 = arith.constant 0 : index
    %c0_18 = arith.constant 0 : index
    %c0_19 = arith.constant 0 : index
    %121 = vector.load %arg6[%c0_17, %c0_18, %c0_19] : memref<2x32x96xf32, #tpu.memory_space<vmem>>, vector<1x32x96xf32>
    %122 = vector.shape_cast %121 : vector<1x32x96xf32> to vector<32x96xf32>
    %cst_20 = arith.constant dense<0.000000e+00> : vector<8x96xf32>
    %123 = tpu.matmul %120, %122, %cst_20 {dimension_numbers = #tpu.dot_dimension_numbers<[1], [0], [0], [1], [0, 0, 1, 1], [], []>} : vector<8x32xf32>, vector<32x96xf32>, vector<8x96xf32> -> vector<8x96xf32>
    %c0_21 = arith.constant 0 : index
    %c0_22 = arith.constant 0 : index
    %c0_23 = arith.constant 0 : index
    %124 = vector.load %arg7[%c0_21, %c0_22, %c0_23] : memref<2x1x96xf32, #tpu.memory_space<vmem>>, vector<1x1x96xf32>
    %125 = vector.shape_cast %124 : vector<1x1x96xf32> to vector<1x96xf32>
    %126 = vector.broadcast %125 : vector<1x96xf32> to vector<8x96xf32>
    %127 = arith.addf %123, %126 : vector<8x96xf32>
    %c0_24 = arith.constant 0 : index
    %c0_25 = arith.constant 0 : index
    %c0_26 = arith.constant 0 : index
    %128 = vector.load %arg8[%c0_24, %c0_25, %c0_26] : memref<2x32x32xf32, #tpu.memory_space<vmem>>, vector<1x32x32xf32>
    %129 = vector.shape_cast %128 : vector<1x32x32xf32> to vector<32x32xf32>
    %cst_27 = arith.constant 0.000000e+00 : f32
    %130 = vector.broadcast %cst_27 : f32 to vector<8x32xf32>
    %131 = vector.extract_strided_slice %127 {offsets = [0, 0], sizes = [8, 8], strides = [1, 1]} : vector<8x96xf32> to vector<8x8xf32>
    %132 = vector.extract_strided_slice %127 {offsets = [0, 32], sizes = [8, 8], strides = [1, 1]} : vector<8x96xf32> to vector<8x8xf32>
    %133 = vector.extract_strided_slice %127 {offsets = [0, 64], sizes = [8, 8], strides = [1, 1]} : vector<8x96xf32> to vector<8x8xf32>
    %cst_28 = arith.constant dense<0.000000e+00> : vector<8x8xf32>
    %134 = tpu.matmul %131, %132, %cst_28 {dimension_numbers = #tpu.dot_dimension_numbers<[1], [1], [0], [0], [0, 0, 1, 0], [], []>} : vector<8x8xf32>, vector<8x8xf32>, vector<8x8xf32> -> vector<8x8xf32>
    %cst_29 = arith.constant dense<0xFF800000> : vector<8xf32>
    %135 = vector.multi_reduction <maximumf>, %134, %cst_29 [1] : vector<8x8xf32> to vector<8xf32>
    %136 = vector.shape_cast %135 : vector<8xf32> to vector<8x1xf32>
    %137 = vector.broadcast %136 : vector<8x1xf32> to vector<8x8xf32>
    %138 = arith.subf %134, %137 : vector<8x8xf32>
    %139 = math.exp %138 : vector<8x8xf32>
    %cst_30 = arith.constant dense<0.000000e+00> : vector<8xf32>
    %140 = vector.multi_reduction <add>, %139, %cst_30 [1] : vector<8x8xf32> to vector<8xf32>
    %141 = vector.shape_cast %140 : vector<8xf32> to vector<8x1xf32>
    %142 = tpu.reciprocal %141 {approx = true} : vector<8x1xf32> -> vector<8x1xf32>
    %143 = vector.broadcast %142 : vector<8x1xf32> to vector<8x8xf32>
    %144 = arith.mulf %139, %143 : vector<8x8xf32>
    %cst_31 = arith.constant dense<0.000000e+00> : vector<8x8xf32>
    %145 = tpu.matmul %144, %133, %cst_31 {dimension_numbers = #tpu.dot_dimension_numbers<[1], [0], [0], [1], [0, 0, 1, 1], [], []>} : vector<8x8xf32>, vector<8x8xf32>, vector<8x8xf32> -> vector<8x8xf32>
    %146 = vector.extract_strided_slice %129 {offsets = [0, 0], sizes = [8, 32], strides = [1, 1]} : vector<32x32xf32> to vector<8x32xf32>
    %cst_32 = arith.constant dense<0.000000e+00> : vector<8x32xf32>
    %147 = tpu.matmul %145, %146, %cst_32 {dimension_numbers = #tpu.dot_dimension_numbers<[1], [0], [0], [1], [0, 0, 1, 1], [], []>} : vector<8x8xf32>, vector<8x32xf32>, vector<8x32xf32> -> vector<8x32xf32>
    %148 = arith.addf %130, %147 : vector<8x32xf32>
    %149 = vector.extract_strided_slice %127 {offsets = [0, 8], sizes = [8, 8], strides = [1, 1]} : vector<8x96xf32> to vector<8x8xf32>
    %150 = vector.extract_strided_slice %127 {offsets = [0, 40], sizes = [8, 8], strides = [1, 1]} : vector<8x96xf32> to vector<8x8xf32>
    %151 = vector.extract_strided_slice %127 {offsets = [0, 72], sizes = [8, 8], strides = [1, 1]} : vector<8x96xf32> to vector<8x8xf32>
    %cst_33 = arith.constant dense<0.000000e+00> : vector<8x8xf32>
    %152 = tpu.matmul %149, %150, %cst_33 {dimension_numbers = #tpu.dot_dimension_numbers<[1], [1], [0], [0], [0, 0, 1, 0], [], []>} : vector<8x8xf32>, vector<8x8xf32>, vector<8x8xf32> -> vector<8x8xf32>
    %cst_34 = arith.constant dense<0xFF800000> : vector<8xf32>
    %153 = vector.multi_reduction <maximumf>, %152, %cst_34 [1] : vector<8x8xf32> to vector<8xf32>
    %154 = vector.shape_cast %153 : vector<8xf32> to vector<8x1xf32>
    %155 = vector.broadcast %154 : vector<8x1xf32> to vector<8x8xf32>
    %156 = arith.subf %152, %155 : vector<8x8xf32>
    %157 = math.exp %156 : vector<8x8xf32>
    %cst_35 = arith.constant dense<0.000000e+00> : vector<8xf32>
    %158 = vector.multi_reduction <add>, %157, %cst_35 [1] : vector<8x8xf32> to vector<8xf32>
    %159 = vector.shape_cast %158 : vector<8xf32> to vector<8x1xf32>
    %160 = tpu.reciprocal %159 {approx = true} : vector<8x1xf32> -> vector<8x1xf32>
    %161 = vector.broadcast %160 : vector<8x1xf32> to vector<8x8xf32>
    %162 = arith.mulf %157, %161 : vector<8x8xf32>
    %cst_36 = arith.constant dense<0.000000e+00> : vector<8x8xf32>
    %163 = tpu.matmul %162, %151, %cst_36 {dimension_numbers = #tpu.dot_dimension_numbers<[1], [0], [0], [1], [0, 0, 1, 1], [], []>} : vector<8x8xf32>, vector<8x8xf32>, vector<8x8xf32> -> vector<8x8xf32>
    %164 = vector.extract_strided_slice %129 {offsets = [8, 0], sizes = [8, 32], strides = [1, 1]} : vector<32x32xf32> to vector<8x32xf32>
    %cst_37 = arith.constant dense<0.000000e+00> : vector<8x32xf32>
    %165 = tpu.matmul %163, %164, %cst_37 {dimension_numbers = #tpu.dot_dimension_numbers<[1], [0], [0], [1], [0, 0, 1, 1], [], []>} : vector<8x8xf32>, vector<8x32xf32>, vector<8x32xf32> -> vector<8x32xf32>
    %166 = arith.addf %148, %165 : vector<8x32xf32>
    %167 = vector.extract_strided_slice %127 {offsets = [0, 16], sizes = [8, 8], strides = [1, 1]} : vector<8x96xf32> to vector<8x8xf32>
    %168 = vector.extract_strided_slice %127 {offsets = [0, 48], sizes = [8, 8], strides = [1, 1]} : vector<8x96xf32> to vector<8x8xf32>
    %169 = vector.extract_strided_slice %127 {offsets = [0, 80], sizes = [8, 8], strides = [1, 1]} : vector<8x96xf32> to vector<8x8xf32>
    %cst_38 = arith.constant dense<0.000000e+00> : vector<8x8xf32>
    %170 = tpu.matmul %167, %168, %cst_38 {dimension_numbers = #tpu.dot_dimension_numbers<[1], [1], [0], [0], [0, 0, 1, 0], [], []>} : vector<8x8xf32>, vector<8x8xf32>, vector<8x8xf32> -> vector<8x8xf32>
    %cst_39 = arith.constant dense<0xFF800000> : vector<8xf32>
    %171 = vector.multi_reduction <maximumf>, %170, %cst_39 [1] : vector<8x8xf32> to vector<8xf32>
    %172 = vector.shape_cast %171 : vector<8xf32> to vector<8x1xf32>
    %173 = vector.broadcast %172 : vector<8x1xf32> to vector<8x8xf32>
    %174 = arith.subf %170, %173 : vector<8x8xf32>
    %175 = math.exp %174 : vector<8x8xf32>
    %cst_40 = arith.constant dense<0.000000e+00> : vector<8xf32>
    %176 = vector.multi_reduction <add>, %175, %cst_40 [1] : vector<8x8xf32> to vector<8xf32>
    %177 = vector.shape_cast %176 : vector<8xf32> to vector<8x1xf32>
    %178 = tpu.reciprocal %177 {approx = true} : vector<8x1xf32> -> vector<8x1xf32>
    %179 = vector.broadcast %178 : vector<8x1xf32> to vector<8x8xf32>
    %180 = arith.mulf %175, %179 : vector<8x8xf32>
    %cst_41 = arith.constant dense<0.000000e+00> : vector<8x8xf32>
    %181 = tpu.matmul %180, %169, %cst_41 {dimension_numbers = #tpu.dot_dimension_numbers<[1], [0], [0], [1], [0, 0, 1, 1], [], []>} : vector<8x8xf32>, vector<8x8xf32>, vector<8x8xf32> -> vector<8x8xf32>
    %182 = vector.extract_strided_slice %129 {offsets = [16, 0], sizes = [8, 32], strides = [1, 1]} : vector<32x32xf32> to vector<8x32xf32>
    %cst_42 = arith.constant dense<0.000000e+00> : vector<8x32xf32>
    %183 = tpu.matmul %181, %182, %cst_42 {dimension_numbers = #tpu.dot_dimension_numbers<[1], [0], [0], [1], [0, 0, 1, 1], [], []>} : vector<8x8xf32>, vector<8x32xf32>, vector<8x32xf32> -> vector<8x32xf32>
    %184 = arith.addf %166, %183 : vector<8x32xf32>
    %185 = vector.extract_strided_slice %127 {offsets = [0, 24], sizes = [8, 8], strides = [1, 1]} : vector<8x96xf32> to vector<8x8xf32>
    %186 = vector.extract_strided_slice %127 {offsets = [0, 56], sizes = [8, 8], strides = [1, 1]} : vector<8x96xf32> to vector<8x8xf32>
    %187 = vector.extract_strided_slice %127 {offsets = [0, 88], sizes = [8, 8], strides = [1, 1]} : vector<8x96xf32> to vector<8x8xf32>
    %cst_43 = arith.constant dense<0.000000e+00> : vector<8x8xf32>
    %188 = tpu.matmul %185, %186, %cst_43 {dimension_numbers = #tpu.dot_dimension_numbers<[1], [1], [0], [0], [0, 0, 1, 0], [], []>} : vector<8x8xf32>, vector<8x8xf32>, vector<8x8xf32> -> vector<8x8xf32>
    %cst_44 = arith.constant dense<0xFF800000> : vector<8xf32>
    %189 = vector.multi_reduction <maximumf>, %188, %cst_44 [1] : vector<8x8xf32> to vector<8xf32>
    %190 = vector.shape_cast %189 : vector<8xf32> to vector<8x1xf32>
    %191 = vector.broadcast %190 : vector<8x1xf32> to vector<8x8xf32>
    %192 = arith.subf %188, %191 : vector<8x8xf32>
    %193 = math.exp %192 : vector<8x8xf32>
    %cst_45 = arith.constant dense<0.000000e+00> : vector<8xf32>
    %194 = vector.multi_reduction <add>, %193, %cst_45 [1] : vector<8x8xf32> to vector<8xf32>
    %195 = vector.shape_cast %194 : vector<8xf32> to vector<8x1xf32>
    %196 = tpu.reciprocal %195 {approx = true} : vector<8x1xf32> -> vector<8x1xf32>
    %197 = vector.broadcast %196 : vector<8x1xf32> to vector<8x8xf32>
    %198 = arith.mulf %193, %197 : vector<8x8xf32>
    %cst_46 = arith.constant dense<0.000000e+00> : vector<8x8xf32>
    %199 = tpu.matmul %198, %187, %cst_46 {dimension_numbers = #tpu.dot_dimension_numbers<[1], [0], [0], [1], [0, 0, 1, 1], [], []>} : vector<8x8xf32>, vector<8x8xf32>, vector<8x8xf32> -> vector<8x8xf32>
    %200 = vector.extract_strided_slice %129 {offsets = [24, 0], sizes = [8, 32], strides = [1, 1]} : vector<32x32xf32> to vector<8x32xf32>
    %cst_47 = arith.constant dense<0.000000e+00> : vector<8x32xf32>
    %201 = tpu.matmul %199, %200, %cst_47 {dimension_numbers = #tpu.dot_dimension_numbers<[1], [0], [0], [1], [0, 0, 1, 1], [], []>} : vector<8x8xf32>, vector<8x32xf32>, vector<8x32xf32> -> vector<8x32xf32>
    %202 = arith.addf %184, %201 : vector<8x32xf32>
    %203 = arith.addf %93, %202 : vector<8x32xf32>
    %204 = vector.broadcast %96 : vector<1x32xf32> to vector<8x32xf32>
    %205 = arith.addf %203, %204 : vector<8x32xf32>
    %cst_48 = arith.constant dense<0.000000e+00> : vector<8xf32>
    %206 = vector.multi_reduction <add>, %205, %cst_48 [1] : vector<8x32xf32> to vector<8xf32>
    %207 = vector.shape_cast %206 : vector<8xf32> to vector<8x1xf32>
    %cst_49 = arith.constant 3.200000e+01 : f32
    %208 = vector.broadcast %cst_49 : f32 to vector<8x1xf32>
    %209 = arith.divf %207, %208 : vector<8x1xf32>
    %210 = vector.broadcast %209 : vector<8x1xf32> to vector<8x32xf32>
    %211 = arith.subf %205, %210 : vector<8x32xf32>
    %212 = arith.mulf %211, %211 : vector<8x32xf32>
    %cst_50 = arith.constant dense<0.000000e+00> : vector<8xf32>
    %213 = vector.multi_reduction <add>, %212, %cst_50 [1] : vector<8x32xf32> to vector<8xf32>
    %214 = vector.shape_cast %213 : vector<8xf32> to vector<8x1xf32>
    %cst_51 = arith.constant 0.0322580636 : f32
    %215 = vector.broadcast %cst_51 : f32 to vector<8x1xf32>
    %216 = arith.mulf %214, %215 : vector<8x1xf32>
    %217 = math.sqrt %216 : vector<8x1xf32>
    %cst_52 = arith.constant 9.99999997E-7 : f32
    %218 = vector.broadcast %cst_52 : f32 to vector<8x1xf32>
    %219 = arith.addf %217, %218 : vector<8x1xf32>
    %220 = tpu.reciprocal %219 : vector<8x1xf32> -> vector<8x1xf32>
    %221 = vector.broadcast %220 : vector<8x1xf32> to vector<8x32xf32>
    %222 = arith.mulf %211, %221 : vector<8x32xf32>
    %223 = vector.broadcast %97 : vector<1x32xf32> to vector<8x32xf32>
    %224 = arith.mulf %223, %222 : vector<8x32xf32>
    %225 = vector.broadcast %98 : vector<1x32xf32> to vector<8x32xf32>
    %226 = arith.addf %224, %225 : vector<8x32xf32>
    %227 = arith.truncf %226 : vector<8x32xf32> to vector<8x32xbf16>
    %c0_53 = arith.constant 0 : index
    %c0_54 = arith.constant 0 : index
    %c0_55 = arith.constant 0 : index
    %228 = vector.load %arg9[%c0_53, %c0_54, %c0_55] : memref<2x32x2048xbf16, #tpu.memory_space<vmem>>, vector<1x32x2048xbf16>
    %229 = vector.shape_cast %228 : vector<1x32x2048xbf16> to vector<32x2048xbf16>
    %cst_56 = arith.constant dense<0.000000e+00> : vector<8x2048xf32>
    %230 = tpu.matmul %227, %229, %cst_56 {dimension_numbers = #tpu.dot_dimension_numbers<[1], [0], [0], [1], [0, 0, 1, 1], [], []>} : vector<8x32xbf16>, vector<32x2048xbf16>, vector<8x2048xf32> -> vector<8x2048xf32>
    %c0_57 = arith.constant 0 : index
    %c0_58 = arith.constant 0 : index
    %c0_59 = arith.constant 0 : index
    %231 = vector.load %arg10[%c0_57, %c0_58, %c0_59] : memref<2x1x2048xf32, #tpu.memory_space<vmem>>, vector<1x1x2048xf32>
    %232 = vector.shape_cast %231 : vector<1x1x2048xf32> to vector<1x2048xf32>
    %233 = vector.broadcast %232 : vector<1x2048xf32> to vector<8x2048xf32>
    %234 = arith.addf %230, %233 : vector<8x2048xf32>
    %cst_60 = arith.constant 0.000000e+00 : f32
    %235 = vector.broadcast %cst_60 : f32 to vector<8x2048xf32>
    %236 = arith.maximumf %234, %235 : vector<8x2048xf32>
    %237 = arith.truncf %236 : vector<8x2048xf32> to vector<8x2048xbf16>
    %c0_61 = arith.constant 0 : index
    %c0_62 = arith.constant 0 : index
    %c0_63 = arith.constant 0 : index
    %238 = vector.load %arg11[%c0_61, %c0_62, %c0_63] : memref<2x2048x32xbf16, #tpu.memory_space<vmem>>, vector<1x2048x32xbf16>
    %239 = vector.shape_cast %238 : vector<1x2048x32xbf16> to vector<2048x32xbf16>
    %cst_64 = arith.constant dense<0.000000e+00> : vector<8x32xf32>
    %240 = tpu.matmul %237, %239, %cst_64 {dimension_numbers = #tpu.dot_dimension_numbers<[1], [0], [0], [1], [0, 0, 1, 1], [], []>} : vector<8x2048xbf16>, vector<2048x32xbf16>, vector<8x32xf32> -> vector<8x32xf32>
    %241 = arith.addf %205, %240 : vector<8x32xf32>
    %242 = vector.broadcast %99 : vector<1x32xf32> to vector<8x32xf32>
    %243 = arith.addf %241, %242 : vector<8x32xf32>
    %244 = vector.extract_strided_slice %1 {offsets = [9, 0], sizes = [1, 32], strides = [1, 1]} : vector<17x32xf32> to vector<1x32xf32>
    %245 = vector.extract_strided_slice %1 {offsets = [10, 0], sizes = [1, 32], strides = [1, 1]} : vector<17x32xf32> to vector<1x32xf32>
    %246 = vector.extract_strided_slice %1 {offsets = [11, 0], sizes = [1, 32], strides = [1, 1]} : vector<17x32xf32> to vector<1x32xf32>
    %247 = vector.extract_strided_slice %1 {offsets = [12, 0], sizes = [1, 32], strides = [1, 1]} : vector<17x32xf32> to vector<1x32xf32>
    %248 = vector.extract_strided_slice %1 {offsets = [13, 0], sizes = [1, 32], strides = [1, 1]} : vector<17x32xf32> to vector<1x32xf32>
    %249 = vector.extract_strided_slice %1 {offsets = [14, 0], sizes = [1, 32], strides = [1, 1]} : vector<17x32xf32> to vector<1x32xf32>
    %cst_65 = arith.constant dense<0.000000e+00> : vector<8xf32>
    %250 = vector.multi_reduction <add>, %243, %cst_65 [1] : vector<8x32xf32> to vector<8xf32>
    %251 = vector.shape_cast %250 : vector<8xf32> to vector<8x1xf32>
    %cst_66 = arith.constant 3.200000e+01 : f32
    %252 = vector.broadcast %cst_66 : f32 to vector<8x1xf32>
    %253 = arith.divf %251, %252 : vector<8x1xf32>
    %254 = vector.broadcast %253 : vector<8x1xf32> to vector<8x32xf32>
    %255 = arith.subf %243, %254 : vector<8x32xf32>
    %256 = arith.mulf %255, %255 : vector<8x32xf32>
    %cst_67 = arith.constant dense<0.000000e+00> : vector<8xf32>
    %257 = vector.multi_reduction <add>, %256, %cst_67 [1] : vector<8x32xf32> to vector<8xf32>
    %258 = vector.shape_cast %257 : vector<8xf32> to vector<8x1xf32>
    %cst_68 = arith.constant 0.0322580636 : f32
    %259 = vector.broadcast %cst_68 : f32 to vector<8x1xf32>
    %260 = arith.mulf %258, %259 : vector<8x1xf32>
    %261 = math.sqrt %260 : vector<8x1xf32>
    %cst_69 = arith.constant 9.99999997E-7 : f32
    %262 = vector.broadcast %cst_69 : f32 to vector<8x1xf32>
    %263 = arith.addf %261, %262 : vector<8x1xf32>
    %264 = tpu.reciprocal %263 : vector<8x1xf32> -> vector<8x1xf32>
    %265 = vector.broadcast %264 : vector<8x1xf32> to vector<8x32xf32>
    %266 = arith.mulf %255, %265 : vector<8x32xf32>
    %267 = vector.broadcast %244 : vector<1x32xf32> to vector<8x32xf32>
    %268 = arith.mulf %267, %266 : vector<8x32xf32>
    %269 = vector.broadcast %245 : vector<1x32xf32> to vector<8x32xf32>
    %270 = arith.addf %268, %269 : vector<8x32xf32>
    %c1 = arith.constant 1 : index
    %c0_70 = arith.constant 0 : index
    %c0_71 = arith.constant 0 : index
    %271 = vector.load %arg6[%c1, %c0_70, %c0_71] : memref<2x32x96xf32, #tpu.memory_space<vmem>>, vector<1x32x96xf32>
    %272 = vector.shape_cast %271 : vector<1x32x96xf32> to vector<32x96xf32>
    %cst_72 = arith.constant dense<0.000000e+00> : vector<8x96xf32>
    %273 = tpu.matmul %270, %272, %cst_72 {dimension_numbers = #tpu.dot_dimension_numbers<[1], [0], [0], [1], [0, 0, 1, 1], [], []>} : vector<8x32xf32>, vector<32x96xf32>, vector<8x96xf32> -> vector<8x96xf32>
    %c1_73 = arith.constant 1 : index
    %c0_74 = arith.constant 0 : index
    %c0_75 = arith.constant 0 : index
    %274 = vector.load %arg7[%c1_73, %c0_74, %c0_75] : memref<2x1x96xf32, #tpu.memory_space<vmem>>, vector<1x1x96xf32>
    %275 = vector.shape_cast %274 : vector<1x1x96xf32> to vector<1x96xf32>
    %276 = vector.broadcast %275 : vector<1x96xf32> to vector<8x96xf32>
    %277 = arith.addf %273, %276 : vector<8x96xf32>
    %c1_76 = arith.constant 1 : index
    %c0_77 = arith.constant 0 : index
    %c0_78 = arith.constant 0 : index
    %278 = vector.load %arg8[%c1_76, %c0_77, %c0_78] : memref<2x32x32xf32, #tpu.memory_space<vmem>>, vector<1x32x32xf32>
    %279 = vector.shape_cast %278 : vector<1x32x32xf32> to vector<32x32xf32>
    %cst_79 = arith.constant 0.000000e+00 : f32
    %280 = vector.broadcast %cst_79 : f32 to vector<8x32xf32>
    %281 = vector.extract_strided_slice %277 {offsets = [0, 0], sizes = [8, 8], strides = [1, 1]} : vector<8x96xf32> to vector<8x8xf32>
    %282 = vector.extract_strided_slice %277 {offsets = [0, 32], sizes = [8, 8], strides = [1, 1]} : vector<8x96xf32> to vector<8x8xf32>
    %283 = vector.extract_strided_slice %277 {offsets = [0, 64], sizes = [8, 8], strides = [1, 1]} : vector<8x96xf32> to vector<8x8xf32>
    %cst_80 = arith.constant dense<0.000000e+00> : vector<8x8xf32>
    %284 = tpu.matmul %281, %282, %cst_80 {dimension_numbers = #tpu.dot_dimension_numbers<[1], [1], [0], [0], [0, 0, 1, 0], [], []>} : vector<8x8xf32>, vector<8x8xf32>, vector<8x8xf32> -> vector<8x8xf32>
    %cst_81 = arith.constant dense<0xFF800000> : vector<8xf32>
    %285 = vector.multi_reduction <maximumf>, %284, %cst_81 [1] : vector<8x8xf32> to vector<8xf32>
    %286 = vector.shape_cast %285 : vector<8xf32> to vector<8x1xf32>
    %287 = vector.broadcast %286 : vector<8x1xf32> to vector<8x8xf32>
    %288 = arith.subf %284, %287 : vector<8x8xf32>
    %289 = math.exp %288 : vector<8x8xf32>
    %cst_82 = arith.constant dense<0.000000e+00> : vector<8xf32>
    %290 = vector.multi_reduction <add>, %289, %cst_82 [1] : vector<8x8xf32> to vector<8xf32>
    %291 = vector.shape_cast %290 : vector<8xf32> to vector<8x1xf32>
    %292 = tpu.reciprocal %291 {approx = true} : vector<8x1xf32> -> vector<8x1xf32>
    %293 = vector.broadcast %292 : vector<8x1xf32> to vector<8x8xf32>
    %294 = arith.mulf %289, %293 : vector<8x8xf32>
    %cst_83 = arith.constant dense<0.000000e+00> : vector<8x8xf32>
    %295 = tpu.matmul %294, %283, %cst_83 {dimension_numbers = #tpu.dot_dimension_numbers<[1], [0], [0], [1], [0, 0, 1, 1], [], []>} : vector<8x8xf32>, vector<8x8xf32>, vector<8x8xf32> -> vector<8x8xf32>
    %296 = vector.extract_strided_slice %279 {offsets = [0, 0], sizes = [8, 32], strides = [1, 1]} : vector<32x32xf32> to vector<8x32xf32>
    %cst_84 = arith.constant dense<0.000000e+00> : vector<8x32xf32>
    %297 = tpu.matmul %295, %296, %cst_84 {dimension_numbers = #tpu.dot_dimension_numbers<[1], [0], [0], [1], [0, 0, 1, 1], [], []>} : vector<8x8xf32>, vector<8x32xf32>, vector<8x32xf32> -> vector<8x32xf32>
    %298 = arith.addf %280, %297 : vector<8x32xf32>
    %299 = vector.extract_strided_slice %277 {offsets = [0, 8], sizes = [8, 8], strides = [1, 1]} : vector<8x96xf32> to vector<8x8xf32>
    %300 = vector.extract_strided_slice %277 {offsets = [0, 40], sizes = [8, 8], strides = [1, 1]} : vector<8x96xf32> to vector<8x8xf32>
    %301 = vector.extract_strided_slice %277 {offsets = [0, 72], sizes = [8, 8], strides = [1, 1]} : vector<8x96xf32> to vector<8x8xf32>
    %cst_85 = arith.constant dense<0.000000e+00> : vector<8x8xf32>
    %302 = tpu.matmul %299, %300, %cst_85 {dimension_numbers = #tpu.dot_dimension_numbers<[1], [1], [0], [0], [0, 0, 1, 0], [], []>} : vector<8x8xf32>, vector<8x8xf32>, vector<8x8xf32> -> vector<8x8xf32>
    %cst_86 = arith.constant dense<0xFF800000> : vector<8xf32>
    %303 = vector.multi_reduction <maximumf>, %302, %cst_86 [1] : vector<8x8xf32> to vector<8xf32>
    %304 = vector.shape_cast %303 : vector<8xf32> to vector<8x1xf32>
    %305 = vector.broadcast %304 : vector<8x1xf32> to vector<8x8xf32>
    %306 = arith.subf %302, %305 : vector<8x8xf32>
    %307 = math.exp %306 : vector<8x8xf32>
    %cst_87 = arith.constant dense<0.000000e+00> : vector<8xf32>
    %308 = vector.multi_reduction <add>, %307, %cst_87 [1] : vector<8x8xf32> to vector<8xf32>
    %309 = vector.shape_cast %308 : vector<8xf32> to vector<8x1xf32>
    %310 = tpu.reciprocal %309 {approx = true} : vector<8x1xf32> -> vector<8x1xf32>
    %311 = vector.broadcast %310 : vector<8x1xf32> to vector<8x8xf32>
    %312 = arith.mulf %307, %311 : vector<8x8xf32>
    %cst_88 = arith.constant dense<0.000000e+00> : vector<8x8xf32>
    %313 = tpu.matmul %312, %301, %cst_88 {dimension_numbers = #tpu.dot_dimension_numbers<[1], [0], [0], [1], [0, 0, 1, 1], [], []>} : vector<8x8xf32>, vector<8x8xf32>, vector<8x8xf32> -> vector<8x8xf32>
    %314 = vector.extract_strided_slice %279 {offsets = [8, 0], sizes = [8, 32], strides = [1, 1]} : vector<32x32xf32> to vector<8x32xf32>
    %cst_89 = arith.constant dense<0.000000e+00> : vector<8x32xf32>
    %315 = tpu.matmul %313, %314, %cst_89 {dimension_numbers = #tpu.dot_dimension_numbers<[1], [0], [0], [1], [0, 0, 1, 1], [], []>} : vector<8x8xf32>, vector<8x32xf32>, vector<8x32xf32> -> vector<8x32xf32>
    %316 = arith.addf %298, %315 : vector<8x32xf32>
    %317 = vector.extract_strided_slice %277 {offsets = [0, 16], sizes = [8, 8], strides = [1, 1]} : vector<8x96xf32> to vector<8x8xf32>
    %318 = vector.extract_strided_slice %277 {offsets = [0, 48], sizes = [8, 8], strides = [1, 1]} : vector<8x96xf32> to vector<8x8xf32>
    %319 = vector.extract_strided_slice %277 {offsets = [0, 80], sizes = [8, 8], strides = [1, 1]} : vector<8x96xf32> to vector<8x8xf32>
    %cst_90 = arith.constant dense<0.000000e+00> : vector<8x8xf32>
    %320 = tpu.matmul %317, %318, %cst_90 {dimension_numbers = #tpu.dot_dimension_numbers<[1], [1], [0], [0], [0, 0, 1, 0], [], []>} : vector<8x8xf32>, vector<8x8xf32>, vector<8x8xf32> -> vector<8x8xf32>
    %cst_91 = arith.constant dense<0xFF800000> : vector<8xf32>
    %321 = vector.multi_reduction <maximumf>, %320, %cst_91 [1] : vector<8x8xf32> to vector<8xf32>
    %322 = vector.shape_cast %321 : vector<8xf32> to vector<8x1xf32>
    %323 = vector.broadcast %322 : vector<8x1xf32> to vector<8x8xf32>
    %324 = arith.subf %320, %323 : vector<8x8xf32>
    %325 = math.exp %324 : vector<8x8xf32>
    %cst_92 = arith.constant dense<0.000000e+00> : vector<8xf32>
    %326 = vector.multi_reduction <add>, %325, %cst_92 [1] : vector<8x8xf32> to vector<8xf32>
    %327 = vector.shape_cast %326 : vector<8xf32> to vector<8x1xf32>
    %328 = tpu.reciprocal %327 {approx = true} : vector<8x1xf32> -> vector<8x1xf32>
    %329 = vector.broadcast %328 : vector<8x1xf32> to vector<8x8xf32>
    %330 = arith.mulf %325, %329 : vector<8x8xf32>
    %cst_93 = arith.constant dense<0.000000e+00> : vector<8x8xf32>
    %331 = tpu.matmul %330, %319, %cst_93 {dimension_numbers = #tpu.dot_dimension_numbers<[1], [0], [0], [1], [0, 0, 1, 1], [], []>} : vector<8x8xf32>, vector<8x8xf32>, vector<8x8xf32> -> vector<8x8xf32>
    %332 = vector.extract_strided_slice %279 {offsets = [16, 0], sizes = [8, 32], strides = [1, 1]} : vector<32x32xf32> to vector<8x32xf32>
    %cst_94 = arith.constant dense<0.000000e+00> : vector<8x32xf32>
    %333 = tpu.matmul %331, %332, %cst_94 {dimension_numbers = #tpu.dot_dimension_numbers<[1], [0], [0], [1], [0, 0, 1, 1], [], []>} : vector<8x8xf32>, vector<8x32xf32>, vector<8x32xf32> -> vector<8x32xf32>
    %334 = arith.addf %316, %333 : vector<8x32xf32>
    %335 = vector.extract_strided_slice %277 {offsets = [0, 24], sizes = [8, 8], strides = [1, 1]} : vector<8x96xf32> to vector<8x8xf32>
    %336 = vector.extract_strided_slice %277 {offsets = [0, 56], sizes = [8, 8], strides = [1, 1]} : vector<8x96xf32> to vector<8x8xf32>
    %337 = vector.extract_strided_slice %277 {offsets = [0, 88], sizes = [8, 8], strides = [1, 1]} : vector<8x96xf32> to vector<8x8xf32>
    %cst_95 = arith.constant dense<0.000000e+00> : vector<8x8xf32>
    %338 = tpu.matmul %335, %336, %cst_95 {dimension_numbers = #tpu.dot_dimension_numbers<[1], [1], [0], [0], [0, 0, 1, 0], [], []>} : vector<8x8xf32>, vector<8x8xf32>, vector<8x8xf32> -> vector<8x8xf32>
    %cst_96 = arith.constant dense<0xFF800000> : vector<8xf32>
    %339 = vector.multi_reduction <maximumf>, %338, %cst_96 [1] : vector<8x8xf32> to vector<8xf32>
    %340 = vector.shape_cast %339 : vector<8xf32> to vector<8x1xf32>
    %341 = vector.broadcast %340 : vector<8x1xf32> to vector<8x8xf32>
    %342 = arith.subf %338, %341 : vector<8x8xf32>
    %343 = math.exp %342 : vector<8x8xf32>
    %cst_97 = arith.constant dense<0.000000e+00> : vector<8xf32>
    %344 = vector.multi_reduction <add>, %343, %cst_97 [1] : vector<8x8xf32> to vector<8xf32>
    %345 = vector.shape_cast %344 : vector<8xf32> to vector<8x1xf32>
    %346 = tpu.reciprocal %345 {approx = true} : vector<8x1xf32> -> vector<8x1xf32>
    %347 = vector.broadcast %346 : vector<8x1xf32> to vector<8x8xf32>
    %348 = arith.mulf %343, %347 : vector<8x8xf32>
    %cst_98 = arith.constant dense<0.000000e+00> : vector<8x8xf32>
    %349 = tpu.matmul %348, %337, %cst_98 {dimension_numbers = #tpu.dot_dimension_numbers<[1], [0], [0], [1], [0, 0, 1, 1], [], []>} : vector<8x8xf32>, vector<8x8xf32>, vector<8x8xf32> -> vector<8x8xf32>
    %350 = vector.extract_strided_slice %279 {offsets = [24, 0], sizes = [8, 32], strides = [1, 1]} : vector<32x32xf32> to vector<8x32xf32>
    %cst_99 = arith.constant dense<0.000000e+00> : vector<8x32xf32>
    %351 = tpu.matmul %349, %350, %cst_99 {dimension_numbers = #tpu.dot_dimension_numbers<[1], [0], [0], [1], [0, 0, 1, 1], [], []>} : vector<8x8xf32>, vector<8x32xf32>, vector<8x32xf32> -> vector<8x32xf32>
    %352 = arith.addf %334, %351 : vector<8x32xf32>
    %353 = arith.addf %243, %352 : vector<8x32xf32>
    %354 = vector.broadcast %246 : vector<1x32xf32> to vector<8x32xf32>
    %355 = arith.addf %353, %354 : vector<8x32xf32>
    %cst_100 = arith.constant dense<0.000000e+00> : vector<8xf32>
    %356 = vector.multi_reduction <add>, %355, %cst_100 [1] : vector<8x32xf32> to vector<8xf32>
    %357 = vector.shape_cast %356 : vector<8xf32> to vector<8x1xf32>
    %cst_101 = arith.constant 3.200000e+01 : f32
    %358 = vector.broadcast %cst_101 : f32 to vector<8x1xf32>
    %359 = arith.divf %357, %358 : vector<8x1xf32>
    %360 = vector.broadcast %359 : vector<8x1xf32> to vector<8x32xf32>
    %361 = arith.subf %355, %360 : vector<8x32xf32>
    %362 = arith.mulf %361, %361 : vector<8x32xf32>
    %cst_102 = arith.constant dense<0.000000e+00> : vector<8xf32>
    %363 = vector.multi_reduction <add>, %362, %cst_102 [1] : vector<8x32xf32> to vector<8xf32>
    %364 = vector.shape_cast %363 : vector<8xf32> to vector<8x1xf32>
    %cst_103 = arith.constant 0.0322580636 : f32
    %365 = vector.broadcast %cst_103 : f32 to vector<8x1xf32>
    %366 = arith.mulf %364, %365 : vector<8x1xf32>
    %367 = math.sqrt %366 : vector<8x1xf32>
    %cst_104 = arith.constant 9.99999997E-7 : f32
    %368 = vector.broadcast %cst_104 : f32 to vector<8x1xf32>
    %369 = arith.addf %367, %368 : vector<8x1xf32>
    %370 = tpu.reciprocal %369 : vector<8x1xf32> -> vector<8x1xf32>
    %371 = vector.broadcast %370 : vector<8x1xf32> to vector<8x32xf32>
    %372 = arith.mulf %361, %371 : vector<8x32xf32>
    %373 = vector.broadcast %247 : vector<1x32xf32> to vector<8x32xf32>
    %374 = arith.mulf %373, %372 : vector<8x32xf32>
    %375 = vector.broadcast %248 : vector<1x32xf32> to vector<8x32xf32>
    %376 = arith.addf %374, %375 : vector<8x32xf32>
    %377 = arith.truncf %376 : vector<8x32xf32> to vector<8x32xbf16>
    %c1_105 = arith.constant 1 : index
    %c0_106 = arith.constant 0 : index
    %c0_107 = arith.constant 0 : index
    %378 = vector.load %arg9[%c1_105, %c0_106, %c0_107] : memref<2x32x2048xbf16, #tpu.memory_space<vmem>>, vector<1x32x2048xbf16>
    %379 = vector.shape_cast %378 : vector<1x32x2048xbf16> to vector<32x2048xbf16>
    %cst_108 = arith.constant dense<0.000000e+00> : vector<8x2048xf32>
    %380 = tpu.matmul %377, %379, %cst_108 {dimension_numbers = #tpu.dot_dimension_numbers<[1], [0], [0], [1], [0, 0, 1, 1], [], []>} : vector<8x32xbf16>, vector<32x2048xbf16>, vector<8x2048xf32> -> vector<8x2048xf32>
    %c1_109 = arith.constant 1 : index
    %c0_110 = arith.constant 0 : index
    %c0_111 = arith.constant 0 : index
    %381 = vector.load %arg10[%c1_109, %c0_110, %c0_111] : memref<2x1x2048xf32, #tpu.memory_space<vmem>>, vector<1x1x2048xf32>
    %382 = vector.shape_cast %381 : vector<1x1x2048xf32> to vector<1x2048xf32>
    %383 = vector.broadcast %382 : vector<1x2048xf32> to vector<8x2048xf32>
    %384 = arith.addf %380, %383 : vector<8x2048xf32>
    %cst_112 = arith.constant 0.000000e+00 : f32
    %385 = vector.broadcast %cst_112 : f32 to vector<8x2048xf32>
    %386 = arith.maximumf %384, %385 : vector<8x2048xf32>
    %387 = arith.truncf %386 : vector<8x2048xf32> to vector<8x2048xbf16>
    %c1_113 = arith.constant 1 : index
    %c0_114 = arith.constant 0 : index
    %c0_115 = arith.constant 0 : index
    %388 = vector.load %arg11[%c1_113, %c0_114, %c0_115] : memref<2x2048x32xbf16, #tpu.memory_space<vmem>>, vector<1x2048x32xbf16>
    %389 = vector.shape_cast %388 : vector<1x2048x32xbf16> to vector<2048x32xbf16>
    %cst_116 = arith.constant dense<0.000000e+00> : vector<8x32xf32>
    %390 = tpu.matmul %387, %389, %cst_116 {dimension_numbers = #tpu.dot_dimension_numbers<[1], [0], [0], [1], [0, 0, 1, 1], [], []>} : vector<8x2048xbf16>, vector<2048x32xbf16>, vector<8x32xf32> -> vector<8x32xf32>
    %391 = arith.addf %355, %390 : vector<8x32xf32>
    %392 = vector.broadcast %249 : vector<1x32xf32> to vector<8x32xf32>
    %393 = arith.addf %391, %392 : vector<8x32xf32>
    %394 = vector.extract_strided_slice %1 {offsets = [15, 0], sizes = [1, 32], strides = [1, 1]} : vector<17x32xf32> to vector<1x32xf32>
    %395 = vector.extract_strided_slice %1 {offsets = [16, 0], sizes = [1, 32], strides = [1, 1]} : vector<17x32xf32> to vector<1x32xf32>
    %cst_117 = arith.constant dense<0.000000e+00> : vector<8xf32>
    %396 = vector.multi_reduction <add>, %393, %cst_117 [1] : vector<8x32xf32> to vector<8xf32>
    %397 = vector.shape_cast %396 : vector<8xf32> to vector<8x1xf32>
    %cst_118 = arith.constant 3.200000e+01 : f32
    %398 = vector.broadcast %cst_118 : f32 to vector<8x1xf32>
    %399 = arith.divf %397, %398 : vector<8x1xf32>
    %400 = vector.broadcast %399 : vector<8x1xf32> to vector<8x32xf32>
    %401 = arith.subf %393, %400 : vector<8x32xf32>
    %402 = arith.mulf %401, %401 : vector<8x32xf32>
    %cst_119 = arith.constant dense<0.000000e+00> : vector<8xf32>
    %403 = vector.multi_reduction <add>, %402, %cst_119 [1] : vector<8x32xf32> to vector<8xf32>
    %404 = vector.shape_cast %403 : vector<8xf32> to vector<8x1xf32>
    %cst_120 = arith.constant 0.0322580636 : f32
    %405 = vector.broadcast %cst_120 : f32 to vector<8x1xf32>
    %406 = arith.mulf %404, %405 : vector<8x1xf32>
    %407 = math.sqrt %406 : vector<8x1xf32>
    %cst_121 = arith.constant 9.99999997E-7 : f32
    %408 = vector.broadcast %cst_121 : f32 to vector<8x1xf32>
    %409 = arith.addf %407, %408 : vector<8x1xf32>
    %410 = tpu.reciprocal %409 : vector<8x1xf32> -> vector<8x1xf32>
    %411 = vector.broadcast %410 : vector<8x1xf32> to vector<8x32xf32>
    %412 = arith.mulf %401, %411 : vector<8x32xf32>
    %413 = vector.broadcast %394 : vector<1x32xf32> to vector<8x32xf32>
    %414 = arith.mulf %413, %412 : vector<8x32xf32>
    %415 = vector.broadcast %395 : vector<1x32xf32> to vector<8x32xf32>
    %416 = arith.addf %414, %415 : vector<8x32xf32>
    %c0_122 = arith.constant 0 : index
    %c0_123 = arith.constant 0 : index
    %417 = vector.load %arg12[%c0_122, %c0_123] : memref<8x32xf32, #tpu.memory_space<vmem>>, vector<8x32xf32>
    tpu.vector_store %arg12[%c0_122, %c0_123], %416 {strides = array<i32>} : memref<8x32xf32, #tpu.memory_space<vmem>>, vector<8x32xf32>,
    return
  }
  func.func @transform_0(%arg0: i32) -> (i32, i32) {
    %c0_i32 = arith.constant 0 : i32
    %c0_i32_0 = arith.constant 0 : i32
    return %arg0, %c0_i32 : i32, i32
  }
  func.func @transform_1(%arg0: i32) -> (i32, i32) {
    %c0_i32 = arith.constant 0 : i32
    %c0_i32_0 = arith.constant 0 : i32
    %c0_i32_1 = arith.constant 0 : i32
    return %c0_i32, %c0_i32_0 : i32, i32
  }
  func.func @transform_2(%arg0: i32) -> (i32, i32) {
    %c0_i32 = arith.constant 0 : i32
    %c0_i32_0 = arith.constant 0 : i32
    %c0_i32_1 = arith.constant 0 : i32
    return %c0_i32, %c0_i32_0 : i32, i32
  }
  func.func @transform_3(%arg0: i32) -> (i32, i32) {
    %c0_i32 = arith.constant 0 : i32
    %c0_i32_0 = arith.constant 0 : i32
    %c0_i32_1 = arith.constant 0 : i32
    return %c0_i32, %c0_i32_0 : i32, i32
  }
  func.func @transform_4(%arg0: i32) -> (i32, i32) {
    %c0_i32 = arith.constant 0 : i32
    %c0_i32_0 = arith.constant 0 : i32
    %c0_i32_1 = arith.constant 0 : i32
    return %c0_i32, %c0_i32_0 : i32, i32
  }
  func.func @transform_5(%arg0: i32) -> (i32, i32, i32) {
    %c0_i32 = arith.constant 0 : i32
    %c0_i32_0 = arith.constant 0 : i32
    %c0_i32_1 = arith.constant 0 : i32
    %c0_i32_2 = arith.constant 0 : i32
    return %c0_i32, %c0_i32_0, %c0_i32_1 : i32, i32, i32
  }
  func.func @transform_6(%arg0: i32) -> (i32, i32, i32) {
    %c0_i32 = arith.constant 0 : i32
    %c0_i32_0 = arith.constant 0 : i32
    %c0_i32_1 = arith.constant 0 : i32
    %c0_i32_2 = arith.constant 0 : i32
    return %c0_i32, %c0_i32_0, %c0_i32_1 : i32, i32, i32
  }
  func.func @transform_7(%arg0: i32) -> (i32, i32, i32) {
    %c0_i32 = arith.constant 0 : i32
    %c0_i32_0 = arith.constant 0 : i32
    %c0_i32_1 = arith.constant 0 : i32
    %c0_i32_2 = arith.constant 0 : i32
    return %c0_i32, %c0_i32_0, %c0_i32_1 : i32, i32, i32
  }
  func.func @transform_8(%arg0: i32) -> (i32, i32, i32) {
    %c0_i32 = arith.constant 0 : i32
    %c0_i32_0 = arith.constant 0 : i32
    %c0_i32_1 = arith.constant 0 : i32
    %c0_i32_2 = arith.constant 0 : i32
    return %c0_i32, %c0_i32_0, %c0_i32_1 : i32, i32, i32
  }
  func.func @transform_9(%arg0: i32) -> (i32, i32, i32) {
    %c0_i32 = arith.constant 0 : i32
    %c0_i32_0 = arith.constant 0 : i32
    %c0_i32_1 = arith.constant 0 : i32
    %c0_i32_2 = arith.constant 0 : i32
    return %c0_i32, %c0_i32_0, %c0_i32_1 : i32, i32, i32
  }
  func.func @transform_10(%arg0: i32) -> (i32, i32, i32) {
    %c0_i32 = arith.constant 0 : i32
    %c0_i32_0 = arith.constant 0 : i32
    %c0_i32_1 = arith.constant 0 : i32
    %c0_i32_2 = arith.constant 0 : i32
    return %c0_i32, %c0_i32_0, %c0_i32_1 : i32, i32, i32
  }
  func.func @transform_11(%arg0: i32) -> (i32, i32) {
    %c0_i32 = arith.constant 0 : i32
    %c0_i32_0 = arith.constant 0 : i32
    return %arg0, %c0_i32 : i32, i32
  }
}

</mosaic_0001>

<llo_original>
// kernel: tpu_custom_call.1
$region0: #{tpu_custom_call.1}
  #allocation0 [shape = 'u32[]', space=smem, size = 0x4, offset = 0x4, fixed_abs, tag = 'smem constant byte address 0x4 - core index']
  #allocation1 [shape = 'u32[144,128]{1,0:T(1,128)}', space=vmem, size = 0x12000, scoped, tag = 'internal scratch']
  %s0 = inlined_call_operand.vmem [shape: s32[16,16], index: 0, kind: input, shape index: {}]
  %s1 = inlined_call_operand.vmem [shape: f32[384,32], index: 1, kind: input, shape index: {}]
  %s2 = inlined_call_operand.vmem [shape: f32[17,32], index: 2, kind: input, shape index: {}]
  %s3 = inlined_call_operand.vmem [shape: f32[8,32], index: 3, kind: input, shape index: {}]
  %s4 = inlined_call_operand.vmem [shape: f32[8,8], index: 4, kind: input, shape index: {}]
  %s5 = inlined_call_operand.vmem [shape: f32[2,32,96], index: 5, kind: input, shape index: {}]
  %s6 = inlined_call_operand.vmem [shape: f32[2,1,96], index: 6, kind: input, shape index: {}]
  %s7 = inlined_call_operand.vmem [shape: f32[2,32,32], index: 7, kind: input, shape index: {}]
  %s8 = inlined_call_operand.vmem [shape: bf16[2,32,2048], index: 8, kind: input, shape index: {}]
  %s9 = inlined_call_operand.vmem [shape: f32[2,1,2048], index: 9, kind: input, shape index: {}]
  %s10 = inlined_call_operand.vmem [shape: bf16[2,2048,32], index: 10, kind: input, shape index: {}]
  %s11 = inlined_call_operand.hbm [shape: f32[16,32], index: 11, kind: output, shape index: {}]
  %s12 = sld [smem:[#allocation0]]
  $region77: #{tpu_custom_call.1} parent=0
    _
  %s14 = ssub.s32 1, %s12
  %s15 = scalar_select 0, %s14, %s12
  $region1: #{tpu_custom_call.1} parent=0
    #allocation2 [shape = 'u8[8192]{0}', space=vmem, size = 0x2000, scoped, tag = 'output window, operand 0']
    #allocation3 [shape = 's32[2]{0}', space=sflag, size = 0x8, scoped, tag = 'scoped memory for tpu_custom_call.1']
    %16 = vsyncpa [#allocation3], 0
    %s17 = scalar_lea.sflag [#allocation3], 1
    %18 = vsyncpa %s17, 0
    loop: start=0, step=1, limit=4
    $region2: #{tpu_custom_call.1} parent=1 // loop_pre_header
      _
    $region3: #{tpu_custom_call.1} parent=1 // loop_header
      %s20 = sphi 0, %s24
      %p21 = scmp.ge.s32.totalorder %s20, 4
      %s30 = sphi 0, %s32
      %s33 = sphi 0, %s30
      %s34 = sphi 0, %s33
      %s50 = sphi 0, %s34
      %s54 = sphi 0, %s54
      %s56 = sphi 0, %s54
      %s57 = sphi 0, %s56
      %s71 = sphi 0, %s57
      %s75 = sphi 0, %s75
      %s77 = sphi 0, %s75
      %s78 = sphi 0, %s77
      %s92 = sphi 0, %s78
      %s96 = sphi 0, %s96
      %s98 = sphi 0, %s96
      %s99 = sphi 0, %s98
      %s113 = sphi 0, %s99
      %s117 = sphi 0, %s117
      %s119 = sphi 0, %s117
      %s120 = sphi 0, %s119
      %s134 = sphi 0, %s120
      %s138 = sphi 0, %s138
      %s140 = sphi 0, %s138
      %s141 = sphi 0, %s140
      %s155 = sphi 0, %s141
      %s159 = sphi 0, %s159
      %s161 = sphi 0, %s159
      %s162 = sphi 0, %s161
      %s176 = sphi 0, %s162
      %s180 = sphi 0, %s180
      %s182 = sphi 0, %s180
      %s183 = sphi 0, %s182
      %s197 = sphi 0, %s183
      %s201 = sphi 0, %s201
      %s203 = sphi 0, %s201
      %s204 = sphi 0, %s203
      %s218 = sphi 0, %s204
      %s222 = sphi 0, %s222
      %s224 = sphi 0, %s222
      %s225 = sphi 0, %s224
      %s239 = sphi 0, %s225
      %s243 = sphi 0, %s243
      %s245 = sphi 0, %s243
      %s246 = sphi 0, %s245
      %s260 = sphi 0, %s246
      %s266 = sphi 0, %s268
      %s269 = sphi 0, %s266
      %s270 = sphi 0, %s269
      %s286 = sphi 0, %s270
    $region4: #{tpu_custom_call.1} parent=1 // loop_header_branch
      %23 = sbr.rel (%p21) target = $region8
    $region5: #{tpu_custom_call.1} parent=1 // loop_body
      %s25 = ssub.s32 %s20, 1
      %s26 = ssub.s32 %s20, 2
      %s27 = sadd.s32 %s20, 1
      %s28 = ssub.s32 %s20, %s27
      %p29 = scmp.eq.s32.totalorder %s28, 0
      %s31 = sadd.s32 %s30, 1
      %s32 = scalar_select %p29, %s30, %s31
      %p35 = pneg %p29
      %p36 = scmp.eq.s32.totalorder %s20, 1
      %p37 = por %p35, %p36
      %p38 = scmp.ne.s32.totalorder %s30, %s33
      %p39 = scmp.eq.s32.totalorder %s20, 0
      %p40 = por %p38, %p39
      %p41 = scmp.ne.s32.totalorder %s30, %s33
      %p42 = scmp.eq.s32.totalorder %s25, 1
      %p43 = por %p41, %p42
      %p44 = scmp.ne.s32.totalorder %s33, %s34
      %p45 = scmp.eq.s32.totalorder %s25, 0
      %p46 = por %p44, %p45
      %p47 = scmp.ne.s32.totalorder %s33, %s34
      %p48 = scmp.eq.s32.totalorder %s26, 1
      %p49 = por %p47, %p48
      %p51 = scmp.ne.s32.totalorder %s34, %s50
      %p52 = scmp.eq.s32.totalorder %s26, 0
      %p53 = por %p51, %p52
      %s55 = sadd.s32 %s54, 1
      %p58 = scmp.eq.s32.totalorder %s20, 1
      %p59 = scmp.ne.s32.totalorder %s54, %s56
      %p60 = scmp.eq.s32.totalorder %s20, 0
      %p61 = por %p59, %p60
      %p62 = scmp.ne.s32.totalorder %s54, %s56
      %p63 = scmp.eq.s32.totalorder %s25, 1
      %p64 = por %p62, %p63
      %p65 = scmp.ne.s32.totalorder %s56, %s57
      %p66 = scmp.eq.s32.totalorder %s25, 0
      %p67 = por %p65, %p66
      %p68 = scmp.ne.s32.totalorder %s56, %s57
      %p69 = scmp.eq.s32.totalorder %s26, 1
      %p70 = por %p68, %p69
      %p72 = scmp.ne.s32.totalorder %s57, %s71
      %p73 = scmp.eq.s32.totalorder %s26, 0
      %p74 = por %p72, %p73
      %s76 = sadd.s32 %s75, 1
      %p79 = scmp.eq.s32.totalorder %s20, 1
      %p80 = scmp.ne.s32.totalorder %s75, %s77
      %p81 = scmp.eq.s32.totalorder %s20, 0
      %p82 = por %p80, %p81
      %p83 = scmp.ne.s32.totalorder %s75, %s77
      %p84 = scmp.eq.s32.totalorder %s25, 1
      %p85 = por %p83, %p84
      %p86 = scmp.ne.s32.totalorder %s77, %s78
      %p87 = scmp.eq.s32.totalorder %s25, 0
      %p88 = por %p86, %p87
      %p89 = scmp.ne.s32.totalorder %s77, %s78
      %p90 = scmp.eq.s32.totalorder %s26, 1
      %p91 = por %p89, %p90
      %p93 = scmp.ne.s32.totalorder %s78, %s92
      %p94 = scmp.eq.s32.totalorder %s26, 0
      %p95 = por %p93, %p94
      %s97 = sadd.s32 %s96, 1
      %p100 = scmp.eq.s32.totalorder %s20, 1
      %p101 = scmp.ne.s32.totalorder %s96, %s98
      %p102 = scmp.eq.s32.totalorder %s20, 0
      %p103 = por %p101, %p102
      %p104 = scmp.ne.s32.totalorder %s96, %s98
      %p105 = scmp.eq.s32.totalorder %s25, 1
      %p106 = por %p104, %p105
      %p107 = scmp.ne.s32.totalorder %s98, %s99
      %p108 = scmp.eq.s32.totalorder %s25, 0
      %p109 = por %p107, %p108
      %p110 = scmp.ne.s32.totalorder %s98, %s99
      %p111 = scmp.eq.s32.totalorder %s26, 1
      %p112 = por %p110, %p111
      %p114 = scmp.ne.s32.totalorder %s99, %s113
      %p115 = scmp.eq.s32.totalorder %s26, 0
      %p116 = por %p114, %p115
      %s118 = sadd.s32 %s117, 1
      %p121 = scmp.eq.s32.totalorder %s20, 1
      %p122 = scmp.ne.s32.totalorder %s117, %s119
      %p123 = scmp.eq.s32.totalorder %s20, 0
      %p124 = por %p122, %p123
      %p125 = scmp.ne.s32.totalorder %s117, %s119
      %p126 = scmp.eq.s32.totalorder %s25, 1
      %p127 = por %p125, %p126
      %p128 = scmp.ne.s32.totalorder %s119, %s120
      %p129 = scmp.eq.s32.totalorder %s25, 0
      %p130 = por %p128, %p129
      %p131 = scmp.ne.s32.totalorder %s119, %s120
      %p132 = scmp.eq.s32.totalorder %s26, 1
      %p133 = por %p131, %p132
      %p135 = scmp.ne.s32.totalorder %s120, %s134
      %p136 = scmp.eq.s32.totalorder %s26, 0
      %p137 = por %p135, %p136
      %s139 = sadd.s32 %s138, 1
      %p142 = scmp.eq.s32.totalorder %s20, 1
      %p143 = scmp.ne.s32.totalorder %s138, %s140
      %p144 = scmp.eq.s32.totalorder %s20, 0
      %p145 = por %p143, %p144
      %p146 = scmp.ne.s32.totalorder %s138, %s140
      %p147 = scmp.eq.s32.totalorder %s25, 1
      %p148 = por %p146, %p147
      %p149 = scmp.ne.s32.totalorder %s140, %s141
      %p150 = scmp.eq.s32.totalorder %s25, 0
      %p151 = por %p149, %p150
      %p152 = scmp.ne.s32.totalorder %s140, %s141
      %p153 = scmp.eq.s32.totalorder %s26, 1
      %p154 = por %p152, %p153
      %p156 = scmp.ne.s32.totalorder %s141, %s155
      %p157 = scmp.eq.s32.totalorder %s26, 0
      %p158 = por %p156, %p157
      %s160 = sadd.s32 %s159, 1
      %p163 = scmp.eq.s32.totalorder %s20, 1
      %p164 = scmp.ne.s32.totalorder %s159, %s161
      %p165 = scmp.eq.s32.totalorder %s20, 0
      %p166 = por %p164, %p165
      %p167 = scmp.ne.s32.totalorder %s159, %s161
      %p168 = scmp.eq.s32.totalorder %s25, 1
      %p169 = por %p167, %p168
      %p170 = scmp.ne.s32.totalorder %s161, %s162
      %p171 = scmp.eq.s32.totalorder %s25, 0
      %p172 = por %p170, %p171
      %p173 = scmp.ne.s32.totalorder %s161, %s162
      %p174 = scmp.eq.s32.totalorder %s26, 1
      %p175 = por %p173, %p174
      %p177 = scmp.ne.s32.totalorder %s162, %s176
      %p178 = scmp.eq.s32.totalorder %s26, 0
      %p179 = por %p177, %p178
      %s181 = sadd.s32 %s180, 1
      %p184 = scmp.eq.s32.totalorder %s20, 1
      %p185 = scmp.ne.s32.totalorder %s180, %s182
      %p186 = scmp.eq.s32.totalorder %s20, 0
      %p187 = por %p185, %p186
      %p188 = scmp.ne.s32.totalorder %s180, %s182
      %p189 = scmp.eq.s32.totalorder %s25, 1
      %p190 = por %p188, %p189
      %p191 = scmp.ne.s32.totalorder %s182, %s183
      %p192 = scmp.eq.s32.totalorder %s25, 0
      %p193 = por %p191, %p192
      %p194 = scmp.ne.s32.totalorder %s182, %s183
      %p195 = scmp.eq.s32.totalorder %s26, 1
      %p196 = por %p194, %p195
      %p198 = scmp.ne.s32.totalorder %s183, %s197
      %p199 = scmp.eq.s32.totalorder %s26, 0
      %p200 = por %p198, %p199
      %s202 = sadd.s32 %s201, 1
      %p205 = scmp.eq.s32.totalorder %s20, 1
      %p206 = scmp.ne.s32.totalorder %s201, %s203
      %p207 = scmp.eq.s32.totalorder %s20, 0
      %p208 = por %p206, %p207
      %p209 = scmp.ne.s32.totalorder %s201, %s203
      %p210 = scmp.eq.s32.totalorder %s25, 1
      %p211 = por %p209, %p210
      %p212 = scmp.ne.s32.totalorder %s203, %s204
      %p213 = scmp.eq.s32.totalorder %s25, 0
      %p214 = por %p212, %p213
      %p215 = scmp.ne.s32.totalorder %s203, %s204
      %p216 = scmp.eq.s32.totalorder %s26, 1
      %p217 = por %p215, %p216
      %p219 = scmp.ne.s32.totalorder %s204, %s218
      %p220 = scmp.eq.s32.totalorder %s26, 0
      %p221 = por %p219, %p220
      %s223 = sadd.s32 %s222, 1
      %p226 = scmp.eq.s32.totalorder %s20, 1
      %p227 = scmp.ne.s32.totalorder %s222, %s224
      %p228 = scmp.eq.s32.totalorder %s20, 0
      %p229 = por %p227, %p228
      %p230 = scmp.ne.s32.totalorder %s222, %s224
      %p231 = scmp.eq.s32.totalorder %s25, 1
      %p232 = por %p230, %p231
      %p233 = scmp.ne.s32.totalorder %s224, %s225
      %p234 = scmp.eq.s32.totalorder %s25, 0
      %p235 = por %p233, %p234
      %p236 = scmp.ne.s32.totalorder %s224, %s225
      %p237 = scmp.eq.s32.totalorder %s26, 1
      %p238 = por %p236, %p237
      %p240 = scmp.ne.s32.totalorder %s225, %s239
      %p241 = scmp.eq.s32.totalorder %s26, 0
      %p242 = por %p240, %p241
      %s244 = sadd.s32 %s243, 1
      %p247 = scmp.eq.s32.totalorder %s20, 1
      %p248 = scmp.ne.s32.totalorder %s243, %s245
      %p249 = scmp.eq.s32.totalorder %s20, 0
      %p250 = por %p248, %p249
      %p251 = scmp.ne.s32.totalorder %s243, %s245
      %p252 = scmp.eq.s32.totalorder %s25, 1
      %p253 = por %p251, %p252
      %p254 = scmp.ne.s32.totalorder %s245, %s246
      %p255 = scmp.eq.s32.totalorder %s25, 0
      %p256 = por %p254, %p255
      %p257 = scmp.ne.s32.totalorder %s245, %s246
      %p258 = scmp.eq.s32.totalorder %s26, 1
      %p259 = por %p257, %p258
      %p261 = scmp.ne.s32.totalorder %s246, %s260
      %p262 = scmp.eq.s32.totalorder %s26, 0
      %p263 = por %p261, %p262
      %s264 = ssub.s32 %s20, %s27
      %p265 = scmp.eq.s32.totalorder %s264, 0
      %s267 = sadd.s32 %s266, 1
      %s268 = scalar_select %p265, %s266, %s267
      %p271 = pneg %p265
      %p272 = scmp.eq.s32.totalorder %s20, 1
      %p273 = por %p271, %p272
      %p274 = scmp.ne.s32.totalorder %s266, %s269
      %p275 = scmp.eq.s32.totalorder %s20, 0
      %p276 = por %p274, %p275
      %p277 = scmp.ne.s32.totalorder %s266, %s269
      %p278 = scmp.eq.s32.totalorder %s25, 1
      %p279 = por %p277, %p278
      %p280 = scmp.ne.s32.totalorder %s269, %s270
      %p281 = scmp.eq.s32.totalorder %s25, 0
      %p282 = por %p280, %p281
      %p283 = scmp.ne.s32.totalorder %s269, %s270
      %p284 = scmp.eq.s32.totalorder %s26, 1
      %p285 = por %p283, %p284
      %p287 = scmp.ne.s32.totalorder %s270, %s286
      %p288 = scmp.eq.s32.totalorder %s26, 0
      %p289 = por %p287, %p288
      %p290 = scmp.le.s32.totalorder 1, %s20
      %p291 = scmp.lt.s32.totalorder %s20, 3
      %p292 = pnand %p290, %p291
      %p293 = pneg %p292
      // Predicated region
      $region9: #{tpu_custom_call.1} parent=5 // pred_check
        _
      $region10: #{tpu_custom_call.1} parent=5 // pred_check_branch
        %295 = sbr.rel (%p292) target = $region12
      $region11: #{tpu_custom_call.1} parent=5 // pred_region
        %s296 = ssub.s32 %s20, 1
        // Predicated region
        $region13: #{tpu_custom_call.1} parent=11 // pred_check
          %p297 = pneg %p67
        $region14: #{tpu_custom_call.1} parent=11 // pred_check_branch
          %299 = sbr.rel (%p297) target = $region16
        $region15: #{tpu_custom_call.1} parent=11 // pred_region
          _
        $region16: #{tpu_custom_call.1} parent=11 // pred_fallthru
          _
        // Predicated region
        $region17: #{tpu_custom_call.1} parent=11 // pred_check
          %p300 = pneg %p88
        $region18: #{tpu_custom_call.1} parent=11 // pred_check_branch
          %302 = sbr.rel (%p300) target = $region20
        $region19: #{tpu_custom_call.1} parent=11 // pred_region
          _
        $region20: #{tpu_custom_call.1} parent=11 // pred_fallthru
          _
        // Predicated region
        $region21: #{tpu_custom_call.1} parent=11 // pred_check
          %p303 = pneg %p109
        $region22: #{tpu_custom_call.1} parent=11 // pred_check_branch
          %305 = sbr.rel (%p303) target = $region24
        $region23: #{tpu_custom_call.1} parent=11 // pred_region
          _
        $region24: #{tpu_custom_call.1} parent=11 // pred_fallthru
          _
        // Predicated region
        $region25: #{tpu_custom_call.1} parent=11 // pred_check
          %p306 = pneg %p130
        $region26: #{tpu_custom_call.1} parent=11 // pred_check_branch
          %308 = sbr.rel (%p306) target = $region28
        $region27: #{tpu_custom_call.1} parent=11 // pred_region
          _
        $region28: #{tpu_custom_call.1} parent=11 // pred_fallthru
          _
        // Predicated region
        $region29: #{tpu_custom_call.1} parent=11 // pred_check
          %p309 = pneg %p151
        $region30: #{tpu_custom_call.1} parent=11 // pred_check_branch
          %311 = sbr.rel (%p309) target = $region32
        $region31: #{tpu_custom_call.1} parent=11 // pred_region
          _
        $region32: #{tpu_custom_call.1} parent=11 // pred_fallthru
          _
        // Predicated region
        $region33: #{tpu_custom_call.1} parent=11 // pred_check
          %p312 = pneg %p172
        $region34: #{tpu_custom_call.1} parent=11 // pred_check_branch
          %314 = sbr.rel (%p312) target = $region36
        $region35: #{tpu_custom_call.1} parent=11 // pred_region
          _
        $region36: #{tpu_custom_call.1} parent=11 // pred_fallthru
          _
        // Predicated region
        $region37: #{tpu_custom_call.1} parent=11 // pred_check
          %p315 = pneg %p193
        $region38: #{tpu_custom_call.1} parent=11 // pred_check_branch
          %317 = sbr.rel (%p315) target = $region40
        $region39: #{tpu_custom_call.1} parent=11 // pred_region
          _
        $region40: #{tpu_custom_call.1} parent=11 // pred_fallthru
          _
        // Predicated region
        $region41: #{tpu_custom_call.1} parent=11 // pred_check
          %p318 = pneg %p214
        $region42: #{tpu_custom_call.1} parent=11 // pred_check_branch
          %320 = sbr.rel (%p318) target = $region44
        $region43: #{tpu_custom_call.1} parent=11 // pred_region
          _
        $region44: #{tpu_custom_call.1} parent=11 // pred_fallthru
          _
        // Predicated region
        $region45: #{tpu_custom_call.1} parent=11 // pred_check
          %p321 = pneg %p235
        $region46: #{tpu_custom_call.1} parent=11 // pred_check_branch
          %323 = sbr.rel (%p321) target = $region48
        $region47: #{tpu_custom_call.1} parent=11 // pred_region
          _
        $region48: #{tpu_custom_call.1} parent=11 // pred_fallthru
          _
        // Predicated region
        $region49: #{tpu_custom_call.1} parent=11 // pred_check
          %p324 = pneg %p256
        $region50: #{tpu_custom_call.1} parent=11 // pred_check_branch
          %326 = sbr.rel (%p324) target = $region52
        $region51: #{tpu_custom_call.1} parent=11 // pred_region
          _
        $region52: #{tpu_custom_call.1} parent=11 // pred_fallthru
          _
      $region12: #{tpu_custom_call.1} parent=5 // pred_fallthru
        _
      %p327 = scmp.lt.s32.totalorder %s20, 2
      // Predicated region
      $region53: #{tpu_custom_call.1} parent=5 // pred_check
        %p328 = pneg %p327
      $region54: #{tpu_custom_call.1} parent=5 // pred_check_branch
        %330 = sbr.rel (%p328) target = $region56
      $region55: #{tpu_custom_call.1} parent=5 // pred_region
        // Predicated region
        $region57: #{tpu_custom_call.1} parent=55 // pred_check
          %p331 = pneg %p40
        $region58: #{tpu_custom_call.1} parent=55 // pred_check_branch
          %333 = sbr.rel (%p331) target = $region60
        $region59: #{tpu_custom_call.1} parent=55 // pred_region
          %p334 = scmp.lt.s32.totalorder %s20, 1
          %s335 = scalar_select %p334, %s20, 1
          %s336 = smul.addr %s335, 8
          %s337 = scalar_lea.vmem %s0, %s336
        $region60: #{tpu_custom_call.1} parent=55 // pred_fallthru
          _
      $region56: #{tpu_custom_call.1} parent=5 // pred_fallthru
        _
      %p338 = scmp.le.s32.totalorder 1, %s20
      %p339 = scmp.lt.s32.totalorder %s20, 3
      %p340 = pnand %p338, %p339
      %p341 = pneg %p340
      // Predicated region
      $region61: #{tpu_custom_call.1} parent=5 // pred_check
        _
      $region62: #{tpu_custom_call.1} parent=5 // pred_check_branch
        %343 = sbr.rel (%p340) target = $region64
      $region63: #{tpu_custom_call.1} parent=5 // pred_region
        %s344 = ssub.s32 %s20, 1
        %p345 = scmp.lt.s32.totalorder %s25, 1
        %s346 = scalar_select %p345, %s25, 1
        %s347 = smul.addr %s346, 8
        %s348 = scalar_lea.vmem %s0, %s347
        %p349 = pneg %p46
        %p350 = pneg %p43
        %p351 = pneg %p67
        %p352 = pneg %p64
        %p353 = pneg %p88
        %p354 = pneg %p85
        %p355 = pneg %p109
        %p356 = pneg %p106
        %p357 = pneg %p130
        %p358 = pneg %p127
        %p359 = pneg %p151
        %p360 = pneg %p148
        %p361 = pneg %p172
        %p362 = pneg %p169
        %p363 = pneg %p193
        %p364 = pneg %p190
        %p365 = pneg %p214
        %p366 = pneg %p211
        %p367 = pneg %p235
        %p368 = pneg %p232
        %p369 = pneg %p256
        %p370 = pneg %p253
        %p371 = pneg %p282
        %p372 = pneg %p279
        %s373 = sand.u32 %s269, 1
        %s374 = scalar_lea.sflag [#allocation3], %s373
        %s375 = sand.u32 %s269, 1
        %s376 = smul.addr %s375, 8
        %s377 = scalar_lea.vmem [#allocation2], %s376
        %p378 = scmp.lt.s32.totalorder %s25, 1
        %s379 = scalar_select %p378, %s25, 1
        %s380 = smul.addr %s379, 8
        %s381 = scalar_lea.vmem %s0, %s380
        %v383 = vld [vmem:[%s381] sm:$0xff]
        %v384 = vld [vmem:[%s2] sm:$0xff]
        %v385 = vld [vmem:[%s2 + $0x8] sm:$0xff]
        %v386 = vld [vmem:[%s2 + $0x10] sm:$0x1]
        %v387 = vlaneseq
        %v388 = vand.u32 %v387, 127
        %v389 = vadd.s32 %v388, 128
        %v390 = vadd.s32 %v388, 256
        %391 = vset.pattern.permute.xlu0 0
        %392 = vperm.xlu0 %391, %v383
        %v393 = vpop.permute.xlu0 %392
        %vm394 = vcmp.eq.s32.totalorder %v388, %v393
        %vm395 = vcmp.eq.s32.totalorder %v389, %v393
        %vm396 = vcmp.eq.s32.totalorder %v390, %v393
        %397 = vset.pattern.permute.xlu0 1
        %398 = vperm.xlu0 %397, %v383
        %v399 = vpop.permute.xlu0 %398
        %vm400 = vcmp.eq.s32.totalorder %v388, %v399
        %vm401 = vcmp.eq.s32.totalorder %v389, %v399
        %vm402 = vcmp.eq.s32.totalorder %v390, %v399
        %vm403 = vmor %vm394, %vm400
        %vm404 = vmor %vm395, %vm401
        %vm405 = vmor %vm396, %vm402
        %406 = vset.pattern.permute.xlu0 2
        %407 = vperm.xlu0 %406, %v383
        %v408 = vpop.permute.xlu0 %407
        %vm409 = vcmp.eq.s32.totalorder %v388, %v408
        %vm410 = vcmp.eq.s32.totalorder %v389, %v408
        %vm411 = vcmp.eq.s32.totalorder %v390, %v408
        %vm412 = vmor %vm403, %vm409
        %vm413 = vmor %vm404, %vm410
        %vm414 = vmor %vm405, %vm411
        %415 = vset.pattern.permute.xlu0 3
        %416 = vperm.xlu0 %415, %v383
        %v417 = vpop.permute.xlu0 %416
        %vm418 = vcmp.eq.s32.totalorder %v388, %v417
        %vm419 = vcmp.eq.s32.totalorder %v389, %v417
        %vm420 = vcmp.eq.s32.totalorder %v390, %v417
        %vm421 = vmor %vm412, %vm418
        %vm422 = vmor %vm413, %vm419
        %vm423 = vmor %vm414, %vm420
        %424 = vset.pattern.permute.xlu0 4
        %425 = vperm.xlu0 %424, %v383
        %v426 = vpop.permute.xlu0 %425
        %vm427 = vcmp.eq.s32.totalorder %v388, %v426
        %vm428 = vcmp.eq.s32.totalorder %v389, %v426
        %vm429 = vcmp.eq.s32.totalorder %v390, %v426
        %vm430 = vmor %vm421, %vm427
        %vm431 = vmor %vm422, %vm428
        %vm432 = vmor %vm423, %vm429
        %433 = vset.pattern.permute.xlu0 5
        %434 = vperm.xlu0 %433, %v383
        %v435 = vpop.permute.xlu0 %434
        %vm436 = vcmp.eq.s32.totalorder %v388, %v435
        %vm437 = vcmp.eq.s32.totalorder %v389, %v435
        %vm438 = vcmp.eq.s32.totalorder %v390, %v435
        %vm439 = vmor %vm430, %vm436
        %vm440 = vmor %vm431, %vm437
        %vm441 = vmor %vm432, %vm438
        %442 = vset.pattern.permute.xlu0 6
        %443 = vperm.xlu0 %442, %v383
        %v444 = vpop.permute.xlu0 %443
        %vm445 = vcmp.eq.s32.totalorder %v388, %v444
        %vm446 = vcmp.eq.s32.totalorder %v389, %v444
        %vm447 = vcmp.eq.s32.totalorder %v390, %v444
        %vm448 = vmor %vm439, %vm445
        %vm449 = vmor %vm440, %vm446
        %vm450 = vmor %vm441, %vm447
        %451 = vset.pattern.permute.xlu0 7
        %452 = vperm.xlu0 %451, %v383
        %v453 = vpop.permute.xlu0 %452
        %vm454 = vcmp.eq.s32.totalorder %v388, %v453
        %vm455 = vcmp.eq.s32.totalorder %v389, %v453
        %vm456 = vcmp.eq.s32.totalorder %v390, %v453
        %vm457 = vmor %vm448, %vm454
        %vm458 = vmor %vm449, %vm455
        %vm459 = vmor %vm450, %vm456
        %460 = vset.pattern.permute.xlu0 8
        %461 = vperm.xlu0 %460, %v383
        %v462 = vpop.permute.xlu0 %461
        %vm463 = vcmp.eq.s32.totalorder %v388, %v462
        %vm464 = vcmp.eq.s32.totalorder %v389, %v462
        %vm465 = vcmp.eq.s32.totalorder %v390, %v462
        %vm466 = vmor %vm457, %vm463
        %vm467 = vmor %vm458, %vm464
        %vm468 = vmor %vm459, %vm465
        %469 = vset.pattern.permute.xlu0 9
        %470 = vperm.xlu0 %469, %v383
        %v471 = vpop.permute.xlu0 %470
        %vm472 = vcmp.eq.s32.totalorder %v388, %v471
        %vm473 = vcmp.eq.s32.totalorder %v389, %v471
        %vm474 = vcmp.eq.s32.totalorder %v390, %v471
        %vm475 = vmor %vm466, %vm472
        %vm476 = vmor %vm467, %vm473
        %vm477 = vmor %vm468, %vm474
        %478 = vset.pattern.permute.xlu0 10
        %479 = vperm.xlu0 %478, %v383
        %v480 = vpop.permute.xlu0 %479
        %vm481 = vcmp.eq.s32.totalorder %v388, %v480
        %vm482 = vcmp.eq.s32.totalorder %v389, %v480
        %vm483 = vcmp.eq.s32.totalorder %v390, %v480
        %vm484 = vmor %vm475, %vm481
        %vm485 = vmor %vm476, %vm482
        %vm486 = vmor %vm477, %vm483
        %487 = vset.pattern.permute.xlu0 11
        %488 = vperm.xlu0 %487, %v383
        %v489 = vpop.permute.xlu0 %488
        %vm490 = vcmp.eq.s32.totalorder %v388, %v489
        %vm491 = vcmp.eq.s32.totalorder %v389, %v489
        %vm492 = vcmp.eq.s32.totalorder %v390, %v489
        %vm493 = vmor %vm484, %vm490
        %vm494 = vmor %vm485, %vm491
        %vm495 = vmor %vm486, %vm492
        %496 = vset.pattern.permute.xlu0 12
        %497 = vperm.xlu0 %496, %v383
        %v498 = vpop.permute.xlu0 %497
        %vm499 = vcmp.eq.s32.totalorder %v388, %v498
        %vm500 = vcmp.eq.s32.totalorder %v389, %v498
        %vm501 = vcmp.eq.s32.totalorder %v390, %v498
        %vm502 = vmor %vm493, %vm499
        %vm503 = vmor %vm494, %vm500
        %vm504 = vmor %vm495, %vm501
        %505 = vset.pattern.permute.xlu0 13
        %506 = vperm.xlu0 %505, %v383
        %v507 = vpop.permute.xlu0 %506
        %vm508 = vcmp.eq.s32.totalorder %v388, %v507
        %vm509 = vcmp.eq.s32.totalorder %v389, %v507
        %vm510 = vcmp.eq.s32.totalorder %v390, %v507
        %vm511 = vmor %vm502, %vm508
        %vm512 = vmor %vm503, %vm509
        %vm513 = vmor %vm504, %vm510
        %514 = vset.pattern.permute.xlu0 14
        %515 = vperm.xlu0 %514, %v383
        %v516 = vpop.permute.xlu0 %515
        %vm517 = vcmp.eq.s32.totalorder %v388, %v516
        %vm518 = vcmp.eq.s32.totalorder %v389, %v516
        %vm519 = vcmp.eq.s32.totalorder %v390, %v516
        %vm520 = vmor %vm511, %vm517
        %vm521 = vmor %vm512, %vm518
        %vm522 = vmor %vm513, %vm519
        %v523 = vsel %vm520, 1, 0
        %v524 = vsel %vm521, 1, 0
        %v525 = vsel %vm522, 1, 0
        %v526 = vcvt.s32.f32 %v523
        %v527 = vcvt.s32.f32 %v524
        %v528 = vcvt.s32.f32 %v525
        %v529 = vld [vmem:[%s1] sm:$0xff]
        %v530 = vld [vmem:[%s1 + $0x8] sm:$0xff]
        %v531 = vld [vmem:[%s1 + $0x10] sm:$0xff]
        %v532 = vld [vmem:[%s1 + $0x18] sm:$0xff]
        %v533 = vld [vmem:[%s1 + $0x20] sm:$0xff]
        %v534 = vld [vmem:[%s1 + $0x28] sm:$0xff]
        %v535 = vld [vmem:[%s1 + $0x30] sm:$0xff]
        %v536 = vld [vmem:[%s1 + $0x38] sm:$0xff]
        %v537 = vld [vmem:[%s1 + $0x40] sm:$0xff]
        %v538 = vld [vmem:[%s1 + $0x48] sm:$0xff]
        %v539 = vld [vmem:[%s1 + $0x50] sm:$0xff]
        %v540 = vld [vmem:[%s1 + $0x58] sm:$0xff]
        %v541 = vld [vmem:[%s1 + $0x60] sm:$0xff]
        %v542 = vld [vmem:[%s1 + $0x68] sm:$0xff]
        %v543 = vld [vmem:[%s1 + $0x70] sm:$0xff]
        %v544 = vld [vmem:[%s1 + $0x78] sm:$0xff]
        %v545 = vld [vmem:[%s1 + $0x80] sm:$0xff]
        %v546 = vld [vmem:[%s1 + $0x88] sm:$0xff]
        %v547 = vld [vmem:[%s1 + $0x90] sm:$0xff]
        %v548 = vld [vmem:[%s1 + $0x98] sm:$0xff]
        %v549 = vld [vmem:[%s1 + $0xa0] sm:$0xff]
        %v550 = vld [vmem:[%s1 + $0xa8] sm:$0xff]
        %v551 = vld [vmem:[%s1 + $0xb0] sm:$0xff]
        %v552 = vld [vmem:[%s1 + $0xb8] sm:$0xff]
        %v553 = vld [vmem:[%s1 + $0xc0] sm:$0xff]
        %v554 = vld [vmem:[%s1 + $0xc8] sm:$0xff]
        %v555 = vld [vmem:[%s1 + $0xd0] sm:$0xff]
        %v556 = vld [vmem:[%s1 + $0xd8] sm:$0xff]
        %v557 = vld [vmem:[%s1 + $0xe0] sm:$0xff]
        %v558 = vld [vmem:[%s1 + $0xe8] sm:$0xff]
        %v559 = vld [vmem:[%s1 + $0xf0] sm:$0xff]
        %v560 = vld [vmem:[%s1 + $0xf8] sm:$0xff]
        %v561 = vld [vmem:[%s1 + $0x100] sm:$0xff]
        %v562 = vld [vmem:[%s1 + $0x108] sm:$0xff]
        %v563 = vld [vmem:[%s1 + $0x110] sm:$0xff]
        %v564 = vld [vmem:[%s1 + $0x118] sm:$0xff]
        %v565 = vld [vmem:[%s1 + $0x120] sm:$0xff]
        %v566 = vld [vmem:[%s1 + $0x128] sm:$0xff]
        %v567 = vld [vmem:[%s1 + $0x130] sm:$0xff]
        %v568 = vld [vmem:[%s1 + $0x138] sm:$0xff]
        %v569 = vld [vmem:[%s1 + $0x140] sm:$0xff]
        %v570 = vld [vmem:[%s1 + $0x148] sm:$0xff]
        %v571 = vld [vmem:[%s1 + $0x150] sm:$0xff]
        %v572 = vld [vmem:[%s1 + $0x158] sm:$0xff]
        %v573 = vld [vmem:[%s1 + $0x160] sm:$0xff]
        %v574 = vld [vmem:[%s1 + $0x168] sm:$0xff]
        %v575 = vld [vmem:[%s1 + $0x170] sm:$0xff]
        %v576 = vld [vmem:[%s1 + $0x178] sm:$0xff]
        %v577 = vlaneseq
        %v578 = vshrl.u32 %v577, 7
        %v579 = vsub.s32 0, %v578
        %v580 = vrot.slane %v384, %v579
        %581 = vmatprep.subr.mxu0 0.0
        %582 = vmatpush1.msra.mxu0 %v529
        %583 = vmatprep.subr.mxu0 0.0
        %584 = vmatpush1.msra.mxu0 %v530
        %585 = vmatprep.subr.mxu0 0.0
        %586 = vmatpush1.msra.mxu0 %v531
        %587 = vmatprep.subr.mxu0 0.0
        %588 = vmatpush1.msra.mxu0 %v532
        %589 = vmatprep.subr.mxu0 0.0
        %590 = vmatpush1.msra.mxu0 %v533
        %591 = vmatprep.subr.mxu0 0.0
        %592 = vmatpush1.msra.mxu0 %v534
        %593 = vmatprep.subr.mxu0 0.0
        %594 = vmatpush1.msra.mxu0 %v535
        %595 = vmatprep.subr.mxu0 0.0
        %596 = vmatpush1.msra.mxu0 %v536
        %597 = vmatprep.subr.mxu0 0.0
        %598 = vmatpush1.msra.mxu0 %v537
        %599 = vmatprep.subr.mxu0 0.0
        %600 = vmatpush1.msra.mxu0 %v538
        %601 = vmatprep.subr.mxu0 0.0
        %602 = vmatpush1.msra.mxu0 %v539
        %603 = vmatprep.subr.mxu0 0.0
        %604 = vmatpush1.msra.mxu0 %v540
        %605 = vmatprep.subr.mxu0 0.0
        %606 = vmatpush1.msra.mxu0 %v541
        %607 = vmatprep.subr.mxu0 0.0
        %608 = vmatpush1.msra.mxu0 %v542
        %609 = vmatprep.subr.mxu0 0.0
        %610 = vmatpush1.msra.mxu0 %v543
        %611 = vmatprep.subr.mxu0 0.0
        %612 = vmatpush1.msra.mxu0 %v544
        %613 = vmatprep.subr.mxu0 0.0
        %614 = vmatpush1.msra.mxu0 %v545
        %615 = vmatprep.subr.mxu0 0.0
        %616 = vmatpush1.msra.mxu0 %v546
        %617 = vmatprep.subr.mxu0 0.0
        %618 = vmatpush1.msra.mxu0 %v547
        %619 = vmatprep.subr.mxu0 0.0
        %620 = vmatpush1.msra.mxu0 %v548
        %621 = vmatprep.subr.mxu0 0.0
        %622 = vmatpush1.msra.mxu0 %v549
        %623 = vmatprep.subr.mxu0 0.0
        %624 = vmatpush1.msra.mxu0 %v550
        %625 = vmatprep.subr.mxu0 0.0
        %626 = vmatpush1.msra.mxu0 %v551
        %627 = vmatprep.subr.mxu0 0.0
        %628 = vmatpush1.msra.mxu0 %v552
        %629 = vmatprep.subr.mxu0 0.0
        %630 = vmatpush1.msra.mxu0 %v553
        %631 = vmatprep.subr.mxu0 0.0
        %632 = vmatpush1.msra.mxu0 %v554
        %633 = vmatprep.subr.mxu0 0.0
        %634 = vmatpush1.msra.mxu0 %v555
        %635 = vmatprep.subr.mxu0 0.0
        %636 = vmatpush1.msra.mxu0 %v556
        %637 = vmatprep.subr.mxu0 0.0
        %638 = vmatpush1.msra.mxu0 %v557
        %639 = vmatprep.subr.mxu0 0.0
        %640 = vmatpush1.msra.mxu0 %v558
        %641 = vmatprep.subr.mxu0 0.0
        %642 = vmatpush1.msra.mxu0 %v559
        %643 = vmatprep.subr.mxu0 0.0
        %644 = vmatpush1.msra.mxu0 %v560
        %645 = vmatprep.mubr.f32.mxu0 %v527
        %646 = vmatmul.mubr.f32.gmra.mrb[0].mxu0 %v526
        %v647 = vpop.f32.mrb[0].mxu0
        %v648 = vadd.f32 %v580, %v647
        %v649 = vpop.f32.mrb[0].mxu0
        %650 = vdwg.mxu0
        %651 = vmatprep.subr.mxu0 0.0
        %652 = vmatpush1.msra.mxu0 %v561
        %653 = vmatprep.subr.mxu0 0.0
        %654 = vmatpush1.msra.mxu0 %v562
        %655 = vmatprep.subr.mxu0 0.0
        %656 = vmatpush1.msra.mxu0 %v563
        %657 = vmatprep.subr.mxu0 0.0
        %658 = vmatpush1.msra.mxu0 %v564
        %659 = vmatprep.subr.mxu0 0.0
        %660 = vmatpush1.msra.mxu0 %v565
        %661 = vmatprep.subr.mxu0 0.0
        %662 = vmatpush1.msra.mxu0 %v566
        %663 = vmatprep.subr.mxu0 0.0
        %664 = vmatpush1.msra.mxu0 %v567
        %665 = vmatprep.subr.mxu0 0.0
        %666 = vmatpush1.msra.mxu0 %v568
        %667 = vmatprep.subr.mxu0 0.0
        %668 = vmatpush1.msra.mxu0 %v569
        %669 = vmatprep.subr.mxu0 0.0
        %670 = vmatpush1.msra.mxu0 %v570
        %671 = vmatprep.subr.mxu0 0.0
        %672 = vmatpush1.msra.mxu0 %v571
        %673 = vmatprep.subr.mxu0 0.0
        %674 = vmatpush1.msra.mxu0 %v572
        %675 = vmatprep.subr.mxu0 0.0
        %676 = vmatpush1.msra.mxu0 %v573
        %677 = vmatprep.subr.mxu0 0.0
        %678 = vmatpush1.msra.mxu0 %v574
        %679 = vmatprep.subr.mxu0 0.0
        %680 = vmatpush1.msra.mxu0 %v575
        %681 = vmatprep.subr.mxu0 0.0
        %682 = vmatpush1.msra.mxu0 %v576
        %683 = vmatprep.subr.mxu0 0.0
        %684 = vmatpush1.msra.mxu0 0.0
        %685 = vmatprep.subr.mxu0 0.0
        %686 = vmatpush1.msra.mxu0 0.0
        %687 = vmatprep.subr.mxu0 0.0
        %688 = vmatpush1.msra.mxu0 0.0
        %689 = vmatprep.subr.mxu0 0.0
        %690 = vmatpush1.msra.mxu0 0.0
        %691 = vmatprep.subr.mxu0 0.0
        %692 = vmatpush1.msra.mxu0 0.0
        %693 = vmatprep.subr.mxu0 0.0
        %694 = vmatpush1.msra.mxu0 0.0
        %695 = vmatprep.subr.mxu0 0.0
        %696 = vmatpush1.msra.mxu0 0.0
        %697 = vmatprep.subr.mxu0 0.0
        %698 = vmatpush1.msra.mxu0 0.0
        %699 = vmatprep.subr.mxu0 0.0
        %700 = vmatpush1.msra.mxu0 0.0
        %701 = vmatprep.subr.mxu0 0.0
        %702 = vmatpush1.msra.mxu0 0.0
        %703 = vmatprep.subr.mxu0 0.0
        %704 = vmatpush1.msra.mxu0 0.0
        %705 = vmatprep.subr.mxu0 0.0
        %706 = vmatpush1.msra.mxu0 0.0
        %707 = vmatprep.subr.mxu0 0.0
        %708 = vmatpush1.msra.mxu0 0.0
        %709 = vmatprep.subr.mxu0 0.0
        %710 = vmatpush1.msra.mxu0 0.0
        %711 = vmatprep.subr.mxu0 0.0
        %712 = vmatpush1.msra.mxu0 0.0
        %713 = vmatprep.subr.mxu0 0.0
        %714 = vmatpush1.msra.mxu0 0.0
        %715 = vmatprep.mubr.f32.mxu0 0.0
        %716 = vmatmul.mubr.f32.gmra.mrb[0].mxu0 %v528
        %v717 = vpop.f32.mrb[0].mxu0
        %v718 = vadd.f32 %v648, %v717
        %v719 = vpop.f32.mrb[0].mxu0
        %720 = vdwg.mxu0
        %vm721 = vcmask 261120
        %v722 = vsel %vm721, %v718, 0.0
        %723 = vadd.xlane.f32.xlu0 %v722
        %v724 = vpop.xlane.xlu0 %723
        %v725 = vrcp.pop 32.0
        %v726 = vmul.f32 %v724, %v725
        %v727 = vsub.f32 %v718, %v726
        %v728 = vmul.f32 %v727, %v727
        %v729 = vsel %vm721, %v728, 0.0
        %730 = vadd.xlane.f32.xlu0 %v729
        %v731 = vpop.xlane.xlu0 %730
        %v732 = vmul.f32 %v731, 0.032258064
        %v733 = vrsqrt.pop %v732
        %v734 = vmul.f32 %v732, %v733
        %vm735 = vcmp.eq.f32.partialorder %v732, inf
        %v736 = vsel %vm735, %v732, %v734
        %vm737 = vcmp.eq.f32.partialorder %v732, 0.0
        %v738 = vand.u32 %v732, 2147483648
        %v739 = vsel %vm737, %v738, %v736
        %v740 = vadd.f32 %v739, 1e-06
        %v741 = vrcp.pop %v740
        %v742 = vmul.f32 %v727, %v741
        %v743 = vlaneseq
        %v744 = vshrl.u32 %v743, 7
        %v745 = vsub.s32 1, %v744
        %v746 = vrot.slane %v384, %v745
        %v747 = vmul.f32 %v746, %v742
        %v748 = vlaneseq
        %v749 = vshrl.u32 %v748, 7
        %v750 = vsub.s32 2, %v749
        %v751 = vrot.slane %v384, %v750
        %v752 = vadd.f32 %v747, %v751
        %v753 = vld [vmem:[%s3] sm:$0xff]
        %v754 = vadd.f32 %v752, %v753
        %v755 = vsel %vm721, %v754, 0.0
        %756 = vadd.xlane.f32.xlu0 %v755
        %v757 = vpop.xlane.xlu0 %756
        %v758 = vmul.f32 %v757, %v725
        %v759 = vsub.f32 %v754, %v758
        %v760 = vmul.f32 %v759, %v759
        %v761 = vsel %vm721, %v760, 0.0
        %762 = vadd.xlane.f32.xlu0 %v761
        %v763 = vpop.xlane.xlu0 %762
        %v764 = vmul.f32 %v763, 0.032258064
        %v765 = vrsqrt.pop %v764
        %v766 = vmul.f32 %v764, %v765
        %vm767 = vcmp.eq.f32.partialorder %v764, inf
        %v768 = vsel %vm767, %v764, %v766
        %vm769 = vcmp.eq.f32.partialorder %v764, 0.0
        %v770 = vand.u32 %v764, 2147483648
        %v771 = vsel %vm769, %v770, %v768
        %v772 = vadd.f32 %v771, 1e-06
        %v773 = vrcp.pop %v772
        %v774 = vmul.f32 %v759, %v773
        %v775 = vlaneseq
        %v776 = vshrl.u32 %v775, 7
        %v777 = vsub.s32 3, %v776
        %v778 = vrot.slane %v384, %v777
        %v779 = vmul.f32 %v778, %v774
        %v780 = vlaneseq
        %v781 = vshrl.u32 %v780, 7
        %v782 = vsub.s32 4, %v781
        %v783 = vrot.slane %v384, %v782
        %v784 = vadd.f32 %v779, %v783
        %v785 = vld [vmem:[%s5] sm:$0xff]
        %v786 = vld [vmem:[%s5 + $0x8] sm:$0xff]
        %v787 = vld [vmem:[%s5 + $0x10] sm:$0xff]
        %v788 = vld [vmem:[%s5 + $0x18] sm:$0xff]
        %v789 = vld [vmem:[%s6] sm:$0x1]
        %v791 = vlaneseq
        %v792 = vshrl.u32 %v791, 7
        %v793 = vsub.s32 0, %v792
        %v794 = vrot.slane %v789, %v793
        %v797 = vsel %vm721, %v784, 0
        %799 = vmatprep.subr.mxu0 0.0
        %800 = vmatpush1.msra.mxu0 %v785
        %801 = vmatprep.subr.mxu0 0.0
        %802 = vmatpush1.msra.mxu0 %v786
        %803 = vmatprep.subr.mxu0 0.0
        %804 = vmatpush1.msra.mxu0 %v787
        %805 = vmatprep.subr.mxu0 0.0
        %806 = vmatpush1.msra.mxu0 %v788
        %807 = vmatprep.subr.mxu0 0.0
        %808 = vmatpush1.msra.mxu0 0.0
        %809 = vmatprep.subr.mxu0 0.0
        %810 = vmatpush1.msra.mxu0 0.0
        %811 = vmatprep.subr.mxu0 0.0
        %812 = vmatpush1.msra.mxu0 0.0
        %813 = vmatprep.subr.mxu0 0.0
        %814 = vmatpush1.msra.mxu0 0.0
        %815 = vmatprep.subr.mxu0 0.0
        %816 = vmatpush1.msra.mxu0 0.0
        %817 = vmatprep.subr.mxu0 0.0
        %818 = vmatpush1.msra.mxu0 0.0
        %819 = vmatprep.subr.mxu0 0.0
        %820 = vmatpush1.msra.mxu0 0.0
        %821 = vmatprep.subr.mxu0 0.0
        %822 = vmatpush1.msra.mxu0 0.0
        %823 = vmatprep.subr.mxu0 0.0
        %824 = vmatpush1.msra.mxu0 0.0
        %825 = vmatprep.subr.mxu0 0.0
        %826 = vmatpush1.msra.mxu0 0.0
        %827 = vmatprep.subr.mxu0 0.0
        %828 = vmatpush1.msra.mxu0 0.0
        %829 = vmatprep.subr.mxu0 0.0
        %830 = vmatpush1.msra.mxu0 0.0
        %831 = vmatprep.subr.mxu0 0.0
        %832 = vmatpush1.msra.mxu0 0.0
        %833 = vmatprep.subr.mxu0 0.0
        %834 = vmatpush1.msra.mxu0 0.0
        %835 = vmatprep.subr.mxu0 0.0
        %836 = vmatpush1.msra.mxu0 0.0
        %837 = vmatprep.subr.mxu0 0.0
        %838 = vmatpush1.msra.mxu0 0.0
        %839 = vmatprep.subr.mxu0 0.0
        %840 = vmatpush1.msra.mxu0 0.0
        %841 = vmatprep.subr.mxu0 0.0
        %842 = vmatpush1.msra.mxu0 0.0
        %843 = vmatprep.subr.mxu0 0.0
        %844 = vmatpush1.msra.mxu0 0.0
        %845 = vmatprep.subr.mxu0 0.0
        %846 = vmatpush1.msra.mxu0 0.0
        %847 = vmatprep.subr.mxu0 0.0
        %848 = vmatpush1.msra.mxu0 0.0
        %849 = vmatprep.subr.mxu0 0.0
        %850 = vmatpush1.msra.mxu0 0.0
        %851 = vmatprep.subr.mxu0 0.0
        %852 = vmatpush1.msra.mxu0 0.0
        %853 = vmatprep.subr.mxu0 0.0
        %854 = vmatpush1.msra.mxu0 0.0
        %855 = vmatprep.subr.mxu0 0.0
        %856 = vmatpush1.msra.mxu0 0.0
        %857 = vmatprep.subr.mxu0 0.0
        %858 = vmatpush1.msra.mxu0 0.0
        %859 = vmatprep.subr.mxu0 0.0
        %860 = vmatpush1.msra.mxu0 0.0
        %861 = vmatprep.subr.mxu0 0.0
        %862 = vmatpush1.msra.mxu0 0.0
        %863 = vmatprep.mubr.f32.mxu0 0.0
        %864 = vmatmul.mubr.f32.gmra.mrb[0].mxu0 %v797
        %v865 = vpop.f32.mrb[0].mxu0
        %v866 = vadd.f32 %v794, %v865
        %v867 = vpop.f32.mrb[0].mxu0
        %868 = vdwg.mxu0
        %v869 = vld [vmem:[%s7] sm:$0xff]
        %v870 = vld [vmem:[%s7 + $0x8] sm:$0xff]
        %v871 = vld [vmem:[%s7 + $0x10] sm:$0xff]
        %v872 = vld [vmem:[%s7 + $0x18] sm:$0xff]
        %874 = vrot.lane.b32.xlu0 %v866, 96
        %v875 = vpop.permute.xlu0 %874
        %vm876 = vcmask 64512
        %v877 = vsel %vm876, %v866, 0
        %v879 = vsel %vm876, %v875, 0
        %881 = vmatprep.subr.mxu0 0.0
        %882 = vmatpush1.xpose.msra.mxu0 %v879
        %883 = vmatprep.subr.mxu0 0.0
        %884 = vmatpush1.xpose.msra.mxu0 0.0
        %885 = vmatprep.subr.mxu0 0.0
        %886 = vmatpush1.xpose.msra.mxu0 0.0
        %887 = vmatprep.subr.mxu0 0.0
        %888 = vmatpush1.xpose.msra.mxu0 0.0
        %889 = vmatprep.subr.mxu0 0.0
        %890 = vmatpush1.xpose.msra.mxu0 0.0
        %891 = vmatprep.subr.mxu0 0.0
        %892 = vmatpush1.xpose.msra.mxu0 0.0
        %893 = vmatprep.subr.mxu0 0.0
        %894 = vmatpush1.xpose.msra.mxu0 0.0
        %895 = vmatprep.subr.mxu0 0.0
        %896 = vmatpush1.xpose.msra.mxu0 0.0
        %897 = vmatprep.subr.mxu0 0.0
        %898 = vmatpush1.xpose.msra.mxu0 0.0
        %899 = vmatprep.subr.mxu0 0.0
        %900 = vmatpush1.xpose.msra.mxu0 0.0
        %901 = vmatprep.subr.mxu0 0.0
        %902 = vmatpush1.xpose.msra.mxu0 0.0
        %903 = vmatprep.subr.mxu0 0.0
        %904 = vmatpush1.xpose.msra.mxu0 0.0
        %905 = vmatprep.subr.mxu0 0.0
        %906 = vmatpush1.xpose.msra.mxu0 0.0
        %907 = vmatprep.subr.mxu0 0.0
        %908 = vmatpush1.xpose.msra.mxu0 0.0
        %909 = vmatprep.subr.mxu0 0.0
        %910 = vmatpush1.xpose.msra.mxu0 0.0
        %911 = vmatprep.subr.mxu0 0.0
        %912 = vmatpush1.xpose.msra.mxu0 0.0
        %913 = vmatprep.subr.mxu0 0.0
        %914 = vmatpush1.xpose.msra.mxu0 0.0
        %915 = vmatprep.subr.mxu0 0.0
        %916 = vmatpush1.xpose.msra.mxu0 0.0
        %917 = vmatprep.subr.mxu0 0.0
        %918 = vmatpush1.xpose.msra.mxu0 0.0
        %919 = vmatprep.subr.mxu0 0.0
        %920 = vmatpush1.xpose.msra.mxu0 0.0
        %921 = vmatprep.subr.mxu0 0.0
        %922 = vmatpush1.xpose.msra.mxu0 0.0
        %923 = vmatprep.subr.mxu0 0.0
        %924 = vmatpush1.xpose.msra.mxu0 0.0
        %925 = vmatprep.subr.mxu0 0.0
        %926 = vmatpush1.xpose.msra.mxu0 0.0
        %927 = vmatprep.subr.mxu0 0.0
        %928 = vmatpush1.xpose.msra.mxu0 0.0
        %929 = vmatprep.subr.mxu0 0.0
        %930 = vmatpush1.xpose.msra.mxu0 0.0
        %931 = vmatprep.subr.mxu0 0.0
        %932 = vmatpush1.xpose.msra.mxu0 0.0
        %933 = vmatprep.subr.mxu0 0.0
        %934 = vmatpush1.xpose.msra.mxu0 0.0
        %935 = vmatprep.subr.mxu0 0.0
        %936 = vmatpush1.xpose.msra.mxu0 0.0
        %937 = vmatprep.subr.mxu0 0.0
        %938 = vmatpush1.xpose.msra.mxu0 0.0
        %939 = vmatprep.subr.mxu0 0.0
        %940 = vmatpush1.xpose.msra.mxu0 0.0
        %941 = vmatprep.subr.mxu0 0.0
        %942 = vmatpush1.xpose.msra.mxu0 0.0
        %943 = vmatprep.subr.mxu0 0.0
        %944 = vmatpush1.xpose.msra.mxu0 0.0
        %945 = vmatprep.mubr.f32.mxu0 0.0
        %946 = vmatmul.mubr.f32.gmra.mrb[0].mxu0 %v877
        %v947 = vpop.f32.mrb[0].mxu0
        %v948 = vadd.f32 0.0, %v947
        %v949 = vpop.f32.mrb[0].mxu0
        %950 = vdwg.mxu0
        %v951 = vsel %vm876, %v948, -inf
        %952 = vmax.xlane.f32.xlu0 %v951
        %v953 = vpop.xlane.xlu0 %952
        %v954 = vsub.f32 %v948, %v953
        %v955 = vmul.f32 %v954, 1.442695
        %v956 = vpow.pop %v955
        %v957 = vsel %vm876, %v956, 0.0
        %958 = vadd.xlane.f32.xlu0 %v957
        %v959 = vpop.xlane.xlu0 %958
        %v960 = vrcp.pop %v959
        %v961 = vmul.f32 %v956, %v960
        %962 = vrot.lane.b32.xlu0 %v866, 64
        %v963 = vpop.permute.xlu0 %962
        %v966 = vsel %vm876, %v961, 0
        %968 = vmatprep.subr.mxu0 0.0
        %969 = vmatpush1.msra.mxu0 %v963
        %970 = vmatprep.subr.mxu0 0.0
        %971 = vmatpush1.msra.mxu0 0.0
        %972 = vmatprep.subr.mxu0 0.0
        %973 = vmatpush1.msra.mxu0 0.0
        %974 = vmatprep.subr.mxu0 0.0
        %975 = vmatpush1.msra.mxu0 0.0
        %976 = vmatprep.subr.mxu0 0.0
        %977 = vmatpush1.msra.mxu0 0.0
        %978 = vmatprep.subr.mxu0 0.0
        %979 = vmatpush1.msra.mxu0 0.0
        %980 = vmatprep.subr.mxu0 0.0
        %981 = vmatpush1.msra.mxu0 0.0
        %982 = vmatprep.subr.mxu0 0.0
        %983 = vmatpush1.msra.mxu0 0.0
        %984 = vmatprep.subr.mxu0 0.0
        %985 = vmatpush1.msra.mxu0 0.0
        %986 = vmatprep.subr.mxu0 0.0
        %987 = vmatpush1.msra.mxu0 0.0
        %988 = vmatprep.subr.mxu0 0.0
        %989 = vmatpush1.msra.mxu0 0.0
        %990 = vmatprep.subr.mxu0 0.0
        %991 = vmatpush1.msra.mxu0 0.0
        %992 = vmatprep.subr.mxu0 0.0
        %993 = vmatpush1.msra.mxu0 0.0
        %994 = vmatprep.subr.mxu0 0.0
        %995 = vmatpush1.msra.mxu0 0.0
        %996 = vmatprep.subr.mxu0 0.0
        %997 = vmatpush1.msra.mxu0 0.0
        %998 = vmatprep.subr.mxu0 0.0
        %999 = vmatpush1.msra.mxu0 0.0
        %1000 = vmatprep.subr.mxu0 0.0
        %1001 = vmatpush1.msra.mxu0 0.0
        %1002 = vmatprep.subr.mxu0 0.0
        %1003 = vmatpush1.msra.mxu0 0.0
        %1004 = vmatprep.subr.mxu0 0.0
        %1005 = vmatpush1.msra.mxu0 0.0
        %1006 = vmatprep.subr.mxu0 0.0
        %1007 = vmatpush1.msra.mxu0 0.0
        %1008 = vmatprep.subr.mxu0 0.0
        %1009 = vmatpush1.msra.mxu0 0.0
        %1010 = vmatprep.subr.mxu0 0.0
        %1011 = vmatpush1.msra.mxu0 0.0
        %1012 = vmatprep.subr.mxu0 0.0
        %1013 = vmatpush1.msra.mxu0 0.0
        %1014 = vmatprep.subr.mxu0 0.0
        %1015 = vmatpush1.msra.mxu0 0.0
        %1016 = vmatprep.subr.mxu0 0.0
        %1017 = vmatpush1.msra.mxu0 0.0
        %1018 = vmatprep.subr.mxu0 0.0
        %1019 = vmatpush1.msra.mxu0 0.0
        %1020 = vmatprep.subr.mxu0 0.0
        %1021 = vmatpush1.msra.mxu0 0.0
        %1022 = vmatprep.subr.mxu0 0.0
        %1023 = vmatpush1.msra.mxu0 0.0
        %1024 = vmatprep.subr.mxu0 0.0
        %1025 = vmatpush1.msra.mxu0 0.0
        %1026 = vmatprep.subr.mxu0 0.0
        %1027 = vmatpush1.msra.mxu0 0.0
        %1028 = vmatprep.subr.mxu0 0.0
        %1029 = vmatpush1.msra.mxu0 0.0
        %1030 = vmatprep.subr.mxu0 0.0
        %1031 = vmatpush1.msra.mxu0 0.0
        %1032 = vmatprep.mubr.f32.mxu0 0.0
        %1033 = vmatmul.mubr.f32.gmra.mrb[0].mxu0 %v966
        %v1034 = vpop.f32.mrb[0].mxu0
        %v1035 = vadd.f32 0.0, %v1034
        %v1036 = vpop.f32.mrb[0].mxu0
        %1037 = vdwg.mxu0
        %1038 = vrot.lane.b32.xlu0 %v866, 120
        %v1039 = vpop.permute.xlu0 %1038
        %1040 = vrot.lane.b32.xlu0 %v866, 88
        %v1041 = vpop.permute.xlu0 %1040
        %v1042 = vsel %vm876, %v1039, 0
        %v1044 = vsel %vm876, %v1041, 0
        %1046 = vmatprep.subr.mxu0 0.0
        %1047 = vmatpush1.xpose.msra.mxu0 %v1044
        %1048 = vmatprep.subr.mxu0 0.0
        %1049 = vmatpush1.xpose.msra.mxu0 0.0
        %1050 = vmatprep.subr.mxu0 0.0
        %1051 = vmatpush1.xpose.msra.mxu0 0.0
        %1052 = vmatprep.subr.mxu0 0.0
        %1053 = vmatpush1.xpose.msra.mxu0 0.0
        %1054 = vmatprep.subr.mxu0 0.0
        %1055 = vmatpush1.xpose.msra.mxu0 0.0
        %1056 = vmatprep.subr.mxu0 0.0
        %1057 = vmatpush1.xpose.msra.mxu0 0.0
        %1058 = vmatprep.subr.mxu0 0.0
        %1059 = vmatpush1.xpose.msra.mxu0 0.0
        %1060 = vmatprep.subr.mxu0 0.0
        %1061 = vmatpush1.xpose.msra.mxu0 0.0
        %1062 = vmatprep.subr.mxu0 0.0
        %1063 = vmatpush1.xpose.msra.mxu0 0.0
        %1064 = vmatprep.subr.mxu0 0.0
        %1065 = vmatpush1.xpose.msra.mxu0 0.0
        %1066 = vmatprep.subr.mxu0 0.0
        %1067 = vmatpush1.xpose.msra.mxu0 0.0
        %1068 = vmatprep.subr.mxu0 0.0
        %1069 = vmatpush1.xpose.msra.mxu0 0.0
        %1070 = vmatprep.subr.mxu0 0.0
        %1071 = vmatpush1.xpose.msra.mxu0 0.0
        %1072 = vmatprep.subr.mxu0 0.0
        %1073 = vmatpush1.xpose.msra.mxu0 0.0
        %1074 = vmatprep.subr.mxu0 0.0
        %1075 = vmatpush1.xpose.msra.mxu0 0.0
        %1076 = vmatprep.subr.mxu0 0.0
        %1077 = vmatpush1.xpose.msra.mxu0 0.0
        %1078 = vmatprep.subr.mxu0 0.0
        %1079 = vmatpush1.xpose.msra.mxu0 0.0
        %1080 = vmatprep.subr.mxu0 0.0
        %1081 = vmatpush1.xpose.msra.mxu0 0.0
        %1082 = vmatprep.subr.mxu0 0.0
        %1083 = vmatpush1.xpose.msra.mxu0 0.0
        %1084 = vmatprep.subr.mxu0 0.0
        %1085 = vmatpush1.xpose.msra.mxu0 0.0
        %1086 = vmatprep.subr.mxu0 0.0
        %1087 = vmatpush1.xpose.msra.mxu0 0.0
        %1088 = vmatprep.subr.mxu0 0.0
        %1089 = vmatpush1.xpose.msra.mxu0 0.0
        %1090 = vmatprep.subr.mxu0 0.0
        %1091 = vmatpush1.xpose.msra.mxu0 0.0
        %1092 = vmatprep.subr.mxu0 0.0
        %1093 = vmatpush1.xpose.msra.mxu0 0.0
        %1094 = vmatprep.subr.mxu0 0.0
        %1095 = vmatpush1.xpose.msra.mxu0 0.0
        %1096 = vmatprep.subr.mxu0 0.0
        %1097 = vmatpush1.xpose.msra.mxu0 0.0
        %1098 = vmatprep.subr.mxu0 0.0
        %1099 = vmatpush1.xpose.msra.mxu0 0.0
        %1100 = vmatprep.subr.mxu0 0.0
        %1101 = vmatpush1.xpose.msra.mxu0 0.0
        %1102 = vmatprep.subr.mxu0 0.0
        %1103 = vmatpush1.xpose.msra.mxu0 0.0
        %1104 = vmatprep.subr.mxu0 0.0
        %1105 = vmatpush1.xpose.msra.mxu0 0.0
        %1106 = vmatprep.subr.mxu0 0.0
        %1107 = vmatpush1.xpose.msra.mxu0 0.0
        %1108 = vmatprep.subr.mxu0 0.0
        %1109 = vmatpush1.xpose.msra.mxu0 0.0
        %1110 = vmatprep.mubr.f32.mxu0 0.0
        %1111 = vmatmul.mubr.f32.gmra.mrb[0].mxu0 %v1042
        %v1112 = vpop.f32.mrb[0].mxu0
        %v1113 = vadd.f32 0.0, %v1112
        %v1114 = vpop.f32.mrb[0].mxu0
        %1115 = vdwg.mxu0
        %v1116 = vsel %vm876, %v1113, -inf
        %1117 = vmax.xlane.f32.xlu0 %v1116
        %v1118 = vpop.xlane.xlu0 %1117
        %v1119 = vsub.f32 %v1113, %v1118
        %v1120 = vmul.f32 %v1119, 1.442695
        %v1121 = vpow.pop %v1120
        %v1122 = vsel %vm876, %v1121, 0.0
        %1123 = vadd.xlane.f32.xlu0 %v1122
        %v1124 = vpop.xlane.xlu0 %1123
        %v1125 = vrcp.pop %v1124
        %v1126 = vmul.f32 %v1121, %v1125
        %1127 = vrot.lane.b32.xlu0 %v866, 56
        %v1128 = vpop.permute.xlu0 %1127
        %v1131 = vsel %vm876, %v1126, 0
        %1133 = vmatprep.subr.mxu0 0.0
        %1134 = vmatpush1.msra.mxu0 %v1128
        %1135 = vmatprep.subr.mxu0 0.0
        %1136 = vmatpush1.msra.mxu0 0.0
        %1137 = vmatprep.subr.mxu0 0.0
        %1138 = vmatpush1.msra.mxu0 0.0
        %1139 = vmatprep.subr.mxu0 0.0
        %1140 = vmatpush1.msra.mxu0 0.0
        %1141 = vmatprep.subr.mxu0 0.0
        %1142 = vmatpush1.msra.mxu0 0.0
        %1143 = vmatprep.subr.mxu0 0.0
        %1144 = vmatpush1.msra.mxu0 0.0
        %1145 = vmatprep.subr.mxu0 0.0
        %1146 = vmatpush1.msra.mxu0 0.0
        %1147 = vmatprep.subr.mxu0 0.0
        %1148 = vmatpush1.msra.mxu0 0.0
        %1149 = vmatprep.subr.mxu0 0.0
        %1150 = vmatpush1.msra.mxu0 0.0
        %1151 = vmatprep.subr.mxu0 0.0
        %1152 = vmatpush1.msra.mxu0 0.0
        %1153 = vmatprep.subr.mxu0 0.0
        %1154 = vmatpush1.msra.mxu0 0.0
        %1155 = vmatprep.subr.mxu0 0.0
        %1156 = vmatpush1.msra.mxu0 0.0
        %1157 = vmatprep.subr.mxu0 0.0
        %1158 = vmatpush1.msra.mxu0 0.0
        %1159 = vmatprep.subr.mxu0 0.0
        %1160 = vmatpush1.msra.mxu0 0.0
        %1161 = vmatprep.subr.mxu0 0.0
        %1162 = vmatpush1.msra.mxu0 0.0
        %1163 = vmatprep.subr.mxu0 0.0
        %1164 = vmatpush1.msra.mxu0 0.0
        %1165 = vmatprep.subr.mxu0 0.0
        %1166 = vmatpush1.msra.mxu0 0.0
        %1167 = vmatprep.subr.mxu0 0.0
        %1168 = vmatpush1.msra.mxu0 0.0
        %1169 = vmatprep.subr.mxu0 0.0
        %1170 = vmatpush1.msra.mxu0 0.0
        %1171 = vmatprep.subr.mxu0 0.0
        %1172 = vmatpush1.msra.mxu0 0.0
        %1173 = vmatprep.subr.mxu0 0.0
        %1174 = vmatpush1.msra.mxu0 0.0
        %1175 = vmatprep.subr.mxu0 0.0
        %1176 = vmatpush1.msra.mxu0 0.0
        %1177 = vmatprep.subr.mxu0 0.0
        %1178 = vmatpush1.msra.mxu0 0.0
        %1179 = vmatprep.subr.mxu0 0.0
        %1180 = vmatpush1.msra.mxu0 0.0
        %1181 = vmatprep.subr.mxu0 0.0
        %1182 = vmatpush1.msra.mxu0 0.0
        %1183 = vmatprep.subr.mxu0 0.0
        %1184 = vmatpush1.msra.mxu0 0.0
        %1185 = vmatprep.subr.mxu0 0.0
        %1186 = vmatpush1.msra.mxu0 0.0
        %1187 = vmatprep.subr.mxu0 0.0
        %1188 = vmatpush1.msra.mxu0 0.0
        %1189 = vmatprep.subr.mxu0 0.0
        %1190 = vmatpush1.msra.mxu0 0.0
        %1191 = vmatprep.subr.mxu0 0.0
        %1192 = vmatpush1.msra.mxu0 0.0
        %1193 = vmatprep.subr.mxu0 0.0
        %1194 = vmatpush1.msra.mxu0 0.0
        %1195 = vmatprep.subr.mxu0 0.0
        %1196 = vmatpush1.msra.mxu0 0.0
        %1197 = vmatprep.mubr.f32.mxu0 0.0
        %1198 = vmatmul.mubr.f32.gmra.mrb[0].mxu0 %v1131
        %v1199 = vpop.f32.mrb[0].mxu0
        %v1200 = vadd.f32 0.0, %v1199
        %v1201 = vpop.f32.mrb[0].mxu0
        %1202 = vdwg.mxu0
        %v1204 = vsel %vm876, %v1200, 0
        %1206 = vmatprep.subr.mxu0 0.0
        %1207 = vmatpush1.msra.mxu0 %v870
        %1208 = vmatprep.subr.mxu0 0.0
        %1209 = vmatpush1.msra.mxu0 0.0
        %1210 = vmatprep.subr.mxu0 0.0
        %1211 = vmatpush1.msra.mxu0 0.0
        %1212 = vmatprep.subr.mxu0 0.0
        %1213 = vmatpush1.msra.mxu0 0.0
        %1214 = vmatprep.subr.mxu0 0.0
        %1215 = vmatpush1.msra.mxu0 0.0
        %1216 = vmatprep.subr.mxu0 0.0
        %1217 = vmatpush1.msra.mxu0 0.0
        %1218 = vmatprep.subr.mxu0 0.0
        %1219 = vmatpush1.msra.mxu0 0.0
        %1220 = vmatprep.subr.mxu0 0.0
        %1221 = vmatpush1.msra.mxu0 0.0
        %1222 = vmatprep.subr.mxu0 0.0
        %1223 = vmatpush1.msra.mxu0 0.0
        %1224 = vmatprep.subr.mxu0 0.0
        %1225 = vmatpush1.msra.mxu0 0.0
        %1226 = vmatprep.subr.mxu0 0.0
        %1227 = vmatpush1.msra.mxu0 0.0
        %1228 = vmatprep.subr.mxu0 0.0
        %1229 = vmatpush1.msra.mxu0 0.0
        %1230 = vmatprep.subr.mxu0 0.0
        %1231 = vmatpush1.msra.mxu0 0.0
        %1232 = vmatprep.subr.mxu0 0.0
        %1233 = vmatpush1.msra.mxu0 0.0
        %1234 = vmatprep.subr.mxu0 0.0
        %1235 = vmatpush1.msra.mxu0 0.0
        %1236 = vmatprep.subr.mxu0 0.0
        %1237 = vmatpush1.msra.mxu0 0.0
        %1238 = vmatprep.subr.mxu0 0.0
        %1239 = vmatpush1.msra.mxu0 0.0
        %1240 = vmatprep.subr.mxu0 0.0
        %1241 = vmatpush1.msra.mxu0 0.0
        %1242 = vmatprep.subr.mxu0 0.0
        %1243 = vmatpush1.msra.mxu0 0.0
        %1244 = vmatprep.subr.mxu0 0.0
        %1245 = vmatpush1.msra.mxu0 0.0
        %1246 = vmatprep.subr.mxu0 0.0
        %1247 = vmatpush1.msra.mxu0 0.0
        %1248 = vmatprep.subr.mxu0 0.0
        %1249 = vmatpush1.msra.mxu0 0.0
        %1250 = vmatprep.subr.mxu0 0.0
        %1251 = vmatpush1.msra.mxu0 0.0
        %1252 = vmatprep.subr.mxu0 0.0
        %1253 = vmatpush1.msra.mxu0 0.0
        %1254 = vmatprep.subr.mxu0 0.0
        %1255 = vmatpush1.msra.mxu0 0.0
        %1256 = vmatprep.subr.mxu0 0.0
        %1257 = vmatpush1.msra.mxu0 0.0
        %1258 = vmatprep.subr.mxu0 0.0
        %1259 = vmatpush1.msra.mxu0 0.0
        %1260 = vmatprep.subr.mxu0 0.0
        %1261 = vmatpush1.msra.mxu0 0.0
        %1262 = vmatprep.subr.mxu0 0.0
        %1263 = vmatpush1.msra.mxu0 0.0
        %1264 = vmatprep.subr.mxu0 0.0
        %1265 = vmatpush1.msra.mxu0 0.0
        %1266 = vmatprep.subr.mxu0 0.0
        %1267 = vmatpush1.msra.mxu0 0.0
        %1268 = vmatprep.subr.mxu0 0.0
        %1269 = vmatpush1.msra.mxu0 0.0
        %1270 = vmatprep.mubr.f32.mxu0 0.0
        %1271 = vmatmul.mubr.f32.gmra.mrb[0].mxu0 %v1204
        %v1272 = vpop.f32.mrb[0].mxu0
        %v1273 = vadd.f32 0.0, %v1272
        %v1274 = vpop.f32.mrb[0].mxu0
        %1275 = vdwg.mxu0
        %v1277 = vsel %vm876, %v1035, 0
        %1279 = vmatprep.subr.mxu0 0.0
        %1280 = vmatpush1.msra.mxu0 %v869
        %1281 = vmatprep.subr.mxu0 0.0
        %1282 = vmatpush1.msra.mxu0 0.0
        %1283 = vmatprep.subr.mxu0 0.0
        %1284 = vmatpush1.msra.mxu0 0.0
        %1285 = vmatprep.subr.mxu0 0.0
        %1286 = vmatpush1.msra.mxu0 0.0
        %1287 = vmatprep.subr.mxu0 0.0
        %1288 = vmatpush1.msra.mxu0 0.0
        %1289 = vmatprep.subr.mxu0 0.0
        %1290 = vmatpush1.msra.mxu0 0.0
        %1291 = vmatprep.subr.mxu0 0.0
        %1292 = vmatpush1.msra.mxu0 0.0
        %1293 = vmatprep.subr.mxu0 0.0
        %1294 = vmatpush1.msra.mxu0 0.0
        %1295 = vmatprep.subr.mxu0 0.0
        %1296 = vmatpush1.msra.mxu0 0.0
        %1297 = vmatprep.subr.mxu0 0.0
        %1298 = vmatpush1.msra.mxu0 0.0
        %1299 = vmatprep.subr.mxu0 0.0
        %1300 = vmatpush1.msra.mxu0 0.0
        %1301 = vmatprep.subr.mxu0 0.0
        %1302 = vmatpush1.msra.mxu0 0.0
        %1303 = vmatprep.subr.mxu0 0.0
        %1304 = vmatpush1.msra.mxu0 0.0
        %1305 = vmatprep.subr.mxu0 0.0
        %1306 = vmatpush1.msra.mxu0 0.0
        %1307 = vmatprep.subr.mxu0 0.0
        %1308 = vmatpush1.msra.mxu0 0.0
        %1309 = vmatprep.subr.mxu0 0.0
        %1310 = vmatpush1.msra.mxu0 0.0
        %1311 = vmatprep.subr.mxu0 0.0
        %1312 = vmatpush1.msra.mxu0 0.0
        %1313 = vmatprep.subr.mxu0 0.0
        %1314 = vmatpush1.msra.mxu0 0.0
        %1315 = vmatprep.subr.mxu0 0.0
        %1316 = vmatpush1.msra.mxu0 0.0
        %1317 = vmatprep.subr.mxu0 0.0
        %1318 = vmatpush1.msra.mxu0 0.0
        %1319 = vmatprep.subr.mxu0 0.0
        %1320 = vmatpush1.msra.mxu0 0.0
        %1321 = vmatprep.subr.mxu0 0.0
        %1322 = vmatpush1.msra.mxu0 0.0
        %1323 = vmatprep.subr.mxu0 0.0
        %1324 = vmatpush1.msra.mxu0 0.0
        %1325 = vmatprep.subr.mxu0 0.0
        %1326 = vmatpush1.msra.mxu0 0.0
        %1327 = vmatprep.subr.mxu0 0.0
        %1328 = vmatpush1.msra.mxu0 0.0
        %1329 = vmatprep.subr.mxu0 0.0
        %1330 = vmatpush1.msra.mxu0 0.0
        %1331 = vmatprep.subr.mxu0 0.0
        %1332 = vmatpush1.msra.mxu0 0.0
        %1333 = vmatprep.subr.mxu0 0.0
        %1334 = vmatpush1.msra.mxu0 0.0
        %1335 = vmatprep.subr.mxu0 0.0
        %1336 = vmatpush1.msra.mxu0 0.0
        %1337 = vmatprep.subr.mxu0 0.0
        %1338 = vmatpush1.msra.mxu0 0.0
        %1339 = vmatprep.subr.mxu0 0.0
        %1340 = vmatpush1.msra.mxu0 0.0
        %1341 = vmatprep.subr.mxu0 0.0
        %1342 = vmatpush1.msra.mxu0 0.0
        %1343 = vmatprep.mubr.f32.mxu0 0.0
        %1344 = vmatmul.mubr.f32.gmra.mrb[0].mxu0 %v1277
        %v1345 = vpop.f32.mrb[0].mxu0
        %v1346 = vadd.f32 %v1273, %v1345
        %v1347 = vpop.f32.mrb[0].mxu0
        %1348 = vdwg.mxu0
        %1349 = vrot.lane.b32.xlu0 %v866, 112
        %v1350 = vpop.permute.xlu0 %1349
        %1351 = vrot.lane.b32.xlu0 %v866, 80
        %v1352 = vpop.permute.xlu0 %1351
        %v1353 = vsel %vm876, %v1350, 0
        %v1355 = vsel %vm876, %v1352, 0
        %1357 = vmatprep.subr.mxu0 0.0
        %1358 = vmatpush1.xpose.msra.mxu0 %v1355
        %1359 = vmatprep.subr.mxu0 0.0
        %1360 = vmatpush1.xpose.msra.mxu0 0.0
        %1361 = vmatprep.subr.mxu0 0.0
        %1362 = vmatpush1.xpose.msra.mxu0 0.0
        %1363 = vmatprep.subr.mxu0 0.0
        %1364 = vmatpush1.xpose.msra.mxu0 0.0
        %1365 = vmatprep.subr.mxu0 0.0
        %1366 = vmatpush1.xpose.msra.mxu0 0.0
        %1367 = vmatprep.subr.mxu0 0.0
        %1368 = vmatpush1.xpose.msra.mxu0 0.0
        %1369 = vmatprep.subr.mxu0 0.0
        %1370 = vmatpush1.xpose.msra.mxu0 0.0
        %1371 = vmatprep.subr.mxu0 0.0
        %1372 = vmatpush1.xpose.msra.mxu0 0.0
        %1373 = vmatprep.subr.mxu0 0.0
        %1374 = vmatpush1.xpose.msra.mxu0 0.0
        %1375 = vmatprep.subr.mxu0 0.0
        %1376 = vmatpush1.xpose.msra.mxu0 0.0
        %1377 = vmatprep.subr.mxu0 0.0
        %1378 = vmatpush1.xpose.msra.mxu0 0.0
        %1379 = vmatprep.subr.mxu0 0.0
        %1380 = vmatpush1.xpose.msra.mxu0 0.0
        %1381 = vmatprep.subr.mxu0 0.0
        %1382 = vmatpush1.xpose.msra.mxu0 0.0
        %1383 = vmatprep.subr.mxu0 0.0
        %1384 = vmatpush1.xpose.msra.mxu0 0.0
        %1385 = vmatprep.subr.mxu0 0.0
        %1386 = vmatpush1.xpose.msra.mxu0 0.0
        %1387 = vmatprep.subr.mxu0 0.0
        %1388 = vmatpush1.xpose.msra.mxu0 0.0
        %1389 = vmatprep.subr.mxu0 0.0
        %1390 = vmatpush1.xpose.msra.mxu0 0.0
        %1391 = vmatprep.subr.mxu0 0.0
        %1392 = vmatpush1.xpose.msra.mxu0 0.0
        %1393 = vmatprep.subr.mxu0 0.0
        %1394 = vmatpush1.xpose.msra.mxu0 0.0
        %1395 = vmatprep.subr.mxu0 0.0
        %1396 = vmatpush1.xpose.msra.mxu0 0.0
        %1397 = vmatprep.subr.mxu0 0.0
        %1398 = vmatpush1.xpose.msra.mxu0 0.0
        %1399 = vmatprep.subr.mxu0 0.0
        %1400 = vmatpush1.xpose.msra.mxu0 0.0
        %1401 = vmatprep.subr.mxu0 0.0
        %1402 = vmatpush1.xpose.msra.mxu0 0.0
        %1403 = vmatprep.subr.mxu0 0.0
        %1404 = vmatpush1.xpose.msra.mxu0 0.0
        %1405 = vmatprep.subr.mxu0 0.0
        %1406 = vmatpush1.xpose.msra.mxu0 0.0
        %1407 = vmatprep.subr.mxu0 0.0
        %1408 = vmatpush1.xpose.msra.mxu0 0.0
        %1409 = vmatprep.subr.mxu0 0.0
        %1410 = vmatpush1.xpose.msra.mxu0 0.0
        %1411 = vmatprep.subr.mxu0 0.0
        %1412 = vmatpush1.xpose.msra.mxu0 0.0
        %1413 = vmatprep.subr.mxu0 0.0
        %1414 = vmatpush1.xpose.msra.mxu0 0.0
        %1415 = vmatprep.subr.mxu0 0.0
        %1416 = vmatpush1.xpose.msra.mxu0 0.0
        %1417 = vmatprep.subr.mxu0 0.0
        %1418 = vmatpush1.xpose.msra.mxu0 0.0
        %1419 = vmatprep.subr.mxu0 0.0
        %1420 = vmatpush1.xpose.msra.mxu0 0.0
        %1421 = vmatprep.mubr.f32.mxu0 0.0
        %1422 = vmatmul.mubr.f32.gmra.mrb[0].mxu0 %v1353
        %v1423 = vpop.f32.mrb[0].mxu0
        %v1424 = vadd.f32 0.0, %v1423
        %v1425 = vpop.f32.mrb[0].mxu0
        %1426 = vdwg.mxu0
        %v1427 = vsel %vm876, %v1424, -inf
        %1428 = vmax.xlane.f32.xlu0 %v1427
        %v1429 = vpop.xlane.xlu0 %1428
        %v1430 = vsub.f32 %v1424, %v1429
        %v1431 = vmul.f32 %v1430, 1.442695
        %v1432 = vpow.pop %v1431
        %v1433 = vsel %vm876, %v1432, 0.0
        %1434 = vadd.xlane.f32.xlu0 %v1433
        %v1435 = vpop.xlane.xlu0 %1434
        %v1436 = vrcp.pop %v1435
        %v1437 = vmul.f32 %v1432, %v1436
        %1438 = vrot.lane.b32.xlu0 %v866, 48
        %v1439 = vpop.permute.xlu0 %1438
        %v1442 = vsel %vm876, %v1437, 0
        %1444 = vmatprep.subr.mxu0 0.0
        %1445 = vmatpush1.msra.mxu0 %v1439
        %1446 = vmatprep.subr.mxu0 0.0
        %1447 = vmatpush1.msra.mxu0 0.0
        %1448 = vmatprep.subr.mxu0 0.0
        %1449 = vmatpush1.msra.mxu0 0.0
        %1450 = vmatprep.subr.mxu0 0.0
        %1451 = vmatpush1.msra.mxu0 0.0
        %1452 = vmatprep.subr.mxu0 0.0
        %1453 = vmatpush1.msra.mxu0 0.0
        %1454 = vmatprep.subr.mxu0 0.0
        %1455 = vmatpush1.msra.mxu0 0.0
        %1456 = vmatprep.subr.mxu0 0.0
        %1457 = vmatpush1.msra.mxu0 0.0
        %1458 = vmatprep.subr.mxu0 0.0
        %1459 = vmatpush1.msra.mxu0 0.0
        %1460 = vmatprep.subr.mxu0 0.0
        %1461 = vmatpush1.msra.mxu0 0.0
        %1462 = vmatprep.subr.mxu0 0.0
        %1463 = vmatpush1.msra.mxu0 0.0
        %1464 = vmatprep.subr.mxu0 0.0
        %1465 = vmatpush1.msra.mxu0 0.0
        %1466 = vmatprep.subr.mxu0 0.0
        %1467 = vmatpush1.msra.mxu0 0.0
        %1468 = vmatprep.subr.mxu0 0.0
        %1469 = vmatpush1.msra.mxu0 0.0
        %1470 = vmatprep.subr.mxu0 0.0
        %1471 = vmatpush1.msra.mxu0 0.0
        %1472 = vmatprep.subr.mxu0 0.0
        %1473 = vmatpush1.msra.mxu0 0.0
        %1474 = vmatprep.subr.mxu0 0.0
        %1475 = vmatpush1.msra.mxu0 0.0
        %1476 = vmatprep.subr.mxu0 0.0
        %1477 = vmatpush1.msra.mxu0 0.0
        %1478 = vmatprep.subr.mxu0 0.0
        %1479 = vmatpush1.msra.mxu0 0.0
        %1480 = vmatprep.subr.mxu0 0.0
        %1481 = vmatpush1.msra.mxu0 0.0
        %1482 = vmatprep.subr.mxu0 0.0
        %1483 = vmatpush1.msra.mxu0 0.0
        %1484 = vmatprep.subr.mxu0 0.0
        %1485 = vmatpush1.msra.mxu0 0.0
        %1486 = vmatprep.subr.mxu0 0.0
        %1487 = vmatpush1.msra.mxu0 0.0
        %1488 = vmatprep.subr.mxu0 0.0
        %1489 = vmatpush1.msra.mxu0 0.0
        %1490 = vmatprep.subr.mxu0 0.0
        %1491 = vmatpush1.msra.mxu0 0.0
        %1492 = vmatprep.subr.mxu0 0.0
        %1493 = vmatpush1.msra.mxu0 0.0
        %1494 = vmatprep.subr.mxu0 0.0
        %1495 = vmatpush1.msra.mxu0 0.0
        %1496 = vmatprep.subr.mxu0 0.0
        %1497 = vmatpush1.msra.mxu0 0.0
        %1498 = vmatprep.subr.mxu0 0.0
        %1499 = vmatpush1.msra.mxu0 0.0
        %1500 = vmatprep.subr.mxu0 0.0
        %1501 = vmatpush1.msra.mxu0 0.0
        %1502 = vmatprep.subr.mxu0 0.0
        %1503 = vmatpush1.msra.mxu0 0.0
        %1504 = vmatprep.subr.mxu0 0.0
        %1505 = vmatpush1.msra.mxu0 0.0
        %1506 = vmatprep.subr.mxu0 0.0
        %1507 = vmatpush1.msra.mxu0 0.0
        %1508 = vmatprep.mubr.f32.mxu0 0.0
        %1509 = vmatmul.mubr.f32.gmra.mrb[0].mxu0 %v1442
        %v1510 = vpop.f32.mrb[0].mxu0
        %v1511 = vadd.f32 0.0, %v1510
        %v1512 = vpop.f32.mrb[0].mxu0
        %1513 = vdwg.mxu0
        %v1515 = vsel %vm876, %v1511, 0
        %1517 = vmatprep.subr.mxu0 0.0
        %1518 = vmatpush1.msra.mxu0 %v871
        %1519 = vmatprep.subr.mxu0 0.0
        %1520 = vmatpush1.msra.mxu0 0.0
        %1521 = vmatprep.subr.mxu0 0.0
        %1522 = vmatpush1.msra.mxu0 0.0
        %1523 = vmatprep.subr.mxu0 0.0
        %1524 = vmatpush1.msra.mxu0 0.0
        %1525 = vmatprep.subr.mxu0 0.0
        %1526 = vmatpush1.msra.mxu0 0.0
        %1527 = vmatprep.subr.mxu0 0.0
        %1528 = vmatpush1.msra.mxu0 0.0
        %1529 = vmatprep.subr.mxu0 0.0
        %1530 = vmatpush1.msra.mxu0 0.0
        %1531 = vmatprep.subr.mxu0 0.0
        %1532 = vmatpush1.msra.mxu0 0.0
        %1533 = vmatprep.subr.mxu0 0.0
        %1534 = vmatpush1.msra.mxu0 0.0
        %1535 = vmatprep.subr.mxu0 0.0
        %1536 = vmatpush1.msra.mxu0 0.0
        %1537 = vmatprep.subr.mxu0 0.0
        %1538 = vmatpush1.msra.mxu0 0.0
        %1539 = vmatprep.subr.mxu0 0.0
        %1540 = vmatpush1.msra.mxu0 0.0
        %1541 = vmatprep.subr.mxu0 0.0
        %1542 = vmatpush1.msra.mxu0 0.0
        %1543 = vmatprep.subr.mxu0 0.0
        %1544 = vmatpush1.msra.mxu0 0.0
        %1545 = vmatprep.subr.mxu0 0.0
        %1546 = vmatpush1.msra.mxu0 0.0
        %1547 = vmatprep.subr.mxu0 0.0
        %1548 = vmatpush1.msra.mxu0 0.0
        %1549 = vmatprep.subr.mxu0 0.0
        %1550 = vmatpush1.msra.mxu0 0.0
        %1551 = vmatprep.subr.mxu0 0.0
        %1552 = vmatpush1.msra.mxu0 0.0
        %1553 = vmatprep.subr.mxu0 0.0
        %1554 = vmatpush1.msra.mxu0 0.0
        %1555 = vmatprep.subr.mxu0 0.0
        %1556 = vmatpush1.msra.mxu0 0.0
        %1557 = vmatprep.subr.mxu0 0.0
        %1558 = vmatpush1.msra.mxu0 0.0
        %1559 = vmatprep.subr.mxu0 0.0
        %1560 = vmatpush1.msra.mxu0 0.0
        %1561 = vmatprep.subr.mxu0 0.0
        %1562 = vmatpush1.msra.mxu0 0.0
        %1563 = vmatprep.subr.mxu0 0.0
        %1564 = vmatpush1.msra.mxu0 0.0
        %1565 = vmatprep.subr.mxu0 0.0
        %1566 = vmatpush1.msra.mxu0 0.0
        %1567 = vmatprep.subr.mxu0 0.0
        %1568 = vmatpush1.msra.mxu0 0.0
        %1569 = vmatprep.subr.mxu0 0.0
        %1570 = vmatpush1.msra.mxu0 0.0
        %1571 = vmatprep.subr.mxu0 0.0
        %1572 = vmatpush1.msra.mxu0 0.0
        %1573 = vmatprep.subr.mxu0 0.0
        %1574 = vmatpush1.msra.mxu0 0.0
        %1575 = vmatprep.subr.mxu0 0.0
        %1576 = vmatpush1.msra.mxu0 0.0
        %1577 = vmatprep.subr.mxu0 0.0
        %1578 = vmatpush1.msra.mxu0 0.0
        %1579 = vmatprep.subr.mxu0 0.0
        %1580 = vmatpush1.msra.mxu0 0.0
        %1581 = vmatprep.mubr.f32.mxu0 0.0
        %1582 = vmatmul.mubr.f32.gmra.mrb[0].mxu0 %v1515
        %v1583 = vpop.f32.mrb[0].mxu0
        %v1584 = vadd.f32 0.0, %v1583
        %v1585 = vpop.f32.mrb[0].mxu0
        %1586 = vdwg.mxu0
        %v1587 = vadd.f32 %v1346, %v1584
        %1588 = vrot.lane.b32.xlu0 %v866, 104
        %v1589 = vpop.permute.xlu0 %1588
        %1590 = vrot.lane.b32.xlu0 %v866, 72
        %v1591 = vpop.permute.xlu0 %1590
        %v1592 = vsel %vm876, %v1589, 0
        %v1594 = vsel %vm876, %v1591, 0
        %1596 = vmatprep.subr.mxu0 0.0
        %1597 = vmatpush1.xpose.msra.mxu0 %v1594
        %1598 = vmatprep.subr.mxu0 0.0
        %1599 = vmatpush1.xpose.msra.mxu0 0.0
        %1600 = vmatprep.subr.mxu0 0.0
        %1601 = vmatpush1.xpose.msra.mxu0 0.0
        %1602 = vmatprep.subr.mxu0 0.0
        %1603 = vmatpush1.xpose.msra.mxu0 0.0
        %1604 = vmatprep.subr.mxu0 0.0
        %1605 = vmatpush1.xpose.msra.mxu0 0.0
        %1606 = vmatprep.subr.mxu0 0.0
        %1607 = vmatpush1.xpose.msra.mxu0 0.0
        %1608 = vmatprep.subr.mxu0 0.0
        %1609 = vmatpush1.xpose.msra.mxu0 0.0
        %1610 = vmatprep.subr.mxu0 0.0
        %1611 = vmatpush1.xpose.msra.mxu0 0.0
        %1612 = vmatprep.subr.mxu0 0.0
        %1613 = vmatpush1.xpose.msra.mxu0 0.0
        %1614 = vmatprep.subr.mxu0 0.0
        %1615 = vmatpush1.xpose.msra.mxu0 0.0
        %1616 = vmatprep.subr.mxu0 0.0
        %1617 = vmatpush1.xpose.msra.mxu0 0.0
        %1618 = vmatprep.subr.mxu0 0.0
        %1619 = vmatpush1.xpose.msra.mxu0 0.0
        %1620 = vmatprep.subr.mxu0 0.0
        %1621 = vmatpush1.xpose.msra.mxu0 0.0
        %1622 = vmatprep.subr.mxu0 0.0
        %1623 = vmatpush1.xpose.msra.mxu0 0.0
        %1624 = vmatprep.subr.mxu0 0.0
        %1625 = vmatpush1.xpose.msra.mxu0 0.0
        %1626 = vmatprep.subr.mxu0 0.0
        %1627 = vmatpush1.xpose.msra.mxu0 0.0
        %1628 = vmatprep.subr.mxu0 0.0
        %1629 = vmatpush1.xpose.msra.mxu0 0.0
        %1630 = vmatprep.subr.mxu0 0.0
        %1631 = vmatpush1.xpose.msra.mxu0 0.0
        %1632 = vmatprep.subr.mxu0 0.0
        %1633 = vmatpush1.xpose.msra.mxu0 0.0
        %1634 = vmatprep.subr.mxu0 0.0
        %1635 = vmatpush1.xpose.msra.mxu0 0.0
        %1636 = vmatprep.subr.mxu0 0.0
        %1637 = vmatpush1.xpose.msra.mxu0 0.0
        %1638 = vmatprep.subr.mxu0 0.0
        %1639 = vmatpush1.xpose.msra.mxu0 0.0
        %1640 = vmatprep.subr.mxu0 0.0
        %1641 = vmatpush1.xpose.msra.mxu0 0.0
        %1642 = vmatprep.subr.mxu0 0.0
        %1643 = vmatpush1.xpose.msra.mxu0 0.0
        %1644 = vmatprep.subr.mxu0 0.0
        %1645 = vmatpush1.xpose.msra.mxu0 0.0
        %1646 = vmatprep.subr.mxu0 0.0
        %1647 = vmatpush1.xpose.msra.mxu0 0.0
        %1648 = vmatprep.subr.mxu0 0.0
        %1649 = vmatpush1.xpose.msra.mxu0 0.0
        %1650 = vmatprep.subr.mxu0 0.0
        %1651 = vmatpush1.xpose.msra.mxu0 0.0
        %1652 = vmatprep.subr.mxu0 0.0
        %1653 = vmatpush1.xpose.msra.mxu0 0.0
        %1654 = vmatprep.subr.mxu0 0.0
        %1655 = vmatpush1.xpose.msra.mxu0 0.0
        %1656 = vmatprep.subr.mxu0 0.0
        %1657 = vmatpush1.xpose.msra.mxu0 0.0
        %1658 = vmatprep.subr.mxu0 0.0
        %1659 = vmatpush1.xpose.msra.mxu0 0.0
        %1660 = vmatprep.mubr.f32.mxu0 0.0
        %1661 = vmatmul.mubr.f32.gmra.mrb[0].mxu0 %v1592
        %v1662 = vpop.f32.mrb[0].mxu0
        %v1663 = vadd.f32 0.0, %v1662
        %v1664 = vpop.f32.mrb[0].mxu0
        %1665 = vdwg.mxu0
        %v1666 = vsel %vm876, %v1663, -inf
        %1667 = vmax.xlane.f32.xlu0 %v1666
        %v1668 = vpop.xlane.xlu0 %1667
        %v1669 = vsub.f32 %v1663, %v1668
        %v1670 = vmul.f32 %v1669, 1.442695
        %v1671 = vpow.pop %v1670
        %v1672 = vsel %vm876, %v1671, 0.0
        %1673 = vadd.xlane.f32.xlu0 %v1672
        %v1674 = vpop.xlane.xlu0 %1673
        %v1675 = vrcp.pop %v1674
        %v1676 = vmul.f32 %v1671, %v1675
        %1677 = vrot.lane.b32.xlu0 %v866, 40
        %v1678 = vpop.permute.xlu0 %1677
        %v1681 = vsel %vm876, %v1676, 0
        %1683 = vmatprep.subr.mxu0 0.0
        %1684 = vmatpush1.msra.mxu0 %v1678
        %1685 = vmatprep.subr.mxu0 0.0
        %1686 = vmatpush1.msra.mxu0 0.0
        %1687 = vmatprep.subr.mxu0 0.0
        %1688 = vmatpush1.msra.mxu0 0.0
        %1689 = vmatprep.subr.mxu0 0.0
        %1690 = vmatpush1.msra.mxu0 0.0
        %1691 = vmatprep.subr.mxu0 0.0
        %1692 = vmatpush1.msra.mxu0 0.0
        %1693 = vmatprep.subr.mxu0 0.0
        %1694 = vmatpush1.msra.mxu0 0.0
        %1695 = vmatprep.subr.mxu0 0.0
        %1696 = vmatpush1.msra.mxu0 0.0
        %1697 = vmatprep.subr.mxu0 0.0
        %1698 = vmatpush1.msra.mxu0 0.0
        %1699 = vmatprep.subr.mxu0 0.0
        %1700 = vmatpush1.msra.mxu0 0.0
        %1701 = vmatprep.subr.mxu0 0.0
        %1702 = vmatpush1.msra.mxu0 0.0
        %1703 = vmatprep.subr.mxu0 0.0
        %1704 = vmatpush1.msra.mxu0 0.0
        %1705 = vmatprep.subr.mxu0 0.0
        %1706 = vmatpush1.msra.mxu0 0.0
        %1707 = vmatprep.subr.mxu0 0.0
        %1708 = vmatpush1.msra.mxu0 0.0
        %1709 = vmatprep.subr.mxu0 0.0
        %1710 = vmatpush1.msra.mxu0 0.0
        %1711 = vmatprep.subr.mxu0 0.0
        %1712 = vmatpush1.msra.mxu0 0.0
        %1713 = vmatprep.subr.mxu0 0.0
        %1714 = vmatpush1.msra.mxu0 0.0
        %1715 = vmatprep.subr.mxu0 0.0
        %1716 = vmatpush1.msra.mxu0 0.0
        %1717 = vmatprep.subr.mxu0 0.0
        %1718 = vmatpush1.msra.mxu0 0.0
        %1719 = vmatprep.subr.mxu0 0.0
        %1720 = vmatpush1.msra.mxu0 0.0
        %1721 = vmatprep.subr.mxu0 0.0
        %1722 = vmatpush1.msra.mxu0 0.0
        %1723 = vmatprep.subr.mxu0 0.0
        %1724 = vmatpush1.msra.mxu0 0.0
        %1725 = vmatprep.subr.mxu0 0.0
        %1726 = vmatpush1.msra.mxu0 0.0
        %1727 = vmatprep.subr.mxu0 0.0
        %1728 = vmatpush1.msra.mxu0 0.0
        %1729 = vmatprep.subr.mxu0 0.0
        %1730 = vmatpush1.msra.mxu0 0.0
        %1731 = vmatprep.subr.mxu0 0.0
        %1732 = vmatpush1.msra.mxu0 0.0
        %1733 = vmatprep.subr.mxu0 0.0
        %1734 = vmatpush1.msra.mxu0 0.0
        %1735 = vmatprep.subr.mxu0 0.0
        %1736 = vmatpush1.msra.mxu0 0.0
        %1737 = vmatprep.subr.mxu0 0.0
        %1738 = vmatpush1.msra.mxu0 0.0
        %1739 = vmatprep.subr.mxu0 0.0
        %1740 = vmatpush1.msra.mxu0 0.0
        %1741 = vmatprep.subr.mxu0 0.0
        %1742 = vmatpush1.msra.mxu0 0.0
        %1743 = vmatprep.subr.mxu0 0.0
        %1744 = vmatpush1.msra.mxu0 0.0
        %1745 = vmatprep.subr.mxu0 0.0
        %1746 = vmatpush1.msra.mxu0 0.0
        %1747 = vmatprep.mubr.f32.mxu0 0.0
        %1748 = vmatmul.mubr.f32.gmra.mrb[0].mxu0 %v1681
        %v1749 = vpop.f32.mrb[0].mxu0
        %v1750 = vadd.f32 0.0, %v1749
        %v1751 = vpop.f32.mrb[0].mxu0
        %1752 = vdwg.mxu0
        %v1754 = vsel %vm876, %v1750, 0
        %1756 = vmatprep.subr.mxu0 0.0
        %1757 = vmatpush1.msra.mxu0 %v872
        %1758 = vmatprep.subr.mxu0 0.0
        %1759 = vmatpush1.msra.mxu0 0.0
        %1760 = vmatprep.subr.mxu0 0.0
        %1761 = vmatpush1.msra.mxu0 0.0
        %1762 = vmatprep.subr.mxu0 0.0
        %1763 = vmatpush1.msra.mxu0 0.0
        %1764 = vmatprep.subr.mxu0 0.0
        %1765 = vmatpush1.msra.mxu0 0.0
        %1766 = vmatprep.subr.mxu0 0.0
        %1767 = vmatpush1.msra.mxu0 0.0
        %1768 = vmatprep.subr.mxu0 0.0
        %1769 = vmatpush1.msra.mxu0 0.0
        %1770 = vmatprep.subr.mxu0 0.0
        %1771 = vmatpush1.msra.mxu0 0.0
        %1772 = vmatprep.subr.mxu0 0.0
        %1773 = vmatpush1.msra.mxu0 0.0
        %1774 = vmatprep.subr.mxu0 0.0
        %1775 = vmatpush1.msra.mxu0 0.0
        %1776 = vmatprep.subr.mxu0 0.0
        %1777 = vmatpush1.msra.mxu0 0.0
        %1778 = vmatprep.subr.mxu0 0.0
        %1779 = vmatpush1.msra.mxu0 0.0
        %1780 = vmatprep.subr.mxu0 0.0
        %1781 = vmatpush1.msra.mxu0 0.0
        %1782 = vmatprep.subr.mxu0 0.0
        %1783 = vmatpush1.msra.mxu0 0.0
        %1784 = vmatprep.subr.mxu0 0.0
        %1785 = vmatpush1.msra.mxu0 0.0
        %1786 = vmatprep.subr.mxu0 0.0
        %1787 = vmatpush1.msra.mxu0 0.0
        %1788 = vmatprep.subr.mxu0 0.0
        %1789 = vmatpush1.msra.mxu0 0.0
        %1790 = vmatprep.subr.mxu0 0.0
        %1791 = vmatpush1.msra.mxu0 0.0
        %1792 = vmatprep.subr.mxu0 0.0
        %1793 = vmatpush1.msra.mxu0 0.0
        %1794 = vmatprep.subr.mxu0 0.0
        %1795 = vmatpush1.msra.mxu0 0.0
        %1796 = vmatprep.subr.mxu0 0.0
        %1797 = vmatpush1.msra.mxu0 0.0
        %1798 = vmatprep.subr.mxu0 0.0
        %1799 = vmatpush1.msra.mxu0 0.0
        %1800 = vmatprep.subr.mxu0 0.0
        %1801 = vmatpush1.msra.mxu0 0.0
        %1802 = vmatprep.subr.mxu0 0.0
        %1803 = vmatpush1.msra.mxu0 0.0
        %1804 = vmatprep.subr.mxu0 0.0
        %1805 = vmatpush1.msra.mxu0 0.0
        %1806 = vmatprep.subr.mxu0 0.0
        %1807 = vmatpush1.msra.mxu0 0.0
        %1808 = vmatprep.subr.mxu0 0.0
        %1809 = vmatpush1.msra.mxu0 0.0
        %1810 = vmatprep.subr.mxu0 0.0
        %1811 = vmatpush1.msra.mxu0 0.0
        %1812 = vmatprep.subr.mxu0 0.0
        %1813 = vmatpush1.msra.mxu0 0.0
        %1814 = vmatprep.subr.mxu0 0.0
        %1815 = vmatpush1.msra.mxu0 0.0
        %1816 = vmatprep.subr.mxu0 0.0
        %1817 = vmatpush1.msra.mxu0 0.0
        %1818 = vmatprep.subr.mxu0 0.0
        %1819 = vmatpush1.msra.mxu0 0.0
        %1820 = vmatprep.mubr.f32.mxu0 0.0
        %1821 = vmatmul.mubr.f32.gmra.mrb[0].mxu0 %v1754
        %v1822 = vpop.f32.mrb[0].mxu0
        %v1823 = vadd.f32 0.0, %v1822
        %v1824 = vpop.f32.mrb[0].mxu0
        %1825 = vdwg.mxu0
        %v1826 = vadd.f32 %v1587, %v1823
        %v1827 = vadd.f32 %v754, %v1826
        %v1828 = vlaneseq
        %v1829 = vshrl.u32 %v1828, 7
        %v1830 = vsub.s32 5, %v1829
        %v1831 = vrot.slane %v384, %v1830
        %v1832 = vadd.f32 %v1827, %v1831
        %v1833 = vsel %vm721, %v1832, 0.0
        %1834 = vadd.xlane.f32.xlu0 %v1833
        %v1835 = vpop.xlane.xlu0 %1834
        %v1836 = vmul.f32 %v1835, %v725
        %v1837 = vsub.f32 %v1832, %v1836
        %v1838 = vmul.f32 %v1837, %v1837
        %v1839 = vsel %vm721, %v1838, 0.0
        %1840 = vadd.xlane.f32.xlu0 %v1839
        %v1841 = vpop.xlane.xlu0 %1840
        %v1842 = vmul.f32 %v1841, 0.032258064
        %v1843 = vrsqrt.pop %v1842
        %v1844 = vmul.f32 %v1842, %v1843
        %vm1845 = vcmp.eq.f32.partialorder %v1842, inf
        %v1846 = vsel %vm1845, %v1842, %v1844
        %vm1847 = vcmp.eq.f32.partialorder %v1842, 0.0
        %v1848 = vand.u32 %v1842, 2147483648
        %v1849 = vsel %vm1847, %v1848, %v1846
        %v1850 = vadd.f32 %v1849, 1e-06
        %v1851 = vrcp.pop %v1850
        %v1852 = vmul.f32 %v1837, %v1851
        %v1853 = vlaneseq
        %v1854 = vshrl.u32 %v1853, 7
        %v1855 = vsub.s32 6, %v1854
        %v1856 = vrot.slane %v384, %v1855
        %v1857 = vmul.f32 %v1856, %v1852
        %v1858 = vlaneseq
        %v1859 = vshrl.u32 %v1858, 7
        %v1860 = vsub.s32 7, %v1859
        %v1861 = vrot.slane %v384, %v1860
        %v1862 = vadd.f32 %v1857, %v1861
        %v1863 = vpack.c.bf16 %v1862, %v1862
        %v1864 = vld [vmem:[%s8] sm:$0xff]
        %v1865 = vld [vmem:[%s8 + $0x8] sm:$0xff]
        %v1866 = vld [vmem:[%s8 + $0x10] sm:$0xff]
        %v1867 = vld [vmem:[%s8 + $0x18] sm:$0xff]
        %v1868 = vld [vmem:[%s8 + $0x20] sm:$0xff]
        %v1869 = vld [vmem:[%s8 + $0x28] sm:$0xff]
        %v1870 = vld [vmem:[%s8 + $0x30] sm:$0xff]
        %v1871 = vld [vmem:[%s8 + $0x38] sm:$0xff]
        %v1872 = vld [vmem:[%s8 + $0x40] sm:$0xff]
        %v1873 = vld [vmem:[%s8 + $0x48] sm:$0xff]
        %v1874 = vld [vmem:[%s8 + $0x50] sm:$0xff]
        %v1875 = vld [vmem:[%s8 + $0x58] sm:$0xff]
        %v1876 = vld [vmem:[%s8 + $0x60] sm:$0xff]
        %v1877 = vld [vmem:[%s8 + $0x68] sm:$0xff]
        %v1878 = vld [vmem:[%s8 + $0x70] sm:$0xff]
        %v1879 = vld [vmem:[%s8 + $0x78] sm:$0xff]
        %v1880 = vld [vmem:[%s8 + $0x80] sm:$0xff]
        %v1881 = vld [vmem:[%s8 + $0x88] sm:$0xff]
        %v1882 = vld [vmem:[%s8 + $0x90] sm:$0xff]
        %v1883 = vld [vmem:[%s8 + $0x98] sm:$0xff]
        %v1884 = vld [vmem:[%s8 + $0xa0] sm:$0xff]
        %v1885 = vld [vmem:[%s8 + $0xa8] sm:$0xff]
        %v1886 = vld [vmem:[%s8 + $0xb0] sm:$0xff]
        %v1887 = vld [vmem:[%s8 + $0xb8] sm:$0xff]
        %v1888 = vld [vmem:[%s8 + $0xc0] sm:$0xff]
        %v1889 = vld [vmem:[%s8 + $0xc8] sm:$0xff]
        %v1890 = vld [vmem:[%s8 + $0xd0] sm:$0xff]
        %v1891 = vld [vmem:[%s8 + $0xd8] sm:$0xff]
        %v1892 = vld [vmem:[%s8 + $0xe0] sm:$0xff]
        %v1893 = vld [vmem:[%s8 + $0xe8] sm:$0xff]
        %v1894 = vld [vmem:[%s8 + $0xf0] sm:$0xff]
        %v1895 = vld [vmem:[%s8 + $0xf8] sm:$0xff]
        %v1896 = vld [vmem:[%s9] sm:$0xff]
        %v1897 = vld [vmem:[%s9 + $0x8] sm:$0xff]
        %v1900 = vlaneseq
        %v1901 = vshrl.u32 %v1900, 7
        %v1902 = vsub.s32 0, %v1901
        %v1903 = vrot.slane %v1896, %v1902
        %v1904 = vlaneseq
        %v1905 = vshrl.u32 %v1904, 7
        %v1906 = vsub.s32 1, %v1905
        %v1907 = vrot.slane %v1896, %v1906
        %v1908 = vlaneseq
        %v1909 = vshrl.u32 %v1908, 7
        %v1910 = vsub.s32 2, %v1909
        %v1911 = vrot.slane %v1896, %v1910
        %v1912 = vlaneseq
        %v1913 = vshrl.u32 %v1912, 7
        %v1914 = vsub.s32 3, %v1913
        %v1915 = vrot.slane %v1896, %v1914
        %v1916 = vlaneseq
        %v1917 = vshrl.u32 %v1916, 7
        %v1918 = vsub.s32 4, %v1917
        %v1919 = vrot.slane %v1896, %v1918
        %v1920 = vlaneseq
        %v1921 = vshrl.u32 %v1920, 7
        %v1922 = vsub.s32 5, %v1921
        %v1923 = vrot.slane %v1896, %v1922
        %v1924 = vlaneseq
        %v1925 = vshrl.u32 %v1924, 7
        %v1926 = vsub.s32 6, %v1925
        %v1927 = vrot.slane %v1896, %v1926
        %v1928 = vlaneseq
        %v1929 = vshrl.u32 %v1928, 7
        %v1930 = vsub.s32 7, %v1929
        %v1931 = vrot.slane %v1896, %v1930
        %v1932 = vlaneseq
        %v1933 = vshrl.u32 %v1932, 7
        %v1934 = vsub.s32 0, %v1933
        %v1935 = vrot.slane %v1897, %v1934
        %v1936 = vlaneseq
        %v1937 = vshrl.u32 %v1936, 7
        %v1938 = vsub.s32 1, %v1937
        %v1939 = vrot.slane %v1897, %v1938
        %v1940 = vlaneseq
        %v1941 = vshrl.u32 %v1940, 7
        %v1942 = vsub.s32 2, %v1941
        %v1943 = vrot.slane %v1897, %v1942
        %v1944 = vlaneseq
        %v1945 = vshrl.u32 %v1944, 7
        %v1946 = vsub.s32 3, %v1945
        %v1947 = vrot.slane %v1897, %v1946
        %v1948 = vlaneseq
        %v1949 = vshrl.u32 %v1948, 7
        %v1950 = vsub.s32 4, %v1949
        %v1951 = vrot.slane %v1897, %v1950
        %v1952 = vlaneseq
        %v1953 = vshrl.u32 %v1952, 7
        %v1954 = vsub.s32 5, %v1953
        %v1955 = vrot.slane %v1897, %v1954
        %v1956 = vlaneseq
        %v1957 = vshrl.u32 %v1956, 7
        %v1958 = vsub.s32 6, %v1957
        %v1959 = vrot.slane %v1897, %v1958
        %v1960 = vlaneseq
        %v1961 = vshrl.u32 %v1960, 7
        %v1962 = vsub.s32 7, %v1961
        %v1963 = vrot.slane %v1897, %v1962
        %v2012 = vunpack.c.l.b16 %v1864
        %v2013 = vunpack.c.h.b16 %v1864
        %v2014 = vunpack.c.l.b16 %v1865
        %v2015 = vunpack.c.h.b16 %v1865
        %v2016 = vunpack.c.l.b16 %v1866
        %v2017 = vunpack.c.h.b16 %v1866
        %v2018 = vunpack.c.l.b16 %v1867
        %v2019 = vunpack.c.h.b16 %v1867
        %v2020 = vunpack.c.l.b16 %v1868
        %v2021 = vunpack.c.h.b16 %v1868
        %v2022 = vunpack.c.l.b16 %v1869
        %v2023 = vunpack.c.h.b16 %v1869
        %v2024 = vunpack.c.l.b16 %v1870
        %v2025 = vunpack.c.h.b16 %v1870
        %v2026 = vunpack.c.l.b16 %v1871
        %v2027 = vunpack.c.h.b16 %v1871
        %v2028 = vunpack.c.l.b16 %v1872
        %v2029 = vunpack.c.h.b16 %v1872
        %v2030 = vunpack.c.l.b16 %v1873
        %v2031 = vunpack.c.h.b16 %v1873
        %v2032 = vunpack.c.l.b16 %v1874
        %v2033 = vunpack.c.h.b16 %v1874
        %v2034 = vunpack.c.l.b16 %v1875
        %v2035 = vunpack.c.h.b16 %v1875
        %v2036 = vunpack.c.l.b16 %v1876
        %v2037 = vunpack.c.h.b16 %v1876
        %v2038 = vunpack.c.l.b16 %v1877
        %v2039 = vunpack.c.h.b16 %v1877
        %v2040 = vunpack.c.l.b16 %v1878
        %v2041 = vunpack.c.h.b16 %v1878
        %v2042 = vunpack.c.l.b16 %v1879
        %v2043 = vunpack.c.h.b16 %v1879
        %v2044 = vunpack.c.l.b16 %v1880
        %v2045 = vunpack.c.h.b16 %v1880
        %v2046 = vunpack.c.l.b16 %v1881
        %v2047 = vunpack.c.h.b16 %v1881
        %v2048 = vunpack.c.l.b16 %v1882
        %v2049 = vunpack.c.h.b16 %v1882
        %v2050 = vunpack.c.l.b16 %v1883
        %v2051 = vunpack.c.h.b16 %v1883
        %v2052 = vunpack.c.l.b16 %v1884
        %v2053 = vunpack.c.h.b16 %v1884
        %v2054 = vunpack.c.l.b16 %v1885
        %v2055 = vunpack.c.h.b16 %v1885
        %v2056 = vunpack.c.l.b16 %v1886
        %v2057 = vunpack.c.h.b16 %v1886
        %v2058 = vunpack.c.l.b16 %v1887
        %v2059 = vunpack.c.h.b16 %v1887
        %v2060 = vunpack.c.l.b16 %v1888
        %v2061 = vunpack.c.h.b16 %v1888
        %v2062 = vunpack.c.l.b16 %v1889
        %v2063 = vunpack.c.h.b16 %v1889
        %v2064 = vunpack.c.l.b16 %v1890
        %v2065 = vunpack.c.h.b16 %v1890
        %v2066 = vunpack.c.l.b16 %v1891
        %v2067 = vunpack.c.h.b16 %v1891
        %v2068 = vunpack.c.l.b16 %v1892
        %v2069 = vunpack.c.h.b16 %v1892
        %v2070 = vunpack.c.l.b16 %v1893
        %v2071 = vunpack.c.h.b16 %v1893
        %v2072 = vunpack.c.l.b16 %v1894
        %v2073 = vunpack.c.h.b16 %v1894
        %v2074 = vunpack.c.l.b16 %v1895
        %v2075 = vunpack.c.h.b16 %v1895
        %v2076 = vpack.c.b16 %v2028, %v2012
        %v2077 = vpack.c.b16 %v2029, %v2013
        %v2078 = vpack.c.b16 %v2030, %v2014
        %v2079 = vpack.c.b16 %v2031, %v2015
        %v2080 = vpack.c.b16 %v2032, %v2016
        %v2081 = vpack.c.b16 %v2033, %v2017
        %v2082 = vpack.c.b16 %v2034, %v2018
        %v2083 = vpack.c.b16 %v2035, %v2019
        %v2084 = vpack.c.b16 %v2036, %v2020
        %v2085 = vpack.c.b16 %v2037, %v2021
        %v2086 = vpack.c.b16 %v2038, %v2022
        %v2087 = vpack.c.b16 %v2039, %v2023
        %v2088 = vpack.c.b16 %v2040, %v2024
        %v2089 = vpack.c.b16 %v2041, %v2025
        %v2090 = vpack.c.b16 %v2042, %v2026
        %v2091 = vpack.c.b16 %v2043, %v2027
        %v2092 = vpack.c.b16 %v2060, %v2044
        %v2093 = vpack.c.b16 %v2061, %v2045
        %v2094 = vpack.c.b16 %v2062, %v2046
        %v2095 = vpack.c.b16 %v2063, %v2047
        %v2096 = vpack.c.b16 %v2064, %v2048
        %v2097 = vpack.c.b16 %v2065, %v2049
        %v2098 = vpack.c.b16 %v2066, %v2050
        %v2099 = vpack.c.b16 %v2067, %v2051
        %v2100 = vpack.c.b16 %v2068, %v2052
        %v2101 = vpack.c.b16 %v2069, %v2053
        %v2102 = vpack.c.b16 %v2070, %v2054
        %v2103 = vpack.c.b16 %v2071, %v2055
        %v2104 = vpack.c.b16 %v2072, %v2056
        %v2105 = vpack.c.b16 %v2073, %v2057
        %v2106 = vpack.c.b16 %v2074, %v2058
        %v2107 = vpack.c.b16 %v2075, %v2059
        %v2141 = vsel %vm721, %v1863, 0
        %2143 = vmatprep.subr.bf16.mxu0 %v2077
        %2144 = vmatpush1.bf16.msra.mxu0 %v2076
        %2145 = vmatprep.subr.bf16.mxu0 %v2093
        %2146 = vmatpush1.bf16.msra.mxu0 %v2092
        %2147 = vmatprep.subr.bf16.mxu0 0
        %2148 = vmatpush1.bf16.msra.mxu0 0
        %2149 = vmatprep.subr.bf16.mxu0 0
        %2150 = vmatpush1.bf16.msra.mxu0 0
        %2151 = vmatprep.subr.bf16.mxu0 0
        %2152 = vmatpush1.bf16.msra.mxu0 0
        %2153 = vmatprep.subr.bf16.mxu0 0
        %2154 = vmatpush1.bf16.msra.mxu0 0
        %2155 = vmatprep.subr.bf16.mxu0 0
        %2156 = vmatpush1.bf16.msra.mxu0 0
        %2157 = vmatprep.subr.bf16.mxu0 0
        %2158 = vmatpush1.bf16.msra.mxu0 0
        %2159 = vmatprep.subr.bf16.mxu0 0
        %2160 = vmatpush1.bf16.msra.mxu0 0
        %2161 = vmatprep.subr.bf16.mxu0 0
        %2162 = vmatpush1.bf16.msra.mxu0 0
        %2163 = vmatprep.subr.bf16.mxu0 0
        %2164 = vmatpush1.bf16.msra.mxu0 0
        %2165 = vmatprep.subr.bf16.mxu0 0
        %2166 = vmatpush1.bf16.msra.mxu0 0
        %2167 = vmatprep.subr.bf16.mxu0 0
        %2168 = vmatpush1.bf16.msra.mxu0 0
        %2169 = vmatprep.subr.bf16.mxu0 0
        %2170 = vmatpush1.bf16.msra.mxu0 0
        %2171 = vmatprep.subr.bf16.mxu0 0
        %2172 = vmatpush1.bf16.msra.mxu0 0
        %2173 = vmatprep.subr.bf16.mxu0 0
        %2174 = vmatpush1.bf16.msra.mxu0 0
        %2175 = vmatprep.mubr.bf16.mxu0 0
        %2176 = vmatmul.mubr.bf16.gmra.mrb[0].mxu0 %v2141
        %v2177 = vpop.f32.mrb[0].mxu0
        %v2178 = vadd.f32 %v1903, %v2177
        %v2179 = vpop.f32.mrb[0].mxu0
        %v2180 = vadd.f32 %v1907, %v2179
        %v2181 = vpop.f32.mrb[0].mxu0
        %v2182 = vpop.f32.mrb[0].mxu0
        %2183 = vdwg.mxu0
        %2184 = vmatprep.subr.bf16.mxu0 %v2079
        %2185 = vmatpush1.bf16.msra.mxu0 %v2078
        %2186 = vmatprep.subr.bf16.mxu0 %v2095
        %2187 = vmatpush1.bf16.msra.mxu0 %v2094
        %2188 = vmatprep.subr.bf16.mxu0 0
        %2189 = vmatpush1.bf16.msra.mxu0 0
        %2190 = vmatprep.subr.bf16.mxu0 0
        %2191 = vmatpush1.bf16.msra.mxu0 0
        %2192 = vmatprep.subr.bf16.mxu0 0
        %2193 = vmatpush1.bf16.msra.mxu0 0
        %2194 = vmatprep.subr.bf16.mxu0 0
        %2195 = vmatpush1.bf16.msra.mxu0 0
        %2196 = vmatprep.subr.bf16.mxu0 0
        %2197 = vmatpush1.bf16.msra.mxu0 0
        %2198 = vmatprep.subr.bf16.mxu0 0
        %2199 = vmatpush1.bf16.msra.mxu0 0
        %2200 = vmatprep.subr.bf16.mxu0 0
        %2201 = vmatpush1.bf16.msra.mxu0 0
        %2202 = vmatprep.subr.bf16.mxu0 0
        %2203 = vmatpush1.bf16.msra.mxu0 0
        %2204 = vmatprep.subr.bf16.mxu0 0
        %2205 = vmatpush1.bf16.msra.mxu0 0
        %2206 = vmatprep.subr.bf16.mxu0 0
        %2207 = vmatpush1.bf16.msra.mxu0 0
        %2208 = vmatprep.subr.bf16.mxu0 0
        %2209 = vmatpush1.bf16.msra.mxu0 0
        %2210 = vmatprep.subr.bf16.mxu0 0
        %2211 = vmatpush1.bf16.msra.mxu0 0
        %2212 = vmatprep.subr.bf16.mxu0 0
        %2213 = vmatpush1.bf16.msra.mxu0 0
        %2214 = vmatprep.subr.bf16.mxu0 0
        %2215 = vmatpush1.bf16.msra.mxu0 0
        %2216 = vmatprep.mubr.bf16.mxu0 0
        %2217 = vmatmul.mubr.bf16.gmra.mrb[0].mxu0 %v2141
        %v2218 = vpop.f32.mrb[0].mxu0
        %v2219 = vadd.f32 %v1911, %v2218
        %v2220 = vpop.f32.mrb[0].mxu0
        %v2221 = vadd.f32 %v1915, %v2220
        %v2222 = vpop.f32.mrb[0].mxu0
        %v2223 = vpop.f32.mrb[0].mxu0
        %2224 = vdwg.mxu0
        %2225 = vmatprep.subr.bf16.mxu0 %v2081
        %2226 = vmatpush1.bf16.msra.mxu0 %v2080
        %2227 = vmatprep.subr.bf16.mxu0 %v2097
        %2228 = vmatpush1.bf16.msra.mxu0 %v2096
        %2229 = vmatprep.subr.bf16.mxu0 0
        %2230 = vmatpush1.bf16.msra.mxu0 0
        %2231 = vmatprep.subr.bf16.mxu0 0
        %2232 = vmatpush1.bf16.msra.mxu0 0
        %2233 = vmatprep.subr.bf16.mxu0 0
        %2234 = vmatpush1.bf16.msra.mxu0 0
        %2235 = vmatprep.subr.bf16.mxu0 0
        %2236 = vmatpush1.bf16.msra.mxu0 0
        %2237 = vmatprep.subr.bf16.mxu0 0
        %2238 = vmatpush1.bf16.msra.mxu0 0
        %2239 = vmatprep.subr.bf16.mxu0 0
        %2240 = vmatpush1.bf16.msra.mxu0 0
        %2241 = vmatprep.subr.bf16.mxu0 0
        %2242 = vmatpush1.bf16.msra.mxu0 0
        %2243 = vmatprep.subr.bf16.mxu0 0
        %2244 = vmatpush1.bf16.msra.mxu0 0
        %2245 = vmatprep.subr.bf16.mxu0 0
        %2246 = vmatpush1.bf16.msra.mxu0 0
        %2247 = vmatprep.subr.bf16.mxu0 0
        %2248 = vmatpush1.bf16.msra.mxu0 0
        %2249 = vmatprep.subr.bf16.mxu0 0
        %2250 = vmatpush1.bf16.msra.mxu0 0
        %2251 = vmatprep.subr.bf16.mxu0 0
        %2252 = vmatpush1.bf16.msra.mxu0 0
        %2253 = vmatprep.subr.bf16.mxu0 0
        %2254 = vmatpush1.bf16.msra.mxu0 0
        %2255 = vmatprep.subr.bf16.mxu0 0
        %2256 = vmatpush1.bf16.msra.mxu0 0
        %2257 = vmatprep.mubr.bf16.mxu0 0
        %2258 = vmatmul.mubr.bf16.gmra.mrb[0].mxu0 %v2141
        %v2259 = vpop.f32.mrb[0].mxu0
        %v2260 = vadd.f32 %v1919, %v2259
        %v2261 = vpop.f32.mrb[0].mxu0
        %v2262 = vadd.f32 %v1923, %v2261
        %v2263 = vpop.f32.mrb[0].mxu0
        %v2264 = vpop.f32.mrb[0].mxu0
        %2265 = vdwg.mxu0
        %2266 = vmatprep.subr.bf16.mxu0 %v2083
        %2267 = vmatpush1.bf16.msra.mxu0 %v2082
        %2268 = vmatprep.subr.bf16.mxu0 %v2099
        %2269 = vmatpush1.bf16.msra.mxu0 %v2098
        %2270 = vmatprep.subr.bf16.mxu0 0
        %2271 = vmatpush1.bf16.msra.mxu0 0
        %2272 = vmatprep.subr.bf16.mxu0 0
        %2273 = vmatpush1.bf16.msra.mxu0 0
        %2274 = vmatprep.subr.bf16.mxu0 0
        %2275 = vmatpush1.bf16.msra.mxu0 0
        %2276 = vmatprep.subr.bf16.mxu0 0
        %2277 = vmatpush1.bf16.msra.mxu0 0
        %2278 = vmatprep.subr.bf16.mxu0 0
        %2279 = vmatpush1.bf16.msra.mxu0 0
        %2280 = vmatprep.subr.bf16.mxu0 0
        %2281 = vmatpush1.bf16.msra.mxu0 0
        %2282 = vmatprep.subr.bf16.mxu0 0
        %2283 = vmatpush1.bf16.msra.mxu0 0
        %2284 = vmatprep.subr.bf16.mxu0 0
        %2285 = vmatpush1.bf16.msra.mxu0 0
        %2286 = vmatprep.subr.bf16.mxu0 0
        %2287 = vmatpush1.bf16.msra.mxu0 0
        %2288 = vmatprep.subr.bf16.mxu0 0
        %2289 = vmatpush1.bf16.msra.mxu0 0
        %2290 = vmatprep.subr.bf16.mxu0 0
        %2291 = vmatpush1.bf16.msra.mxu0 0
        %2292 = vmatprep.subr.bf16.mxu0 0
        %2293 = vmatpush1.bf16.msra.mxu0 0
        %2294 = vmatprep.subr.bf16.mxu0 0
        %2295 = vmatpush1.bf16.msra.mxu0 0
        %2296 = vmatprep.subr.bf16.mxu0 0
        %2297 = vmatpush1.bf16.msra.mxu0 0
        %2298 = vmatprep.mubr.bf16.mxu0 0
        %2299 = vmatmul.mubr.bf16.gmra.mrb[0].mxu0 %v2141
        %v2300 = vpop.f32.mrb[0].mxu0
        %v2301 = vadd.f32 %v1927, %v2300
        %v2302 = vpop.f32.mrb[0].mxu0
        %v2303 = vadd.f32 %v1931, %v2302
        %v2304 = vpop.f32.mrb[0].mxu0
        %v2305 = vpop.f32.mrb[0].mxu0
        %2306 = vdwg.mxu0
        %2307 = vmatprep.subr.bf16.mxu0 %v2085
        %2308 = vmatpush1.bf16.msra.mxu0 %v2084
        %2309 = vmatprep.subr.bf16.mxu0 %v2101
        %2310 = vmatpush1.bf16.msra.mxu0 %v2100
        %2311 = vmatprep.subr.bf16.mxu0 0
        %2312 = vmatpush1.bf16.msra.mxu0 0
        %2313 = vmatprep.subr.bf16.mxu0 0
        %2314 = vmatpush1.bf16.msra.mxu0 0
        %2315 = vmatprep.subr.bf16.mxu0 0
        %2316 = vmatpush1.bf16.msra.mxu0 0
        %2317 = vmatprep.subr.bf16.mxu0 0
        %2318 = vmatpush1.bf16.msra.mxu0 0
        %2319 = vmatprep.subr.bf16.mxu0 0
        %2320 = vmatpush1.bf16.msra.mxu0 0
        %2321 = vmatprep.subr.bf16.mxu0 0
        %2322 = vmatpush1.bf16.msra.mxu0 0
        %2323 = vmatprep.subr.bf16.mxu0 0
        %2324 = vmatpush1.bf16.msra.mxu0 0
        %2325 = vmatprep.subr.bf16.mxu0 0
        %2326 = vmatpush1.bf16.msra.mxu0 0
        %2327 = vmatprep.subr.bf16.mxu0 0
        %2328 = vmatpush1.bf16.msra.mxu0 0
        %2329 = vmatprep.subr.bf16.mxu0 0
        %2330 = vmatpush1.bf16.msra.mxu0 0
        %2331 = vmatprep.subr.bf16.mxu0 0
        %2332 = vmatpush1.bf16.msra.mxu0 0
        %2333 = vmatprep.subr.bf16.mxu0 0
        %2334 = vmatpush1.bf16.msra.mxu0 0
        %2335 = vmatprep.subr.bf16.mxu0 0
        %2336 = vmatpush1.bf16.msra.mxu0 0
        %2337 = vmatprep.subr.bf16.mxu0 0
        %2338 = vmatpush1.bf16.msra.mxu0 0
        %2339 = vmatprep.mubr.bf16.mxu0 0
        %2340 = vmatmul.mubr.bf16.gmra.mrb[0].mxu0 %v2141
        %v2341 = vpop.f32.mrb[0].mxu0
        %v2342 = vadd.f32 %v1935, %v2341
        %v2343 = vpop.f32.mrb[0].mxu0
        %v2344 = vadd.f32 %v1939, %v2343
        %v2345 = vpop.f32.mrb[0].mxu0
        %v2346 = vpop.f32.mrb[0].mxu0
        %2347 = vdwg.mxu0
        %2348 = vmatprep.subr.bf16.mxu0 %v2087
        %2349 = vmatpush1.bf16.msra.mxu0 %v2086
        %2350 = vmatprep.subr.bf16.mxu0 %v2103
        %2351 = vmatpush1.bf16.msra.mxu0 %v2102
        %2352 = vmatprep.subr.bf16.mxu0 0
        %2353 = vmatpush1.bf16.msra.mxu0 0
        %2354 = vmatprep.subr.bf16.mxu0 0
        %2355 = vmatpush1.bf16.msra.mxu0 0
        %2356 = vmatprep.subr.bf16.mxu0 0
        %2357 = vmatpush1.bf16.msra.mxu0 0
        %2358 = vmatprep.subr.bf16.mxu0 0
        %2359 = vmatpush1.bf16.msra.mxu0 0
        %2360 = vmatprep.subr.bf16.mxu0 0
        %2361 = vmatpush1.bf16.msra.mxu0 0
        %2362 = vmatprep.subr.bf16.mxu0 0
        %2363 = vmatpush1.bf16.msra.mxu0 0
        %2364 = vmatprep.subr.bf16.mxu0 0
        %2365 = vmatpush1.bf16.msra.mxu0 0
        %2366 = vmatprep.subr.bf16.mxu0 0
        %2367 = vmatpush1.bf16.msra.mxu0 0
        %2368 = vmatprep.subr.bf16.mxu0 0
        %2369 = vmatpush1.bf16.msra.mxu0 0
        %2370 = vmatprep.subr.bf16.mxu0 0
        %2371 = vmatpush1.bf16.msra.mxu0 0
        %2372 = vmatprep.subr.bf16.mxu0 0
        %2373 = vmatpush1.bf16.msra.mxu0 0
        %2374 = vmatprep.subr.bf16.mxu0 0
        %2375 = vmatpush1.bf16.msra.mxu0 0
        %2376 = vmatprep.subr.bf16.mxu0 0
        %2377 = vmatpush1.bf16.msra.mxu0 0
        %2378 = vmatprep.subr.bf16.mxu0 0
        %2379 = vmatpush1.bf16.msra.mxu0 0
        %2380 = vmatprep.mubr.bf16.mxu0 0
        %2381 = vmatmul.mubr.bf16.gmra.mrb[0].mxu0 %v2141
        %v2382 = vpop.f32.mrb[0].mxu0
        %v2383 = vadd.f32 %v1943, %v2382
        %v2384 = vpop.f32.mrb[0].mxu0
        %v2385 = vadd.f32 %v1947, %v2384
        %v2386 = vpop.f32.mrb[0].mxu0
        %v2387 = vpop.f32.mrb[0].mxu0
        %2388 = vdwg.mxu0
        %2389 = vmatprep.subr.bf16.mxu0 %v2089
        %2390 = vmatpush1.bf16.msra.mxu0 %v2088
        %2391 = vmatprep.subr.bf16.mxu0 %v2105
        %2392 = vmatpush1.bf16.msra.mxu0 %v2104
        %2393 = vmatprep.subr.bf16.mxu0 0
        %2394 = vmatpush1.bf16.msra.mxu0 0
        %2395 = vmatprep.subr.bf16.mxu0 0
        %2396 = vmatpush1.bf16.msra.mxu0 0
        %2397 = vmatprep.subr.bf16.mxu0 0
        %2398 = vmatpush1.bf16.msra.mxu0 0
        %2399 = vmatprep.subr.bf16.mxu0 0
        %2400 = vmatpush1.bf16.msra.mxu0 0
        %2401 = vmatprep.subr.bf16.mxu0 0
        %2402 = vmatpush1.bf16.msra.mxu0 0
        %2403 = vmatprep.subr.bf16.mxu0 0
        %2404 = vmatpush1.bf16.msra.mxu0 0
        %2405 = vmatprep.subr.bf16.mxu0 0
        %2406 = vmatpush1.bf16.msra.mxu0 0
        %2407 = vmatprep.subr.bf16.mxu0 0
        %2408 = vmatpush1.bf16.msra.mxu0 0
        %2409 = vmatprep.subr.bf16.mxu0 0
        %2410 = vmatpush1.bf16.msra.mxu0 0
        %2411 = vmatprep.subr.bf16.mxu0 0
        %2412 = vmatpush1.bf16.msra.mxu0 0
        %2413 = vmatprep.subr.bf16.mxu0 0
        %2414 = vmatpush1.bf16.msra.mxu0 0
        %2415 = vmatprep.subr.bf16.mxu0 0
        %2416 = vmatpush1.bf16.msra.mxu0 0
        %2417 = vmatprep.subr.bf16.mxu0 0
        %2418 = vmatpush1.bf16.msra.mxu0 0
        %2419 = vmatprep.subr.bf16.mxu0 0
        %2420 = vmatpush1.bf16.msra.mxu0 0
        %2421 = vmatprep.mubr.bf16.mxu0 0
        %2422 = vmatmul.mubr.bf16.gmra.mrb[0].mxu0 %v2141
        %v2423 = vpop.f32.mrb[0].mxu0
        %v2424 = vadd.f32 %v1951, %v2423
        %v2425 = vpop.f32.mrb[0].mxu0
        %v2426 = vadd.f32 %v1955, %v2425
        %v2427 = vpop.f32.mrb[0].mxu0
        %v2428 = vpop.f32.mrb[0].mxu0
        %2429 = vdwg.mxu0
        %2430 = vmatprep.subr.bf16.mxu0 %v2091
        %2431 = vmatpush1.bf16.msra.mxu0 %v2090
        %2432 = vmatprep.subr.bf16.mxu0 %v2107
        %2433 = vmatpush1.bf16.msra.mxu0 %v2106
        %2434 = vmatprep.subr.bf16.mxu0 0
        %2435 = vmatpush1.bf16.msra.mxu0 0
        %2436 = vmatprep.subr.bf16.mxu0 0
        %2437 = vmatpush1.bf16.msra.mxu0 0
        %2438 = vmatprep.subr.bf16.mxu0 0
        %2439 = vmatpush1.bf16.msra.mxu0 0
        %2440 = vmatprep.subr.bf16.mxu0 0
        %2441 = vmatpush1.bf16.msra.mxu0 0
        %2442 = vmatprep.subr.bf16.mxu0 0
        %2443 = vmatpush1.bf16.msra.mxu0 0
        %2444 = vmatprep.subr.bf16.mxu0 0
        %2445 = vmatpush1.bf16.msra.mxu0 0
        %2446 = vmatprep.subr.bf16.mxu0 0
        %2447 = vmatpush1.bf16.msra.mxu0 0
        %2448 = vmatprep.subr.bf16.mxu0 0
        %2449 = vmatpush1.bf16.msra.mxu0 0
        %2450 = vmatprep.subr.bf16.mxu0 0
        %2451 = vmatpush1.bf16.msra.mxu0 0
        %2452 = vmatprep.subr.bf16.mxu0 0
        %2453 = vmatpush1.bf16.msra.mxu0 0
        %2454 = vmatprep.subr.bf16.mxu0 0
        %2455 = vmatpush1.bf16.msra.mxu0 0
        %2456 = vmatprep.subr.bf16.mxu0 0
        %2457 = vmatpush1.bf16.msra.mxu0 0
        %2458 = vmatprep.subr.bf16.mxu0 0
        %2459 = vmatpush1.bf16.msra.mxu0 0
        %2460 = vmatprep.subr.bf16.mxu0 0
        %2461 = vmatpush1.bf16.msra.mxu0 0
        %2462 = vmatprep.mubr.bf16.mxu0 0
        %2463 = vmatmul.mubr.bf16.gmra.mrb[0].mxu0 %v2141
        %v2464 = vpop.f32.mrb[0].mxu0
        %v2465 = vadd.f32 %v1959, %v2464
        %v2466 = vpop.f32.mrb[0].mxu0
        %v2467 = vadd.f32 %v1963, %v2466
        %v2468 = vpop.f32.mrb[0].mxu0
        %v2469 = vpop.f32.mrb[0].mxu0
        %2470 = vdwg.mxu0
        %v2471 = vmax.f32 %v2178, 0.0
        %v2472 = vmax.f32 %v2180, 0.0
        %v2473 = vmax.f32 %v2219, 0.0
        %v2474 = vmax.f32 %v2221, 0.0
        %v2475 = vmax.f32 %v2260, 0.0
        %v2476 = vmax.f32 %v2262, 0.0
        %v2477 = vmax.f32 %v2301, 0.0
        %v2478 = vmax.f32 %v2303, 0.0
        %v2479 = vmax.f32 %v2342, 0.0
        %v2480 = vmax.f32 %v2344, 0.0
        %v2481 = vmax.f32 %v2383, 0.0
        %v2482 = vmax.f32 %v2385, 0.0
        %v2483 = vmax.f32 %v2424, 0.0
        %v2484 = vmax.f32 %v2426, 0.0
        %v2485 = vmax.f32 %v2465, 0.0
        %v2486 = vmax.f32 %v2467, 0.0
        %v2487 = vpack.c.bf16 %v2471, %v2471
        %v2488 = vpack.c.bf16 %v2472, %v2472
        %v2489 = vpack.c.bf16 %v2473, %v2473
        %v2490 = vpack.c.bf16 %v2474, %v2474
        %v2491 = vpack.c.bf16 %v2475, %v2475
        %v2492 = vpack.c.bf16 %v2476, %v2476
        %v2493 = vpack.c.bf16 %v2477, %v2477
        %v2494 = vpack.c.bf16 %v2478, %v2478
        %v2495 = vpack.c.bf16 %v2479, %v2479
        %v2496 = vpack.c.bf16 %v2480, %v2480
        %v2497 = vpack.c.bf16 %v2481, %v2481
        %v2498 = vpack.c.bf16 %v2482, %v2482
        %v2499 = vpack.c.bf16 %v2483, %v2483
        %v2500 = vpack.c.bf16 %v2484, %v2484
        %v2501 = vpack.c.bf16 %v2485, %v2485
        %v2502 = vpack.c.bf16 %v2486, %v2486
        %v2503 = vld [vmem:[%s10] sm:$0xf]
        %v2504 = vld [vmem:[%s10 + $0x4] sm:$0xf]
        %v2505 = vld [vmem:[%s10 + $0x8] sm:$0xf]
        %v2506 = vld [vmem:[%s10 + $0xc] sm:$0xf]
        %v2507 = vld [vmem:[%s10 + $0x10] sm:$0xf]
        %v2508 = vld [vmem:[%s10 + $0x14] sm:$0xf]
        %v2509 = vld [vmem:[%s10 + $0x18] sm:$0xf]
        %v2510 = vld [vmem:[%s10 + $0x1c] sm:$0xf]
        %v2511 = vld [vmem:[%s10 + $0x20] sm:$0xf]
        %v2512 = vld [vmem:[%s10 + $0x24] sm:$0xf]
        %v2513 = vld [vmem:[%s10 + $0x28] sm:$0xf]
        %v2514 = vld [vmem:[%s10 + $0x2c] sm:$0xf]
        %v2515 = vld [vmem:[%s10 + $0x30] sm:$0xf]
        %v2516 = vld [vmem:[%s10 + $0x34] sm:$0xf]
        %v2517 = vld [vmem:[%s10 + $0x38] sm:$0xf]
        %v2518 = vld [vmem:[%s10 + $0x3c] sm:$0xf]
        %v2519 = vld [vmem:[%s10 + $0x40] sm:$0xf]
        %v2520 = vld [vmem:[%s10 + $0x44] sm:$0xf]
        %v2521 = vld [vmem:[%s10 + $0x48] sm:$0xf]
        %v2522 = vld [vmem:[%s10 + $0x4c] sm:$0xf]
        %v2523 = vld [vmem:[%s10 + $0x50] sm:$0xf]
        %v2524 = vld [vmem:[%s10 + $0x54] sm:$0xf]
        %v2525 = vld [vmem:[%s10 + $0x58] sm:$0xf]
        %v2526 = vld [vmem:[%s10 + $0x5c] sm:$0xf]
        %v2527 = vld [vmem:[%s10 + $0x60] sm:$0xf]
        %v2528 = vld [vmem:[%s10 + $0x64] sm:$0xf]
        %v2529 = vld [vmem:[%s10 + $0x68] sm:$0xf]
        %v2530 = vld [vmem:[%s10 + $0x6c] sm:$0xf]
        %v2531 = vld [vmem:[%s10 + $0x70] sm:$0xf]
        %v2532 = vld [vmem:[%s10 + $0x74] sm:$0xf]
        %v2533 = vld [vmem:[%s10 + $0x78] sm:$0xf]
        %v2534 = vld [vmem:[%s10 + $0x7c] sm:$0xf]
        %v2535 = vld [vmem:[%s10 + $0x80] sm:$0xf]
        %v2536 = vld [vmem:[%s10 + $0x84] sm:$0xf]
        %v2537 = vld [vmem:[%s10 + $0x88] sm:$0xf]
        %v2538 = vld [vmem:[%s10 + $0x8c] sm:$0xf]
        %v2539 = vld [vmem:[%s10 + $0x90] sm:$0xf]
        %v2540 = vld [vmem:[%s10 + $0x94] sm:$0xf]
        %v2541 = vld [vmem:[%s10 + $0x98] sm:$0xf]
        %v2542 = vld [vmem:[%s10 + $0x9c] sm:$0xf]
        %v2543 = vld [vmem:[%s10 + $0xa0] sm:$0xf]
        %v2544 = vld [vmem:[%s10 + $0xa4] sm:$0xf]
        %v2545 = vld [vmem:[%s10 + $0xa8] sm:$0xf]
        %v2546 = vld [vmem:[%s10 + $0xac] sm:$0xf]
        %v2547 = vld [vmem:[%s10 + $0xb0] sm:$0xf]
        %v2548 = vld [vmem:[%s10 + $0xb4] sm:$0xf]
        %v2549 = vld [vmem:[%s10 + $0xb8] sm:$0xf]
        %v2550 = vld [vmem:[%s10 + $0xbc] sm:$0xf]
        %v2551 = vld [vmem:[%s10 + $0xc0] sm:$0xf]
        %v2552 = vld [vmem:[%s10 + $0xc4] sm:$0xf]
        %v2553 = vld [vmem:[%s10 + $0xc8] sm:$0xf]
        %v2554 = vld [vmem:[%s10 + $0xcc] sm:$0xf]
        %v2555 = vld [vmem:[%s10 + $0xd0] sm:$0xf]
        %v2556 = vld [vmem:[%s10 + $0xd4] sm:$0xf]
        %v2557 = vld [vmem:[%s10 + $0xd8] sm:$0xf]
        %v2558 = vld [vmem:[%s10 + $0xdc] sm:$0xf]
        %v2559 = vld [vmem:[%s10 + $0xe0] sm:$0xf]
        %v2560 = vld [vmem:[%s10 + $0xe4] sm:$0xf]
        %v2561 = vld [vmem:[%s10 + $0xe8] sm:$0xf]
        %v2562 = vld [vmem:[%s10 + $0xec] sm:$0xf]
        %v2563 = vld [vmem:[%s10 + $0xf0] sm:$0xf]
        %v2564 = vld [vmem:[%s10 + $0xf4] sm:$0xf]
        %v2565 = vld [vmem:[%s10 + $0xf8] sm:$0xf]
        %v2566 = vld [vmem:[%s10 + $0xfc] sm:$0xf]
        %v2567 = vld [vmem:[%s10 + $0x100] sm:$0xf]
        %v2568 = vld [vmem:[%s10 + $0x104] sm:$0xf]
        %v2569 = vld [vmem:[%s10 + $0x108] sm:$0xf]
        %v2570 = vld [vmem:[%s10 + $0x10c] sm:$0xf]
        %v2571 = vld [vmem:[%s10 + $0x110] sm:$0xf]
        %v2572 = vld [vmem:[%s10 + $0x114] sm:$0xf]
        %v2573 = vld [vmem:[%s10 + $0x118] sm:$0xf]
        %v2574 = vld [vmem:[%s10 + $0x11c] sm:$0xf]
        %v2575 = vld [vmem:[%s10 + $0x120] sm:$0xf]
        %v2576 = vld [vmem:[%s10 + $0x124] sm:$0xf]
        %v2577 = vld [vmem:[%s10 + $0x128] sm:$0xf]
        %v2578 = vld [vmem:[%s10 + $0x12c] sm:$0xf]
        %v2579 = vld [vmem:[%s10 + $0x130] sm:$0xf]
        %v2580 = vld [vmem:[%s10 + $0x134] sm:$0xf]
        %v2581 = vld [vmem:[%s10 + $0x138] sm:$0xf]
        %v2582 = vld [vmem:[%s10 + $0x13c] sm:$0xf]
        %v2583 = vld [vmem:[%s10 + $0x140] sm:$0xf]
        %v2584 = vld [vmem:[%s10 + $0x144] sm:$0xf]
        %v2585 = vld [vmem:[%s10 + $0x148] sm:$0xf]
        %v2586 = vld [vmem:[%s10 + $0x14c] sm:$0xf]
        %v2587 = vld [vmem:[%s10 + $0x150] sm:$0xf]
        %v2588 = vld [vmem:[%s10 + $0x154] sm:$0xf]
        %v2589 = vld [vmem:[%s10 + $0x158] sm:$0xf]
        %v2590 = vld [vmem:[%s10 + $0x15c] sm:$0xf]
        %v2591 = vld [vmem:[%s10 + $0x160] sm:$0xf]
        %v2592 = vld [vmem:[%s10 + $0x164] sm:$0xf]
        %v2593 = vld [vmem:[%s10 + $0x168] sm:$0xf]
        %v2594 = vld [vmem:[%s10 + $0x16c] sm:$0xf]
        %v2595 = vld [vmem:[%s10 + $0x170] sm:$0xf]
        %v2596 = vld [vmem:[%s10 + $0x174] sm:$0xf]
        %v2597 = vld [vmem:[%s10 + $0x178] sm:$0xf]
        %v2598 = vld [vmem:[%s10 + $0x17c] sm:$0xf]
        %v2599 = vld [vmem:[%s10 + $0x180] sm:$0xf]
        %v2600 = vld [vmem:[%s10 + $0x184] sm:$0xf]
        %v2601 = vld [vmem:[%s10 + $0x188] sm:$0xf]
        %v2602 = vld [vmem:[%s10 + $0x18c] sm:$0xf]
        %v2603 = vld [vmem:[%s10 + $0x190] sm:$0xf]
        %v2604 = vld [vmem:[%s10 + $0x194] sm:$0xf]
        %v2605 = vld [vmem:[%s10 + $0x198] sm:$0xf]
        %v2606 = vld [vmem:[%s10 + $0x19c] sm:$0xf]
        %v2607 = vld [vmem:[%s10 + $0x1a0] sm:$0xf]
        %v2608 = vld [vmem:[%s10 + $0x1a4] sm:$0xf]
        %v2609 = vld [vmem:[%s10 + $0x1a8] sm:$0xf]
        %v2610 = vld [vmem:[%s10 + $0x1ac] sm:$0xf]
        %v2611 = vld [vmem:[%s10 + $0x1b0] sm:$0xf]
        %v2612 = vld [vmem:[%s10 + $0x1b4] sm:$0xf]
        %v2613 = vld [vmem:[%s10 + $0x1b8] sm:$0xf]
        %v2614 = vld [vmem:[%s10 + $0x1bc] sm:$0xf]
        %v2615 = vld [vmem:[%s10 + $0x1c0] sm:$0xf]
        %v2616 = vld [vmem:[%s10 + $0x1c4] sm:$0xf]
        %v2617 = vld [vmem:[%s10 + $0x1c8] sm:$0xf]
        %v2618 = vld [vmem:[%s10 + $0x1cc] sm:$0xf]
        %v2619 = vld [vmem:[%s10 + $0x1d0] sm:$0xf]
        %v2620 = vld [vmem:[%s10 + $0x1d4] sm:$0xf]
        %v2621 = vld [vmem:[%s10 + $0x1d8] sm:$0xf]
        %v2622 = vld [vmem:[%s10 + $0x1dc] sm:$0xf]
        %v2623 = vld [vmem:[%s10 + $0x1e0] sm:$0xf]
        %v2624 = vld [vmem:[%s10 + $0x1e4] sm:$0xf]
        %v2625 = vld [vmem:[%s10 + $0x1e8] sm:$0xf]
        %v2626 = vld [vmem:[%s10 + $0x1ec] sm:$0xf]
        %v2627 = vld [vmem:[%s10 + $0x1f0] sm:$0xf]
        %v2628 = vld [vmem:[%s10 + $0x1f4] sm:$0xf]
        %v2629 = vld [vmem:[%s10 + $0x1f8] sm:$0xf]
        %v2630 = vld [vmem:[%s10 + $0x1fc] sm:$0xf]
        %v2631 = vld [vmem:[%s10 + $0x200] sm:$0xf]
        %v2632 = vld [vmem:[%s10 + $0x204] sm:$0xf]
        %v2633 = vld [vmem:[%s10 + $0x208] sm:$0xf]
        %v2634 = vld [vmem:[%s10 + $0x20c] sm:$0xf]
        %v2635 = vld [vmem:[%s10 + $0x210] sm:$0xf]
        %v2636 = vld [vmem:[%s10 + $0x214] sm:$0xf]
        %v2637 = vld [vmem:[%s10 + $0x218] sm:$0xf]
        %v2638 = vld [vmem:[%s10 + $0x21c] sm:$0xf]
        %v2639 = vld [vmem:[%s10 + $0x220] sm:$0xf]
        %v2640 = vld [vmem:[%s10 + $0x224] sm:$0xf]
        %v2641 = vld [vmem:[%s10 + $0x228] sm:$0xf]
        %v2642 = vld [vmem:[%s10 + $0x22c] sm:$0xf]
        %v2643 = vld [vmem:[%s10 + $0x230] sm:$0xf]
        %v2644 = vld [vmem:[%s10 + $0x234] sm:$0xf]
        %v2645 = vld [vmem:[%s10 + $0x238] sm:$0xf]
        %v2646 = vld [vmem:[%s10 + $0x23c] sm:$0xf]
        %v2647 = vld [vmem:[%s10 + $0x240] sm:$0xf]
        %v2648 = vld [vmem:[%s10 + $0x244] sm:$0xf]
        %v2649 = vld [vmem:[%s10 + $0x248] sm:$0xf]
        %v2650 = vld [vmem:[%s10 + $0x24c] sm:$0xf]
        %v2651 = vld [vmem:[%s10 + $0x250] sm:$0xf]
        %v2652 = vld [vmem:[%s10 + $0x254] sm:$0xf]
        %v2653 = vld [vmem:[%s10 + $0x258] sm:$0xf]
        %v2654 = vld [vmem:[%s10 + $0x25c] sm:$0xf]
        %v2655 = vld [vmem:[%s10 + $0x260] sm:$0xf]
        %v2656 = vld [vmem:[%s10 + $0x264] sm:$0xf]
        %v2657 = vld [vmem:[%s10 + $0x268] sm:$0xf]
        %v2658 = vld [vmem:[%s10 + $0x26c] sm:$0xf]
        %v2659 = vld [vmem:[%s10 + $0x270] sm:$0xf]
        %v2660 = vld [vmem:[%s10 + $0x274] sm:$0xf]
        %v2661 = vld [vmem:[%s10 + $0x278] sm:$0xf]
        %v2662 = vld [vmem:[%s10 + $0x27c] sm:$0xf]
        %v2663 = vld [vmem:[%s10 + $0x280] sm:$0xf]
        %v2664 = vld [vmem:[%s10 + $0x284] sm:$0xf]
        %v2665 = vld [vmem:[%s10 + $0x288] sm:$0xf]
        %v2666 = vld [vmem:[%s10 + $0x28c] sm:$0xf]
        %v2667 = vld [vmem:[%s10 + $0x290] sm:$0xf]
        %v2668 = vld [vmem:[%s10 + $0x294] sm:$0xf]
        %v2669 = vld [vmem:[%s10 + $0x298] sm:$0xf]
        %v2670 = vld [vmem:[%s10 + $0x29c] sm:$0xf]
        %v2671 = vld [vmem:[%s10 + $0x2a0] sm:$0xf]
        %v2672 = vld [vmem:[%s10 + $0x2a4] sm:$0xf]
        %v2673 = vld [vmem:[%s10 + $0x2a8] sm:$0xf]
        %v2674 = vld [vmem:[%s10 + $0x2ac] sm:$0xf]
        %v2675 = vld [vmem:[%s10 + $0x2b0] sm:$0xf]
        %v2676 = vld [vmem:[%s10 + $0x2b4] sm:$0xf]
        %v2677 = vld [vmem:[%s10 + $0x2b8] sm:$0xf]
        %v2678 = vld [vmem:[%s10 + $0x2bc] sm:$0xf]
        %v2679 = vld [vmem:[%s10 + $0x2c0] sm:$0xf]
        %v2680 = vld [vmem:[%s10 + $0x2c4] sm:$0xf]
        %v2681 = vld [vmem:[%s10 + $0x2c8] sm:$0xf]
        %v2682 = vld [vmem:[%s10 + $0x2cc] sm:$0xf]
        %v2683 = vld [vmem:[%s10 + $0x2d0] sm:$0xf]
        %v2684 = vld [vmem:[%s10 + $0x2d4] sm:$0xf]
        %v2685 = vld [vmem:[%s10 + $0x2d8] sm:$0xf]
        %v2686 = vld [vmem:[%s10 + $0x2dc] sm:$0xf]
        %v2687 = vld [vmem:[%s10 + $0x2e0] sm:$0xf]
        %v2688 = vld [vmem:[%s10 + $0x2e4] sm:$0xf]
        %v2689 = vld [vmem:[%s10 + $0x2e8] sm:$0xf]
        %v2690 = vld [vmem:[%s10 + $0x2ec] sm:$0xf]
        %v2691 = vld [vmem:[%s10 + $0x2f0] sm:$0xf]
        %v2692 = vld [vmem:[%s10 + $0x2f4] sm:$0xf]
        %v2693 = vld [vmem:[%s10 + $0x2f8] sm:$0xf]
        %v2694 = vld [vmem:[%s10 + $0x2fc] sm:$0xf]
        %v2695 = vld [vmem:[%s10 + $0x300] sm:$0xf]
        %v2696 = vld [vmem:[%s10 + $0x304] sm:$0xf]
        %v2697 = vld [vmem:[%s10 + $0x308] sm:$0xf]
        %v2698 = vld [vmem:[%s10 + $0x30c] sm:$0xf]
        %v2699 = vld [vmem:[%s10 + $0x310] sm:$0xf]
        %v2700 = vld [vmem:[%s10 + $0x314] sm:$0xf]
        %v2701 = vld [vmem:[%s10 + $0x318] sm:$0xf]
        %v2702 = vld [vmem:[%s10 + $0x31c] sm:$0xf]
        %v2703 = vld [vmem:[%s10 + $0x320] sm:$0xf]
        %v2704 = vld [vmem:[%s10 + $0x324] sm:$0xf]
        %v2705 = vld [vmem:[%s10 + $0x328] sm:$0xf]
        %v2706 = vld [vmem:[%s10 + $0x32c] sm:$0xf]
        %v2707 = vld [vmem:[%s10 + $0x330] sm:$0xf]
        %v2708 = vld [vmem:[%s10 + $0x334] sm:$0xf]
        %v2709 = vld [vmem:[%s10 + $0x338] sm:$0xf]
        %v2710 = vld [vmem:[%s10 + $0x33c] sm:$0xf]
        %v2711 = vld [vmem:[%s10 + $0x340] sm:$0xf]
        %v2712 = vld [vmem:[%s10 + $0x344] sm:$0xf]
        %v2713 = vld [vmem:[%s10 + $0x348] sm:$0xf]
        %v2714 = vld [vmem:[%s10 + $0x34c] sm:$0xf]
        %v2715 = vld [vmem:[%s10 + $0x350] sm:$0xf]
        %v2716 = vld [vmem:[%s10 + $0x354] sm:$0xf]
        %v2717 = vld [vmem:[%s10 + $0x358] sm:$0xf]
        %v2718 = vld [vmem:[%s10 + $0x35c] sm:$0xf]
        %v2719 = vld [vmem:[%s10 + $0x360] sm:$0xf]
        %v2720 = vld [vmem:[%s10 + $0x364] sm:$0xf]
        %v2721 = vld [vmem:[%s10 + $0x368] sm:$0xf]
        %v2722 = vld [vmem:[%s10 + $0x36c] sm:$0xf]
        %v2723 = vld [vmem:[%s10 + $0x370] sm:$0xf]
        %v2724 = vld [vmem:[%s10 + $0x374] sm:$0xf]
        %v2725 = vld [vmem:[%s10 + $0x378] sm:$0xf]
        %v2726 = vld [vmem:[%s10 + $0x37c] sm:$0xf]
        %v2727 = vld [vmem:[%s10 + $0x380] sm:$0xf]
        %v2728 = vld [vmem:[%s10 + $0x384] sm:$0xf]
        %v2729 = vld [vmem:[%s10 + $0x388] sm:$0xf]
        %v2730 = vld [vmem:[%s10 + $0x38c] sm:$0xf]
        %v2731 = vld [vmem:[%s10 + $0x390] sm:$0xf]
        %v2732 = vld [vmem:[%s10 + $0x394] sm:$0xf]
        %v2733 = vld [vmem:[%s10 + $0x398] sm:$0xf]
        %v2734 = vld [vmem:[%s10 + $0x39c] sm:$0xf]
        %v2735 = vld [vmem:[%s10 + $0x3a0] sm:$0xf]
        %v2736 = vld [vmem:[%s10 + $0x3a4] sm:$0xf]
        %v2737 = vld [vmem:[%s10 + $0x3a8] sm:$0xf]
        %v2738 = vld [vmem:[%s10 + $0x3ac] sm:$0xf]
        %v2739 = vld [vmem:[%s10 + $0x3b0] sm:$0xf]
        %v2740 = vld [vmem:[%s10 + $0x3b4] sm:$0xf]
        %v2741 = vld [vmem:[%s10 + $0x3b8] sm:$0xf]
        %v2742 = vld [vmem:[%s10 + $0x3bc] sm:$0xf]
        %v2743 = vld [vmem:[%s10 + $0x3c0] sm:$0xf]
        %v2744 = vld [vmem:[%s10 + $0x3c4] sm:$0xf]
        %v2745 = vld [vmem:[%s10 + $0x3c8] sm:$0xf]
        %v2746 = vld [vmem:[%s10 + $0x3cc] sm:$0xf]
        %v2747 = vld [vmem:[%s10 + $0x3d0] sm:$0xf]
        %v2748 = vld [vmem:[%s10 + $0x3d4] sm:$0xf]
        %v2749 = vld [vmem:[%s10 + $0x3d8] sm:$0xf]
        %v2750 = vld [vmem:[%s10 + $0x3dc] sm:$0xf]
        %v2751 = vld [vmem:[%s10 + $0x3e0] sm:$0xf]
        %v2752 = vld [vmem:[%s10 + $0x3e4] sm:$0xf]
        %v2753 = vld [vmem:[%s10 + $0x3e8] sm:$0xf]
        %v2754 = vld [vmem:[%s10 + $0x3ec] sm:$0xf]
        %v2755 = vld [vmem:[%s10 + $0x3f0] sm:$0xf]
        %v2756 = vld [vmem:[%s10 + $0x3f4] sm:$0xf]
        %v2757 = vld [vmem:[%s10 + $0x3f8] sm:$0xf]
        %v2758 = vld [vmem:[%s10 + $0x3fc] sm:$0xf]
        %v3015 = vunpack.c.l.b16 %v2503
        %v3016 = vunpack.c.l.b16 %v2504
        %v3017 = vunpack.c.l.b16 %v2505
        %v3018 = vunpack.c.l.b16 %v2506
        %v3019 = vunpack.c.l.b16 %v2507
        %v3020 = vunpack.c.l.b16 %v2508
        %v3021 = vunpack.c.l.b16 %v2509
        %v3022 = vunpack.c.l.b16 %v2510
        %v3023 = vunpack.c.l.b16 %v2511
        %v3024 = vunpack.c.l.b16 %v2512
        %v3025 = vunpack.c.l.b16 %v2513
        %v3026 = vunpack.c.l.b16 %v2514
        %v3027 = vunpack.c.l.b16 %v2515
        %v3028 = vunpack.c.l.b16 %v2516
        %v3029 = vunpack.c.l.b16 %v2517
        %v3030 = vunpack.c.l.b16 %v2518
        %v3031 = vunpack.c.l.b16 %v2519
        %v3032 = vunpack.c.l.b16 %v2520
        %v3033 = vunpack.c.l.b16 %v2521
        %v3034 = vunpack.c.l.b16 %v2522
        %v3035 = vunpack.c.l.b16 %v2523
        %v3036 = vunpack.c.l.b16 %v2524
        %v3037 = vunpack.c.l.b16 %v2525
        %v3038 = vunpack.c.l.b16 %v2526
        %v3039 = vunpack.c.l.b16 %v2527
        %v3040 = vunpack.c.l.b16 %v2528
        %v3041 = vunpack.c.l.b16 %v2529
        %v3042 = vunpack.c.l.b16 %v2530
        %v3043 = vunpack.c.l.b16 %v2531
        %v3044 = vunpack.c.l.b16 %v2532
        %v3045 = vunpack.c.l.b16 %v2533
        %v3046 = vunpack.c.l.b16 %v2534
        %v3047 = vunpack.c.l.b16 %v2535
        %v3048 = vunpack.c.l.b16 %v2536
        %v3049 = vunpack.c.l.b16 %v2537
        %v3050 = vunpack.c.l.b16 %v2538
        %v3051 = vunpack.c.l.b16 %v2539
        %v3052 = vunpack.c.l.b16 %v2540
        %v3053 = vunpack.c.l.b16 %v2541
        %v3054 = vunpack.c.l.b16 %v2542
        %v3055 = vunpack.c.l.b16 %v2543
        %v3056 = vunpack.c.l.b16 %v2544
        %v3057 = vunpack.c.l.b16 %v2545
        %v3058 = vunpack.c.l.b16 %v2546
        %v3059 = vunpack.c.l.b16 %v2547
        %v3060 = vunpack.c.l.b16 %v2548
        %v3061 = vunpack.c.l.b16 %v2549
        %v3062 = vunpack.c.l.b16 %v2550
        %v3063 = vunpack.c.l.b16 %v2551
        %v3064 = vunpack.c.l.b16 %v2552
        %v3065 = vunpack.c.l.b16 %v2553
        %v3066 = vunpack.c.l.b16 %v2554
        %v3067 = vunpack.c.l.b16 %v2555
        %v3068 = vunpack.c.l.b16 %v2556
        %v3069 = vunpack.c.l.b16 %v2557
        %v3070 = vunpack.c.l.b16 %v2558
        %v3071 = vunpack.c.l.b16 %v2559
        %v3072 = vunpack.c.l.b16 %v2560
        %v3073 = vunpack.c.l.b16 %v2561
        %v3074 = vunpack.c.l.b16 %v2562
        %v3075 = vunpack.c.l.b16 %v2563
        %v3076 = vunpack.c.l.b16 %v2564
        %v3077 = vunpack.c.l.b16 %v2565
        %v3078 = vunpack.c.l.b16 %v2566
        %v3079 = vunpack.c.l.b16 %v2567
        %v3080 = vunpack.c.l.b16 %v2568
        %v3081 = vunpack.c.l.b16 %v2569
        %v3082 = vunpack.c.l.b16 %v2570
        %v3083 = vunpack.c.l.b16 %v2571
        %v3084 = vunpack.c.l.b16 %v2572
        %v3085 = vunpack.c.l.b16 %v2573
        %v3086 = vunpack.c.l.b16 %v2574
        %v3087 = vunpack.c.l.b16 %v2575
        %v3088 = vunpack.c.l.b16 %v2576
        %v3089 = vunpack.c.l.b16 %v2577
        %v3090 = vunpack.c.l.b16 %v2578
        %v3091 = vunpack.c.l.b16 %v2579
        %v3092 = vunpack.c.l.b16 %v2580
        %v3093 = vunpack.c.l.b16 %v2581
        %v3094 = vunpack.c.l.b16 %v2582
        %v3095 = vunpack.c.l.b16 %v2583
        %v3096 = vunpack.c.l.b16 %v2584
        %v3097 = vunpack.c.l.b16 %v2585
        %v3098 = vunpack.c.l.b16 %v2586
        %v3099 = vunpack.c.l.b16 %v2587
        %v3100 = vunpack.c.l.b16 %v2588
        %v3101 = vunpack.c.l.b16 %v2589
        %v3102 = vunpack.c.l.b16 %v2590
        %v3103 = vunpack.c.l.b16 %v2591
        %v3104 = vunpack.c.l.b16 %v2592
        %v3105 = vunpack.c.l.b16 %v2593
        %v3106 = vunpack.c.l.b16 %v2594
        %v3107 = vunpack.c.l.b16 %v2595
        %v3108 = vunpack.c.l.b16 %v2596
        %v3109 = vunpack.c.l.b16 %v2597
        %v3110 = vunpack.c.l.b16 %v2598
        %v3111 = vunpack.c.l.b16 %v2599
        %v3112 = vunpack.c.l.b16 %v2600
        %v3113 = vunpack.c.l.b16 %v2601
        %v3114 = vunpack.c.l.b16 %v2602
        %v3115 = vunpack.c.l.b16 %v2603
        %v3116 = vunpack.c.l.b16 %v2604
        %v3117 = vunpack.c.l.b16 %v2605
        %v3118 = vunpack.c.l.b16 %v2606
        %v3119 = vunpack.c.l.b16 %v2607
        %v3120 = vunpack.c.l.b16 %v2608
        %v3121 = vunpack.c.l.b16 %v2609
        %v3122 = vunpack.c.l.b16 %v2610
        %v3123 = vunpack.c.l.b16 %v2611
        %v3124 = vunpack.c.l.b16 %v2612
        %v3125 = vunpack.c.l.b16 %v2613
        %v3126 = vunpack.c.l.b16 %v2614
        %v3127 = vunpack.c.l.b16 %v2615
        %v3128 = vunpack.c.l.b16 %v2616
        %v3129 = vunpack.c.l.b16 %v2617
        %v3130 = vunpack.c.l.b16 %v2618
        %v3131 = vunpack.c.l.b16 %v2619
        %v3132 = vunpack.c.l.b16 %v2620
        %v3133 = vunpack.c.l.b16 %v2621
        %v3134 = vunpack.c.l.b16 %v2622
        %v3135 = vunpack.c.l.b16 %v2623
        %v3136 = vunpack.c.l.b16 %v2624
        %v3137 = vunpack.c.l.b16 %v2625
        %v3138 = vunpack.c.l.b16 %v2626
        %v3139 = vunpack.c.l.b16 %v2627
        %v3140 = vunpack.c.l.b16 %v2628
        %v3141 = vunpack.c.l.b16 %v2629
        %v3142 = vunpack.c.l.b16 %v2630
        %v3143 = vunpack.c.l.b16 %v2631
        %v3144 = vunpack.c.l.b16 %v2632
        %v3145 = vunpack.c.l.b16 %v2633
        %v3146 = vunpack.c.l.b16 %v2634
        %v3147 = vunpack.c.l.b16 %v2635
        %v3148 = vunpack.c.l.b16 %v2636
        %v3149 = vunpack.c.l.b16 %v2637
        %v3150 = vunpack.c.l.b16 %v2638
        %v3151 = vunpack.c.l.b16 %v2639
        %v3152 = vunpack.c.l.b16 %v2640
        %v3153 = vunpack.c.l.b16 %v2641
        %v3154 = vunpack.c.l.b16 %v2642
        %v3155 = vunpack.c.l.b16 %v2643
        %v3156 = vunpack.c.l.b16 %v2644
        %v3157 = vunpack.c.l.b16 %v2645
        %v3158 = vunpack.c.l.b16 %v2646
        %v3159 = vunpack.c.l.b16 %v2647
        %v3160 = vunpack.c.l.b16 %v2648
        %v3161 = vunpack.c.l.b16 %v2649
        %v3162 = vunpack.c.l.b16 %v2650
        %v3163 = vunpack.c.l.b16 %v2651
        %v3164 = vunpack.c.l.b16 %v2652
        %v3165 = vunpack.c.l.b16 %v2653
        %v3166 = vunpack.c.l.b16 %v2654
        %v3167 = vunpack.c.l.b16 %v2655
        %v3168 = vunpack.c.l.b16 %v2656
        %v3169 = vunpack.c.l.b16 %v2657
        %v3170 = vunpack.c.l.b16 %v2658
        %v3171 = vunpack.c.l.b16 %v2659
        %v3172 = vunpack.c.l.b16 %v2660
        %v3173 = vunpack.c.l.b16 %v2661
        %v3174 = vunpack.c.l.b16 %v2662
        %v3175 = vunpack.c.l.b16 %v2663
        %v3176 = vunpack.c.l.b16 %v2664
        %v3177 = vunpack.c.l.b16 %v2665
        %v3178 = vunpack.c.l.b16 %v2666
        %v3179 = vunpack.c.l.b16 %v2667
        %v3180 = vunpack.c.l.b16 %v2668
        %v3181 = vunpack.c.l.b16 %v2669
        %v3182 = vunpack.c.l.b16 %v2670
        %v3183 = vunpack.c.l.b16 %v2671
        %v3184 = vunpack.c.l.b16 %v2672
        %v3185 = vunpack.c.l.b16 %v2673
        %v3186 = vunpack.c.l.b16 %v2674
        %v3187 = vunpack.c.l.b16 %v2675
        %v3188 = vunpack.c.l.b16 %v2676
        %v3189 = vunpack.c.l.b16 %v2677
        %v3190 = vunpack.c.l.b16 %v2678
        %v3191 = vunpack.c.l.b16 %v2679
        %v3192 = vunpack.c.l.b16 %v2680
        %v3193 = vunpack.c.l.b16 %v2681
        %v3194 = vunpack.c.l.b16 %v2682
        %v3195 = vunpack.c.l.b16 %v2683
        %v3196 = vunpack.c.l.b16 %v2684
        %v3197 = vunpack.c.l.b16 %v2685
        %v3198 = vunpack.c.l.b16 %v2686
        %v3199 = vunpack.c.l.b16 %v2687
        %v3200 = vunpack.c.l.b16 %v2688
        %v3201 = vunpack.c.l.b16 %v2689
        %v3202 = vunpack.c.l.b16 %v2690
        %v3203 = vunpack.c.l.b16 %v2691
        %v3204 = vunpack.c.l.b16 %v2692
        %v3205 = vunpack.c.l.b16 %v2693
        %v3206 = vunpack.c.l.b16 %v2694
        %v3207 = vunpack.c.l.b16 %v2695
        %v3208 = vunpack.c.l.b16 %v2696
        %v3209 = vunpack.c.l.b16 %v2697
        %v3210 = vunpack.c.l.b16 %v2698
        %v3211 = vunpack.c.l.b16 %v2699
        %v3212 = vunpack.c.l.b16 %v2700
        %v3213 = vunpack.c.l.b16 %v2701
        %v3214 = vunpack.c.l.b16 %v2702
        %v3215 = vunpack.c.l.b16 %v2703
        %v3216 = vunpack.c.l.b16 %v2704
        %v3217 = vunpack.c.l.b16 %v2705
        %v3218 = vunpack.c.l.b16 %v2706
        %v3219 = vunpack.c.l.b16 %v2707
        %v3220 = vunpack.c.l.b16 %v2708
        %v3221 = vunpack.c.l.b16 %v2709
        %v3222 = vunpack.c.l.b16 %v2710
        %v3223 = vunpack.c.l.b16 %v2711
        %v3224 = vunpack.c.l.b16 %v2712
        %v3225 = vunpack.c.l.b16 %v2713
        %v3226 = vunpack.c.l.b16 %v2714
        %v3227 = vunpack.c.l.b16 %v2715
        %v3228 = vunpack.c.l.b16 %v2716
        %v3229 = vunpack.c.l.b16 %v2717
        %v3230 = vunpack.c.l.b16 %v2718
        %v3231 = vunpack.c.l.b16 %v2719
        %v3232 = vunpack.c.l.b16 %v2720
        %v3233 = vunpack.c.l.b16 %v2721
        %v3234 = vunpack.c.l.b16 %v2722
        %v3235 = vunpack.c.l.b16 %v2723
        %v3236 = vunpack.c.l.b16 %v2724
        %v3237 = vunpack.c.l.b16 %v2725
        %v3238 = vunpack.c.l.b16 %v2726
        %v3239 = vunpack.c.l.b16 %v2727
        %v3240 = vunpack.c.l.b16 %v2728
        %v3241 = vunpack.c.l.b16 %v2729
        %v3242 = vunpack.c.l.b16 %v2730
        %v3243 = vunpack.c.l.b16 %v2731
        %v3244 = vunpack.c.l.b16 %v2732
        %v3245 = vunpack.c.l.b16 %v2733
        %v3246 = vunpack.c.l.b16 %v2734
        %v3247 = vunpack.c.l.b16 %v2735
        %v3248 = vunpack.c.l.b16 %v2736
        %v3249 = vunpack.c.l.b16 %v2737
        %v3250 = vunpack.c.l.b16 %v2738
        %v3251 = vunpack.c.l.b16 %v2739
        %v3252 = vunpack.c.l.b16 %v2740
        %v3253 = vunpack.c.l.b16 %v2741
        %v3254 = vunpack.c.l.b16 %v2742
        %v3255 = vunpack.c.l.b16 %v2743
        %v3256 = vunpack.c.l.b16 %v2744
        %v3257 = vunpack.c.l.b16 %v2745
        %v3258 = vunpack.c.l.b16 %v2746
        %v3259 = vunpack.c.l.b16 %v2747
        %v3260 = vunpack.c.l.b16 %v2748
        %v3261 = vunpack.c.l.b16 %v2749
        %v3262 = vunpack.c.l.b16 %v2750
        %v3263 = vunpack.c.l.b16 %v2751
        %v3264 = vunpack.c.l.b16 %v2752
        %v3265 = vunpack.c.l.b16 %v2753
        %v3266 = vunpack.c.l.b16 %v2754
        %v3267 = vunpack.c.l.b16 %v2755
        %v3268 = vunpack.c.l.b16 %v2756
        %v3269 = vunpack.c.l.b16 %v2757
        %v3270 = vunpack.c.l.b16 %v2758
        %v3271 = vpack.c.b16 %v3016, %v3015
        %v3272 = vpack.c.b16 %v3018, %v3017
        %v3273 = vpack.c.b16 %v3020, %v3019
        %v3274 = vpack.c.b16 %v3022, %v3021
        %v3275 = vpack.c.b16 %v3024, %v3023
        %v3276 = vpack.c.b16 %v3026, %v3025
        %v3277 = vpack.c.b16 %v3028, %v3027
        %v3278 = vpack.c.b16 %v3030, %v3029
        %v3279 = vpack.c.b16 %v3032, %v3031
        %v3280 = vpack.c.b16 %v3034, %v3033
        %v3281 = vpack.c.b16 %v3036, %v3035
        %v3282 = vpack.c.b16 %v3038, %v3037
        %v3283 = vpack.c.b16 %v3040, %v3039
        %v3284 = vpack.c.b16 %v3042, %v3041
        %v3285 = vpack.c.b16 %v3044, %v3043
        %v3286 = vpack.c.b16 %v3046, %v3045
        %v3287 = vpack.c.b16 %v3048, %v3047
        %v3288 = vpack.c.b16 %v3050, %v3049
        %v3289 = vpack.c.b16 %v3052, %v3051
        %v3290 = vpack.c.b16 %v3054, %v3053
        %v3291 = vpack.c.b16 %v3056, %v3055
        %v3292 = vpack.c.b16 %v3058, %v3057
        %v3293 = vpack.c.b16 %v3060, %v3059
        %v3294 = vpack.c.b16 %v3062, %v3061
        %v3295 = vpack.c.b16 %v3064, %v3063
        %v3296 = vpack.c.b16 %v3066, %v3065
        %v3297 = vpack.c.b16 %v3068, %v3067
        %v3298 = vpack.c.b16 %v3070, %v3069
        %v3299 = vpack.c.b16 %v3072, %v3071
        %v3300 = vpack.c.b16 %v3074, %v3073
        %v3301 = vpack.c.b16 %v3076, %v3075
        %v3302 = vpack.c.b16 %v3078, %v3077
        %v3303 = vpack.c.b16 %v3080, %v3079
        %v3304 = vpack.c.b16 %v3082, %v3081
        %v3305 = vpack.c.b16 %v3084, %v3083
        %v3306 = vpack.c.b16 %v3086, %v3085
        %v3307 = vpack.c.b16 %v3088, %v3087
        %v3308 = vpack.c.b16 %v3090, %v3089
        %v3309 = vpack.c.b16 %v3092, %v3091
        %v3310 = vpack.c.b16 %v3094, %v3093
        %v3311 = vpack.c.b16 %v3096, %v3095
        %v3312 = vpack.c.b16 %v3098, %v3097
        %v3313 = vpack.c.b16 %v3100, %v3099
        %v3314 = vpack.c.b16 %v3102, %v3101
        %v3315 = vpack.c.b16 %v3104, %v3103
        %v3316 = vpack.c.b16 %v3106, %v3105
        %v3317 = vpack.c.b16 %v3108, %v3107
        %v3318 = vpack.c.b16 %v3110, %v3109
        %v3319 = vpack.c.b16 %v3112, %v3111
        %v3320 = vpack.c.b16 %v3114, %v3113
        %v3321 = vpack.c.b16 %v3116, %v3115
        %v3322 = vpack.c.b16 %v3118, %v3117
        %v3323 = vpack.c.b16 %v3120, %v3119
        %v3324 = vpack.c.b16 %v3122, %v3121
        %v3325 = vpack.c.b16 %v3124, %v3123
        %v3326 = vpack.c.b16 %v3126, %v3125
        %v3327 = vpack.c.b16 %v3128, %v3127
        %v3328 = vpack.c.b16 %v3130, %v3129
        %v3329 = vpack.c.b16 %v3132, %v3131
        %v3330 = vpack.c.b16 %v3134, %v3133
        %v3331 = vpack.c.b16 %v3136, %v3135
        %v3332 = vpack.c.b16 %v3138, %v3137
        %v3333 = vpack.c.b16 %v3140, %v3139
        %v3334 = vpack.c.b16 %v3142, %v3141
        %v3335 = vpack.c.b16 %v3144, %v3143
        %v3336 = vpack.c.b16 %v3146, %v3145
        %v3337 = vpack.c.b16 %v3148, %v3147
        %v3338 = vpack.c.b16 %v3150, %v3149
        %v3339 = vpack.c.b16 %v3152, %v3151
        %v3340 = vpack.c.b16 %v3154, %v3153
        %v3341 = vpack.c.b16 %v3156, %v3155
        %v3342 = vpack.c.b16 %v3158, %v3157
        %v3343 = vpack.c.b16 %v3160, %v3159
        %v3344 = vpack.c.b16 %v3162, %v3161
        %v3345 = vpack.c.b16 %v3164, %v3163
        %v3346 = vpack.c.b16 %v3166, %v3165
        %v3347 = vpack.c.b16 %v3168, %v3167
        %v3348 = vpack.c.b16 %v3170, %v3169
        %v3349 = vpack.c.b16 %v3172, %v3171
        %v3350 = vpack.c.b16 %v3174, %v3173
        %v3351 = vpack.c.b16 %v3176, %v3175
        %v3352 = vpack.c.b16 %v3178, %v3177
        %v3353 = vpack.c.b16 %v3180, %v3179
        %v3354 = vpack.c.b16 %v3182, %v3181
        %v3355 = vpack.c.b16 %v3184, %v3183
        %v3356 = vpack.c.b16 %v3186, %v3185
        %v3357 = vpack.c.b16 %v3188, %v3187
        %v3358 = vpack.c.b16 %v3190, %v3189
        %v3359 = vpack.c.b16 %v3192, %v3191
        %v3360 = vpack.c.b16 %v3194, %v3193
        %v3361 = vpack.c.b16 %v3196, %v3195
        %v3362 = vpack.c.b16 %v3198, %v3197
        %v3363 = vpack.c.b16 %v3200, %v3199
        %v3364 = vpack.c.b16 %v3202, %v3201
        %v3365 = vpack.c.b16 %v3204, %v3203
        %v3366 = vpack.c.b16 %v3206, %v3205
        %v3367 = vpack.c.b16 %v3208, %v3207
        %v3368 = vpack.c.b16 %v3210, %v3209
        %v3369 = vpack.c.b16 %v3212, %v3211
        %v3370 = vpack.c.b16 %v3214, %v3213
        %v3371 = vpack.c.b16 %v3216, %v3215
        %v3372 = vpack.c.b16 %v3218, %v3217
        %v3373 = vpack.c.b16 %v3220, %v3219
        %v3374 = vpack.c.b16 %v3222, %v3221
        %v3375 = vpack.c.b16 %v3224, %v3223
        %v3376 = vpack.c.b16 %v3226, %v3225
        %v3377 = vpack.c.b16 %v3228, %v3227
        %v3378 = vpack.c.b16 %v3230, %v3229
        %v3379 = vpack.c.b16 %v3232, %v3231
        %v3380 = vpack.c.b16 %v3234, %v3233
        %v3381 = vpack.c.b16 %v3236, %v3235
        %v3382 = vpack.c.b16 %v3238, %v3237
        %v3383 = vpack.c.b16 %v3240, %v3239
        %v3384 = vpack.c.b16 %v3242, %v3241
        %v3385 = vpack.c.b16 %v3244, %v3243
        %v3386 = vpack.c.b16 %v3246, %v3245
        %v3387 = vpack.c.b16 %v3248, %v3247
        %v3388 = vpack.c.b16 %v3250, %v3249
        %v3389 = vpack.c.b16 %v3252, %v3251
        %v3390 = vpack.c.b16 %v3254, %v3253
        %v3391 = vpack.c.b16 %v3256, %v3255
        %v3392 = vpack.c.b16 %v3258, %v3257
        %v3393 = vpack.c.b16 %v3260, %v3259
        %v3394 = vpack.c.b16 %v3262, %v3261
        %v3395 = vpack.c.b16 %v3264, %v3263
        %v3396 = vpack.c.b16 %v3266, %v3265
        %v3397 = vpack.c.b16 %v3268, %v3267
        %v3398 = vpack.c.b16 %v3270, %v3269
        %3527 = vmatprep.subr.bf16.mxu0 0
        %3528 = vmatpush1.bf16.msra.mxu0 %v3271
        %3529 = vmatprep.subr.bf16.mxu0 0
        %3530 = vmatpush1.bf16.msra.mxu0 %v3272
        %3531 = vmatprep.subr.bf16.mxu0 0
        %3532 = vmatpush1.bf16.msra.mxu0 %v3273
        %3533 = vmatprep.subr.bf16.mxu0 0
        %3534 = vmatpush1.bf16.msra.mxu0 %v3274
        %3535 = vmatprep.subr.bf16.mxu0 0
        %3536 = vmatpush1.bf16.msra.mxu0 %v3275
        %3537 = vmatprep.subr.bf16.mxu0 0
        %3538 = vmatpush1.bf16.msra.mxu0 %v3276
        %3539 = vmatprep.subr.bf16.mxu0 0
        %3540 = vmatpush1.bf16.msra.mxu0 %v3277
        %3541 = vmatprep.subr.bf16.mxu0 0
        %3542 = vmatpush1.bf16.msra.mxu0 %v3278
        %3543 = vmatprep.subr.bf16.mxu0 0
        %3544 = vmatpush1.bf16.msra.mxu0 %v3279
        %3545 = vmatprep.subr.bf16.mxu0 0
        %3546 = vmatpush1.bf16.msra.mxu0 %v3280
        %3547 = vmatprep.subr.bf16.mxu0 0
        %3548 = vmatpush1.bf16.msra.mxu0 %v3281
        %3549 = vmatprep.subr.bf16.mxu0 0
        %3550 = vmatpush1.bf16.msra.mxu0 %v3282
        %3551 = vmatprep.subr.bf16.mxu0 0
        %3552 = vmatpush1.bf16.msra.mxu0 %v3283
        %3553 = vmatprep.subr.bf16.mxu0 0
        %3554 = vmatpush1.bf16.msra.mxu0 %v3284
        %3555 = vmatprep.subr.bf16.mxu0 0
        %3556 = vmatpush1.bf16.msra.mxu0 %v3285
        %3557 = vmatprep.subr.bf16.mxu0 0
        %3558 = vmatpush1.bf16.msra.mxu0 %v3286
        %3559 = vmatprep.mubr.bf16.mxu0 %v2488
        %3560 = vmatmul.mubr.bf16.gmra.mrb[0].mxu0 %v2487
        %v3561 = vpop.f32.mrb[0].mxu0
        %v3562 = vadd.f32 0.0, %v3561
        %v3563 = vpop.f32.mrb[0].mxu0
        %v3564 = vpop.f32.mrb[0].mxu0
        %v3565 = vpop.f32.mrb[0].mxu0
        %3566 = vdwg.mxu0
        %3567 = vmatprep.subr.bf16.mxu0 0
        %3568 = vmatpush1.bf16.msra.mxu0 %v3287
        %3569 = vmatprep.subr.bf16.mxu0 0
        %3570 = vmatpush1.bf16.msra.mxu0 %v3288
        %3571 = vmatprep.subr.bf16.mxu0 0
        %3572 = vmatpush1.bf16.msra.mxu0 %v3289
        %3573 = vmatprep.subr.bf16.mxu0 0
        %3574 = vmatpush1.bf16.msra.mxu0 %v3290
        %3575 = vmatprep.subr.bf16.mxu0 0
        %3576 = vmatpush1.bf16.msra.mxu0 %v3291
        %3577 = vmatprep.subr.bf16.mxu0 0
        %3578 = vmatpush1.bf16.msra.mxu0 %v3292
        %3579 = vmatprep.subr.bf16.mxu0 0
        %3580 = vmatpush1.bf16.msra.mxu0 %v3293
        %3581 = vmatprep.subr.bf16.mxu0 0
        %3582 = vmatpush1.bf16.msra.mxu0 %v3294
        %3583 = vmatprep.subr.bf16.mxu0 0
        %3584 = vmatpush1.bf16.msra.mxu0 %v3295
        %3585 = vmatprep.subr.bf16.mxu0 0
        %3586 = vmatpush1.bf16.msra.mxu0 %v3296
        %3587 = vmatprep.subr.bf16.mxu0 0
        %3588 = vmatpush1.bf16.msra.mxu0 %v3297
        %3589 = vmatprep.subr.bf16.mxu0 0
        %3590 = vmatpush1.bf16.msra.mxu0 %v3298
        %3591 = vmatprep.subr.bf16.mxu0 0
        %3592 = vmatpush1.bf16.msra.mxu0 %v3299
        %3593 = vmatprep.subr.bf16.mxu0 0
        %3594 = vmatpush1.bf16.msra.mxu0 %v3300
        %3595 = vmatprep.subr.bf16.mxu0 0
        %3596 = vmatpush1.bf16.msra.mxu0 %v3301
        %3597 = vmatprep.subr.bf16.mxu0 0
        %3598 = vmatpush1.bf16.msra.mxu0 %v3302
        %3599 = vmatprep.mubr.bf16.mxu0 %v2490
        %3600 = vmatmul.mubr.bf16.gmra.mrb[0].mxu0 %v2489
        %v3601 = vpop.f32.mrb[0].mxu0
        %v3602 = vadd.f32 %v3562, %v3601
        %v3603 = vpop.f32.mrb[0].mxu0
        %v3604 = vpop.f32.mrb[0].mxu0
        %v3605 = vpop.f32.mrb[0].mxu0
        %3606 = vdwg.mxu0
        %3607 = vmatprep.subr.bf16.mxu0 0
        %3608 = vmatpush1.bf16.msra.mxu0 %v3303
        %3609 = vmatprep.subr.bf16.mxu0 0
        %3610 = vmatpush1.bf16.msra.mxu0 %v3304
        %3611 = vmatprep.subr.bf16.mxu0 0
        %3612 = vmatpush1.bf16.msra.mxu0 %v3305
        %3613 = vmatprep.subr.bf16.mxu0 0
        %3614 = vmatpush1.bf16.msra.mxu0 %v3306
        %3615 = vmatprep.subr.bf16.mxu0 0
        %3616 = vmatpush1.bf16.msra.mxu0 %v3307
        %3617 = vmatprep.subr.bf16.mxu0 0
        %3618 = vmatpush1.bf16.msra.mxu0 %v3308
        %3619 = vmatprep.subr.bf16.mxu0 0
        %3620 = vmatpush1.bf16.msra.mxu0 %v3309
        %3621 = vmatprep.subr.bf16.mxu0 0
        %3622 = vmatpush1.bf16.msra.mxu0 %v3310
        %3623 = vmatprep.subr.bf16.mxu0 0
        %3624 = vmatpush1.bf16.msra.mxu0 %v3311
        %3625 = vmatprep.subr.bf16.mxu0 0
        %3626 = vmatpush1.bf16.msra.mxu0 %v3312
        %3627 = vmatprep.subr.bf16.mxu0 0
        %3628 = vmatpush1.bf16.msra.mxu0 %v3313
        %3629 = vmatprep.subr.bf16.mxu0 0
        %3630 = vmatpush1.bf16.msra.mxu0 %v3314
        %3631 = vmatprep.subr.bf16.mxu0 0
        %3632 = vmatpush1.bf16.msra.mxu0 %v3315
        %3633 = vmatprep.subr.bf16.mxu0 0
        %3634 = vmatpush1.bf16.msra.mxu0 %v3316
        %3635 = vmatprep.subr.bf16.mxu0 0
        %3636 = vmatpush1.bf16.msra.mxu0 %v3317
        %3637 = vmatprep.subr.bf16.mxu0 0
        %3638 = vmatpush1.bf16.msra.mxu0 %v3318
        %3639 = vmatprep.mubr.bf16.mxu0 %v2492
        %3640 = vmatmul.mubr.bf16.gmra.mrb[0].mxu0 %v2491
        %v3641 = vpop.f32.mrb[0].mxu0
        %v3642 = vadd.f32 %v3602, %v3641
        %v3643 = vpop.f32.mrb[0].mxu0
        %v3644 = vpop.f32.mrb[0].mxu0
        %v3645 = vpop.f32.mrb[0].mxu0
        %3646 = vdwg.mxu0
        %3647 = vmatprep.subr.bf16.mxu0 0
        %3648 = vmatpush1.bf16.msra.mxu0 %v3319
        %3649 = vmatprep.subr.bf16.mxu0 0
        %3650 = vmatpush1.bf16.msra.mxu0 %v3320
        %3651 = vmatprep.subr.bf16.mxu0 0
        %3652 = vmatpush1.bf16.msra.mxu0 %v3321
        %3653 = vmatprep.subr.bf16.mxu0 0
        %3654 = vmatpush1.bf16.msra.mxu0 %v3322
        %3655 = vmatprep.subr.bf16.mxu0 0
        %3656 = vmatpush1.bf16.msra.mxu0 %v3323
        %3657 = vmatprep.subr.bf16.mxu0 0
        %3658 = vmatpush1.bf16.msra.mxu0 %v3324
        %3659 = vmatprep.subr.bf16.mxu0 0
        %3660 = vmatpush1.bf16.msra.mxu0 %v3325
        %3661 = vmatprep.subr.bf16.mxu0 0
        %3662 = vmatpush1.bf16.msra.mxu0 %v3326
        %3663 = vmatprep.subr.bf16.mxu0 0
        %3664 = vmatpush1.bf16.msra.mxu0 %v3327
        %3665 = vmatprep.subr.bf16.mxu0 0
        %3666 = vmatpush1.bf16.msra.mxu0 %v3328
        %3667 = vmatprep.subr.bf16.mxu0 0
        %3668 = vmatpush1.bf16.msra.mxu0 %v3329
        %3669 = vmatprep.subr.bf16.mxu0 0
        %3670 = vmatpush1.bf16.msra.mxu0 %v3330
        %3671 = vmatprep.subr.bf16.mxu0 0
        %3672 = vmatpush1.bf16.msra.mxu0 %v3331
        %3673 = vmatprep.subr.bf16.mxu0 0
        %3674 = vmatpush1.bf16.msra.mxu0 %v3332
        %3675 = vmatprep.subr.bf16.mxu0 0
        %3676 = vmatpush1.bf16.msra.mxu0 %v3333
        %3677 = vmatprep.subr.bf16.mxu0 0
        %3678 = vmatpush1.bf16.msra.mxu0 %v3334
        %3679 = vmatprep.mubr.bf16.mxu0 %v2494
        %3680 = vmatmul.mubr.bf16.gmra.mrb[0].mxu0 %v2493
        %v3681 = vpop.f32.mrb[0].mxu0
        %v3682 = vadd.f32 %v3642, %v3681
        %v3683 = vpop.f32.mrb[0].mxu0
        %v3684 = vpop.f32.mrb[0].mxu0
        %v3685 = vpop.f32.mrb[0].mxu0
        %3686 = vdwg.mxu0
        %3687 = vmatprep.subr.bf16.mxu0 0
        %3688 = vmatpush1.bf16.msra.mxu0 %v3335
        %3689 = vmatprep.subr.bf16.mxu0 0
        %3690 = vmatpush1.bf16.msra.mxu0 %v3336
        %3691 = vmatprep.subr.bf16.mxu0 0
        %3692 = vmatpush1.bf16.msra.mxu0 %v3337
        %3693 = vmatprep.subr.bf16.mxu0 0
        %3694 = vmatpush1.bf16.msra.mxu0 %v3338
        %3695 = vmatprep.subr.bf16.mxu0 0
        %3696 = vmatpush1.bf16.msra.mxu0 %v3339
        %3697 = vmatprep.subr.bf16.mxu0 0
        %3698 = vmatpush1.bf16.msra.mxu0 %v3340
        %3699 = vmatprep.subr.bf16.mxu0 0
        %3700 = vmatpush1.bf16.msra.mxu0 %v3341
        %3701 = vmatprep.subr.bf16.mxu0 0
        %3702 = vmatpush1.bf16.msra.mxu0 %v3342
        %3703 = vmatprep.subr.bf16.mxu0 0
        %3704 = vmatpush1.bf16.msra.mxu0 %v3343
        %3705 = vmatprep.subr.bf16.mxu0 0
        %3706 = vmatpush1.bf16.msra.mxu0 %v3344
        %3707 = vmatprep.subr.bf16.mxu0 0
        %3708 = vmatpush1.bf16.msra.mxu0 %v3345
        %3709 = vmatprep.subr.bf16.mxu0 0
        %3710 = vmatpush1.bf16.msra.mxu0 %v3346
        %3711 = vmatprep.subr.bf16.mxu0 0
        %3712 = vmatpush1.bf16.msra.mxu0 %v3347
        %3713 = vmatprep.subr.bf16.mxu0 0
        %3714 = vmatpush1.bf16.msra.mxu0 %v3348
        %3715 = vmatprep.subr.bf16.mxu0 0
        %3716 = vmatpush1.bf16.msra.mxu0 %v3349
        %3717 = vmatprep.subr.bf16.mxu0 0
        %3718 = vmatpush1.bf16.msra.mxu0 %v3350
        %3719 = vmatprep.mubr.bf16.mxu0 %v2496
        %3720 = vmatmul.mubr.bf16.gmra.mrb[0].mxu0 %v2495
        %v3721 = vpop.f32.mrb[0].mxu0
        %v3722 = vadd.f32 %v3682, %v3721
        %v3723 = vpop.f32.mrb[0].mxu0
        %v3724 = vpop.f32.mrb[0].mxu0
        %v3725 = vpop.f32.mrb[0].mxu0
        %3726 = vdwg.mxu0
        %3727 = vmatprep.subr.bf16.mxu0 0
        %3728 = vmatpush1.bf16.msra.mxu0 %v3351
        %3729 = vmatprep.subr.bf16.mxu0 0
        %3730 = vmatpush1.bf16.msra.mxu0 %v3352
        %3731 = vmatprep.subr.bf16.mxu0 0
        %3732 = vmatpush1.bf16.msra.mxu0 %v3353
        %3733 = vmatprep.subr.bf16.mxu0 0
        %3734 = vmatpush1.bf16.msra.mxu0 %v3354
        %3735 = vmatprep.subr.bf16.mxu0 0
        %3736 = vmatpush1.bf16.msra.mxu0 %v3355
        %3737 = vmatprep.subr.bf16.mxu0 0
        %3738 = vmatpush1.bf16.msra.mxu0 %v3356
        %3739 = vmatprep.subr.bf16.mxu0 0
        %3740 = vmatpush1.bf16.msra.mxu0 %v3357
        %3741 = vmatprep.subr.bf16.mxu0 0
        %3742 = vmatpush1.bf16.msra.mxu0 %v3358
        %3743 = vmatprep.subr.bf16.mxu0 0
        %3744 = vmatpush1.bf16.msra.mxu0 %v3359
        %3745 = vmatprep.subr.bf16.mxu0 0
        %3746 = vmatpush1.bf16.msra.mxu0 %v3360
        %3747 = vmatprep.subr.bf16.mxu0 0
        %3748 = vmatpush1.bf16.msra.mxu0 %v3361
        %3749 = vmatprep.subr.bf16.mxu0 0
        %3750 = vmatpush1.bf16.msra.mxu0 %v3362
        %3751 = vmatprep.subr.bf16.mxu0 0
        %3752 = vmatpush1.bf16.msra.mxu0 %v3363
        %3753 = vmatprep.subr.bf16.mxu0 0
        %3754 = vmatpush1.bf16.msra.mxu0 %v3364
        %3755 = vmatprep.subr.bf16.mxu0 0
        %3756 = vmatpush1.bf16.msra.mxu0 %v3365
        %3757 = vmatprep.subr.bf16.mxu0 0
        %3758 = vmatpush1.bf16.msra.mxu0 %v3366
        %3759 = vmatprep.mubr.bf16.mxu0 %v2498
        %3760 = vmatmul.mubr.bf16.gmra.mrb[0].mxu0 %v2497
        %v3761 = vpop.f32.mrb[0].mxu0
        %v3762 = vadd.f32 %v3722, %v3761
        %v3763 = vpop.f32.mrb[0].mxu0
        %v3764 = vpop.f32.mrb[0].mxu0
        %v3765 = vpop.f32.mrb[0].mxu0
        %3766 = vdwg.mxu0
        %3767 = vmatprep.subr.bf16.mxu0 0
        %3768 = vmatpush1.bf16.msra.mxu0 %v3367
        %3769 = vmatprep.subr.bf16.mxu0 0
        %3770 = vmatpush1.bf16.msra.mxu0 %v3368
        %3771 = vmatprep.subr.bf16.mxu0 0
        %3772 = vmatpush1.bf16.msra.mxu0 %v3369
        %3773 = vmatprep.subr.bf16.mxu0 0
        %3774 = vmatpush1.bf16.msra.mxu0 %v3370
        %3775 = vmatprep.subr.bf16.mxu0 0
        %3776 = vmatpush1.bf16.msra.mxu0 %v3371
        %3777 = vmatprep.subr.bf16.mxu0 0
        %3778 = vmatpush1.bf16.msra.mxu0 %v3372
        %3779 = vmatprep.subr.bf16.mxu0 0
        %3780 = vmatpush1.bf16.msra.mxu0 %v3373
        %3781 = vmatprep.subr.bf16.mxu0 0
        %3782 = vmatpush1.bf16.msra.mxu0 %v3374
        %3783 = vmatprep.subr.bf16.mxu0 0
        %3784 = vmatpush1.bf16.msra.mxu0 %v3375
        %3785 = vmatprep.subr.bf16.mxu0 0
        %3786 = vmatpush1.bf16.msra.mxu0 %v3376
        %3787 = vmatprep.subr.bf16.mxu0 0
        %3788 = vmatpush1.bf16.msra.mxu0 %v3377
        %3789 = vmatprep.subr.bf16.mxu0 0
        %3790 = vmatpush1.bf16.msra.mxu0 %v3378
        %3791 = vmatprep.subr.bf16.mxu0 0
        %3792 = vmatpush1.bf16.msra.mxu0 %v3379
        %3793 = vmatprep.subr.bf16.mxu0 0
        %3794 = vmatpush1.bf16.msra.mxu0 %v3380
        %3795 = vmatprep.subr.bf16.mxu0 0
        %3796 = vmatpush1.bf16.msra.mxu0 %v3381
        %3797 = vmatprep.subr.bf16.mxu0 0
        %3798 = vmatpush1.bf16.msra.mxu0 %v3382
        %3799 = vmatprep.mubr.bf16.mxu0 %v2500
        %3800 = vmatmul.mubr.bf16.gmra.mrb[0].mxu0 %v2499
        %v3801 = vpop.f32.mrb[0].mxu0
        %v3802 = vadd.f32 %v3762, %v3801
        %v3803 = vpop.f32.mrb[0].mxu0
        %v3804 = vpop.f32.mrb[0].mxu0
        %v3805 = vpop.f32.mrb[0].mxu0
        %3806 = vdwg.mxu0
        %3807 = vmatprep.subr.bf16.mxu0 0
        %3808 = vmatpush1.bf16.msra.mxu0 %v3383
        %3809 = vmatprep.subr.bf16.mxu0 0
        %3810 = vmatpush1.bf16.msra.mxu0 %v3384
        %3811 = vmatprep.subr.bf16.mxu0 0
        %3812 = vmatpush1.bf16.msra.mxu0 %v3385
        %3813 = vmatprep.subr.bf16.mxu0 0
        %3814 = vmatpush1.bf16.msra.mxu0 %v3386
        %3815 = vmatprep.subr.bf16.mxu0 0
        %3816 = vmatpush1.bf16.msra.mxu0 %v3387
        %3817 = vmatprep.subr.bf16.mxu0 0
        %3818 = vmatpush1.bf16.msra.mxu0 %v3388
        %3819 = vmatprep.subr.bf16.mxu0 0
        %3820 = vmatpush1.bf16.msra.mxu0 %v3389
        %3821 = vmatprep.subr.bf16.mxu0 0
        %3822 = vmatpush1.bf16.msra.mxu0 %v3390
        %3823 = vmatprep.subr.bf16.mxu0 0
        %3824 = vmatpush1.bf16.msra.mxu0 %v3391
        %3825 = vmatprep.subr.bf16.mxu0 0
        %3826 = vmatpush1.bf16.msra.mxu0 %v3392
        %3827 = vmatprep.subr.bf16.mxu0 0
        %3828 = vmatpush1.bf16.msra.mxu0 %v3393
        %3829 = vmatprep.subr.bf16.mxu0 0
        %3830 = vmatpush1.bf16.msra.mxu0 %v3394
        %3831 = vmatprep.subr.bf16.mxu0 0
        %3832 = vmatpush1.bf16.msra.mxu0 %v3395
        %3833 = vmatprep.subr.bf16.mxu0 0
        %3834 = vmatpush1.bf16.msra.mxu0 %v3396
        %3835 = vmatprep.subr.bf16.mxu0 0
        %3836 = vmatpush1.bf16.msra.mxu0 %v3397
        %3837 = vmatprep.subr.bf16.mxu0 0
        %3838 = vmatpush1.bf16.msra.mxu0 %v3398
        %3839 = vmatprep.mubr.bf16.mxu0 %v2502
        %3840 = vmatmul.mubr.bf16.gmra.mrb[0].mxu0 %v2501
        %v3841 = vpop.f32.mrb[0].mxu0
        %v3842 = vadd.f32 %v3802, %v3841
        %v3843 = vpop.f32.mrb[0].mxu0
        %v3844 = vpop.f32.mrb[0].mxu0
        %v3845 = vpop.f32.mrb[0].mxu0
        %3846 = vdwg.mxu0
        %v3847 = vadd.f32 %v1832, %v3842
        %v3848 = vlaneseq
        %v3849 = vshrl.u32 %v3848, 7
        %v3850 = vsub.s32 0, %v3849
        %v3851 = vrot.slane %v385, %v3850
        %v3852 = vadd.f32 %v3847, %v3851
        %v3853 = vsel %vm721, %v3852, 0.0
        %3854 = vadd.xlane.f32.xlu0 %v3853
        %v3855 = vpop.xlane.xlu0 %3854
        %v3856 = vmul.f32 %v3855, %v725
        %v3857 = vsub.f32 %v3852, %v3856
        %v3858 = vmul.f32 %v3857, %v3857
        %v3859 = vsel %vm721, %v3858, 0.0
        %3860 = vadd.xlane.f32.xlu0 %v3859
        %v3861 = vpop.xlane.xlu0 %3860
        %v3862 = vmul.f32 %v3861, 0.032258064
        %v3863 = vrsqrt.pop %v3862
        %v3864 = vmul.f32 %v3862, %v3863
        %vm3865 = vcmp.eq.f32.partialorder %v3862, inf
        %v3866 = vsel %vm3865, %v3862, %v3864
        %vm3867 = vcmp.eq.f32.partialorder %v3862, 0.0
        %v3868 = vand.u32 %v3862, 2147483648
        %v3869 = vsel %vm3867, %v3868, %v3866
        %v3870 = vadd.f32 %v3869, 1e-06
        %v3871 = vrcp.pop %v3870
        %v3872 = vmul.f32 %v3857, %v3871
        %v3873 = vlaneseq
        %v3874 = vshrl.u32 %v3873, 7
        %v3875 = vsub.s32 1, %v3874
        %v3876 = vrot.slane %v385, %v3875
        %v3877 = vmul.f32 %v3876, %v3872
        %v3878 = vlaneseq
        %v3879 = vshrl.u32 %v3878, 7
        %v3880 = vsub.s32 2, %v3879
        %v3881 = vrot.slane %v385, %v3880
        %v3882 = vadd.f32 %v3877, %v3881
        %s3883 = scalar_lea.vmem %s5, 32
        %v3884 = vld [vmem:[%s3883] sm:$0xff]
        %v3885 = vld [vmem:[%s3883 + $0x8] sm:$0xff]
        %v3886 = vld [vmem:[%s3883 + $0x10] sm:$0xff]
        %v3887 = vld [vmem:[%s3883 + $0x18] sm:$0xff]
        %s3888 = scalar_lea.vmem %s6, 1
        %v3889 = vld [vmem:[%s3888] sm:$0x1]
        %v3891 = vlaneseq
        %v3892 = vshrl.u32 %v3891, 7
        %v3893 = vsub.s32 0, %v3892
        %v3894 = vrot.slane %v3889, %v3893
        %v3897 = vsel %vm721, %v3882, 0
        %3899 = vmatprep.subr.mxu0 0.0
        %3900 = vmatpush1.msra.mxu0 %v3884
        %3901 = vmatprep.subr.mxu0 0.0
        %3902 = vmatpush1.msra.mxu0 %v3885
        %3903 = vmatprep.subr.mxu0 0.0
        %3904 = vmatpush1.msra.mxu0 %v3886
        %3905 = vmatprep.subr.mxu0 0.0
        %3906 = vmatpush1.msra.mxu0 %v3887
        %3907 = vmatprep.subr.mxu0 0.0
        %3908 = vmatpush1.msra.mxu0 0.0
        %3909 = vmatprep.subr.mxu0 0.0
        %3910 = vmatpush1.msra.mxu0 0.0
        %3911 = vmatprep.subr.mxu0 0.0
        %3912 = vmatpush1.msra.mxu0 0.0
        %3913 = vmatprep.subr.mxu0 0.0
        %3914 = vmatpush1.msra.mxu0 0.0
        %3915 = vmatprep.subr.mxu0 0.0
        %3916 = vmatpush1.msra.mxu0 0.0
        %3917 = vmatprep.subr.mxu0 0.0
        %3918 = vmatpush1.msra.mxu0 0.0
        %3919 = vmatprep.subr.mxu0 0.0
        %3920 = vmatpush1.msra.mxu0 0.0
        %3921 = vmatprep.subr.mxu0 0.0
        %3922 = vmatpush1.msra.mxu0 0.0
        %3923 = vmatprep.subr.mxu0 0.0
        %3924 = vmatpush1.msra.mxu0 0.0
        %3925 = vmatprep.subr.mxu0 0.0
        %3926 = vmatpush1.msra.mxu0 0.0
        %3927 = vmatprep.subr.mxu0 0.0
        %3928 = vmatpush1.msra.mxu0 0.0
        %3929 = vmatprep.subr.mxu0 0.0
        %3930 = vmatpush1.msra.mxu0 0.0
        %3931 = vmatprep.subr.mxu0 0.0
        %3932 = vmatpush1.msra.mxu0 0.0
        %3933 = vmatprep.subr.mxu0 0.0
        %3934 = vmatpush1.msra.mxu0 0.0
        %3935 = vmatprep.subr.mxu0 0.0
        %3936 = vmatpush1.msra.mxu0 0.0
        %3937 = vmatprep.subr.mxu0 0.0
        %3938 = vmatpush1.msra.mxu0 0.0
        %3939 = vmatprep.subr.mxu0 0.0
        %3940 = vmatpush1.msra.mxu0 0.0
        %3941 = vmatprep.subr.mxu0 0.0
        %3942 = vmatpush1.msra.mxu0 0.0
        %3943 = vmatprep.subr.mxu0 0.0
        %3944 = vmatpush1.msra.mxu0 0.0
        %3945 = vmatprep.subr.mxu0 0.0
        %3946 = vmatpush1.msra.mxu0 0.0
        %3947 = vmatprep.subr.mxu0 0.0
        %3948 = vmatpush1.msra.mxu0 0.0
        %3949 = vmatprep.subr.mxu0 0.0
        %3950 = vmatpush1.msra.mxu0 0.0
        %3951 = vmatprep.subr.mxu0 0.0
        %3952 = vmatpush1.msra.mxu0 0.0
        %3953 = vmatprep.subr.mxu0 0.0
        %3954 = vmatpush1.msra.mxu0 0.0
        %3955 = vmatprep.subr.mxu0 0.0
        %3956 = vmatpush1.msra.mxu0 0.0
        %3957 = vmatprep.subr.mxu0 0.0
        %3958 = vmatpush1.msra.mxu0 0.0
        %3959 = vmatprep.subr.mxu0 0.0
        %3960 = vmatpush1.msra.mxu0 0.0
        %3961 = vmatprep.subr.mxu0 0.0
        %3962 = vmatpush1.msra.mxu0 0.0
        %3963 = vmatprep.mubr.f32.mxu0 0.0
        %3964 = vmatmul.mubr.f32.gmra.mrb[0].mxu0 %v3897
        %v3965 = vpop.f32.mrb[0].mxu0
        %v3966 = vadd.f32 %v3894, %v3965
        %v3967 = vpop.f32.mrb[0].mxu0
        %3968 = vdwg.mxu0
        %s3969 = scalar_lea.vmem %s7, 32
        %v3970 = vld [vmem:[%s3969] sm:$0xff]
        %v3971 = vld [vmem:[%s3969 + $0x8] sm:$0xff]
        %v3972 = vld [vmem:[%s3969 + $0x10] sm:$0xff]
        %v3973 = vld [vmem:[%s3969 + $0x18] sm:$0xff]
        %3975 = vrot.lane.b32.xlu0 %v3966, 96
        %v3976 = vpop.permute.xlu0 %3975
        %v3977 = vsel %vm876, %v3966, 0
        %v3979 = vsel %vm876, %v3976, 0
        %3981 = vmatprep.subr.mxu0 0.0
        %3982 = vmatpush1.xpose.msra.mxu0 %v3979
        %3983 = vmatprep.subr.mxu0 0.0
        %3984 = vmatpush1.xpose.msra.mxu0 0.0
        %3985 = vmatprep.subr.mxu0 0.0
        %3986 = vmatpush1.xpose.msra.mxu0 0.0
        %3987 = vmatprep.subr.mxu0 0.0
        %3988 = vmatpush1.xpose.msra.mxu0 0.0
        %3989 = vmatprep.subr.mxu0 0.0
        %3990 = vmatpush1.xpose.msra.mxu0 0.0
        %3991 = vmatprep.subr.mxu0 0.0
        %3992 = vmatpush1.xpose.msra.mxu0 0.0
        %3993 = vmatprep.subr.mxu0 0.0
        %3994 = vmatpush1.xpose.msra.mxu0 0.0
        %3995 = vmatprep.subr.mxu0 0.0
        %3996 = vmatpush1.xpose.msra.mxu0 0.0
        %3997 = vmatprep.subr.mxu0 0.0
        %3998 = vmatpush1.xpose.msra.mxu0 0.0
        %3999 = vmatprep.subr.mxu0 0.0
        %4000 = vmatpush1.xpose.msra.mxu0 0.0
        %4001 = vmatprep.subr.mxu0 0.0
        %4002 = vmatpush1.xpose.msra.mxu0 0.0
        %4003 = vmatprep.subr.mxu0 0.0
        %4004 = vmatpush1.xpose.msra.mxu0 0.0
        %4005 = vmatprep.subr.mxu0 0.0
        %4006 = vmatpush1.xpose.msra.mxu0 0.0
        %4007 = vmatprep.subr.mxu0 0.0
        %4008 = vmatpush1.xpose.msra.mxu0 0.0
        %4009 = vmatprep.subr.mxu0 0.0
        %4010 = vmatpush1.xpose.msra.mxu0 0.0
        %4011 = vmatprep.subr.mxu0 0.0
        %4012 = vmatpush1.xpose.msra.mxu0 0.0
        %4013 = vmatprep.subr.mxu0 0.0
        %4014 = vmatpush1.xpose.msra.mxu0 0.0
        %4015 = vmatprep.subr.mxu0 0.0
        %4016 = vmatpush1.xpose.msra.mxu0 0.0
        %4017 = vmatprep.subr.mxu0 0.0
        %4018 = vmatpush1.xpose.msra.mxu0 0.0
        %4019 = vmatprep.subr.mxu0 0.0
        %4020 = vmatpush1.xpose.msra.mxu0 0.0
        %4021 = vmatprep.subr.mxu0 0.0
        %4022 = vmatpush1.xpose.msra.mxu0 0.0
        %4023 = vmatprep.subr.mxu0 0.0
        %4024 = vmatpush1.xpose.msra.mxu0 0.0
        %4025 = vmatprep.subr.mxu0 0.0
        %4026 = vmatpush1.xpose.msra.mxu0 0.0
        %4027 = vmatprep.subr.mxu0 0.0
        %4028 = vmatpush1.xpose.msra.mxu0 0.0
        %4029 = vmatprep.subr.mxu0 0.0
        %4030 = vmatpush1.xpose.msra.mxu0 0.0
        %4031 = vmatprep.subr.mxu0 0.0
        %4032 = vmatpush1.xpose.msra.mxu0 0.0
        %4033 = vmatprep.subr.mxu0 0.0
        %4034 = vmatpush1.xpose.msra.mxu0 0.0
        %4035 = vmatprep.subr.mxu0 0.0
        %4036 = vmatpush1.xpose.msra.mxu0 0.0
        %4037 = vmatprep.subr.mxu0 0.0
        %4038 = vmatpush1.xpose.msra.mxu0 0.0
        %4039 = vmatprep.subr.mxu0 0.0
        %4040 = vmatpush1.xpose.msra.mxu0 0.0
        %4041 = vmatprep.subr.mxu0 0.0
        %4042 = vmatpush1.xpose.msra.mxu0 0.0
        %4043 = vmatprep.subr.mxu0 0.0
        %4044 = vmatpush1.xpose.msra.mxu0 0.0
        %4045 = vmatprep.mubr.f32.mxu0 0.0
        %4046 = vmatmul.mubr.f32.gmra.mrb[0].mxu0 %v3977
        %v4047 = vpop.f32.mrb[0].mxu0
        %v4048 = vadd.f32 0.0, %v4047
        %v4049 = vpop.f32.mrb[0].mxu0
        %4050 = vdwg.mxu0
        %v4051 = vsel %vm876, %v4048, -inf
        %4052 = vmax.xlane.f32.xlu0 %v4051
        %v4053 = vpop.xlane.xlu0 %4052
        %v4054 = vsub.f32 %v4048, %v4053
        %v4055 = vmul.f32 %v4054, 1.442695
        %v4056 = vpow.pop %v4055
        %v4057 = vsel %vm876, %v4056, 0.0
        %4058 = vadd.xlane.f32.xlu0 %v4057
        %v4059 = vpop.xlane.xlu0 %4058
        %v4060 = vrcp.pop %v4059
        %v4061 = vmul.f32 %v4056, %v4060
        %4062 = vrot.lane.b32.xlu0 %v3966, 64
        %v4063 = vpop.permute.xlu0 %4062
        %v4066 = vsel %vm876, %v4061, 0
        %4068 = vmatprep.subr.mxu0 0.0
        %4069 = vmatpush1.msra.mxu0 %v4063
        %4070 = vmatprep.subr.mxu0 0.0
        %4071 = vmatpush1.msra.mxu0 0.0
        %4072 = vmatprep.subr.mxu0 0.0
        %4073 = vmatpush1.msra.mxu0 0.0
        %4074 = vmatprep.subr.mxu0 0.0
        %4075 = vmatpush1.msra.mxu0 0.0
        %4076 = vmatprep.subr.mxu0 0.0
        %4077 = vmatpush1.msra.mxu0 0.0
        %4078 = vmatprep.subr.mxu0 0.0
        %4079 = vmatpush1.msra.mxu0 0.0
        %4080 = vmatprep.subr.mxu0 0.0
        %4081 = vmatpush1.msra.mxu0 0.0
        %4082 = vmatprep.subr.mxu0 0.0
        %4083 = vmatpush1.msra.mxu0 0.0
        %4084 = vmatprep.subr.mxu0 0.0
        %4085 = vmatpush1.msra.mxu0 0.0
        %4086 = vmatprep.subr.mxu0 0.0
        %4087 = vmatpush1.msra.mxu0 0.0
        %4088 = vmatprep.subr.mxu0 0.0
        %4089 = vmatpush1.msra.mxu0 0.0
        %4090 = vmatprep.subr.mxu0 0.0
        %4091 = vmatpush1.msra.mxu0 0.0
        %4092 = vmatprep.subr.mxu0 0.0
        %4093 = vmatpush1.msra.mxu0 0.0
        %4094 = vmatprep.subr.mxu0 0.0
        %4095 = vmatpush1.msra.mxu0 0.0
        %4096 = vmatprep.subr.mxu0 0.0
        %4097 = vmatpush1.msra.mxu0 0.0
        %4098 = vmatprep.subr.mxu0 0.0
        %4099 = vmatpush1.msra.mxu0 0.0
        %4100 = vmatprep.subr.mxu0 0.0
        %4101 = vmatpush1.msra.mxu0 0.0
        %4102 = vmatprep.subr.mxu0 0.0
        %4103 = vmatpush1.msra.mxu0 0.0
        %4104 = vmatprep.subr.mxu0 0.0
        %4105 = vmatpush1.msra.mxu0 0.0
        %4106 = vmatprep.subr.mxu0 0.0
        %4107 = vmatpush1.msra.mxu0 0.0
        %4108 = vmatprep.subr.mxu0 0.0
        %4109 = vmatpush1.msra.mxu0 0.0
        %4110 = vmatprep.subr.mxu0 0.0
        %4111 = vmatpush1.msra.mxu0 0.0
        %4112 = vmatprep.subr.mxu0 0.0
        %4113 = vmatpush1.msra.mxu0 0.0
        %4114 = vmatprep.subr.mxu0 0.0
        %4115 = vmatpush1.msra.mxu0 0.0
        %4116 = vmatprep.subr.mxu0 0.0
        %4117 = vmatpush1.msra.mxu0 0.0
        %4118 = vmatprep.subr.mxu0 0.0
        %4119 = vmatpush1.msra.mxu0 0.0
        %4120 = vmatprep.subr.mxu0 0.0
        %4121 = vmatpush1.msra.mxu0 0.0
        %4122 = vmatprep.subr.mxu0 0.0
        %4123 = vmatpush1.msra.mxu0 0.0
        %4124 = vmatprep.subr.mxu0 0.0
        %4125 = vmatpush1.msra.mxu0 0.0
        %4126 = vmatprep.subr.mxu0 0.0
        %4127 = vmatpush1.msra.mxu0 0.0
        %4128 = vmatprep.subr.mxu0 0.0
        %4129 = vmatpush1.msra.mxu0 0.0
        %4130 = vmatprep.subr.mxu0 0.0
        %4131 = vmatpush1.msra.mxu0 0.0
        %4132 = vmatprep.mubr.f32.mxu0 0.0
        %4133 = vmatmul.mubr.f32.gmra.mrb[0].mxu0 %v4066
        %v4134 = vpop.f32.mrb[0].mxu0
        %v4135 = vadd.f32 0.0, %v4134
        %v4136 = vpop.f32.mrb[0].mxu0
        %4137 = vdwg.mxu0
        %4138 = vrot.lane.b32.xlu0 %v3966, 120
        %v4139 = vpop.permute.xlu0 %4138
        %4140 = vrot.lane.b32.xlu0 %v3966, 88
        %v4141 = vpop.permute.xlu0 %4140
        %v4142 = vsel %vm876, %v4139, 0
        %v4144 = vsel %vm876, %v4141, 0
        %4146 = vmatprep.subr.mxu0 0.0
        %4147 = vmatpush1.xpose.msra.mxu0 %v4144
        %4148 = vmatprep.subr.mxu0 0.0
        %4149 = vmatpush1.xpose.msra.mxu0 0.0
        %4150 = vmatprep.subr.mxu0 0.0
        %4151 = vmatpush1.xpose.msra.mxu0 0.0
        %4152 = vmatprep.subr.mxu0 0.0
        %4153 = vmatpush1.xpose.msra.mxu0 0.0
        %4154 = vmatprep.subr.mxu0 0.0
        %4155 = vmatpush1.xpose.msra.mxu0 0.0
        %4156 = vmatprep.subr.mxu0 0.0
        %4157 = vmatpush1.xpose.msra.mxu0 0.0
        %4158 = vmatprep.subr.mxu0 0.0
        %4159 = vmatpush1.xpose.msra.mxu0 0.0
        %4160 = vmatprep.subr.mxu0 0.0
        %4161 = vmatpush1.xpose.msra.mxu0 0.0
        %4162 = vmatprep.subr.mxu0 0.0
        %4163 = vmatpush1.xpose.msra.mxu0 0.0
        %4164 = vmatprep.subr.mxu0 0.0
        %4165 = vmatpush1.xpose.msra.mxu0 0.0
        %4166 = vmatprep.subr.mxu0 0.0
        %4167 = vmatpush1.xpose.msra.mxu0 0.0
        %4168 = vmatprep.subr.mxu0 0.0
        %4169 = vmatpush1.xpose.msra.mxu0 0.0
        %4170 = vmatprep.subr.mxu0 0.0
        %4171 = vmatpush1.xpose.msra.mxu0 0.0
        %4172 = vmatprep.subr.mxu0 0.0
        %4173 = vmatpush1.xpose.msra.mxu0 0.0
        %4174 = vmatprep.subr.mxu0 0.0
        %4175 = vmatpush1.xpose.msra.mxu0 0.0
        %4176 = vmatprep.subr.mxu0 0.0
        %4177 = vmatpush1.xpose.msra.mxu0 0.0
        %4178 = vmatprep.subr.mxu0 0.0
        %4179 = vmatpush1.xpose.msra.mxu0 0.0
        %4180 = vmatprep.subr.mxu0 0.0
        %4181 = vmatpush1.xpose.msra.mxu0 0.0
        %4182 = vmatprep.subr.mxu0 0.0
        %4183 = vmatpush1.xpose.msra.mxu0 0.0
        %4184 = vmatprep.subr.mxu0 0.0
        %4185 = vmatpush1.xpose.msra.mxu0 0.0
        %4186 = vmatprep.subr.mxu0 0.0
        %4187 = vmatpush1.xpose.msra.mxu0 0.0
        %4188 = vmatprep.subr.mxu0 0.0
        %4189 = vmatpush1.xpose.msra.mxu0 0.0
        %4190 = vmatprep.subr.mxu0 0.0
        %4191 = vmatpush1.xpose.msra.mxu0 0.0
        %4192 = vmatprep.subr.mxu0 0.0
        %4193 = vmatpush1.xpose.msra.mxu0 0.0
        %4194 = vmatprep.subr.mxu0 0.0
        %4195 = vmatpush1.xpose.msra.mxu0 0.0
        %4196 = vmatprep.subr.mxu0 0.0
        %4197 = vmatpush1.xpose.msra.mxu0 0.0
        %4198 = vmatprep.subr.mxu0 0.0
        %4199 = vmatpush1.xpose.msra.mxu0 0.0
        %4200 = vmatprep.subr.mxu0 0.0
        %4201 = vmatpush1.xpose.msra.mxu0 0.0
        %4202 = vmatprep.subr.mxu0 0.0
        %4203 = vmatpush1.xpose.msra.mxu0 0.0
        %4204 = vmatprep.subr.mxu0 0.0
        %4205 = vmatpush1.xpose.msra.mxu0 0.0
        %4206 = vmatprep.subr.mxu0 0.0
        %4207 = vmatpush1.xpose.msra.mxu0 0.0
        %4208 = vmatprep.subr.mxu0 0.0
        %4209 = vmatpush1.xpose.msra.mxu0 0.0
        %4210 = vmatprep.mubr.f32.mxu0 0.0
        %4211 = vmatmul.mubr.f32.gmra.mrb[0].mxu0 %v4142
        %v4212 = vpop.f32.mrb[0].mxu0
        %v4213 = vadd.f32 0.0, %v4212
        %v4214 = vpop.f32.mrb[0].mxu0
        %4215 = vdwg.mxu0
        %v4216 = vsel %vm876, %v4213, -inf
        %4217 = vmax.xlane.f32.xlu0 %v4216
        %v4218 = vpop.xlane.xlu0 %4217
        %v4219 = vsub.f32 %v4213, %v4218
        %v4220 = vmul.f32 %v4219, 1.442695
        %v4221 = vpow.pop %v4220
        %v4222 = vsel %vm876, %v4221, 0.0
        %4223 = vadd.xlane.f32.xlu0 %v4222
        %v4224 = vpop.xlane.xlu0 %4223
        %v4225 = vrcp.pop %v4224
        %v4226 = vmul.f32 %v4221, %v4225
        %4227 = vrot.lane.b32.xlu0 %v3966, 56
        %v4228 = vpop.permute.xlu0 %4227
        %v4231 = vsel %vm876, %v4226, 0
        %4233 = vmatprep.subr.mxu0 0.0
        %4234 = vmatpush1.msra.mxu0 %v4228
        %4235 = vmatprep.subr.mxu0 0.0
        %4236 = vmatpush1.msra.mxu0 0.0
        %4237 = vmatprep.subr.mxu0 0.0
        %4238 = vmatpush1.msra.mxu0 0.0
        %4239 = vmatprep.subr.mxu0 0.0
        %4240 = vmatpush1.msra.mxu0 0.0
        %4241 = vmatprep.subr.mxu0 0.0
        %4242 = vmatpush1.msra.mxu0 0.0
        %4243 = vmatprep.subr.mxu0 0.0
        %4244 = vmatpush1.msra.mxu0 0.0
        %4245 = vmatprep.subr.mxu0 0.0
        %4246 = vmatpush1.msra.mxu0 0.0
        %4247 = vmatprep.subr.mxu0 0.0
        %4248 = vmatpush1.msra.mxu0 0.0
        %4249 = vmatprep.subr.mxu0 0.0
        %4250 = vmatpush1.msra.mxu0 0.0
        %4251 = vmatprep.subr.mxu0 0.0
        %4252 = vmatpush1.msra.mxu0 0.0
        %4253 = vmatprep.subr.mxu0 0.0
        %4254 = vmatpush1.msra.mxu0 0.0
        %4255 = vmatprep.subr.mxu0 0.0
        %4256 = vmatpush1.msra.mxu0 0.0
        %4257 = vmatprep.subr.mxu0 0.0
        %4258 = vmatpush1.msra.mxu0 0.0
        %4259 = vmatprep.subr.mxu0 0.0
        %4260 = vmatpush1.msra.mxu0 0.0
        %4261 = vmatprep.subr.mxu0 0.0
        %4262 = vmatpush1.msra.mxu0 0.0
        %4263 = vmatprep.subr.mxu0 0.0
        %4264 = vmatpush1.msra.mxu0 0.0
        %4265 = vmatprep.subr.mxu0 0.0
        %4266 = vmatpush1.msra.mxu0 0.0
        %4267 = vmatprep.subr.mxu0 0.0
        %4268 = vmatpush1.msra.mxu0 0.0
        %4269 = vmatprep.subr.mxu0 0.0
        %4270 = vmatpush1.msra.mxu0 0.0
        %4271 = vmatprep.subr.mxu0 0.0
        %4272 = vmatpush1.msra.mxu0 0.0
        %4273 = vmatprep.subr.mxu0 0.0
        %4274 = vmatpush1.msra.mxu0 0.0
        %4275 = vmatprep.subr.mxu0 0.0
        %4276 = vmatpush1.msra.mxu0 0.0
        %4277 = vmatprep.subr.mxu0 0.0
        %4278 = vmatpush1.msra.mxu0 0.0
        %4279 = vmatprep.subr.mxu0 0.0
        %4280 = vmatpush1.msra.mxu0 0.0
        %4281 = vmatprep.subr.mxu0 0.0
        %4282 = vmatpush1.msra.mxu0 0.0
        %4283 = vmatprep.subr.mxu0 0.0
        %4284 = vmatpush1.msra.mxu0 0.0
        %4285 = vmatprep.subr.mxu0 0.0
        %4286 = vmatpush1.msra.mxu0 0.0
        %4287 = vmatprep.subr.mxu0 0.0
        %4288 = vmatpush1.msra.mxu0 0.0
        %4289 = vmatprep.subr.mxu0 0.0
        %4290 = vmatpush1.msra.mxu0 0.0
        %4291 = vmatprep.subr.mxu0 0.0
        %4292 = vmatpush1.msra.mxu0 0.0
        %4293 = vmatprep.subr.mxu0 0.0
        %4294 = vmatpush1.msra.mxu0 0.0
        %4295 = vmatprep.subr.mxu0 0.0
        %4296 = vmatpush1.msra.mxu0 0.0
        %4297 = vmatprep.mubr.f32.mxu0 0.0
        %4298 = vmatmul.mubr.f32.gmra.mrb[0].mxu0 %v4231
        %v4299 = vpop.f32.mrb[0].mxu0
        %v4300 = vadd.f32 0.0, %v4299
        %v4301 = vpop.f32.mrb[0].mxu0
        %4302 = vdwg.mxu0
        %v4304 = vsel %vm876, %v4300, 0
        %4306 = vmatprep.subr.mxu0 0.0
        %4307 = vmatpush1.msra.mxu0 %v3971
        %4308 = vmatprep.subr.mxu0 0.0
        %4309 = vmatpush1.msra.mxu0 0.0
        %4310 = vmatprep.subr.mxu0 0.0
        %4311 = vmatpush1.msra.mxu0 0.0
        %4312 = vmatprep.subr.mxu0 0.0
        %4313 = vmatpush1.msra.mxu0 0.0
        %4314 = vmatprep.subr.mxu0 0.0
        %4315 = vmatpush1.msra.mxu0 0.0
        %4316 = vmatprep.subr.mxu0 0.0
        %4317 = vmatpush1.msra.mxu0 0.0
        %4318 = vmatprep.subr.mxu0 0.0
        %4319 = vmatpush1.msra.mxu0 0.0
        %4320 = vmatprep.subr.mxu0 0.0
        %4321 = vmatpush1.msra.mxu0 0.0
        %4322 = vmatprep.subr.mxu0 0.0
        %4323 = vmatpush1.msra.mxu0 0.0
        %4324 = vmatprep.subr.mxu0 0.0
        %4325 = vmatpush1.msra.mxu0 0.0
        %4326 = vmatprep.subr.mxu0 0.0
        %4327 = vmatpush1.msra.mxu0 0.0
        %4328 = vmatprep.subr.mxu0 0.0
        %4329 = vmatpush1.msra.mxu0 0.0
        %4330 = vmatprep.subr.mxu0 0.0
        %4331 = vmatpush1.msra.mxu0 0.0
        %4332 = vmatprep.subr.mxu0 0.0
        %4333 = vmatpush1.msra.mxu0 0.0
        %4334 = vmatprep.subr.mxu0 0.0
        %4335 = vmatpush1.msra.mxu0 0.0
        %4336 = vmatprep.subr.mxu0 0.0
        %4337 = vmatpush1.msra.mxu0 0.0
        %4338 = vmatprep.subr.mxu0 0.0
        %4339 = vmatpush1.msra.mxu0 0.0
        %4340 = vmatprep.subr.mxu0 0.0
        %4341 = vmatpush1.msra.mxu0 0.0
        %4342 = vmatprep.subr.mxu0 0.0
        %4343 = vmatpush1.msra.mxu0 0.0
        %4344 = vmatprep.subr.mxu0 0.0
        %4345 = vmatpush1.msra.mxu0 0.0
        %4346 = vmatprep.subr.mxu0 0.0
        %4347 = vmatpush1.msra.mxu0 0.0
        %4348 = vmatprep.subr.mxu0 0.0
        %4349 = vmatpush1.msra.mxu0 0.0
        %4350 = vmatprep.subr.mxu0 0.0
        %4351 = vmatpush1.msra.mxu0 0.0
        %4352 = vmatprep.subr.mxu0 0.0
        %4353 = vmatpush1.msra.mxu0 0.0
        %4354 = vmatprep.subr.mxu0 0.0
        %4355 = vmatpush1.msra.mxu0 0.0
        %4356 = vmatprep.subr.mxu0 0.0
        %4357 = vmatpush1.msra.mxu0 0.0
        %4358 = vmatprep.subr.mxu0 0.0
        %4359 = vmatpush1.msra.mxu0 0.0
        %4360 = vmatprep.subr.mxu0 0.0
        %4361 = vmatpush1.msra.mxu0 0.0
        %4362 = vmatprep.subr.mxu0 0.0
        %4363 = vmatpush1.msra.mxu0 0.0
        %4364 = vmatprep.subr.mxu0 0.0
        %4365 = vmatpush1.msra.mxu0 0.0
        %4366 = vmatprep.subr.mxu0 0.0
        %4367 = vmatpush1.msra.mxu0 0.0
        %4368 = vmatprep.subr.mxu0 0.0
        %4369 = vmatpush1.msra.mxu0 0.0
        %4370 = vmatprep.mubr.f32.mxu0 0.0
        %4371 = vmatmul.mubr.f32.gmra.mrb[0].mxu0 %v4304
        %v4372 = vpop.f32.mrb[0].mxu0
        %v4373 = vadd.f32 0.0, %v4372
        %v4374 = vpop.f32.mrb[0].mxu0
        %4375 = vdwg.mxu0
        %v4377 = vsel %vm876, %v4135, 0
        %4379 = vmatprep.subr.mxu0 0.0
        %4380 = vmatpush1.msra.mxu0 %v3970
        %4381 = vmatprep.subr.mxu0 0.0
        %4382 = vmatpush1.msra.mxu0 0.0
        %4383 = vmatprep.subr.mxu0 0.0
        %4384 = vmatpush1.msra.mxu0 0.0
        %4385 = vmatprep.subr.mxu0 0.0
        %4386 = vmatpush1.msra.mxu0 0.0
        %4387 = vmatprep.subr.mxu0 0.0
        %4388 = vmatpush1.msra.mxu0 0.0
        %4389 = vmatprep.subr.mxu0 0.0
        %4390 = vmatpush1.msra.mxu0 0.0
        %4391 = vmatprep.subr.mxu0 0.0
        %4392 = vmatpush1.msra.mxu0 0.0
        %4393 = vmatprep.subr.mxu0 0.0
        %4394 = vmatpush1.msra.mxu0 0.0
        %4395 = vmatprep.subr.mxu0 0.0
        %4396 = vmatpush1.msra.mxu0 0.0
        %4397 = vmatprep.subr.mxu0 0.0
        %4398 = vmatpush1.msra.mxu0 0.0
        %4399 = vmatprep.subr.mxu0 0.0
        %4400 = vmatpush1.msra.mxu0 0.0
        %4401 = vmatprep.subr.mxu0 0.0
        %4402 = vmatpush1.msra.mxu0 0.0
        %4403 = vmatprep.subr.mxu0 0.0
        %4404 = vmatpush1.msra.mxu0 0.0
        %4405 = vmatprep.subr.mxu0 0.0
        %4406 = vmatpush1.msra.mxu0 0.0
        %4407 = vmatprep.subr.mxu0 0.0
        %4408 = vmatpush1.msra.mxu0 0.0
        %4409 = vmatprep.subr.mxu0 0.0
        %4410 = vmatpush1.msra.mxu0 0.0
        %4411 = vmatprep.subr.mxu0 0.0
        %4412 = vmatpush1.msra.mxu0 0.0
        %4413 = vmatprep.subr.mxu0 0.0
        %4414 = vmatpush1.msra.mxu0 0.0
        %4415 = vmatprep.subr.mxu0 0.0
        %4416 = vmatpush1.msra.mxu0 0.0
        %4417 = vmatprep.subr.mxu0 0.0
        %4418 = vmatpush1.msra.mxu0 0.0
        %4419 = vmatprep.subr.mxu0 0.0
        %4420 = vmatpush1.msra.mxu0 0.0
        %4421 = vmatprep.subr.mxu0 0.0
        %4422 = vmatpush1.msra.mxu0 0.0
        %4423 = vmatprep.subr.mxu0 0.0
        %4424 = vmatpush1.msra.mxu0 0.0
        %4425 = vmatprep.subr.mxu0 0.0
        %4426 = vmatpush1.msra.mxu0 0.0
        %4427 = vmatprep.subr.mxu0 0.0
        %4428 = vmatpush1.msra.mxu0 0.0
        %4429 = vmatprep.subr.mxu0 0.0
        %4430 = vmatpush1.msra.mxu0 0.0
        %4431 = vmatprep.subr.mxu0 0.0
        %4432 = vmatpush1.msra.mxu0 0.0
        %4433 = vmatprep.subr.mxu0 0.0
        %4434 = vmatpush1.msra.mxu0 0.0
        %4435 = vmatprep.subr.mxu0 0.0
        %4436 = vmatpush1.msra.mxu0 0.0
        %4437 = vmatprep.subr.mxu0 0.0
        %4438 = vmatpush1.msra.mxu0 0.0
        %4439 = vmatprep.subr.mxu0 0.0
        %4440 = vmatpush1.msra.mxu0 0.0
        %4441 = vmatprep.subr.mxu0 0.0
        %4442 = vmatpush1.msra.mxu0 0.0
        %4443 = vmatprep.mubr.f32.mxu0 0.0
        %4444 = vmatmul.mubr.f32.gmra.mrb[0].mxu0 %v4377
        %v4445 = vpop.f32.mrb[0].mxu0
        %v4446 = vadd.f32 %v4373, %v4445
        %v4447 = vpop.f32.mrb[0].mxu0
        %4448 = vdwg.mxu0
        %4449 = vrot.lane.b32.xlu0 %v3966, 112
        %v4450 = vpop.permute.xlu0 %4449
        %4451 = vrot.lane.b32.xlu0 %v3966, 80
        %v4452 = vpop.permute.xlu0 %4451
        %v4453 = vsel %vm876, %v4450, 0
        %v4455 = vsel %vm876, %v4452, 0
        %4457 = vmatprep.subr.mxu0 0.0
        %4458 = vmatpush1.xpose.msra.mxu0 %v4455
        %4459 = vmatprep.subr.mxu0 0.0
        %4460 = vmatpush1.xpose.msra.mxu0 0.0
        %4461 = vmatprep.subr.mxu0 0.0
        %4462 = vmatpush1.xpose.msra.mxu0 0.0
        %4463 = vmatprep.subr.mxu0 0.0
        %4464 = vmatpush1.xpose.msra.mxu0 0.0
        %4465 = vmatprep.subr.mxu0 0.0
        %4466 = vmatpush1.xpose.msra.mxu0 0.0
        %4467 = vmatprep.subr.mxu0 0.0
        %4468 = vmatpush1.xpose.msra.mxu0 0.0
        %4469 = vmatprep.subr.mxu0 0.0
        %4470 = vmatpush1.xpose.msra.mxu0 0.0
        %4471 = vmatprep.subr.mxu0 0.0
        %4472 = vmatpush1.xpose.msra.mxu0 0.0
        %4473 = vmatprep.subr.mxu0 0.0
        %4474 = vmatpush1.xpose.msra.mxu0 0.0
        %4475 = vmatprep.subr.mxu0 0.0
        %4476 = vmatpush1.xpose.msra.mxu0 0.0
        %4477 = vmatprep.subr.mxu0 0.0
        %4478 = vmatpush1.xpose.msra.mxu0 0.0
        %4479 = vmatprep.subr.mxu0 0.0
        %4480 = vmatpush1.xpose.msra.mxu0 0.0
        %4481 = vmatprep.subr.mxu0 0.0
        %4482 = vmatpush1.xpose.msra.mxu0 0.0
        %4483 = vmatprep.subr.mxu0 0.0
        %4484 = vmatpush1.xpose.msra.mxu0 0.0
        %4485 = vmatprep.subr.mxu0 0.0
        %4486 = vmatpush1.xpose.msra.mxu0 0.0
        %4487 = vmatprep.subr.mxu0 0.0
        %4488 = vmatpush1.xpose.msra.mxu0 0.0
        %4489 = vmatprep.subr.mxu0 0.0
        %4490 = vmatpush1.xpose.msra.mxu0 0.0
        %4491 = vmatprep.subr.mxu0 0.0
        %4492 = vmatpush1.xpose.msra.mxu0 0.0
        %4493 = vmatprep.subr.mxu0 0.0
        %4494 = vmatpush1.xpose.msra.mxu0 0.0
        %4495 = vmatprep.subr.mxu0 0.0
        %4496 = vmatpush1.xpose.msra.mxu0 0.0
        %4497 = vmatprep.subr.mxu0 0.0
        %4498 = vmatpush1.xpose.msra.mxu0 0.0
        %4499 = vmatprep.subr.mxu0 0.0
        %4500 = vmatpush1.xpose.msra.mxu0 0.0
        %4501 = vmatprep.subr.mxu0 0.0
        %4502 = vmatpush1.xpose.msra.mxu0 0.0
        %4503 = vmatprep.subr.mxu0 0.0
        %4504 = vmatpush1.xpose.msra.mxu0 0.0
        %4505 = vmatprep.subr.mxu0 0.0
        %4506 = vmatpush1.xpose.msra.mxu0 0.0
        %4507 = vmatprep.subr.mxu0 0.0
        %4508 = vmatpush1.xpose.msra.mxu0 0.0
        %4509 = vmatprep.subr.mxu0 0.0
        %4510 = vmatpush1.xpose.msra.mxu0 0.0
        %4511 = vmatprep.subr.mxu0 0.0
        %4512 = vmatpush1.xpose.msra.mxu0 0.0
        %4513 = vmatprep.subr.mxu0 0.0
        %4514 = vmatpush1.xpose.msra.mxu0 0.0
        %4515 = vmatprep.subr.mxu0 0.0
        %4516 = vmatpush1.xpose.msra.mxu0 0.0
        %4517 = vmatprep.subr.mxu0 0.0
        %4518 = vmatpush1.xpose.msra.mxu0 0.0
        %4519 = vmatprep.subr.mxu0 0.0
        %4520 = vmatpush1.xpose.msra.mxu0 0.0
        %4521 = vmatprep.mubr.f32.mxu0 0.0
        %4522 = vmatmul.mubr.f32.gmra.mrb[0].mxu0 %v4453
        %v4523 = vpop.f32.mrb[0].mxu0
        %v4524 = vadd.f32 0.0, %v4523
        %v4525 = vpop.f32.mrb[0].mxu0
        %4526 = vdwg.mxu0
        %v4527 = vsel %vm876, %v4524, -inf
        %4528 = vmax.xlane.f32.xlu0 %v4527
        %v4529 = vpop.xlane.xlu0 %4528
        %v4530 = vsub.f32 %v4524, %v4529
        %v4531 = vmul.f32 %v4530, 1.442695
        %v4532 = vpow.pop %v4531
        %v4533 = vsel %vm876, %v4532, 0.0
        %4534 = vadd.xlane.f32.xlu0 %v4533
        %v4535 = vpop.xlane.xlu0 %4534
        %v4536 = vrcp.pop %v4535
        %v4537 = vmul.f32 %v4532, %v4536
        %4538 = vrot.lane.b32.xlu0 %v3966, 48
        %v4539 = vpop.permute.xlu0 %4538
        %v4542 = vsel %vm876, %v4537, 0
        %4544 = vmatprep.subr.mxu0 0.0
        %4545 = vmatpush1.msra.mxu0 %v4539
        %4546 = vmatprep.subr.mxu0 0.0
        %4547 = vmatpush1.msra.mxu0 0.0
        %4548 = vmatprep.subr.mxu0 0.0
        %4549 = vmatpush1.msra.mxu0 0.0
        %4550 = vmatprep.subr.mxu0 0.0
        %4551 = vmatpush1.msra.mxu0 0.0
        %4552 = vmatprep.subr.mxu0 0.0
        %4553 = vmatpush1.msra.mxu0 0.0
        %4554 = vmatprep.subr.mxu0 0.0
        %4555 = vmatpush1.msra.mxu0 0.0
        %4556 = vmatprep.subr.mxu0 0.0
        %4557 = vmatpush1.msra.mxu0 0.0
        %4558 = vmatprep.subr.mxu0 0.0
        %4559 = vmatpush1.msra.mxu0 0.0
        %4560 = vmatprep.subr.mxu0 0.0
        %4561 = vmatpush1.msra.mxu0 0.0
        %4562 = vmatprep.subr.mxu0 0.0
        %4563 = vmatpush1.msra.mxu0 0.0
        %4564 = vmatprep.subr.mxu0 0.0
        %4565 = vmatpush1.msra.mxu0 0.0
        %4566 = vmatprep.subr.mxu0 0.0
        %4567 = vmatpush1.msra.mxu0 0.0
        %4568 = vmatprep.subr.mxu0 0.0
        %4569 = vmatpush1.msra.mxu0 0.0
        %4570 = vmatprep.subr.mxu0 0.0
        %4571 = vmatpush1.msra.mxu0 0.0
        %4572 = vmatprep.subr.mxu0 0.0
        %4573 = vmatpush1.msra.mxu0 0.0
        %4574 = vmatprep.subr.mxu0 0.0
        %4575 = vmatpush1.msra.mxu0 0.0
        %4576 = vmatprep.subr.mxu0 0.0
        %4577 = vmatpush1.msra.mxu0 0.0
        %4578 = vmatprep.subr.mxu0 0.0
        %4579 = vmatpush1.msra.mxu0 0.0
        %4580 = vmatprep.subr.mxu0 0.0
        %4581 = vmatpush1.msra.mxu0 0.0
        %4582 = vmatprep.subr.mxu0 0.0
        %4583 = vmatpush1.msra.mxu0 0.0
        %4584 = vmatprep.subr.mxu0 0.0
        %4585 = vmatpush1.msra.mxu0 0.0
        %4586 = vmatprep.subr.mxu0 0.0
        %4587 = vmatpush1.msra.mxu0 0.0
        %4588 = vmatprep.subr.mxu0 0.0
        %4589 = vmatpush1.msra.mxu0 0.0
        %4590 = vmatprep.subr.mxu0 0.0
        %4591 = vmatpush1.msra.mxu0 0.0
        %4592 = vmatprep.subr.mxu0 0.0
        %4593 = vmatpush1.msra.mxu0 0.0
        %4594 = vmatprep.subr.mxu0 0.0
        %4595 = vmatpush1.msra.mxu0 0.0
        %4596 = vmatprep.subr.mxu0 0.0
        %4597 = vmatpush1.msra.mxu0 0.0
        %4598 = vmatprep.subr.mxu0 0.0
        %4599 = vmatpush1.msra.mxu0 0.0
        %4600 = vmatprep.subr.mxu0 0.0
        %4601 = vmatpush1.msra.mxu0 0.0
        %4602 = vmatprep.subr.mxu0 0.0
        %4603 = vmatpush1.msra.mxu0 0.0
        %4604 = vmatprep.subr.mxu0 0.0
        %4605 = vmatpush1.msra.mxu0 0.0
        %4606 = vmatprep.subr.mxu0 0.0
        %4607 = vmatpush1.msra.mxu0 0.0
        %4608 = vmatprep.mubr.f32.mxu0 0.0
        %4609 = vmatmul.mubr.f32.gmra.mrb[0].mxu0 %v4542
        %v4610 = vpop.f32.mrb[0].mxu0
        %v4611 = vadd.f32 0.0, %v4610
        %v4612 = vpop.f32.mrb[0].mxu0
        %4613 = vdwg.mxu0
        %v4615 = vsel %vm876, %v4611, 0
        %4617 = vmatprep.subr.mxu0 0.0
        %4618 = vmatpush1.msra.mxu0 %v3972
        %4619 = vmatprep.subr.mxu0 0.0
        %4620 = vmatpush1.msra.mxu0 0.0
        %4621 = vmatprep.subr.mxu0 0.0
        %4622 = vmatpush1.msra.mxu0 0.0
        %4623 = vmatprep.subr.mxu0 0.0
        %4624 = vmatpush1.msra.mxu0 0.0
        %4625 = vmatprep.subr.mxu0 0.0
        %4626 = vmatpush1.msra.mxu0 0.0
        %4627 = vmatprep.subr.mxu0 0.0
        %4628 = vmatpush1.msra.mxu0 0.0
        %4629 = vmatprep.subr.mxu0 0.0
        %4630 = vmatpush1.msra.mxu0 0.0
        %4631 = vmatprep.subr.mxu0 0.0
        %4632 = vmatpush1.msra.mxu0 0.0
        %4633 = vmatprep.subr.mxu0 0.0
        %4634 = vmatpush1.msra.mxu0 0.0
        %4635 = vmatprep.subr.mxu0 0.0
        %4636 = vmatpush1.msra.mxu0 0.0
        %4637 = vmatprep.subr.mxu0 0.0
        %4638 = vmatpush1.msra.mxu0 0.0
        %4639 = vmatprep.subr.mxu0 0.0
        %4640 = vmatpush1.msra.mxu0 0.0
        %4641 = vmatprep.subr.mxu0 0.0
        %4642 = vmatpush1.msra.mxu0 0.0
        %4643 = vmatprep.subr.mxu0 0.0
        %4644 = vmatpush1.msra.mxu0 0.0
        %4645 = vmatprep.subr.mxu0 0.0
        %4646 = vmatpush1.msra.mxu0 0.0
        %4647 = vmatprep.subr.mxu0 0.0
        %4648 = vmatpush1.msra.mxu0 0.0
        %4649 = vmatprep.subr.mxu0 0.0
        %4650 = vmatpush1.msra.mxu0 0.0
        %4651 = vmatprep.subr.mxu0 0.0
        %4652 = vmatpush1.msra.mxu0 0.0
        %4653 = vmatprep.subr.mxu0 0.0
        %4654 = vmatpush1.msra.mxu0 0.0
        %4655 = vmatprep.subr.mxu0 0.0
        %4656 = vmatpush1.msra.mxu0 0.0
        %4657 = vmatprep.subr.mxu0 0.0
        %4658 = vmatpush1.msra.mxu0 0.0
        %4659 = vmatprep.subr.mxu0 0.0
        %4660 = vmatpush1.msra.mxu0 0.0
        %4661 = vmatprep.subr.mxu0 0.0
        %4662 = vmatpush1.msra.mxu0 0.0
        %4663 = vmatprep.subr.mxu0 0.0
        %4664 = vmatpush1.msra.mxu0 0.0
        %4665 = vmatprep.subr.mxu0 0.0
        %4666 = vmatpush1.msra.mxu0 0.0
        %4667 = vmatprep.subr.mxu0 0.0
        %4668 = vmatpush1.msra.mxu0 0.0
        %4669 = vmatprep.subr.mxu0 0.0
        %4670 = vmatpush1.msra.mxu0 0.0
        %4671 = vmatprep.subr.mxu0 0.0
        %4672 = vmatpush1.msra.mxu0 0.0
        %4673 = vmatprep.subr.mxu0 0.0
        %4674 = vmatpush1.msra.mxu0 0.0
        %4675 = vmatprep.subr.mxu0 0.0
        %4676 = vmatpush1.msra.mxu0 0.0
        %4677 = vmatprep.subr.mxu0 0.0
        %4678 = vmatpush1.msra.mxu0 0.0
        %4679 = vmatprep.subr.mxu0 0.0
        %4680 = vmatpush1.msra.mxu0 0.0
        %4681 = vmatprep.mubr.f32.mxu0 0.0
        %4682 = vmatmul.mubr.f32.gmra.mrb[0].mxu0 %v4615
        %v4683 = vpop.f32.mrb[0].mxu0
        %v4684 = vadd.f32 0.0, %v4683
        %v4685 = vpop.f32.mrb[0].mxu0
        %4686 = vdwg.mxu0
        %v4687 = vadd.f32 %v4446, %v4684
        %4688 = vrot.lane.b32.xlu0 %v3966, 104
        %v4689 = vpop.permute.xlu0 %4688
        %4690 = vrot.lane.b32.xlu0 %v3966, 72
        %v4691 = vpop.permute.xlu0 %4690
        %v4692 = vsel %vm876, %v4689, 0
        %v4694 = vsel %vm876, %v4691, 0
        %4696 = vmatprep.subr.mxu0 0.0
        %4697 = vmatpush1.xpose.msra.mxu0 %v4694
        %4698 = vmatprep.subr.mxu0 0.0
        %4699 = vmatpush1.xpose.msra.mxu0 0.0
        %4700 = vmatprep.subr.mxu0 0.0
        %4701 = vmatpush1.xpose.msra.mxu0 0.0
        %4702 = vmatprep.subr.mxu0 0.0
        %4703 = vmatpush1.xpose.msra.mxu0 0.0
        %4704 = vmatprep.subr.mxu0 0.0
        %4705 = vmatpush1.xpose.msra.mxu0 0.0
        %4706 = vmatprep.subr.mxu0 0.0
        %4707 = vmatpush1.xpose.msra.mxu0 0.0
        %4708 = vmatprep.subr.mxu0 0.0
        %4709 = vmatpush1.xpose.msra.mxu0 0.0
        %4710 = vmatprep.subr.mxu0 0.0
        %4711 = vmatpush1.xpose.msra.mxu0 0.0
        %4712 = vmatprep.subr.mxu0 0.0
        %4713 = vmatpush1.xpose.msra.mxu0 0.0
        %4714 = vmatprep.subr.mxu0 0.0
        %4715 = vmatpush1.xpose.msra.mxu0 0.0
        %4716 = vmatprep.subr.mxu0 0.0
        %4717 = vmatpush1.xpose.msra.mxu0 0.0
        %4718 = vmatprep.subr.mxu0 0.0
        %4719 = vmatpush1.xpose.msra.mxu0 0.0
        %4720 = vmatprep.subr.mxu0 0.0
        %4721 = vmatpush1.xpose.msra.mxu0 0.0
        %4722 = vmatprep.subr.mxu0 0.0
        %4723 = vmatpush1.xpose.msra.mxu0 0.0
        %4724 = vmatprep.subr.mxu0 0.0
        %4725 = vmatpush1.xpose.msra.mxu0 0.0
        %4726 = vmatprep.subr.mxu0 0.0
        %4727 = vmatpush1.xpose.msra.mxu0 0.0
        %4728 = vmatprep.subr.mxu0 0.0
        %4729 = vmatpush1.xpose.msra.mxu0 0.0
        %4730 = vmatprep.subr.mxu0 0.0
        %4731 = vmatpush1.xpose.msra.mxu0 0.0
        %4732 = vmatprep.subr.mxu0 0.0
        %4733 = vmatpush1.xpose.msra.mxu0 0.0
        %4734 = vmatprep.subr.mxu0 0.0
        %4735 = vmatpush1.xpose.msra.mxu0 0.0
        %4736 = vmatprep.subr.mxu0 0.0
        %4737 = vmatpush1.xpose.msra.mxu0 0.0
        %4738 = vmatprep.subr.mxu0 0.0
        %4739 = vmatpush1.xpose.msra.mxu0 0.0
        %4740 = vmatprep.subr.mxu0 0.0
        %4741 = vmatpush1.xpose.msra.mxu0 0.0
        %4742 = vmatprep.subr.mxu0 0.0
        %4743 = vmatpush1.xpose.msra.mxu0 0.0
        %4744 = vmatprep.subr.mxu0 0.0
        %4745 = vmatpush1.xpose.msra.mxu0 0.0
        %4746 = vmatprep.subr.mxu0 0.0
        %4747 = vmatpush1.xpose.msra.mxu0 0.0
        %4748 = vmatprep.subr.mxu0 0.0
        %4749 = vmatpush1.xpose.msra.mxu0 0.0
        %4750 = vmatprep.subr.mxu0 0.0
        %4751 = vmatpush1.xpose.msra.mxu0 0.0
        %4752 = vmatprep.subr.mxu0 0.0
        %4753 = vmatpush1.xpose.msra.mxu0 0.0
        %4754 = vmatprep.subr.mxu0 0.0
        %4755 = vmatpush1.xpose.msra.mxu0 0.0
        %4756 = vmatprep.subr.mxu0 0.0
        %4757 = vmatpush1.xpose.msra.mxu0 0.0
        %4758 = vmatprep.subr.mxu0 0.0
        %4759 = vmatpush1.xpose.msra.mxu0 0.0
        %4760 = vmatprep.mubr.f32.mxu0 0.0
        %4761 = vmatmul.mubr.f32.gmra.mrb[0].mxu0 %v4692
        %v4762 = vpop.f32.mrb[0].mxu0
        %v4763 = vadd.f32 0.0, %v4762
        %v4764 = vpop.f32.mrb[0].mxu0
        %4765 = vdwg.mxu0
        %v4766 = vsel %vm876, %v4763, -inf
        %4767 = vmax.xlane.f32.xlu0 %v4766
        %v4768 = vpop.xlane.xlu0 %4767
        %v4769 = vsub.f32 %v4763, %v4768
        %v4770 = vmul.f32 %v4769, 1.442695
        %v4771 = vpow.pop %v4770
        %v4772 = vsel %vm876, %v4771, 0.0
        %4773 = vadd.xlane.f32.xlu0 %v4772
        %v4774 = vpop.xlane.xlu0 %4773
        %v4775 = vrcp.pop %v4774
        %v4776 = vmul.f32 %v4771, %v4775
        %4777 = vrot.lane.b32.xlu0 %v3966, 40
        %v4778 = vpop.permute.xlu0 %4777
        %v4781 = vsel %vm876, %v4776, 0
        %4783 = vmatprep.subr.mxu0 0.0
        %4784 = vmatpush1.msra.mxu0 %v4778
        %4785 = vmatprep.subr.mxu0 0.0
        %4786 = vmatpush1.msra.mxu0 0.0
        %4787 = vmatprep.subr.mxu0 0.0
        %4788 = vmatpush1.msra.mxu0 0.0
        %4789 = vmatprep.subr.mxu0 0.0
        %4790 = vmatpush1.msra.mxu0 0.0
        %4791 = vmatprep.subr.mxu0 0.0
        %4792 = vmatpush1.msra.mxu0 0.0
        %4793 = vmatprep.subr.mxu0 0.0
        %4794 = vmatpush1.msra.mxu0 0.0
        %4795 = vmatprep.subr.mxu0 0.0
        %4796 = vmatpush1.msra.mxu0 0.0
        %4797 = vmatprep.subr.mxu0 0.0
        %4798 = vmatpush1.msra.mxu0 0.0
        %4799 = vmatprep.subr.mxu0 0.0
        %4800 = vmatpush1.msra.mxu0 0.0
        %4801 = vmatprep.subr.mxu0 0.0
        %4802 = vmatpush1.msra.mxu0 0.0
        %4803 = vmatprep.subr.mxu0 0.0
        %4804 = vmatpush1.msra.mxu0 0.0
        %4805 = vmatprep.subr.mxu0 0.0
        %4806 = vmatpush1.msra.mxu0 0.0
        %4807 = vmatprep.subr.mxu0 0.0
        %4808 = vmatpush1.msra.mxu0 0.0
        %4809 = vmatprep.subr.mxu0 0.0
        %4810 = vmatpush1.msra.mxu0 0.0
        %4811 = vmatprep.subr.mxu0 0.0
        %4812 = vmatpush1.msra.mxu0 0.0
        %4813 = vmatprep.subr.mxu0 0.0
        %4814 = vmatpush1.msra.mxu0 0.0
        %4815 = vmatprep.subr.mxu0 0.0
        %4816 = vmatpush1.msra.mxu0 0.0
        %4817 = vmatprep.subr.mxu0 0.0
        %4818 = vmatpush1.msra.mxu0 0.0
        %4819 = vmatprep.subr.mxu0 0.0
        %4820 = vmatpush1.msra.mxu0 0.0
        %4821 = vmatprep.subr.mxu0 0.0
        %4822 = vmatpush1.msra.mxu0 0.0
        %4823 = vmatprep.subr.mxu0 0.0
        %4824 = vmatpush1.msra.mxu0 0.0
        %4825 = vmatprep.subr.mxu0 0.0
        %4826 = vmatpush1.msra.mxu0 0.0
        %4827 = vmatprep.subr.mxu0 0.0
        %4828 = vmatpush1.msra.mxu0 0.0
        %4829 = vmatprep.subr.mxu0 0.0
        %4830 = vmatpush1.msra.mxu0 0.0
        %4831 = vmatprep.subr.mxu0 0.0
        %4832 = vmatpush1.msra.mxu0 0.0
        %4833 = vmatprep.subr.mxu0 0.0
        %4834 = vmatpush1.msra.mxu0 0.0
        %4835 = vmatprep.subr.mxu0 0.0
        %4836 = vmatpush1.msra.mxu0 0.0
        %4837 = vmatprep.subr.mxu0 0.0
        %4838 = vmatpush1.msra.mxu0 0.0
        %4839 = vmatprep.subr.mxu0 0.0
        %4840 = vmatpush1.msra.mxu0 0.0
        %4841 = vmatprep.subr.mxu0 0.0
        %4842 = vmatpush1.msra.mxu0 0.0
        %4843 = vmatprep.subr.mxu0 0.0
        %4844 = vmatpush1.msra.mxu0 0.0
        %4845 = vmatprep.subr.mxu0 0.0
        %4846 = vmatpush1.msra.mxu0 0.0
        %4847 = vmatprep.mubr.f32.mxu0 0.0
        %4848 = vmatmul.mubr.f32.gmra.mrb[0].mxu0 %v4781
        %v4849 = vpop.f32.mrb[0].mxu0
        %v4850 = vadd.f32 0.0, %v4849
        %v4851 = vpop.f32.mrb[0].mxu0
        %4852 = vdwg.mxu0
        %v4854 = vsel %vm876, %v4850, 0
        %4856 = vmatprep.subr.mxu0 0.0
        %4857 = vmatpush1.msra.mxu0 %v3973
        %4858 = vmatprep.subr.mxu0 0.0
        %4859 = vmatpush1.msra.mxu0 0.0
        %4860 = vmatprep.subr.mxu0 0.0
        %4861 = vmatpush1.msra.mxu0 0.0
        %4862 = vmatprep.subr.mxu0 0.0
        %4863 = vmatpush1.msra.mxu0 0.0
        %4864 = vmatprep.subr.mxu0 0.0
        %4865 = vmatpush1.msra.mxu0 0.0
        %4866 = vmatprep.subr.mxu0 0.0
        %4867 = vmatpush1.msra.mxu0 0.0
        %4868 = vmatprep.subr.mxu0 0.0
        %4869 = vmatpush1.msra.mxu0 0.0
        %4870 = vmatprep.subr.mxu0 0.0
        %4871 = vmatpush1.msra.mxu0 0.0
        %4872 = vmatprep.subr.mxu0 0.0
        %4873 = vmatpush1.msra.mxu0 0.0
        %4874 = vmatprep.subr.mxu0 0.0
        %4875 = vmatpush1.msra.mxu0 0.0
        %4876 = vmatprep.subr.mxu0 0.0
        %4877 = vmatpush1.msra.mxu0 0.0
        %4878 = vmatprep.subr.mxu0 0.0
        %4879 = vmatpush1.msra.mxu0 0.0
        %4880 = vmatprep.subr.mxu0 0.0
        %4881 = vmatpush1.msra.mxu0 0.0
        %4882 = vmatprep.subr.mxu0 0.0
        %4883 = vmatpush1.msra.mxu0 0.0
        %4884 = vmatprep.subr.mxu0 0.0
        %4885 = vmatpush1.msra.mxu0 0.0
        %4886 = vmatprep.subr.mxu0 0.0
        %4887 = vmatpush1.msra.mxu0 0.0
        %4888 = vmatprep.subr.mxu0 0.0
        %4889 = vmatpush1.msra.mxu0 0.0
        %4890 = vmatprep.subr.mxu0 0.0
        %4891 = vmatpush1.msra.mxu0 0.0
        %4892 = vmatprep.subr.mxu0 0.0
        %4893 = vmatpush1.msra.mxu0 0.0
        %4894 = vmatprep.subr.mxu0 0.0
        %4895 = vmatpush1.msra.mxu0 0.0
        %4896 = vmatprep.subr.mxu0 0.0
        %4897 = vmatpush1.msra.mxu0 0.0
        %4898 = vmatprep.subr.mxu0 0.0
        %4899 = vmatpush1.msra.mxu0 0.0
        %4900 = vmatprep.subr.mxu0 0.0
        %4901 = vmatpush1.msra.mxu0 0.0
        %4902 = vmatprep.subr.mxu0 0.0
        %4903 = vmatpush1.msra.mxu0 0.0
        %4904 = vmatprep.subr.mxu0 0.0
        %4905 = vmatpush1.msra.mxu0 0.0
        %4906 = vmatprep.subr.mxu0 0.0
        %4907 = vmatpush1.msra.mxu0 0.0
        %4908 = vmatprep.subr.mxu0 0.0
        %4909 = vmatpush1.msra.mxu0 0.0
        %4910 = vmatprep.subr.mxu0 0.0
        %4911 = vmatpush1.msra.mxu0 0.0
        %4912 = vmatprep.subr.mxu0 0.0
        %4913 = vmatpush1.msra.mxu0 0.0
        %4914 = vmatprep.subr.mxu0 0.0
        %4915 = vmatpush1.msra.mxu0 0.0
        %4916 = vmatprep.subr.mxu0 0.0
        %4917 = vmatpush1.msra.mxu0 0.0
        %4918 = vmatprep.subr.mxu0 0.0
        %4919 = vmatpush1.msra.mxu0 0.0
        %4920 = vmatprep.mubr.f32.mxu0 0.0
        %4921 = vmatmul.mubr.f32.gmra.mrb[0].mxu0 %v4854
        %v4922 = vpop.f32.mrb[0].mxu0
        %v4923 = vadd.f32 0.0, %v4922
        %v4924 = vpop.f32.mrb[0].mxu0
        %4925 = vdwg.mxu0
        %v4926 = vadd.f32 %v4687, %v4923
        %v4927 = vadd.f32 %v3852, %v4926
        %v4928 = vlaneseq
        %v4929 = vshrl.u32 %v4928, 7
        %v4930 = vsub.s32 3, %v4929
        %v4931 = vrot.slane %v385, %v4930
        %v4932 = vadd.f32 %v4927, %v4931
        %v4933 = vsel %vm721, %v4932, 0.0
        %4934 = vadd.xlane.f32.xlu0 %v4933
        %v4935 = vpop.xlane.xlu0 %4934
        %v4936 = vmul.f32 %v4935, %v725
        %v4937 = vsub.f32 %v4932, %v4936
        %v4938 = vmul.f32 %v4937, %v4937
        %v4939 = vsel %vm721, %v4938, 0.0
        %4940 = vadd.xlane.f32.xlu0 %v4939
        %v4941 = vpop.xlane.xlu0 %4940
        %v4942 = vmul.f32 %v4941, 0.032258064
        %v4943 = vrsqrt.pop %v4942
        %v4944 = vmul.f32 %v4942, %v4943
        %vm4945 = vcmp.eq.f32.partialorder %v4942, inf
        %v4946 = vsel %vm4945, %v4942, %v4944
        %vm4947 = vcmp.eq.f32.partialorder %v4942, 0.0
        %v4948 = vand.u32 %v4942, 2147483648
        %v4949 = vsel %vm4947, %v4948, %v4946
        %v4950 = vadd.f32 %v4949, 1e-06
        %v4951 = vrcp.pop %v4950
        %v4952 = vmul.f32 %v4937, %v4951
        %v4953 = vlaneseq
        %v4954 = vshrl.u32 %v4953, 7
        %v4955 = vsub.s32 4, %v4954
        %v4956 = vrot.slane %v385, %v4955
        %v4957 = vmul.f32 %v4956, %v4952
        %v4958 = vlaneseq
        %v4959 = vshrl.u32 %v4958, 7
        %v4960 = vsub.s32 5, %v4959
        %v4961 = vrot.slane %v385, %v4960
        %v4962 = vadd.f32 %v4957, %v4961
        %v4963 = vpack.c.bf16 %v4962, %v4962
        %s4964 = scalar_lea.vmem %s8, 256
        %v4965 = vld [vmem:[%s4964] sm:$0xff]
        %v4966 = vld [vmem:[%s4964 + $0x8] sm:$0xff]
        %v4967 = vld [vmem:[%s4964 + $0x10] sm:$0xff]
        %v4968 = vld [vmem:[%s4964 + $0x18] sm:$0xff]
        %v4969 = vld [vmem:[%s4964 + $0x20] sm:$0xff]
        %v4970 = vld [vmem:[%s4964 + $0x28] sm:$0xff]
        %v4971 = vld [vmem:[%s4964 + $0x30] sm:$0xff]
        %v4972 = vld [vmem:[%s4964 + $0x38] sm:$0xff]
        %v4973 = vld [vmem:[%s4964 + $0x40] sm:$0xff]
        %v4974 = vld [vmem:[%s4964 + $0x48] sm:$0xff]
        %v4975 = vld [vmem:[%s4964 + $0x50] sm:$0xff]
        %v4976 = vld [vmem:[%s4964 + $0x58] sm:$0xff]
        %v4977 = vld [vmem:[%s4964 + $0x60] sm:$0xff]
        %v4978 = vld [vmem:[%s4964 + $0x68] sm:$0xff]
        %v4979 = vld [vmem:[%s4964 + $0x70] sm:$0xff]
        %v4980 = vld [vmem:[%s4964 + $0x78] sm:$0xff]
        %v4981 = vld [vmem:[%s4964 + $0x80] sm:$0xff]
        %v4982 = vld [vmem:[%s4964 + $0x88] sm:$0xff]
        %v4983 = vld [vmem:[%s4964 + $0x90] sm:$0xff]
        %v4984 = vld [vmem:[%s4964 + $0x98] sm:$0xff]
        %v4985 = vld [vmem:[%s4964 + $0xa0] sm:$0xff]
        %v4986 = vld [vmem:[%s4964 + $0xa8] sm:$0xff]
        %v4987 = vld [vmem:[%s4964 + $0xb0] sm:$0xff]
        %v4988 = vld [vmem:[%s4964 + $0xb8] sm:$0xff]
        %v4989 = vld [vmem:[%s4964 + $0xc0] sm:$0xff]
        %v4990 = vld [vmem:[%s4964 + $0xc8] sm:$0xff]
        %v4991 = vld [vmem:[%s4964 + $0xd0] sm:$0xff]
        %v4992 = vld [vmem:[%s4964 + $0xd8] sm:$0xff]
        %v4993 = vld [vmem:[%s4964 + $0xe0] sm:$0xff]
        %v4994 = vld [vmem:[%s4964 + $0xe8] sm:$0xff]
        %v4995 = vld [vmem:[%s4964 + $0xf0] sm:$0xff]
        %v4996 = vld [vmem:[%s4964 + $0xf8] sm:$0xff]
        %s4997 = scalar_lea.vmem %s9, 16
        %v4998 = vld [vmem:[%s4997] sm:$0xff]
        %v4999 = vld [vmem:[%s4997 + $0x8] sm:$0xff]
        %v5002 = vlaneseq
        %v5003 = vshrl.u32 %v5002, 7
        %v5004 = vsub.s32 0, %v5003
        %v5005 = vrot.slane %v4998, %v5004
        %v5006 = vlaneseq
        %v5007 = vshrl.u32 %v5006, 7
        %v5008 = vsub.s32 1, %v5007
        %v5009 = vrot.slane %v4998, %v5008
        %v5010 = vlaneseq
        %v5011 = vshrl.u32 %v5010, 7
        %v5012 = vsub.s32 2, %v5011
        %v5013 = vrot.slane %v4998, %v5012
        %v5014 = vlaneseq
        %v5015 = vshrl.u32 %v5014, 7
        %v5016 = vsub.s32 3, %v5015
        %v5017 = vrot.slane %v4998, %v5016
        %v5018 = vlaneseq
        %v5019 = vshrl.u32 %v5018, 7
        %v5020 = vsub.s32 4, %v5019
        %v5021 = vrot.slane %v4998, %v5020
        %v5022 = vlaneseq
        %v5023 = vshrl.u32 %v5022, 7
        %v5024 = vsub.s32 5, %v5023
        %v5025 = vrot.slane %v4998, %v5024
        %v5026 = vlaneseq
        %v5027 = vshrl.u32 %v5026, 7
        %v5028 = vsub.s32 6, %v5027
        %v5029 = vrot.slane %v4998, %v5028
        %v5030 = vlaneseq
        %v5031 = vshrl.u32 %v5030, 7
        %v5032 = vsub.s32 7, %v5031
        %v5033 = vrot.slane %v4998, %v5032
        %v5034 = vlaneseq
        %v5035 = vshrl.u32 %v5034, 7
        %v5036 = vsub.s32 0, %v5035
        %v5037 = vrot.slane %v4999, %v5036
        %v5038 = vlaneseq
        %v5039 = vshrl.u32 %v5038, 7
        %v5040 = vsub.s32 1, %v5039
        %v5041 = vrot.slane %v4999, %v5040
        %v5042 = vlaneseq
        %v5043 = vshrl.u32 %v5042, 7
        %v5044 = vsub.s32 2, %v5043
        %v5045 = vrot.slane %v4999, %v5044
        %v5046 = vlaneseq
        %v5047 = vshrl.u32 %v5046, 7
        %v5048 = vsub.s32 3, %v5047
        %v5049 = vrot.slane %v4999, %v5048
        %v5050 = vlaneseq
        %v5051 = vshrl.u32 %v5050, 7
        %v5052 = vsub.s32 4, %v5051
        %v5053 = vrot.slane %v4999, %v5052
        %v5054 = vlaneseq
        %v5055 = vshrl.u32 %v5054, 7
        %v5056 = vsub.s32 5, %v5055
        %v5057 = vrot.slane %v4999, %v5056
        %v5058 = vlaneseq
        %v5059 = vshrl.u32 %v5058, 7
        %v5060 = vsub.s32 6, %v5059
        %v5061 = vrot.slane %v4999, %v5060
        %v5062 = vlaneseq
        %v5063 = vshrl.u32 %v5062, 7
        %v5064 = vsub.s32 7, %v5063
        %v5065 = vrot.slane %v4999, %v5064
        %v5114 = vunpack.c.l.b16 %v4965
        %v5115 = vunpack.c.h.b16 %v4965
        %v5116 = vunpack.c.l.b16 %v4966
        %v5117 = vunpack.c.h.b16 %v4966
        %v5118 = vunpack.c.l.b16 %v4967
        %v5119 = vunpack.c.h.b16 %v4967
        %v5120 = vunpack.c.l.b16 %v4968
        %v5121 = vunpack.c.h.b16 %v4968
        %v5122 = vunpack.c.l.b16 %v4969
        %v5123 = vunpack.c.h.b16 %v4969
        %v5124 = vunpack.c.l.b16 %v4970
        %v5125 = vunpack.c.h.b16 %v4970
        %v5126 = vunpack.c.l.b16 %v4971
        %v5127 = vunpack.c.h.b16 %v4971
        %v5128 = vunpack.c.l.b16 %v4972
        %v5129 = vunpack.c.h.b16 %v4972
        %v5130 = vunpack.c.l.b16 %v4973
        %v5131 = vunpack.c.h.b16 %v4973
        %v5132 = vunpack.c.l.b16 %v4974
        %v5133 = vunpack.c.h.b16 %v4974
        %v5134 = vunpack.c.l.b16 %v4975
        %v5135 = vunpack.c.h.b16 %v4975
        %v5136 = vunpack.c.l.b16 %v4976
        %v5137 = vunpack.c.h.b16 %v4976
        %v5138 = vunpack.c.l.b16 %v4977
        %v5139 = vunpack.c.h.b16 %v4977
        %v5140 = vunpack.c.l.b16 %v4978
        %v5141 = vunpack.c.h.b16 %v4978
        %v5142 = vunpack.c.l.b16 %v4979
        %v5143 = vunpack.c.h.b16 %v4979
        %v5144 = vunpack.c.l.b16 %v4980
        %v5145 = vunpack.c.h.b16 %v4980
        %v5146 = vunpack.c.l.b16 %v4981
        %v5147 = vunpack.c.h.b16 %v4981
        %v5148 = vunpack.c.l.b16 %v4982
        %v5149 = vunpack.c.h.b16 %v4982
        %v5150 = vunpack.c.l.b16 %v4983
        %v5151 = vunpack.c.h.b16 %v4983
        %v5152 = vunpack.c.l.b16 %v4984
        %v5153 = vunpack.c.h.b16 %v4984
        %v5154 = vunpack.c.l.b16 %v4985
        %v5155 = vunpack.c.h.b16 %v4985
        %v5156 = vunpack.c.l.b16 %v4986
        %v5157 = vunpack.c.h.b16 %v4986
        %v5158 = vunpack.c.l.b16 %v4987
        %v5159 = vunpack.c.h.b16 %v4987
        %v5160 = vunpack.c.l.b16 %v4988
        %v5161 = vunpack.c.h.b16 %v4988
        %v5162 = vunpack.c.l.b16 %v4989
        %v5163 = vunpack.c.h.b16 %v4989
        %v5164 = vunpack.c.l.b16 %v4990
        %v5165 = vunpack.c.h.b16 %v4990
        %v5166 = vunpack.c.l.b16 %v4991
        %v5167 = vunpack.c.h.b16 %v4991
        %v5168 = vunpack.c.l.b16 %v4992
        %v5169 = vunpack.c.h.b16 %v4992
        %v5170 = vunpack.c.l.b16 %v4993
        %v5171 = vunpack.c.h.b16 %v4993
        %v5172 = vunpack.c.l.b16 %v4994
        %v5173 = vunpack.c.h.b16 %v4994
        %v5174 = vunpack.c.l.b16 %v4995
        %v5175 = vunpack.c.h.b16 %v4995
        %v5176 = vunpack.c.l.b16 %v4996
        %v5177 = vunpack.c.h.b16 %v4996
        %v5178 = vpack.c.b16 %v5130, %v5114
        %v5179 = vpack.c.b16 %v5131, %v5115
        %v5180 = vpack.c.b16 %v5132, %v5116
        %v5181 = vpack.c.b16 %v5133, %v5117
        %v5182 = vpack.c.b16 %v5134, %v5118
        %v5183 = vpack.c.b16 %v5135, %v5119
        %v5184 = vpack.c.b16 %v5136, %v5120
        %v5185 = vpack.c.b16 %v5137, %v5121
        %v5186 = vpack.c.b16 %v5138, %v5122
        %v5187 = vpack.c.b16 %v5139, %v5123
        %v5188 = vpack.c.b16 %v5140, %v5124
        %v5189 = vpack.c.b16 %v5141, %v5125
        %v5190 = vpack.c.b16 %v5142, %v5126
        %v5191 = vpack.c.b16 %v5143, %v5127
        %v5192 = vpack.c.b16 %v5144, %v5128
        %v5193 = vpack.c.b16 %v5145, %v5129
        %v5194 = vpack.c.b16 %v5162, %v5146
        %v5195 = vpack.c.b16 %v5163, %v5147
        %v5196 = vpack.c.b16 %v5164, %v5148
        %v5197 = vpack.c.b16 %v5165, %v5149
        %v5198 = vpack.c.b16 %v5166, %v5150
        %v5199 = vpack.c.b16 %v5167, %v5151
        %v5200 = vpack.c.b16 %v5168, %v5152
        %v5201 = vpack.c.b16 %v5169, %v5153
        %v5202 = vpack.c.b16 %v5170, %v5154
        %v5203 = vpack.c.b16 %v5171, %v5155
        %v5204 = vpack.c.b16 %v5172, %v5156
        %v5205 = vpack.c.b16 %v5173, %v5157
        %v5206 = vpack.c.b16 %v5174, %v5158
        %v5207 = vpack.c.b16 %v5175, %v5159
        %v5208 = vpack.c.b16 %v5176, %v5160
        %v5209 = vpack.c.b16 %v5177, %v5161
        %v5243 = vsel %vm721, %v4963, 0
        %5245 = vmatprep.subr.bf16.mxu0 %v5179
        %5246 = vmatpush1.bf16.msra.mxu0 %v5178
        %5247 = vmatprep.subr.bf16.mxu0 %v5195
        %5248 = vmatpush1.bf16.msra.mxu0 %v5194
        %5249 = vmatprep.subr.bf16.mxu0 0
        %5250 = vmatpush1.bf16.msra.mxu0 0
        %5251 = vmatprep.subr.bf16.mxu0 0
        %5252 = vmatpush1.bf16.msra.mxu0 0
        %5253 = vmatprep.subr.bf16.mxu0 0
        %5254 = vmatpush1.bf16.msra.mxu0 0
        %5255 = vmatprep.subr.bf16.mxu0 0
        %5256 = vmatpush1.bf16.msra.mxu0 0
        %5257 = vmatprep.subr.bf16.mxu0 0
        %5258 = vmatpush1.bf16.msra.mxu0 0
        %5259 = vmatprep.subr.bf16.mxu0 0
        %5260 = vmatpush1.bf16.msra.mxu0 0
        %5261 = vmatprep.subr.bf16.mxu0 0
        %5262 = vmatpush1.bf16.msra.mxu0 0
        %5263 = vmatprep.subr.bf16.mxu0 0
        %5264 = vmatpush1.bf16.msra.mxu0 0
        %5265 = vmatprep.subr.bf16.mxu0 0
        %5266 = vmatpush1.bf16.msra.mxu0 0
        %5267 = vmatprep.subr.bf16.mxu0 0
        %5268 = vmatpush1.bf16.msra.mxu0 0
        %5269 = vmatprep.subr.bf16.mxu0 0
        %5270 = vmatpush1.bf16.msra.mxu0 0
        %5271 = vmatprep.subr.bf16.mxu0 0
        %5272 = vmatpush1.bf16.msra.mxu0 0
        %5273 = vmatprep.subr.bf16.mxu0 0
        %5274 = vmatpush1.bf16.msra.mxu0 0
        %5275 = vmatprep.subr.bf16.mxu0 0
        %5276 = vmatpush1.bf16.msra.mxu0 0
        %5277 = vmatprep.mubr.bf16.mxu0 0
        %5278 = vmatmul.mubr.bf16.gmra.mrb[0].mxu0 %v5243
        %v5279 = vpop.f32.mrb[0].mxu0
        %v5280 = vadd.f32 %v5005, %v5279
        %v5281 = vpop.f32.mrb[0].mxu0
        %v5282 = vadd.f32 %v5009, %v5281
        %v5283 = vpop.f32.mrb[0].mxu0
        %v5284 = vpop.f32.mrb[0].mxu0
        %5285 = vdwg.mxu0
        %5286 = vmatprep.subr.bf16.mxu0 %v5181
        %5287 = vmatpush1.bf16.msra.mxu0 %v5180
        %5288 = vmatprep.subr.bf16.mxu0 %v5197
        %5289 = vmatpush1.bf16.msra.mxu0 %v5196
        %5290 = vmatprep.subr.bf16.mxu0 0
        %5291 = vmatpush1.bf16.msra.mxu0 0
        %5292 = vmatprep.subr.bf16.mxu0 0
        %5293 = vmatpush1.bf16.msra.mxu0 0
        %5294 = vmatprep.subr.bf16.mxu0 0
        %5295 = vmatpush1.bf16.msra.mxu0 0
        %5296 = vmatprep.subr.bf16.mxu0 0
        %5297 = vmatpush1.bf16.msra.mxu0 0
        %5298 = vmatprep.subr.bf16.mxu0 0
        %5299 = vmatpush1.bf16.msra.mxu0 0
        %5300 = vmatprep.subr.bf16.mxu0 0
        %5301 = vmatpush1.bf16.msra.mxu0 0
        %5302 = vmatprep.subr.bf16.mxu0 0
        %5303 = vmatpush1.bf16.msra.mxu0 0
        %5304 = vmatprep.subr.bf16.mxu0 0
        %5305 = vmatpush1.bf16.msra.mxu0 0
        %5306 = vmatprep.subr.bf16.mxu0 0
        %5307 = vmatpush1.bf16.msra.mxu0 0
        %5308 = vmatprep.subr.bf16.mxu0 0
        %5309 = vmatpush1.bf16.msra.mxu0 0
        %5310 = vmatprep.subr.bf16.mxu0 0
        %5311 = vmatpush1.bf16.msra.mxu0 0
        %5312 = vmatprep.subr.bf16.mxu0 0
        %5313 = vmatpush1.bf16.msra.mxu0 0
        %5314 = vmatprep.subr.bf16.mxu0 0
        %5315 = vmatpush1.bf16.msra.mxu0 0
        %5316 = vmatprep.subr.bf16.mxu0 0
        %5317 = vmatpush1.bf16.msra.mxu0 0
        %5318 = vmatprep.mubr.bf16.mxu0 0
        %5319 = vmatmul.mubr.bf16.gmra.mrb[0].mxu0 %v5243
        %v5320 = vpop.f32.mrb[0].mxu0
        %v5321 = vadd.f32 %v5013, %v5320
        %v5322 = vpop.f32.mrb[0].mxu0
        %v5323 = vadd.f32 %v5017, %v5322
        %v5324 = vpop.f32.mrb[0].mxu0
        %v5325 = vpop.f32.mrb[0].mxu0
        %5326 = vdwg.mxu0
        %5327 = vmatprep.subr.bf16.mxu0 %v5183
        %5328 = vmatpush1.bf16.msra.mxu0 %v5182
        %5329 = vmatprep.subr.bf16.mxu0 %v5199
        %5330 = vmatpush1.bf16.msra.mxu0 %v5198
        %5331 = vmatprep.subr.bf16.mxu0 0
        %5332 = vmatpush1.bf16.msra.mxu0 0
        %5333 = vmatprep.subr.bf16.mxu0 0
        %5334 = vmatpush1.bf16.msra.mxu0 0
        %5335 = vmatprep.subr.bf16.mxu0 0
        %5336 = vmatpush1.bf16.msra.mxu0 0
        %5337 = vmatprep.subr.bf16.mxu0 0
        %5338 = vmatpush1.bf16.msra.mxu0 0
        %5339 = vmatprep.subr.bf16.mxu0 0
        %5340 = vmatpush1.bf16.msra.mxu0 0
        %5341 = vmatprep.subr.bf16.mxu0 0
        %5342 = vmatpush1.bf16.msra.mxu0 0
        %5343 = vmatprep.subr.bf16.mxu0 0
        %5344 = vmatpush1.bf16.msra.mxu0 0
        %5345 = vmatprep.subr.bf16.mxu0 0
        %5346 = vmatpush1.bf16.msra.mxu0 0
        %5347 = vmatprep.subr.bf16.mxu0 0
        %5348 = vmatpush1.bf16.msra.mxu0 0
        %5349 = vmatprep.subr.bf16.mxu0 0
        %5350 = vmatpush1.bf16.msra.mxu0 0
        %5351 = vmatprep.subr.bf16.mxu0 0
        %5352 = vmatpush1.bf16.msra.mxu0 0
        %5353 = vmatprep.subr.bf16.mxu0 0
        %5354 = vmatpush1.bf16.msra.mxu0 0
        %5355 = vmatprep.subr.bf16.mxu0 0
        %5356 = vmatpush1.bf16.msra.mxu0 0
        %5357 = vmatprep.subr.bf16.mxu0 0
        %5358 = vmatpush1.bf16.msra.mxu0 0
        %5359 = vmatprep.mubr.bf16.mxu0 0
        %5360 = vmatmul.mubr.bf16.gmra.mrb[0].mxu0 %v5243
        %v5361 = vpop.f32.mrb[0].mxu0
        %v5362 = vadd.f32 %v5021, %v5361
        %v5363 = vpop.f32.mrb[0].mxu0
        %v5364 = vadd.f32 %v5025, %v5363
        %v5365 = vpop.f32.mrb[0].mxu0
        %v5366 = vpop.f32.mrb[0].mxu0
        %5367 = vdwg.mxu0
        %5368 = vmatprep.subr.bf16.mxu0 %v5185
        %5369 = vmatpush1.bf16.msra.mxu0 %v5184
        %5370 = vmatprep.subr.bf16.mxu0 %v5201
        %5371 = vmatpush1.bf16.msra.mxu0 %v5200
        %5372 = vmatprep.subr.bf16.mxu0 0
        %5373 = vmatpush1.bf16.msra.mxu0 0
        %5374 = vmatprep.subr.bf16.mxu0 0
        %5375 = vmatpush1.bf16.msra.mxu0 0
        %5376 = vmatprep.subr.bf16.mxu0 0
        %5377 = vmatpush1.bf16.msra.mxu0 0
        %5378 = vmatprep.subr.bf16.mxu0 0
        %5379 = vmatpush1.bf16.msra.mxu0 0
        %5380 = vmatprep.subr.bf16.mxu0 0
        %5381 = vmatpush1.bf16.msra.mxu0 0
        %5382 = vmatprep.subr.bf16.mxu0 0
        %5383 = vmatpush1.bf16.msra.mxu0 0
        %5384 = vmatprep.subr.bf16.mxu0 0
        %5385 = vmatpush1.bf16.msra.mxu0 0
        %5386 = vmatprep.subr.bf16.mxu0 0
        %5387 = vmatpush1.bf16.msra.mxu0 0
        %5388 = vmatprep.subr.bf16.mxu0 0
        %5389 = vmatpush1.bf16.msra.mxu0 0
        %5390 = vmatprep.subr.bf16.mxu0 0
        %5391 = vmatpush1.bf16.msra.mxu0 0
        %5392 = vmatprep.subr.bf16.mxu0 0
        %5393 = vmatpush1.bf16.msra.mxu0 0
        %5394 = vmatprep.subr.bf16.mxu0 0
        %5395 = vmatpush1.bf16.msra.mxu0 0
        %5396 = vmatprep.subr.bf16.mxu0 0
        %5397 = vmatpush1.bf16.msra.mxu0 0
        %5398 = vmatprep.subr.bf16.mxu0 0
        %5399 = vmatpush1.bf16.msra.mxu0 0
        %5400 = vmatprep.mubr.bf16.mxu0 0
        %5401 = vmatmul.mubr.bf16.gmra.mrb[0].mxu0 %v5243
        %v5402 = vpop.f32.mrb[0].mxu0
        %v5403 = vadd.f32 %v5029, %v5402
        %v5404 = vpop.f32.mrb[0].mxu0
        %v5405 = vadd.f32 %v5033, %v5404
        %v5406 = vpop.f32.mrb[0].mxu0
        %v5407 = vpop.f32.mrb[0].mxu0
        %5408 = vdwg.mxu0
        %5409 = vmatprep.subr.bf16.mxu0 %v5187
        %5410 = vmatpush1.bf16.msra.mxu0 %v5186
        %5411 = vmatprep.subr.bf16.mxu0 %v5203
        %5412 = vmatpush1.bf16.msra.mxu0 %v5202
        %5413 = vmatprep.subr.bf16.mxu0 0
        %5414 = vmatpush1.bf16.msra.mxu0 0
        %5415 = vmatprep.subr.bf16.mxu0 0
        %5416 = vmatpush1.bf16.msra.mxu0 0
        %5417 = vmatprep.subr.bf16.mxu0 0
        %5418 = vmatpush1.bf16.msra.mxu0 0
        %5419 = vmatprep.subr.bf16.mxu0 0
        %5420 = vmatpush1.bf16.msra.mxu0 0
        %5421 = vmatprep.subr.bf16.mxu0 0
        %5422 = vmatpush1.bf16.msra.mxu0 0
        %5423 = vmatprep.subr.bf16.mxu0 0
        %5424 = vmatpush1.bf16.msra.mxu0 0
        %5425 = vmatprep.subr.bf16.mxu0 0
        %5426 = vmatpush1.bf16.msra.mxu0 0
        %5427 = vmatprep.subr.bf16.mxu0 0
        %5428 = vmatpush1.bf16.msra.mxu0 0
        %5429 = vmatprep.subr.bf16.mxu0 0
        %5430 = vmatpush1.bf16.msra.mxu0 0
        %5431 = vmatprep.subr.bf16.mxu0 0
        %5432 = vmatpush1.bf16.msra.mxu0 0
        %5433 = vmatprep.subr.bf16.mxu0 0
        %5434 = vmatpush1.bf16.msra.mxu0 0
        %5435 = vmatprep.subr.bf16.mxu0 0
        %5436 = vmatpush1.bf16.msra.mxu0 0
        %5437 = vmatprep.subr.bf16.mxu0 0
        %5438 = vmatpush1.bf16.msra.mxu0 0
        %5439 = vmatprep.subr.bf16.mxu0 0
        %5440 = vmatpush1.bf16.msra.mxu0 0
        %5441 = vmatprep.mubr.bf16.mxu0 0
        %5442 = vmatmul.mubr.bf16.gmra.mrb[0].mxu0 %v5243
        %v5443 = vpop.f32.mrb[0].mxu0
        %v5444 = vadd.f32 %v5037, %v5443
        %v5445 = vpop.f32.mrb[0].mxu0
        %v5446 = vadd.f32 %v5041, %v5445
        %v5447 = vpop.f32.mrb[0].mxu0
        %v5448 = vpop.f32.mrb[0].mxu0
        %5449 = vdwg.mxu0
        %5450 = vmatprep.subr.bf16.mxu0 %v5189
        %5451 = vmatpush1.bf16.msra.mxu0 %v5188
        %5452 = vmatprep.subr.bf16.mxu0 %v5205
        %5453 = vmatpush1.bf16.msra.mxu0 %v5204
        %5454 = vmatprep.subr.bf16.mxu0 0
        %5455 = vmatpush1.bf16.msra.mxu0 0
        %5456 = vmatprep.subr.bf16.mxu0 0
        %5457 = vmatpush1.bf16.msra.mxu0 0
        %5458 = vmatprep.subr.bf16.mxu0 0
        %5459 = vmatpush1.bf16.msra.mxu0 0
        %5460 = vmatprep.subr.bf16.mxu0 0
        %5461 = vmatpush1.bf16.msra.mxu0 0
        %5462 = vmatprep.subr.bf16.mxu0 0
        %5463 = vmatpush1.bf16.msra.mxu0 0
        %5464 = vmatprep.subr.bf16.mxu0 0
        %5465 = vmatpush1.bf16.msra.mxu0 0
        %5466 = vmatprep.subr.bf16.mxu0 0
        %5467 = vmatpush1.bf16.msra.mxu0 0
        %5468 = vmatprep.subr.bf16.mxu0 0
        %5469 = vmatpush1.bf16.msra.mxu0 0
        %5470 = vmatprep.subr.bf16.mxu0 0
        %5471 = vmatpush1.bf16.msra.mxu0 0
        %5472 = vmatprep.subr.bf16.mxu0 0
        %5473 = vmatpush1.bf16.msra.mxu0 0
        %5474 = vmatprep.subr.bf16.mxu0 0
        %5475 = vmatpush1.bf16.msra.mxu0 0
        %5476 = vmatprep.subr.bf16.mxu0 0
        %5477 = vmatpush1.bf16.msra.mxu0 0
        %5478 = vmatprep.subr.bf16.mxu0 0
        %5479 = vmatpush1.bf16.msra.mxu0 0
        %5480 = vmatprep.subr.bf16.mxu0 0
        %5481 = vmatpush1.bf16.msra.mxu0 0
        %5482 = vmatprep.mubr.bf16.mxu0 0
        %5483 = vmatmul.mubr.bf16.gmra.mrb[0].mxu0 %v5243
        %v5484 = vpop.f32.mrb[0].mxu0
        %v5485 = vadd.f32 %v5045, %v5484
        %v5486 = vpop.f32.mrb[0].mxu0
        %v5487 = vadd.f32 %v5049, %v5486
        %v5488 = vpop.f32.mrb[0].mxu0
        %v5489 = vpop.f32.mrb[0].mxu0
        %5490 = vdwg.mxu0
        %5491 = vmatprep.subr.bf16.mxu0 %v5191
        %5492 = vmatpush1.bf16.msra.mxu0 %v5190
        %5493 = vmatprep.subr.bf16.mxu0 %v5207
        %5494 = vmatpush1.bf16.msra.mxu0 %v5206
        %5495 = vmatprep.subr.bf16.mxu0 0
        %5496 = vmatpush1.bf16.msra.mxu0 0
        %5497 = vmatprep.subr.bf16.mxu0 0
        %5498 = vmatpush1.bf16.msra.mxu0 0
        %5499 = vmatprep.subr.bf16.mxu0 0
        %5500 = vmatpush1.bf16.msra.mxu0 0
        %5501 = vmatprep.subr.bf16.mxu0 0
        %5502 = vmatpush1.bf16.msra.mxu0 0
        %5503 = vmatprep.subr.bf16.mxu0 0
        %5504 = vmatpush1.bf16.msra.mxu0 0
        %5505 = vmatprep.subr.bf16.mxu0 0
        %5506 = vmatpush1.bf16.msra.mxu0 0
        %5507 = vmatprep.subr.bf16.mxu0 0
        %5508 = vmatpush1.bf16.msra.mxu0 0
        %5509 = vmatprep.subr.bf16.mxu0 0
        %5510 = vmatpush1.bf16.msra.mxu0 0
        %5511 = vmatprep.subr.bf16.mxu0 0
        %5512 = vmatpush1.bf16.msra.mxu0 0
        %5513 = vmatprep.subr.bf16.mxu0 0
        %5514 = vmatpush1.bf16.msra.mxu0 0
        %5515 = vmatprep.subr.bf16.mxu0 0
        %5516 = vmatpush1.bf16.msra.mxu0 0
        %5517 = vmatprep.subr.bf16.mxu0 0
        %5518 = vmatpush1.bf16.msra.mxu0 0
        %5519 = vmatprep.subr.bf16.mxu0 0
        %5520 = vmatpush1.bf16.msra.mxu0 0
        %5521 = vmatprep.subr.bf16.mxu0 0
        %5522 = vmatpush1.bf16.msra.mxu0 0
        %5523 = vmatprep.mubr.bf16.mxu0 0
        %5524 = vmatmul.mubr.bf16.gmra.mrb[0].mxu0 %v5243
        %v5525 = vpop.f32.mrb[0].mxu0
        %v5526 = vadd.f32 %v5053, %v5525
        %v5527 = vpop.f32.mrb[0].mxu0
        %v5528 = vadd.f32 %v5057, %v5527
        %v5529 = vpop.f32.mrb[0].mxu0
        %v5530 = vpop.f32.mrb[0].mxu0
        %5531 = vdwg.mxu0
        %5532 = vmatprep.subr.bf16.mxu0 %v5193
        %5533 = vmatpush1.bf16.msra.mxu0 %v5192
        %5534 = vmatprep.subr.bf16.mxu0 %v5209
        %5535 = vmatpush1.bf16.msra.mxu0 %v5208
        %5536 = vmatprep.subr.bf16.mxu0 0
        %5537 = vmatpush1.bf16.msra.mxu0 0
        %5538 = vmatprep.subr.bf16.mxu0 0
        %5539 = vmatpush1.bf16.msra.mxu0 0
        %5540 = vmatprep.subr.bf16.mxu0 0
        %5541 = vmatpush1.bf16.msra.mxu0 0
        %5542 = vmatprep.subr.bf16.mxu0 0
        %5543 = vmatpush1.bf16.msra.mxu0 0
        %5544 = vmatprep.subr.bf16.mxu0 0
        %5545 = vmatpush1.bf16.msra.mxu0 0
        %5546 = vmatprep.subr.bf16.mxu0 0
        %5547 = vmatpush1.bf16.msra.mxu0 0
        %5548 = vmatprep.subr.bf16.mxu0 0
        %5549 = vmatpush1.bf16.msra.mxu0 0
        %5550 = vmatprep.subr.bf16.mxu0 0
        %5551 = vmatpush1.bf16.msra.mxu0 0
        %5552 = vmatprep.subr.bf16.mxu0 0
        %5553 = vmatpush1.bf16.msra.mxu0 0
        %5554 = vmatprep.subr.bf16.mxu0 0
        %5555 = vmatpush1.bf16.msra.mxu0 0
        %5556 = vmatprep.subr.bf16.mxu0 0
        %5557 = vmatpush1.bf16.msra.mxu0 0
        %5558 = vmatprep.subr.bf16.mxu0 0
        %5559 = vmatpush1.bf16.msra.mxu0 0
        %5560 = vmatprep.subr.bf16.mxu0 0
        %5561 = vmatpush1.bf16.msra.mxu0 0
        %5562 = vmatprep.subr.bf16.mxu0 0
        %5563 = vmatpush1.bf16.msra.mxu0 0
        %5564 = vmatprep.mubr.bf16.mxu0 0
        %5565 = vmatmul.mubr.bf16.gmra.mrb[0].mxu0 %v5243
        %v5566 = vpop.f32.mrb[0].mxu0
        %v5567 = vadd.f32 %v5061, %v5566
        %v5568 = vpop.f32.mrb[0].mxu0
        %v5569 = vadd.f32 %v5065, %v5568
        %v5570 = vpop.f32.mrb[0].mxu0
        %v5571 = vpop.f32.mrb[0].mxu0
        %5572 = vdwg.mxu0
        %v5573 = vmax.f32 %v5280, 0.0
        %v5574 = vmax.f32 %v5282, 0.0
        %v5575 = vmax.f32 %v5321, 0.0
        %v5576 = vmax.f32 %v5323, 0.0
        %v5577 = vmax.f32 %v5362, 0.0
        %v5578 = vmax.f32 %v5364, 0.0
        %v5579 = vmax.f32 %v5403, 0.0
        %v5580 = vmax.f32 %v5405, 0.0
        %v5581 = vmax.f32 %v5444, 0.0
        %v5582 = vmax.f32 %v5446, 0.0
        %v5583 = vmax.f32 %v5485, 0.0
        %v5584 = vmax.f32 %v5487, 0.0
        %v5585 = vmax.f32 %v5526, 0.0
        %v5586 = vmax.f32 %v5528, 0.0
        %v5587 = vmax.f32 %v5567, 0.0
        %v5588 = vmax.f32 %v5569, 0.0
        %v5589 = vpack.c.bf16 %v5573, %v5573
        %v5590 = vpack.c.bf16 %v5574, %v5574
        %v5591 = vpack.c.bf16 %v5575, %v5575
        %v5592 = vpack.c.bf16 %v5576, %v5576
        %v5593 = vpack.c.bf16 %v5577, %v5577
        %v5594 = vpack.c.bf16 %v5578, %v5578
        %v5595 = vpack.c.bf16 %v5579, %v5579
        %v5596 = vpack.c.bf16 %v5580, %v5580
        %v5597 = vpack.c.bf16 %v5581, %v5581
        %v5598 = vpack.c.bf16 %v5582, %v5582
        %v5599 = vpack.c.bf16 %v5583, %v5583
        %v5600 = vpack.c.bf16 %v5584, %v5584
        %v5601 = vpack.c.bf16 %v5585, %v5585
        %v5602 = vpack.c.bf16 %v5586, %v5586
        %v5603 = vpack.c.bf16 %v5587, %v5587
        %v5604 = vpack.c.bf16 %v5588, %v5588
        %s5605 = scalar_lea.vmem %s10, 1024
        %v5606 = vld [vmem:[%s5605] sm:$0xf]
        %v5607 = vld [vmem:[%s5605 + $0x4] sm:$0xf]
        %v5608 = vld [vmem:[%s5605 + $0x8] sm:$0xf]
        %v5609 = vld [vmem:[%s5605 + $0xc] sm:$0xf]
        %v5610 = vld [vmem:[%s5605 + $0x10] sm:$0xf]
        %v5611 = vld [vmem:[%s5605 + $0x14] sm:$0xf]
        %v5612 = vld [vmem:[%s5605 + $0x18] sm:$0xf]
        %v5613 = vld [vmem:[%s5605 + $0x1c] sm:$0xf]
        %v5614 = vld [vmem:[%s5605 + $0x20] sm:$0xf]
        %v5615 = vld [vmem:[%s5605 + $0x24] sm:$0xf]
        %v5616 = vld [vmem:[%s5605 + $0x28] sm:$0xf]
        %v5617 = vld [vmem:[%s5605 + $0x2c] sm:$0xf]
        %v5618 = vld [vmem:[%s5605 + $0x30] sm:$0xf]
        %v5619 = vld [vmem:[%s5605 + $0x34] sm:$0xf]
        %v5620 = vld [vmem:[%s5605 + $0x38] sm:$0xf]
        %v5621 = vld [vmem:[%s5605 + $0x3c] sm:$0xf]
        %v5622 = vld [vmem:[%s5605 + $0x40] sm:$0xf]
        %v5623 = vld [vmem:[%s5605 + $0x44] sm:$0xf]
        %v5624 = vld [vmem:[%s5605 + $0x48] sm:$0xf]
        %v5625 = vld [vmem:[%s5605 + $0x4c] sm:$0xf]
        %v5626 = vld [vmem:[%s5605 + $0x50] sm:$0xf]
        %v5627 = vld [vmem:[%s5605 + $0x54] sm:$0xf]
        %v5628 = vld [vmem:[%s5605 + $0x58] sm:$0xf]
        %v5629 = vld [vmem:[%s5605 + $0x5c] sm:$0xf]
        %v5630 = vld [vmem:[%s5605 + $0x60] sm:$0xf]
        %v5631 = vld [vmem:[%s5605 + $0x64] sm:$0xf]
        %v5632 = vld [vmem:[%s5605 + $0x68] sm:$0xf]
        %v5633 = vld [vmem:[%s5605 + $0x6c] sm:$0xf]
        %v5634 = vld [vmem:[%s5605 + $0x70] sm:$0xf]
        %v5635 = vld [vmem:[%s5605 + $0x74] sm:$0xf]
        %v5636 = vld [vmem:[%s5605 + $0x78] sm:$0xf]
        %v5637 = vld [vmem:[%s5605 + $0x7c] sm:$0xf]
        %v5638 = vld [vmem:[%s5605 + $0x80] sm:$0xf]
        %v5639 = vld [vmem:[%s5605 + $0x84] sm:$0xf]
        %v5640 = vld [vmem:[%s5605 + $0x88] sm:$0xf]
        %v5641 = vld [vmem:[%s5605 + $0x8c] sm:$0xf]
        %v5642 = vld [vmem:[%s5605 + $0x90] sm:$0xf]
        %v5643 = vld [vmem:[%s5605 + $0x94] sm:$0xf]
        %v5644 = vld [vmem:[%s5605 + $0x98] sm:$0xf]
        %v5645 = vld [vmem:[%s5605 + $0x9c] sm:$0xf]
        %v5646 = vld [vmem:[%s5605 + $0xa0] sm:$0xf]
        %v5647 = vld [vmem:[%s5605 + $0xa4] sm:$0xf]
        %v5648 = vld [vmem:[%s5605 + $0xa8] sm:$0xf]
        %v5649 = vld [vmem:[%s5605 + $0xac] sm:$0xf]
        %v5650 = vld [vmem:[%s5605 + $0xb0] sm:$0xf]
        %v5651 = vld [vmem:[%s5605 + $0xb4] sm:$0xf]
        %v5652 = vld [vmem:[%s5605 + $0xb8] sm:$0xf]
        %v5653 = vld [vmem:[%s5605 + $0xbc] sm:$0xf]
        %v5654 = vld [vmem:[%s5605 + $0xc0] sm:$0xf]
        %v5655 = vld [vmem:[%s5605 + $0xc4] sm:$0xf]
        %v5656 = vld [vmem:[%s5605 + $0xc8] sm:$0xf]
        %v5657 = vld [vmem:[%s5605 + $0xcc] sm:$0xf]
        %v5658 = vld [vmem:[%s5605 + $0xd0] sm:$0xf]
        %v5659 = vld [vmem:[%s5605 + $0xd4] sm:$0xf]
        %v5660 = vld [vmem:[%s5605 + $0xd8] sm:$0xf]
        %v5661 = vld [vmem:[%s5605 + $0xdc] sm:$0xf]
        %v5662 = vld [vmem:[%s5605 + $0xe0] sm:$0xf]
        %v5663 = vld [vmem:[%s5605 + $0xe4] sm:$0xf]
        %v5664 = vld [vmem:[%s5605 + $0xe8] sm:$0xf]
        %v5665 = vld [vmem:[%s5605 + $0xec] sm:$0xf]
        %v5666 = vld [vmem:[%s5605 + $0xf0] sm:$0xf]
        %v5667 = vld [vmem:[%s5605 + $0xf4] sm:$0xf]
        %v5668 = vld [vmem:[%s5605 + $0xf8] sm:$0xf]
        %v5669 = vld [vmem:[%s5605 + $0xfc] sm:$0xf]
        %v5670 = vld [vmem:[%s5605 + $0x100] sm:$0xf]
        %v5671 = vld [vmem:[%s5605 + $0x104] sm:$0xf]
        %v5672 = vld [vmem:[%s5605 + $0x108] sm:$0xf]
        %v5673 = vld [vmem:[%s5605 + $0x10c] sm:$0xf]
        %v5674 = vld [vmem:[%s5605 + $0x110] sm:$0xf]
        %v5675 = vld [vmem:[%s5605 + $0x114] sm:$0xf]
        %v5676 = vld [vmem:[%s5605 + $0x118] sm:$0xf]
        %v5677 = vld [vmem:[%s5605 + $0x11c] sm:$0xf]
        %v5678 = vld [vmem:[%s5605 + $0x120] sm:$0xf]
        %v5679 = vld [vmem:[%s5605 + $0x124] sm:$0xf]
        %v5680 = vld [vmem:[%s5605 + $0x128] sm:$0xf]
        %v5681 = vld [vmem:[%s5605 + $0x12c] sm:$0xf]
        %v5682 = vld [vmem:[%s5605 + $0x130] sm:$0xf]
        %v5683 = vld [vmem:[%s5605 + $0x134] sm:$0xf]
        %v5684 = vld [vmem:[%s5605 + $0x138] sm:$0xf]
        %v5685 = vld [vmem:[%s5605 + $0x13c] sm:$0xf]
        %v5686 = vld [vmem:[%s5605 + $0x140] sm:$0xf]
        %v5687 = vld [vmem:[%s5605 + $0x144] sm:$0xf]
        %v5688 = vld [vmem:[%s5605 + $0x148] sm:$0xf]
        %v5689 = vld [vmem:[%s5605 + $0x14c] sm:$0xf]
        %v5690 = vld [vmem:[%s5605 + $0x150] sm:$0xf]
        %v5691 = vld [vmem:[%s5605 + $0x154] sm:$0xf]
        %v5692 = vld [vmem:[%s5605 + $0x158] sm:$0xf]
        %v5693 = vld [vmem:[%s5605 + $0x15c] sm:$0xf]
        %v5694 = vld [vmem:[%s5605 + $0x160] sm:$0xf]
        %v5695 = vld [vmem:[%s5605 + $0x164] sm:$0xf]
        %v5696 = vld [vmem:[%s5605 + $0x168] sm:$0xf]
        %v5697 = vld [vmem:[%s5605 + $0x16c] sm:$0xf]
        %v5698 = vld [vmem:[%s5605 + $0x170] sm:$0xf]
        %v5699 = vld [vmem:[%s5605 + $0x174] sm:$0xf]
        %v5700 = vld [vmem:[%s5605 + $0x178] sm:$0xf]
        %v5701 = vld [vmem:[%s5605 + $0x17c] sm:$0xf]
        %v5702 = vld [vmem:[%s5605 + $0x180] sm:$0xf]
        %v5703 = vld [vmem:[%s5605 + $0x184] sm:$0xf]
        %v5704 = vld [vmem:[%s5605 + $0x188] sm:$0xf]
        %v5705 = vld [vmem:[%s5605 + $0x18c] sm:$0xf]
        %v5706 = vld [vmem:[%s5605 + $0x190] sm:$0xf]
        %v5707 = vld [vmem:[%s5605 + $0x194] sm:$0xf]
        %v5708 = vld [vmem:[%s5605 + $0x198] sm:$0xf]
        %v5709 = vld [vmem:[%s5605 + $0x19c] sm:$0xf]
        %v5710 = vld [vmem:[%s5605 + $0x1a0] sm:$0xf]
        %v5711 = vld [vmem:[%s5605 + $0x1a4] sm:$0xf]
        %v5712 = vld [vmem:[%s5605 + $0x1a8] sm:$0xf]
        %v5713 = vld [vmem:[%s5605 + $0x1ac] sm:$0xf]
        %v5714 = vld [vmem:[%s5605 + $0x1b0] sm:$0xf]
        %v5715 = vld [vmem:[%s5605 + $0x1b4] sm:$0xf]
        %v5716 = vld [vmem:[%s5605 + $0x1b8] sm:$0xf]
        %v5717 = vld [vmem:[%s5605 + $0x1bc] sm:$0xf]
        %v5718 = vld [vmem:[%s5605 + $0x1c0] sm:$0xf]
        %v5719 = vld [vmem:[%s5605 + $0x1c4] sm:$0xf]
        %v5720 = vld [vmem:[%s5605 + $0x1c8] sm:$0xf]
        %v5721 = vld [vmem:[%s5605 + $0x1cc] sm:$0xf]
        %v5722 = vld [vmem:[%s5605 + $0x1d0] sm:$0xf]
        %v5723 = vld [vmem:[%s5605 + $0x1d4] sm:$0xf]
        %v5724 = vld [vmem:[%s5605 + $0x1d8] sm:$0xf]
        %v5725 = vld [vmem:[%s5605 + $0x1dc] sm:$0xf]
        %v5726 = vld [vmem:[%s5605 + $0x1e0] sm:$0xf]
        %v5727 = vld [vmem:[%s5605 + $0x1e4] sm:$0xf]
        %v5728 = vld [vmem:[%s5605 + $0x1e8] sm:$0xf]
        %v5729 = vld [vmem:[%s5605 + $0x1ec] sm:$0xf]
        %v5730 = vld [vmem:[%s5605 + $0x1f0] sm:$0xf]
        %v5731 = vld [vmem:[%s5605 + $0x1f4] sm:$0xf]
        %v5732 = vld [vmem:[%s5605 + $0x1f8] sm:$0xf]
        %v5733 = vld [vmem:[%s5605 + $0x1fc] sm:$0xf]
        %v5734 = vld [vmem:[%s5605 + $0x200] sm:$0xf]
        %v5735 = vld [vmem:[%s5605 + $0x204] sm:$0xf]
        %v5736 = vld [vmem:[%s5605 + $0x208] sm:$0xf]
        %v5737 = vld [vmem:[%s5605 + $0x20c] sm:$0xf]
        %v5738 = vld [vmem:[%s5605 + $0x210] sm:$0xf]
        %v5739 = vld [vmem:[%s5605 + $0x214] sm:$0xf]
        %v5740 = vld [vmem:[%s5605 + $0x218] sm:$0xf]
        %v5741 = vld [vmem:[%s5605 + $0x21c] sm:$0xf]
        %v5742 = vld [vmem:[%s5605 + $0x220] sm:$0xf]
        %v5743 = vld [vmem:[%s5605 + $0x224] sm:$0xf]
        %v5744 = vld [vmem:[%s5605 + $0x228] sm:$0xf]
        %v5745 = vld [vmem:[%s5605 + $0x22c] sm:$0xf]
        %v5746 = vld [vmem:[%s5605 + $0x230] sm:$0xf]
        %v5747 = vld [vmem:[%s5605 + $0x234] sm:$0xf]
        %v5748 = vld [vmem:[%s5605 + $0x238] sm:$0xf]
        %v5749 = vld [vmem:[%s5605 + $0x23c] sm:$0xf]
        %v5750 = vld [vmem:[%s5605 + $0x240] sm:$0xf]
        %v5751 = vld [vmem:[%s5605 + $0x244] sm:$0xf]
        %v5752 = vld [vmem:[%s5605 + $0x248] sm:$0xf]
        %v5753 = vld [vmem:[%s5605 + $0x24c] sm:$0xf]
        %v5754 = vld [vmem:[%s5605 + $0x250] sm:$0xf]
        %v5755 = vld [vmem:[%s5605 + $0x254] sm:$0xf]
        %v5756 = vld [vmem:[%s5605 + $0x258] sm:$0xf]
        %v5757 = vld [vmem:[%s5605 + $0x25c] sm:$0xf]
        %v5758 = vld [vmem:[%s5605 + $0x260] sm:$0xf]
        %v5759 = vld [vmem:[%s5605 + $0x264] sm:$0xf]
        %v5760 = vld [vmem:[%s5605 + $0x268] sm:$0xf]
        %v5761 = vld [vmem:[%s5605 + $0x26c] sm:$0xf]
        %v5762 = vld [vmem:[%s5605 + $0x270] sm:$0xf]
        %v5763 = vld [vmem:[%s5605 + $0x274] sm:$0xf]
        %v5764 = vld [vmem:[%s5605 + $0x278] sm:$0xf]
        %v5765 = vld [vmem:[%s5605 + $0x27c] sm:$0xf]
        %v5766 = vld [vmem:[%s5605 + $0x280] sm:$0xf]
        %v5767 = vld [vmem:[%s5605 + $0x284] sm:$0xf]
        %v5768 = vld [vmem:[%s5605 + $0x288] sm:$0xf]
        %v5769 = vld [vmem:[%s5605 + $0x28c] sm:$0xf]
        %v5770 = vld [vmem:[%s5605 + $0x290] sm:$0xf]
        %v5771 = vld [vmem:[%s5605 + $0x294] sm:$0xf]
        %v5772 = vld [vmem:[%s5605 + $0x298] sm:$0xf]
        %v5773 = vld [vmem:[%s5605 + $0x29c] sm:$0xf]
        %v5774 = vld [vmem:[%s5605 + $0x2a0] sm:$0xf]
        %v5775 = vld [vmem:[%s5605 + $0x2a4] sm:$0xf]
        %v5776 = vld [vmem:[%s5605 + $0x2a8] sm:$0xf]
        %v5777 = vld [vmem:[%s5605 + $0x2ac] sm:$0xf]
        %v5778 = vld [vmem:[%s5605 + $0x2b0] sm:$0xf]
        %v5779 = vld [vmem:[%s5605 + $0x2b4] sm:$0xf]
        %v5780 = vld [vmem:[%s5605 + $0x2b8] sm:$0xf]
        %v5781 = vld [vmem:[%s5605 + $0x2bc] sm:$0xf]
        %v5782 = vld [vmem:[%s5605 + $0x2c0] sm:$0xf]
        %v5783 = vld [vmem:[%s5605 + $0x2c4] sm:$0xf]
        %v5784 = vld [vmem:[%s5605 + $0x2c8] sm:$0xf]
        %v5785 = vld [vmem:[%s5605 + $0x2cc] sm:$0xf]
        %v5786 = vld [vmem:[%s5605 + $0x2d0] sm:$0xf]
        %v5787 = vld [vmem:[%s5605 + $0x2d4] sm:$0xf]
        %v5788 = vld [vmem:[%s5605 + $0x2d8] sm:$0xf]
        %v5789 = vld [vmem:[%s5605 + $0x2dc] sm:$0xf]
        %v5790 = vld [vmem:[%s5605 + $0x2e0] sm:$0xf]
        %v5791 = vld [vmem:[%s5605 + $0x2e4] sm:$0xf]
        %v5792 = vld [vmem:[%s5605 + $0x2e8] sm:$0xf]
        %v5793 = vld [vmem:[%s5605 + $0x2ec] sm:$0xf]
        %v5794 = vld [vmem:[%s5605 + $0x2f0] sm:$0xf]
        %v5795 = vld [vmem:[%s5605 + $0x2f4] sm:$0xf]
        %v5796 = vld [vmem:[%s5605 + $0x2f8] sm:$0xf]
        %v5797 = vld [vmem:[%s5605 + $0x2fc] sm:$0xf]
        %v5798 = vld [vmem:[%s5605 + $0x300] sm:$0xf]
        %v5799 = vld [vmem:[%s5605 + $0x304] sm:$0xf]
        %v5800 = vld [vmem:[%s5605 + $0x308] sm:$0xf]
        %v5801 = vld [vmem:[%s5605 + $0x30c] sm:$0xf]
        %v5802 = vld [vmem:[%s5605 + $0x310] sm:$0xf]
        %v5803 = vld [vmem:[%s5605 + $0x314] sm:$0xf]
        %v5804 = vld [vmem:[%s5605 + $0x318] sm:$0xf]
        %v5805 = vld [vmem:[%s5605 + $0x31c] sm:$0xf]
        %v5806 = vld [vmem:[%s5605 + $0x320] sm:$0xf]
        %v5807 = vld [vmem:[%s5605 + $0x324] sm:$0xf]
        %v5808 = vld [vmem:[%s5605 + $0x328] sm:$0xf]
        %v5809 = vld [vmem:[%s5605 + $0x32c] sm:$0xf]
        %v5810 = vld [vmem:[%s5605 + $0x330] sm:$0xf]
        %v5811 = vld [vmem:[%s5605 + $0x334] sm:$0xf]
        %v5812 = vld [vmem:[%s5605 + $0x338] sm:$0xf]
        %v5813 = vld [vmem:[%s5605 + $0x33c] sm:$0xf]
        %v5814 = vld [vmem:[%s5605 + $0x340] sm:$0xf]
        %v5815 = vld [vmem:[%s5605 + $0x344] sm:$0xf]
        %v5816 = vld [vmem:[%s5605 + $0x348] sm:$0xf]
        %v5817 = vld [vmem:[%s5605 + $0x34c] sm:$0xf]
        %v5818 = vld [vmem:[%s5605 + $0x350] sm:$0xf]
        %v5819 = vld [vmem:[%s5605 + $0x354] sm:$0xf]
        %v5820 = vld [vmem:[%s5605 + $0x358] sm:$0xf]
        %v5821 = vld [vmem:[%s5605 + $0x35c] sm:$0xf]
        %v5822 = vld [vmem:[%s5605 + $0x360] sm:$0xf]
        %v5823 = vld [vmem:[%s5605 + $0x364] sm:$0xf]
        %v5824 = vld [vmem:[%s5605 + $0x368] sm:$0xf]
        %v5825 = vld [vmem:[%s5605 + $0x36c] sm:$0xf]
        %v5826 = vld [vmem:[%s5605 + $0x370] sm:$0xf]
        %v5827 = vld [vmem:[%s5605 + $0x374] sm:$0xf]
        %v5828 = vld [vmem:[%s5605 + $0x378] sm:$0xf]
        %v5829 = vld [vmem:[%s5605 + $0x37c] sm:$0xf]
        %v5830 = vld [vmem:[%s5605 + $0x380] sm:$0xf]
        %v5831 = vld [vmem:[%s5605 + $0x384] sm:$0xf]
        %v5832 = vld [vmem:[%s5605 + $0x388] sm:$0xf]
        %v5833 = vld [vmem:[%s5605 + $0x38c] sm:$0xf]
        %v5834 = vld [vmem:[%s5605 + $0x390] sm:$0xf]
        %v5835 = vld [vmem:[%s5605 + $0x394] sm:$0xf]
        %v5836 = vld [vmem:[%s5605 + $0x398] sm:$0xf]
        %v5837 = vld [vmem:[%s5605 + $0x39c] sm:$0xf]
        %v5838 = vld [vmem:[%s5605 + $0x3a0] sm:$0xf]
        %v5839 = vld [vmem:[%s5605 + $0x3a4] sm:$0xf]
        %v5840 = vld [vmem:[%s5605 + $0x3a8] sm:$0xf]
        %v5841 = vld [vmem:[%s5605 + $0x3ac] sm:$0xf]
        %v5842 = vld [vmem:[%s5605 + $0x3b0] sm:$0xf]
        %v5843 = vld [vmem:[%s5605 + $0x3b4] sm:$0xf]
        %v5844 = vld [vmem:[%s5605 + $0x3b8] sm:$0xf]
        %v5845 = vld [vmem:[%s5605 + $0x3bc] sm:$0xf]
        %v5846 = vld [vmem:[%s5605 + $0x3c0] sm:$0xf]
        %v5847 = vld [vmem:[%s5605 + $0x3c4] sm:$0xf]
        %v5848 = vld [vmem:[%s5605 + $0x3c8] sm:$0xf]
        %v5849 = vld [vmem:[%s5605 + $0x3cc] sm:$0xf]
        %v5850 = vld [vmem:[%s5605 + $0x3d0] sm:$0xf]
        %v5851 = vld [vmem:[%s5605 + $0x3d4] sm:$0xf]
        %v5852 = vld [vmem:[%s5605 + $0x3d8] sm:$0xf]
        %v5853 = vld [vmem:[%s5605 + $0x3dc] sm:$0xf]
        %v5854 = vld [vmem:[%s5605 + $0x3e0] sm:$0xf]
        %v5855 = vld [vmem:[%s5605 + $0x3e4] sm:$0xf]
        %v5856 = vld [vmem:[%s5605 + $0x3e8] sm:$0xf]
        %v5857 = vld [vmem:[%s5605 + $0x3ec] sm:$0xf]
        %v5858 = vld [vmem:[%s5605 + $0x3f0] sm:$0xf]
        %v5859 = vld [vmem:[%s5605 + $0x3f4] sm:$0xf]
        %v5860 = vld [vmem:[%s5605 + $0x3f8] sm:$0xf]
        %v5861 = vld [vmem:[%s5605 + $0x3fc] sm:$0xf]
        %v6118 = vunpack.c.l.b16 %v5606
        %v6119 = vunpack.c.l.b16 %v5607
        %v6120 = vunpack.c.l.b16 %v5608
        %v6121 = vunpack.c.l.b16 %v5609
        %v6122 = vunpack.c.l.b16 %v5610
        %v6123 = vunpack.c.l.b16 %v5611
        %v6124 = vunpack.c.l.b16 %v5612
        %v6125 = vunpack.c.l.b16 %v5613
        %v6126 = vunpack.c.l.b16 %v5614
        %v6127 = vunpack.c.l.b16 %v5615
        %v6128 = vunpack.c.l.b16 %v5616
        %v6129 = vunpack.c.l.b16 %v5617
        %v6130 = vunpack.c.l.b16 %v5618
        %v6131 = vunpack.c.l.b16 %v5619
        %v6132 = vunpack.c.l.b16 %v5620
        %v6133 = vunpack.c.l.b16 %v5621
        %v6134 = vunpack.c.l.b16 %v5622
        %v6135 = vunpack.c.l.b16 %v5623
        %v6136 = vunpack.c.l.b16 %v5624
        %v6137 = vunpack.c.l.b16 %v5625
        %v6138 = vunpack.c.l.b16 %v5626
        %v6139 = vunpack.c.l.b16 %v5627
        %v6140 = vunpack.c.l.b16 %v5628
        %v6141 = vunpack.c.l.b16 %v5629
        %v6142 = vunpack.c.l.b16 %v5630
        %v6143 = vunpack.c.l.b16 %v5631
        %v6144 = vunpack.c.l.b16 %v5632
        %v6145 = vunpack.c.l.b16 %v5633
        %v6146 = vunpack.c.l.b16 %v5634
        %v6147 = vunpack.c.l.b16 %v5635
        %v6148 = vunpack.c.l.b16 %v5636
        %v6149 = vunpack.c.l.b16 %v5637
        %v6150 = vunpack.c.l.b16 %v5638
        %v6151 = vunpack.c.l.b16 %v5639
        %v6152 = vunpack.c.l.b16 %v5640
        %v6153 = vunpack.c.l.b16 %v5641
        %v6154 = vunpack.c.l.b16 %v5642
        %v6155 = vunpack.c.l.b16 %v5643
        %v6156 = vunpack.c.l.b16 %v5644
        %v6157 = vunpack.c.l.b16 %v5645
        %v6158 = vunpack.c.l.b16 %v5646
        %v6159 = vunpack.c.l.b16 %v5647
        %v6160 = vunpack.c.l.b16 %v5648
        %v6161 = vunpack.c.l.b16 %v5649
        %v6162 = vunpack.c.l.b16 %v5650
        %v6163 = vunpack.c.l.b16 %v5651
        %v6164 = vunpack.c.l.b16 %v5652
        %v6165 = vunpack.c.l.b16 %v5653
        %v6166 = vunpack.c.l.b16 %v5654
        %v6167 = vunpack.c.l.b16 %v5655
        %v6168 = vunpack.c.l.b16 %v5656
        %v6169 = vunpack.c.l.b16 %v5657
        %v6170 = vunpack.c.l.b16 %v5658
        %v6171 = vunpack.c.l.b16 %v5659
        %v6172 = vunpack.c.l.b16 %v5660
        %v6173 = vunpack.c.l.b16 %v5661
        %v6174 = vunpack.c.l.b16 %v5662
        %v6175 = vunpack.c.l.b16 %v5663
        %v6176 = vunpack.c.l.b16 %v5664
        %v6177 = vunpack.c.l.b16 %v5665
        %v6178 = vunpack.c.l.b16 %v5666
        %v6179 = vunpack.c.l.b16 %v5667
        %v6180 = vunpack.c.l.b16 %v5668
        %v6181 = vunpack.c.l.b16 %v5669
        %v6182 = vunpack.c.l.b16 %v5670
        %v6183 = vunpack.c.l.b16 %v5671
        %v6184 = vunpack.c.l.b16 %v5672
        %v6185 = vunpack.c.l.b16 %v5673
        %v6186 = vunpack.c.l.b16 %v5674
        %v6187 = vunpack.c.l.b16 %v5675
        %v6188 = vunpack.c.l.b16 %v5676
        %v6189 = vunpack.c.l.b16 %v5677
        %v6190 = vunpack.c.l.b16 %v5678
        %v6191 = vunpack.c.l.b16 %v5679
        %v6192 = vunpack.c.l.b16 %v5680
        %v6193 = vunpack.c.l.b16 %v5681
        %v6194 = vunpack.c.l.b16 %v5682
        %v6195 = vunpack.c.l.b16 %v5683
        %v6196 = vunpack.c.l.b16 %v5684
        %v6197 = vunpack.c.l.b16 %v5685
        %v6198 = vunpack.c.l.b16 %v5686
        %v6199 = vunpack.c.l.b16 %v5687
        %v6200 = vunpack.c.l.b16 %v5688
        %v6201 = vunpack.c.l.b16 %v5689
        %v6202 = vunpack.c.l.b16 %v5690
        %v6203 = vunpack.c.l.b16 %v5691
        %v6204 = vunpack.c.l.b16 %v5692
        %v6205 = vunpack.c.l.b16 %v5693
        %v6206 = vunpack.c.l.b16 %v5694
        %v6207 = vunpack.c.l.b16 %v5695
        %v6208 = vunpack.c.l.b16 %v5696
        %v6209 = vunpack.c.l.b16 %v5697
        %v6210 = vunpack.c.l.b16 %v5698
        %v6211 = vunpack.c.l.b16 %v5699
        %v6212 = vunpack.c.l.b16 %v5700
        %v6213 = vunpack.c.l.b16 %v5701
        %v6214 = vunpack.c.l.b16 %v5702
        %v6215 = vunpack.c.l.b16 %v5703
        %v6216 = vunpack.c.l.b16 %v5704
        %v6217 = vunpack.c.l.b16 %v5705
        %v6218 = vunpack.c.l.b16 %v5706
        %v6219 = vunpack.c.l.b16 %v5707
        %v6220 = vunpack.c.l.b16 %v5708
        %v6221 = vunpack.c.l.b16 %v5709
        %v6222 = vunpack.c.l.b16 %v5710
        %v6223 = vunpack.c.l.b16 %v5711
        %v6224 = vunpack.c.l.b16 %v5712
        %v6225 = vunpack.c.l.b16 %v5713
        %v6226 = vunpack.c.l.b16 %v5714
        %v6227 = vunpack.c.l.b16 %v5715
        %v6228 = vunpack.c.l.b16 %v5716
        %v6229 = vunpack.c.l.b16 %v5717
        %v6230 = vunpack.c.l.b16 %v5718
        %v6231 = vunpack.c.l.b16 %v5719
        %v6232 = vunpack.c.l.b16 %v5720
        %v6233 = vunpack.c.l.b16 %v5721
        %v6234 = vunpack.c.l.b16 %v5722
        %v6235 = vunpack.c.l.b16 %v5723
        %v6236 = vunpack.c.l.b16 %v5724
        %v6237 = vunpack.c.l.b16 %v5725
        %v6238 = vunpack.c.l.b16 %v5726
        %v6239 = vunpack.c.l.b16 %v5727
        %v6240 = vunpack.c.l.b16 %v5728
        %v6241 = vunpack.c.l.b16 %v5729
        %v6242 = vunpack.c.l.b16 %v5730
        %v6243 = vunpack.c.l.b16 %v5731
        %v6244 = vunpack.c.l.b16 %v5732
        %v6245 = vunpack.c.l.b16 %v5733
        %v6246 = vunpack.c.l.b16 %v5734
        %v6247 = vunpack.c.l.b16 %v5735
        %v6248 = vunpack.c.l.b16 %v5736
        %v6249 = vunpack.c.l.b16 %v5737
        %v6250 = vunpack.c.l.b16 %v5738
        %v6251 = vunpack.c.l.b16 %v5739
        %v6252 = vunpack.c.l.b16 %v5740
        %v6253 = vunpack.c.l.b16 %v5741
        %v6254 = vunpack.c.l.b16 %v5742
        %v6255 = vunpack.c.l.b16 %v5743
        %v6256 = vunpack.c.l.b16 %v5744
        %v6257 = vunpack.c.l.b16 %v5745
        %v6258 = vunpack.c.l.b16 %v5746
        %v6259 = vunpack.c.l.b16 %v5747
        %v6260 = vunpack.c.l.b16 %v5748
        %v6261 = vunpack.c.l.b16 %v5749
        %v6262 = vunpack.c.l.b16 %v5750
        %v6263 = vunpack.c.l.b16 %v5751
        %v6264 = vunpack.c.l.b16 %v5752
        %v6265 = vunpack.c.l.b16 %v5753
        %v6266 = vunpack.c.l.b16 %v5754
        %v6267 = vunpack.c.l.b16 %v5755
        %v6268 = vunpack.c.l.b16 %v5756
        %v6269 = vunpack.c.l.b16 %v5757
        %v6270 = vunpack.c.l.b16 %v5758
        %v6271 = vunpack.c.l.b16 %v5759
        %v6272 = vunpack.c.l.b16 %v5760
        %v6273 = vunpack.c.l.b16 %v5761
        %v6274 = vunpack.c.l.b16 %v5762
        %v6275 = vunpack.c.l.b16 %v5763
        %v6276 = vunpack.c.l.b16 %v5764
        %v6277 = vunpack.c.l.b16 %v5765
        %v6278 = vunpack.c.l.b16 %v5766
        %v6279 = vunpack.c.l.b16 %v5767
        %v6280 = vunpack.c.l.b16 %v5768
        %v6281 = vunpack.c.l.b16 %v5769
        %v6282 = vunpack.c.l.b16 %v5770
        %v6283 = vunpack.c.l.b16 %v5771
        %v6284 = vunpack.c.l.b16 %v5772
        %v6285 = vunpack.c.l.b16 %v5773
        %v6286 = vunpack.c.l.b16 %v5774
        %v6287 = vunpack.c.l.b16 %v5775
        %v6288 = vunpack.c.l.b16 %v5776
        %v6289 = vunpack.c.l.b16 %v5777
        %v6290 = vunpack.c.l.b16 %v5778
        %v6291 = vunpack.c.l.b16 %v5779
        %v6292 = vunpack.c.l.b16 %v5780
        %v6293 = vunpack.c.l.b16 %v5781
        %v6294 = vunpack.c.l.b16 %v5782
        %v6295 = vunpack.c.l.b16 %v5783
        %v6296 = vunpack.c.l.b16 %v5784
        %v6297 = vunpack.c.l.b16 %v5785
        %v6298 = vunpack.c.l.b16 %v5786
        %v6299 = vunpack.c.l.b16 %v5787
        %v6300 = vunpack.c.l.b16 %v5788
        %v6301 = vunpack.c.l.b16 %v5789
        %v6302 = vunpack.c.l.b16 %v5790
        %v6303 = vunpack.c.l.b16 %v5791
        %v6304 = vunpack.c.l.b16 %v5792
        %v6305 = vunpack.c.l.b16 %v5793
        %v6306 = vunpack.c.l.b16 %v5794
        %v6307 = vunpack.c.l.b16 %v5795
        %v6308 = vunpack.c.l.b16 %v5796
        %v6309 = vunpack.c.l.b16 %v5797
        %v6310 = vunpack.c.l.b16 %v5798
        %v6311 = vunpack.c.l.b16 %v5799
        %v6312 = vunpack.c.l.b16 %v5800
        %v6313 = vunpack.c.l.b16 %v5801
        %v6314 = vunpack.c.l.b16 %v5802
        %v6315 = vunpack.c.l.b16 %v5803
        %v6316 = vunpack.c.l.b16 %v5804
        %v6317 = vunpack.c.l.b16 %v5805
        %v6318 = vunpack.c.l.b16 %v5806
        %v6319 = vunpack.c.l.b16 %v5807
        %v6320 = vunpack.c.l.b16 %v5808
        %v6321 = vunpack.c.l.b16 %v5809
        %v6322 = vunpack.c.l.b16 %v5810
        %v6323 = vunpack.c.l.b16 %v5811
        %v6324 = vunpack.c.l.b16 %v5812
        %v6325 = vunpack.c.l.b16 %v5813
        %v6326 = vunpack.c.l.b16 %v5814
        %v6327 = vunpack.c.l.b16 %v5815
        %v6328 = vunpack.c.l.b16 %v5816
        %v6329 = vunpack.c.l.b16 %v5817
        %v6330 = vunpack.c.l.b16 %v5818
        %v6331 = vunpack.c.l.b16 %v5819
        %v6332 = vunpack.c.l.b16 %v5820
        %v6333 = vunpack.c.l.b16 %v5821
        %v6334 = vunpack.c.l.b16 %v5822
        %v6335 = vunpack.c.l.b16 %v5823
        %v6336 = vunpack.c.l.b16 %v5824
        %v6337 = vunpack.c.l.b16 %v5825
        %v6338 = vunpack.c.l.b16 %v5826
        %v6339 = vunpack.c.l.b16 %v5827
        %v6340 = vunpack.c.l.b16 %v5828
        %v6341 = vunpack.c.l.b16 %v5829
        %v6342 = vunpack.c.l.b16 %v5830
        %v6343 = vunpack.c.l.b16 %v5831
        %v6344 = vunpack.c.l.b16 %v5832
        %v6345 = vunpack.c.l.b16 %v5833
        %v6346 = vunpack.c.l.b16 %v5834
        %v6347 = vunpack.c.l.b16 %v5835
        %v6348 = vunpack.c.l.b16 %v5836
        %v6349 = vunpack.c.l.b16 %v5837
        %v6350 = vunpack.c.l.b16 %v5838
        %v6351 = vunpack.c.l.b16 %v5839
        %v6352 = vunpack.c.l.b16 %v5840
        %v6353 = vunpack.c.l.b16 %v5841
        %v6354 = vunpack.c.l.b16 %v5842
        %v6355 = vunpack.c.l.b16 %v5843
        %v6356 = vunpack.c.l.b16 %v5844
        %v6357 = vunpack.c.l.b16 %v5845
        %v6358 = vunpack.c.l.b16 %v5846
        %v6359 = vunpack.c.l.b16 %v5847
        %v6360 = vunpack.c.l.b16 %v5848
        %v6361 = vunpack.c.l.b16 %v5849
        %v6362 = vunpack.c.l.b16 %v5850
        %v6363 = vunpack.c.l.b16 %v5851
        %v6364 = vunpack.c.l.b16 %v5852
        %v6365 = vunpack.c.l.b16 %v5853
        %v6366 = vunpack.c.l.b16 %v5854
        %v6367 = vunpack.c.l.b16 %v5855
        %v6368 = vunpack.c.l.b16 %v5856
        %v6369 = vunpack.c.l.b16 %v5857
        %v6370 = vunpack.c.l.b16 %v5858
        %v6371 = vunpack.c.l.b16 %v5859
        %v6372 = vunpack.c.l.b16 %v5860
        %v6373 = vunpack.c.l.b16 %v5861
        %v6374 = vpack.c.b16 %v6119, %v6118
        %v6375 = vpack.c.b16 %v6121, %v6120
        %v6376 = vpack.c.b16 %v6123, %v6122
        %v6377 = vpack.c.b16 %v6125, %v6124
        %v6378 = vpack.c.b16 %v6127, %v6126
        %v6379 = vpack.c.b16 %v6129, %v6128
        %v6380 = vpack.c.b16 %v6131, %v6130
        %v6381 = vpack.c.b16 %v6133, %v6132
        %v6382 = vpack.c.b16 %v6135, %v6134
        %v6383 = vpack.c.b16 %v6137, %v6136
        %v6384 = vpack.c.b16 %v6139, %v6138
        %v6385 = vpack.c.b16 %v6141, %v6140
        %v6386 = vpack.c.b16 %v6143, %v6142
        %v6387 = vpack.c.b16 %v6145, %v6144
        %v6388 = vpack.c.b16 %v6147, %v6146
        %v6389 = vpack.c.b16 %v6149, %v6148
        %v6390 = vpack.c.b16 %v6151, %v6150
        %v6391 = vpack.c.b16 %v6153, %v6152
        %v6392 = vpack.c.b16 %v6155, %v6154
        %v6393 = vpack.c.b16 %v6157, %v6156
        %v6394 = vpack.c.b16 %v6159, %v6158
        %v6395 = vpack.c.b16 %v6161, %v6160
        %v6396 = vpack.c.b16 %v6163, %v6162
        %v6397 = vpack.c.b16 %v6165, %v6164
        %v6398 = vpack.c.b16 %v6167, %v6166
        %v6399 = vpack.c.b16 %v6169, %v6168
        %v6400 = vpack.c.b16 %v6171, %v6170
        %v6401 = vpack.c.b16 %v6173, %v6172
        %v6402 = vpack.c.b16 %v6175, %v6174
        %v6403 = vpack.c.b16 %v6177, %v6176
        %v6404 = vpack.c.b16 %v6179, %v6178
        %v6405 = vpack.c.b16 %v6181, %v6180
        %v6406 = vpack.c.b16 %v6183, %v6182
        %v6407 = vpack.c.b16 %v6185, %v6184
        %v6408 = vpack.c.b16 %v6187, %v6186
        %v6409 = vpack.c.b16 %v6189, %v6188
        %v6410 = vpack.c.b16 %v6191, %v6190
        %v6411 = vpack.c.b16 %v6193, %v6192
        %v6412 = vpack.c.b16 %v6195, %v6194
        %v6413 = vpack.c.b16 %v6197, %v6196
        %v6414 = vpack.c.b16 %v6199, %v6198
        %v6415 = vpack.c.b16 %v6201, %v6200
        %v6416 = vpack.c.b16 %v6203, %v6202
        %v6417 = vpack.c.b16 %v6205, %v6204
        %v6418 = vpack.c.b16 %v6207, %v6206
        %v6419 = vpack.c.b16 %v6209, %v6208
        %v6420 = vpack.c.b16 %v6211, %v6210
        %v6421 = vpack.c.b16 %v6213, %v6212
        %v6422 = vpack.c.b16 %v6215, %v6214
        %v6423 = vpack.c.b16 %v6217, %v6216
        %v6424 = vpack.c.b16 %v6219, %v6218
        %v6425 = vpack.c.b16 %v6221, %v6220
        %v6426 = vpack.c.b16 %v6223, %v6222
        %v6427 = vpack.c.b16 %v6225, %v6224
        %v6428 = vpack.c.b16 %v6227, %v6226
        %v6429 = vpack.c.b16 %v6229, %v6228
        %v6430 = vpack.c.b16 %v6231, %v6230
        %v6431 = vpack.c.b16 %v6233, %v6232
        %v6432 = vpack.c.b16 %v6235, %v6234
        %v6433 = vpack.c.b16 %v6237, %v6236
        %v6434 = vpack.c.b16 %v6239, %v6238
        %v6435 = vpack.c.b16 %v6241, %v6240
        %v6436 = vpack.c.b16 %v6243, %v6242
        %v6437 = vpack.c.b16 %v6245, %v6244
        %v6438 = vpack.c.b16 %v6247, %v6246
        %v6439 = vpack.c.b16 %v6249, %v6248
        %v6440 = vpack.c.b16 %v6251, %v6250
        %v6441 = vpack.c.b16 %v6253, %v6252
        %v6442 = vpack.c.b16 %v6255, %v6254
        %v6443 = vpack.c.b16 %v6257, %v6256
        %v6444 = vpack.c.b16 %v6259, %v6258
        %v6445 = vpack.c.b16 %v6261, %v6260
        %v6446 = vpack.c.b16 %v6263, %v6262
        %v6447 = vpack.c.b16 %v6265, %v6264
        %v6448 = vpack.c.b16 %v6267, %v6266
        %v6449 = vpack.c.b16 %v6269, %v6268
        %v6450 = vpack.c.b16 %v6271, %v6270
        %v6451 = vpack.c.b16 %v6273, %v6272
        %v6452 = vpack.c.b16 %v6275, %v6274
        %v6453 = vpack.c.b16 %v6277, %v6276
        %v6454 = vpack.c.b16 %v6279, %v6278
        %v6455 = vpack.c.b16 %v6281, %v6280
        %v6456 = vpack.c.b16 %v6283, %v6282
        %v6457 = vpack.c.b16 %v6285, %v6284
        %v6458 = vpack.c.b16 %v6287, %v6286
        %v6459 = vpack.c.b16 %v6289, %v6288
        %v6460 = vpack.c.b16 %v6291, %v6290
        %v6461 = vpack.c.b16 %v6293, %v6292
        %v6462 = vpack.c.b16 %v6295, %v6294
        %v6463 = vpack.c.b16 %v6297, %v6296
        %v6464 = vpack.c.b16 %v6299, %v6298
        %v6465 = vpack.c.b16 %v6301, %v6300
        %v6466 = vpack.c.b16 %v6303, %v6302
        %v6467 = vpack.c.b16 %v6305, %v6304
        %v6468 = vpack.c.b16 %v6307, %v6306
        %v6469 = vpack.c.b16 %v6309, %v6308
        %v6470 = vpack.c.b16 %v6311, %v6310
        %v6471 = vpack.c.b16 %v6313, %v6312
        %v6472 = vpack.c.b16 %v6315, %v6314
        %v6473 = vpack.c.b16 %v6317, %v6316
        %v6474 = vpack.c.b16 %v6319, %v6318
        %v6475 = vpack.c.b16 %v6321, %v6320
        %v6476 = vpack.c.b16 %v6323, %v6322
        %v6477 = vpack.c.b16 %v6325, %v6324
        %v6478 = vpack.c.b16 %v6327, %v6326
        %v6479 = vpack.c.b16 %v6329, %v6328
        %v6480 = vpack.c.b16 %v6331, %v6330
        %v6481 = vpack.c.b16 %v6333, %v6332
        %v6482 = vpack.c.b16 %v6335, %v6334
        %v6483 = vpack.c.b16 %v6337, %v6336
        %v6484 = vpack.c.b16 %v6339, %v6338
        %v6485 = vpack.c.b16 %v6341, %v6340
        %v6486 = vpack.c.b16 %v6343, %v6342
        %v6487 = vpack.c.b16 %v6345, %v6344
        %v6488 = vpack.c.b16 %v6347, %v6346
        %v6489 = vpack.c.b16 %v6349, %v6348
        %v6490 = vpack.c.b16 %v6351, %v6350
        %v6491 = vpack.c.b16 %v6353, %v6352
        %v6492 = vpack.c.b16 %v6355, %v6354
        %v6493 = vpack.c.b16 %v6357, %v6356
        %v6494 = vpack.c.b16 %v6359, %v6358
        %v6495 = vpack.c.b16 %v6361, %v6360
        %v6496 = vpack.c.b16 %v6363, %v6362
        %v6497 = vpack.c.b16 %v6365, %v6364
        %v6498 = vpack.c.b16 %v6367, %v6366
        %v6499 = vpack.c.b16 %v6369, %v6368
        %v6500 = vpack.c.b16 %v6371, %v6370
        %v6501 = vpack.c.b16 %v6373, %v6372
        %6630 = vmatprep.subr.bf16.mxu0 0
        %6631 = vmatpush1.bf16.msra.mxu0 %v6374
        %6632 = vmatprep.subr.bf16.mxu0 0
        %6633 = vmatpush1.bf16.msra.mxu0 %v6375
        %6634 = vmatprep.subr.bf16.mxu0 0
        %6635 = vmatpush1.bf16.msra.mxu0 %v6376
        %6636 = vmatprep.subr.bf16.mxu0 0
        %6637 = vmatpush1.bf16.msra.mxu0 %v6377
        %6638 = vmatprep.subr.bf16.mxu0 0
        %6639 = vmatpush1.bf16.msra.mxu0 %v6378
        %6640 = vmatprep.subr.bf16.mxu0 0
        %6641 = vmatpush1.bf16.msra.mxu0 %v6379
        %6642 = vmatprep.subr.bf16.mxu0 0
        %6643 = vmatpush1.bf16.msra.mxu0 %v6380
        %6644 = vmatprep.subr.bf16.mxu0 0
        %6645 = vmatpush1.bf16.msra.mxu0 %v6381
        %6646 = vmatprep.subr.bf16.mxu0 0
        %6647 = vmatpush1.bf16.msra.mxu0 %v6382
        %6648 = vmatprep.subr.bf16.mxu0 0
        %6649 = vmatpush1.bf16.msra.mxu0 %v6383
        %6650 = vmatprep.subr.bf16.mxu0 0
        %6651 = vmatpush1.bf16.msra.mxu0 %v6384
        %6652 = vmatprep.subr.bf16.mxu0 0
        %6653 = vmatpush1.bf16.msra.mxu0 %v6385
        %6654 = vmatprep.subr.bf16.mxu0 0
        %6655 = vmatpush1.bf16.msra.mxu0 %v6386
        %6656 = vmatprep.subr.bf16.mxu0 0
        %6657 = vmatpush1.bf16.msra.mxu0 %v6387
        %6658 = vmatprep.subr.bf16.mxu0 0
        %6659 = vmatpush1.bf16.msra.mxu0 %v6388
        %6660 = vmatprep.subr.bf16.mxu0 0
        %6661 = vmatpush1.bf16.msra.mxu0 %v6389
        %6662 = vmatprep.mubr.bf16.mxu0 %v5590
        %6663 = vmatmul.mubr.bf16.gmra.mrb[0].mxu0 %v5589
        %v6664 = vpop.f32.mrb[0].mxu0
        %v6665 = vadd.f32 0.0, %v6664
        %v6666 = vpop.f32.mrb[0].mxu0
        %v6667 = vpop.f32.mrb[0].mxu0
        %v6668 = vpop.f32.mrb[0].mxu0
        %6669 = vdwg.mxu0
        %6670 = vmatprep.subr.bf16.mxu0 0
        %6671 = vmatpush1.bf16.msra.mxu0 %v6390
        %6672 = vmatprep.subr.bf16.mxu0 0
        %6673 = vmatpush1.bf16.msra.mxu0 %v6391
        %6674 = vmatprep.subr.bf16.mxu0 0
        %6675 = vmatpush1.bf16.msra.mxu0 %v6392
        %6676 = vmatprep.subr.bf16.mxu0 0
        %6677 = vmatpush1.bf16.msra.mxu0 %v6393
        %6678 = vmatprep.subr.bf16.mxu0 0
        %6679 = vmatpush1.bf16.msra.mxu0 %v6394
        %6680 = vmatprep.subr.bf16.mxu0 0
        %6681 = vmatpush1.bf16.msra.mxu0 %v6395
        %6682 = vmatprep.subr.bf16.mxu0 0
        %6683 = vmatpush1.bf16.msra.mxu0 %v6396
        %6684 = vmatprep.subr.bf16.mxu0 0
        %6685 = vmatpush1.bf16.msra.mxu0 %v6397
        %6686 = vmatprep.subr.bf16.mxu0 0
        %6687 = vmatpush1.bf16.msra.mxu0 %v6398
        %6688 = vmatprep.subr.bf16.mxu0 0
        %6689 = vmatpush1.bf16.msra.mxu0 %v6399
        %6690 = vmatprep.subr.bf16.mxu0 0
        %6691 = vmatpush1.bf16.msra.mxu0 %v6400
        %6692 = vmatprep.subr.bf16.mxu0 0
        %6693 = vmatpush1.bf16.msra.mxu0 %v6401
        %6694 = vmatprep.subr.bf16.mxu0 0
        %6695 = vmatpush1.bf16.msra.mxu0 %v6402
        %6696 = vmatprep.subr.bf16.mxu0 0
        %6697 = vmatpush1.bf16.msra.mxu0 %v6403
        %6698 = vmatprep.subr.bf16.mxu0 0
        %6699 = vmatpush1.bf16.msra.mxu0 %v6404
        %6700 = vmatprep.subr.bf16.mxu0 0
        %6701 = vmatpush1.bf16.msra.mxu0 %v6405
        %6702 = vmatprep.mubr.bf16.mxu0 %v5592
        %6703 = vmatmul.mubr.bf16.gmra.mrb[0].mxu0 %v5591
        %v6704 = vpop.f32.mrb[0].mxu0
        %v6705 = vadd.f32 %v6665, %v6704
        %v6706 = vpop.f32.mrb[0].mxu0
        %v6707 = vpop.f32.mrb[0].mxu0
        %v6708 = vpop.f32.mrb[0].mxu0
        %6709 = vdwg.mxu0
        %6710 = vmatprep.subr.bf16.mxu0 0
        %6711 = vmatpush1.bf16.msra.mxu0 %v6406
        %6712 = vmatprep.subr.bf16.mxu0 0
        %6713 = vmatpush1.bf16.msra.mxu0 %v6407
        %6714 = vmatprep.subr.bf16.mxu0 0
        %6715 = vmatpush1.bf16.msra.mxu0 %v6408
        %6716 = vmatprep.subr.bf16.mxu0 0
        %6717 = vmatpush1.bf16.msra.mxu0 %v6409
        %6718 = vmatprep.subr.bf16.mxu0 0
        %6719 = vmatpush1.bf16.msra.mxu0 %v6410
        %6720 = vmatprep.subr.bf16.mxu0 0
        %6721 = vmatpush1.bf16.msra.mxu0 %v6411
        %6722 = vmatprep.subr.bf16.mxu0 0
        %6723 = vmatpush1.bf16.msra.mxu0 %v6412
        %6724 = vmatprep.subr.bf16.mxu0 0
        %6725 = vmatpush1.bf16.msra.mxu0 %v6413
        %6726 = vmatprep.subr.bf16.mxu0 0
        %6727 = vmatpush1.bf16.msra.mxu0 %v6414
        %6728 = vmatprep.subr.bf16.mxu0 0
        %6729 = vmatpush1.bf16.msra.mxu0 %v6415
        %6730 = vmatprep.subr.bf16.mxu0 0
        %6731 = vmatpush1.bf16.msra.mxu0 %v6416
        %6732 = vmatprep.subr.bf16.mxu0 0
        %6733 = vmatpush1.bf16.msra.mxu0 %v6417
        %6734 = vmatprep.subr.bf16.mxu0 0
        %6735 = vmatpush1.bf16.msra.mxu0 %v6418
        %6736 = vmatprep.subr.bf16.mxu0 0
        %6737 = vmatpush1.bf16.msra.mxu0 %v6419
        %6738 = vmatprep.subr.bf16.mxu0 0
        %6739 = vmatpush1.bf16.msra.mxu0 %v6420
        %6740 = vmatprep.subr.bf16.mxu0 0
        %6741 = vmatpush1.bf16.msra.mxu0 %v6421
        %6742 = vmatprep.mubr.bf16.mxu0 %v5594
        %6743 = vmatmul.mubr.bf16.gmra.mrb[0].mxu0 %v5593
        %v6744 = vpop.f32.mrb[0].mxu0
        %v6745 = vadd.f32 %v6705, %v6744
        %v6746 = vpop.f32.mrb[0].mxu0
        %v6747 = vpop.f32.mrb[0].mxu0
        %v6748 = vpop.f32.mrb[0].mxu0
        %6749 = vdwg.mxu0
        %6750 = vmatprep.subr.bf16.mxu0 0
        %6751 = vmatpush1.bf16.msra.mxu0 %v6422
        %6752 = vmatprep.subr.bf16.mxu0 0
        %6753 = vmatpush1.bf16.msra.mxu0 %v6423
        %6754 = vmatprep.subr.bf16.mxu0 0
        %6755 = vmatpush1.bf16.msra.mxu0 %v6424
        %6756 = vmatprep.subr.bf16.mxu0 0
        %6757 = vmatpush1.bf16.msra.mxu0 %v6425
        %6758 = vmatprep.subr.bf16.mxu0 0
        %6759 = vmatpush1.bf16.msra.mxu0 %v6426
        %6760 = vmatprep.subr.bf16.mxu0 0
        %6761 = vmatpush1.bf16.msra.mxu0 %v6427
        %6762 = vmatprep.subr.bf16.mxu0 0
        %6763 = vmatpush1.bf16.msra.mxu0 %v6428
        %6764 = vmatprep.subr.bf16.mxu0 0
        %6765 = vmatpush1.bf16.msra.mxu0 %v6429
        %6766 = vmatprep.subr.bf16.mxu0 0
        %6767 = vmatpush1.bf16.msra.mxu0 %v6430
        %6768 = vmatprep.subr.bf16.mxu0 0
        %6769 = vmatpush1.bf16.msra.mxu0 %v6431
        %6770 = vmatprep.subr.bf16.mxu0 0
        %6771 = vmatpush1.bf16.msra.mxu0 %v6432
        %6772 = vmatprep.subr.bf16.mxu0 0
        %6773 = vmatpush1.bf16.msra.mxu0 %v6433
        %6774 = vmatprep.subr.bf16.mxu0 0
        %6775 = vmatpush1.bf16.msra.mxu0 %v6434
        %6776 = vmatprep.subr.bf16.mxu0 0
        %6777 = vmatpush1.bf16.msra.mxu0 %v6435
        %6778 = vmatprep.subr.bf16.mxu0 0
        %6779 = vmatpush1.bf16.msra.mxu0 %v6436
        %6780 = vmatprep.subr.bf16.mxu0 0
        %6781 = vmatpush1.bf16.msra.mxu0 %v6437
        %6782 = vmatprep.mubr.bf16.mxu0 %v5596
        %6783 = vmatmul.mubr.bf16.gmra.mrb[0].mxu0 %v5595
        %v6784 = vpop.f32.mrb[0].mxu0
        %v6785 = vadd.f32 %v6745, %v6784
        %v6786 = vpop.f32.mrb[0].mxu0
        %v6787 = vpop.f32.mrb[0].mxu0
        %v6788 = vpop.f32.mrb[0].mxu0
        %6789 = vdwg.mxu0
        %6790 = vmatprep.subr.bf16.mxu0 0
        %6791 = vmatpush1.bf16.msra.mxu0 %v6438
        %6792 = vmatprep.subr.bf16.mxu0 0
        %6793 = vmatpush1.bf16.msra.mxu0 %v6439
        %6794 = vmatprep.subr.bf16.mxu0 0
        %6795 = vmatpush1.bf16.msra.mxu0 %v6440
        %6796 = vmatprep.subr.bf16.mxu0 0
        %6797 = vmatpush1.bf16.msra.mxu0 %v6441
        %6798 = vmatprep.subr.bf16.mxu0 0
        %6799 = vmatpush1.bf16.msra.mxu0 %v6442
        %6800 = vmatprep.subr.bf16.mxu0 0
        %6801 = vmatpush1.bf16.msra.mxu0 %v6443
        %6802 = vmatprep.subr.bf16.mxu0 0
        %6803 = vmatpush1.bf16.msra.mxu0 %v6444
        %6804 = vmatprep.subr.bf16.mxu0 0
        %6805 = vmatpush1.bf16.msra.mxu0 %v6445
        %6806 = vmatprep.subr.bf16.mxu0 0
        %6807 = vmatpush1.bf16.msra.mxu0 %v6446
        %6808 = vmatprep.subr.bf16.mxu0 0
        %6809 = vmatpush1.bf16.msra.mxu0 %v6447
        %6810 = vmatprep.subr.bf16.mxu0 0
        %6811 = vmatpush1.bf16.msra.mxu0 %v6448
        %6812 = vmatprep.subr.bf16.mxu0 0
        %6813 = vmatpush1.bf16.msra.mxu0 %v6449
        %6814 = vmatprep.subr.bf16.mxu0 0
        %6815 = vmatpush1.bf16.msra.mxu0 %v6450
        %6816 = vmatprep.subr.bf16.mxu0 0
        %6817 = vmatpush1.bf16.msra.mxu0 %v6451
        %6818 = vmatprep.subr.bf16.mxu0 0
        %6819 = vmatpush1.bf16.msra.mxu0 %v6452
        %6820 = vmatprep.subr.bf16.mxu0 0
        %6821 = vmatpush1.bf16.msra.mxu0 %v6453
        %6822 = vmatprep.mubr.bf16.mxu0 %v5598
        %6823 = vmatmul.mubr.bf16.gmra.mrb[0].mxu0 %v5597
        %v6824 = vpop.f32.mrb[0].mxu0
        %v6825 = vadd.f32 %v6785, %v6824
        %v6826 = vpop.f32.mrb[0].mxu0
        %v6827 = vpop.f32.mrb[0].mxu0
        %v6828 = vpop.f32.mrb[0].mxu0
        %6829 = vdwg.mxu0
        %6830 = vmatprep.subr.bf16.mxu0 0
        %6831 = vmatpush1.bf16.msra.mxu0 %v6454
        %6832 = vmatprep.subr.bf16.mxu0 0
        %6833 = vmatpush1.bf16.msra.mxu0 %v6455
        %6834 = vmatprep.subr.bf16.mxu0 0
        %6835 = vmatpush1.bf16.msra.mxu0 %v6456
        %6836 = vmatprep.subr.bf16.mxu0 0
        %6837 = vmatpush1.bf16.msra.mxu0 %v6457
        %6838 = vmatprep.subr.bf16.mxu0 0
        %6839 = vmatpush1.bf16.msra.mxu0 %v6458
        %6840 = vmatprep.subr.bf16.mxu0 0
        %6841 = vmatpush1.bf16.msra.mxu0 %v6459
        %6842 = vmatprep.subr.bf16.mxu0 0
        %6843 = vmatpush1.bf16.msra.mxu0 %v6460
        %6844 = vmatprep.subr.bf16.mxu0 0
        %6845 = vmatpush1.bf16.msra.mxu0 %v6461
        %6846 = vmatprep.subr.bf16.mxu0 0
        %6847 = vmatpush1.bf16.msra.mxu0 %v6462
        %6848 = vmatprep.subr.bf16.mxu0 0
        %6849 = vmatpush1.bf16.msra.mxu0 %v6463
        %6850 = vmatprep.subr.bf16.mxu0 0
        %6851 = vmatpush1.bf16.msra.mxu0 %v6464
        %6852 = vmatprep.subr.bf16.mxu0 0
        %6853 = vmatpush1.bf16.msra.mxu0 %v6465
        %6854 = vmatprep.subr.bf16.mxu0 0
        %6855 = vmatpush1.bf16.msra.mxu0 %v6466
        %6856 = vmatprep.subr.bf16.mxu0 0
        %6857 = vmatpush1.bf16.msra.mxu0 %v6467
        %6858 = vmatprep.subr.bf16.mxu0 0
        %6859 = vmatpush1.bf16.msra.mxu0 %v6468
        %6860 = vmatprep.subr.bf16.mxu0 0
        %6861 = vmatpush1.bf16.msra.mxu0 %v6469
        %6862 = vmatprep.mubr.bf16.mxu0 %v5600
        %6863 = vmatmul.mubr.bf16.gmra.mrb[0].mxu0 %v5599
        %v6864 = vpop.f32.mrb[0].mxu0
        %v6865 = vadd.f32 %v6825, %v6864
        %v6866 = vpop.f32.mrb[0].mxu0
        %v6867 = vpop.f32.mrb[0].mxu0
        %v6868 = vpop.f32.mrb[0].mxu0
        %6869 = vdwg.mxu0
        %6870 = vmatprep.subr.bf16.mxu0 0
        %6871 = vmatpush1.bf16.msra.mxu0 %v6470
        %6872 = vmatprep.subr.bf16.mxu0 0
        %6873 = vmatpush1.bf16.msra.mxu0 %v6471
        %6874 = vmatprep.subr.bf16.mxu0 0
        %6875 = vmatpush1.bf16.msra.mxu0 %v6472
        %6876 = vmatprep.subr.bf16.mxu0 0
        %6877 = vmatpush1.bf16.msra.mxu0 %v6473
        %6878 = vmatprep.subr.bf16.mxu0 0
        %6879 = vmatpush1.bf16.msra.mxu0 %v6474
        %6880 = vmatprep.subr.bf16.mxu0 0
        %6881 = vmatpush1.bf16.msra.mxu0 %v6475
        %6882 = vmatprep.subr.bf16.mxu0 0
        %6883 = vmatpush1.bf16.msra.mxu0 %v6476
        %6884 = vmatprep.subr.bf16.mxu0 0
        %6885 = vmatpush1.bf16.msra.mxu0 %v6477
        %6886 = vmatprep.subr.bf16.mxu0 0
        %6887 = vmatpush1.bf16.msra.mxu0 %v6478
        %6888 = vmatprep.subr.bf16.mxu0 0
        %6889 = vmatpush1.bf16.msra.mxu0 %v6479
        %6890 = vmatprep.subr.bf16.mxu0 0
        %6891 = vmatpush1.bf16.msra.mxu0 %v6480
        %6892 = vmatprep.subr.bf16.mxu0 0
        %6893 = vmatpush1.bf16.msra.mxu0 %v6481
        %6894 = vmatprep.subr.bf16.mxu0 0
        %6895 = vmatpush1.bf16.msra.mxu0 %v6482
        %6896 = vmatprep.subr.bf16.mxu0 0
        %6897 = vmatpush1.bf16.msra.mxu0 %v6483
        %6898 = vmatprep.subr.bf16.mxu0 0
        %6899 = vmatpush1.bf16.msra.mxu0 %v6484
        %6900 = vmatprep.subr.bf16.mxu0 0
        %6901 = vmatpush1.bf16.msra.mxu0 %v6485
        %6902 = vmatprep.mubr.bf16.mxu0 %v5602
        %6903 = vmatmul.mubr.bf16.gmra.mrb[0].mxu0 %v5601
        %v6904 = vpop.f32.mrb[0].mxu0
        %v6905 = vadd.f32 %v6865, %v6904
        %v6906 = vpop.f32.mrb[0].mxu0
        %v6907 = vpop.f32.mrb[0].mxu0
        %v6908 = vpop.f32.mrb[0].mxu0
        %6909 = vdwg.mxu0
        %6910 = vmatprep.subr.bf16.mxu0 0
        %6911 = vmatpush1.bf16.msra.mxu0 %v6486
        %6912 = vmatprep.subr.bf16.mxu0 0
        %6913 = vmatpush1.bf16.msra.mxu0 %v6487
        %6914 = vmatprep.subr.bf16.mxu0 0
        %6915 = vmatpush1.bf16.msra.mxu0 %v6488
        %6916 = vmatprep.subr.bf16.mxu0 0
        %6917 = vmatpush1.bf16.msra.mxu0 %v6489
        %6918 = vmatprep.subr.bf16.mxu0 0
        %6919 = vmatpush1.bf16.msra.mxu0 %v6490
        %6920 = vmatprep.subr.bf16.mxu0 0
        %6921 = vmatpush1.bf16.msra.mxu0 %v6491
        %6922 = vmatprep.subr.bf16.mxu0 0
        %6923 = vmatpush1.bf16.msra.mxu0 %v6492
        %6924 = vmatprep.subr.bf16.mxu0 0
        %6925 = vmatpush1.bf16.msra.mxu0 %v6493
        %6926 = vmatprep.subr.bf16.mxu0 0
        %6927 = vmatpush1.bf16.msra.mxu0 %v6494
        %6928 = vmatprep.subr.bf16.mxu0 0
        %6929 = vmatpush1.bf16.msra.mxu0 %v6495
        %6930 = vmatprep.subr.bf16.mxu0 0
        %6931 = vmatpush1.bf16.msra.mxu0 %v6496
        %6932 = vmatprep.subr.bf16.mxu0 0
        %6933 = vmatpush1.bf16.msra.mxu0 %v6497
        %6934 = vmatprep.subr.bf16.mxu0 0
        %6935 = vmatpush1.bf16.msra.mxu0 %v6498
        %6936 = vmatprep.subr.bf16.mxu0 0
        %6937 = vmatpush1.bf16.msra.mxu0 %v6499
        %6938 = vmatprep.subr.bf16.mxu0 0
        %6939 = vmatpush1.bf16.msra.mxu0 %v6500
        %6940 = vmatprep.subr.bf16.mxu0 0
        %6941 = vmatpush1.bf16.msra.mxu0 %v6501
        %6942 = vmatprep.mubr.bf16.mxu0 %v5604
        %6943 = vmatmul.mubr.bf16.gmra.mrb[0].mxu0 %v5603
        %v6944 = vpop.f32.mrb[0].mxu0
        %v6945 = vadd.f32 %v6905, %v6944
        %v6946 = vpop.f32.mrb[0].mxu0
        %v6947 = vpop.f32.mrb[0].mxu0
        %v6948 = vpop.f32.mrb[0].mxu0
        %6949 = vdwg.mxu0
        %v6950 = vadd.f32 %v4932, %v6945
        %v6951 = vlaneseq
        %v6952 = vshrl.u32 %v6951, 7
        %v6953 = vsub.s32 6, %v6952
        %v6954 = vrot.slane %v385, %v6953
        %v6955 = vadd.f32 %v6950, %v6954
        %v6956 = vsel %vm721, %v6955, 0.0
        %6957 = vadd.xlane.f32.xlu0 %v6956
        %v6958 = vpop.xlane.xlu0 %6957
        %v6959 = vmul.f32 %v6958, %v725
        %v6960 = vsub.f32 %v6955, %v6959
        %v6961 = vmul.f32 %v6960, %v6960
        %v6962 = vsel %vm721, %v6961, 0.0
        %6963 = vadd.xlane.f32.xlu0 %v6962
        %v6964 = vpop.xlane.xlu0 %6963
        %v6965 = vmul.f32 %v6964, 0.032258064
        %v6966 = vrsqrt.pop %v6965
        %v6967 = vmul.f32 %v6965, %v6966
        %vm6968 = vcmp.eq.f32.partialorder %v6965, inf
        %v6969 = vsel %vm6968, %v6965, %v6967
        %vm6970 = vcmp.eq.f32.partialorder %v6965, 0.0
        %v6971 = vand.u32 %v6965, 2147483648
        %v6972 = vsel %vm6970, %v6971, %v6969
        %v6973 = vadd.f32 %v6972, 1e-06
        %v6974 = vrcp.pop %v6973
        %v6975 = vmul.f32 %v6960, %v6974
        %v6976 = vlaneseq
        %v6977 = vshrl.u32 %v6976, 7
        %v6978 = vsub.s32 7, %v6977
        %v6979 = vrot.slane %v385, %v6978
        %v6980 = vmul.f32 %v6979, %v6975
        %v6981 = vlaneseq
        %v6982 = vshrl.u32 %v6981, 7
        %v6983 = vsub.s32 0, %v6982
        %v6984 = vrot.slane %v386, %v6983
        %v6985 = vadd.f32 %v6980, %v6984
        %6986 = vst.msk [vmem:[%s377] sm:$0xff] %vm721, %v6985
        %s6987 = sand.u32 %s269, 1
        %s6988 = scalar_lea.sflag [#allocation3], %s6987
        %s6989 = sand.u32 %s269, 1
        %s6990 = smul.addr %s6989, 8
        %s6991 = scalar_lea.vmem [#allocation2], %s6990
        // Predicated region
        $region65: #{tpu_custom_call.1} parent=63 // pred_check
          %p6992 = pneg %p279
        $region66: #{tpu_custom_call.1} parent=63 // pred_check_branch
          %6994 = sbr.rel (%p6992) target = $region68
        $region67: #{tpu_custom_call.1} parent=63 // pred_region
          %s6996 = ssub.s32 128, 128
          %6997 = vsyncadd %s6988, %s6996
          %s6998 = smul.addr %s25, 128
          %s6999 = scalar_lea.hbm %s11, %s6998
          %s7001 = sshll.u32 %s6991, 4
          %s7002 = int_to_ptr.vmem [resolvable:$true] %s7001
          %7004 = dma.vmem_to_hbm [thread:$0]  %s7002, 128, %s6999, %s6988
        $region68: #{tpu_custom_call.1} parent=63 // pred_fallthru
          _
      $region64: #{tpu_custom_call.1} parent=5 // pred_fallthru
        _
      %p7005 = scmp.le.s32.totalorder 2, %s20
      // Predicated region
      $region69: #{tpu_custom_call.1} parent=5 // pred_check
        %p7006 = pneg %p7005
      $region70: #{tpu_custom_call.1} parent=5 // pred_check_branch
        %7008 = sbr.rel (%p7006) target = $region72
      $region71: #{tpu_custom_call.1} parent=5 // pred_region
        %s7009 = ssub.s32 %s20, 2
        // Predicated region
        $region73: #{tpu_custom_call.1} parent=71 // pred_check
          %p7010 = pneg %p285
        $region74: #{tpu_custom_call.1} parent=71 // pred_check_branch
          %7012 = sbr.rel (%p7010) target = $region76
        $region75: #{tpu_custom_call.1} parent=71 // pred_region
          %s7013 = sand.u32 %s270, 1
          %s7014 = scalar_lea.sflag [#allocation3], %s7013
          %s7015 = sand.u32 %s270, 1
          %s7016 = smul.addr %s7015, 8
          %s7017 = scalar_lea.vmem [#allocation2], %s7016
          %7018 = dma.done %s7014, 128
        $region76: #{tpu_custom_call.1} parent=71 // pred_fallthru
          _
      $region72: #{tpu_custom_call.1} parent=5 // pred_fallthru
        _
    $region6: #{tpu_custom_call.1} parent=1 // loop_footer
      %s24 = sadd.s32 1, %s20
    $region7: #{tpu_custom_call.1} parent=1 // loop_footer_branch
      %19 = sbr.rel target = $region3
    $region8: #{tpu_custom_call.1} parent=1 // loop_exit
      _
    %7019 = vsyncpa [#allocation3], 1
    %s7020 = scalar_lea.sflag [#allocation3], 1
    %7021 = vsyncpa %s7020, 1

</llo_original>
